<compile_context>
chip_gen: v7x
topology: tpu7x:2x2x1
jax: 0.10.0
libtpu: 0.0.40
codegen_flags: <defaults>
</compile_context>

<pallas_src>
import functools

import jax
import jax.numpy as jnp
from jax.experimental import pallas as pl
from jax.experimental.pallas import tpu as pltpu

_LANES = 128
_ROW_ALIGN = 32  # sublane multiple that is layout-safe for f32 / bf16 / int8 tiles


def _make_freq_bands(num_freq: int, log_sampling: bool = True):
    """Pure-Python frequency bands (no trace-time device round-trip)."""
    if num_freq <= 0:
        return []
    if num_freq == 1:
        return [1.0]
    max_freq = num_freq - 1
    if log_sampling:
        return [2.0 ** (max_freq * i / (num_freq - 1)) for i in range(num_freq)]
    lo, hi = 2.0 ** 0.0, 2.0 ** float(max_freq)
    return [lo + (hi - lo) * i / (num_freq - 1) for i in range(num_freq)]


def _pe_kernel(x_ref, o_ref, *, freq_bands, include_input):
    # x_ref: (rows_block, 128) lane-dense input slab.
    # o_ref: (K, rows_block, 128) planar output; o_ref[k] is one full dense slab.
    x = x_ref[...].astype(jnp.float32)       # compute in f32 (matches torch f32 math)
    out_dtype = o_ref.dtype
    k = 0
    if include_input:
        o_ref[k] = x.astype(out_dtype)
        k += 1
    for f in freq_bands:
        xf = x * jnp.float32(f)               # VPU
        o_ref[k] = jnp.sin(xf).astype(out_dtype)       # EUP, streamed to VMEM
        o_ref[k + 1] = jnp.cos(xf).astype(out_dtype)
        k += 2


@functools.partial(
    jax.jit,
    static_argnames=("num_freq", "include_input", "log_sampling", "block_rows"))
def pe_embed(x, *, num_freq=10, include_input=True, log_sampling=True,
             block_rows=512):
    """Positional encoding matching PE.forward.  x: (..., D) -> (..., D*(1+2F))."""
    orig_shape = x.shape
    d = orig_shape[-1]
    freq_bands = _make_freq_bands(num_freq, log_sampling)
    k_out = (1 if include_input else 0) + 2 * num_freq
    out_dim = d * k_out
    if k_out == 0:
        return jnp.zeros((*orig_shape[:-1], 0), x.dtype)

    # Flatten to a lane-dense (rows, 128) layout.
    x_flat = x.reshape(-1)
    m = x_flat.shape[0]
    n_points = m // d

    rows_needed = pl.cdiv(m, _LANES)
    rows_block = min(
        block_rows,
        ((rows_needed + _ROW_ALIGN - 1) // _ROW_ALIGN) * _ROW_ALIGN)
    rows_block = max(rows_block, _ROW_ALIGN)
    rows = ((rows_needed + rows_block - 1) // rows_block) * rows_block
    m_pad = rows * _LANES
    if m_pad != m:
        # Only the (small) input is padded; padded tail computes sin(0)/cos(0)
        # and is dropped by the wrapper slice below.
        x_flat = jnp.pad(x_flat, (0, m_pad - m))
    x2 = x_flat.reshape(rows, _LANES)

    kernel = functools.partial(
        _pe_kernel, freq_bands=freq_bands, include_input=include_input)

    itemsize = jnp.dtype(x.dtype).itemsize
    cost = pl.CostEstimate(
        flops=num_freq * m_pad,                   # the x*f multiplies
        transcendentals=2 * num_freq * m_pad,     # sin + cos per band
        bytes_accessed=(1 + k_out) * m_pad * itemsize,
    )

    out_planar = pl.pallas_call(
        kernel,
        out_shape=jax.ShapeDtypeStruct((k_out, rows, _LANES), x.dtype),
        grid_spec=pltpu.PrefetchScalarGridSpec(
            num_scalar_prefetch=0,
            grid=(rows // rows_block,),
            in_specs=[pl.BlockSpec((rows_block, _LANES), lambda i: (i, 0))],
            out_specs=pl.BlockSpec((k_out, rows_block, _LANES),
                                   lambda i: (0, i, 0)),
        ),
        compiler_params=pltpu.CompilerParams(
            dimension_semantics=("parallel",),   # row tiles shard across TCs on v7x
        ),
        cost_estimate=cost,
    )(x2)

    # Planar (K, m_pad) -> (K, N, D) -> (N, K, D) -> (..., K*D): exactly the PyTorch
    # concat-along-last-dim ordering. Slice/transpose/reshape fuse under jit.
    out = out_planar.reshape(k_out, m_pad)[:, :m].reshape(k_out, n_points, d)
    out = jnp.transpose(out, (1, 0, 2)).reshape(*orig_shape[:-1], out_dim)
    return out

# TODO(synk): windowed_embed / cosine_easing_window (training-schedule windowing) is
# not part of forward() and is not implemented here.


def pe_embed_ref(x, *, num_freq=10, include_input=True, log_sampling=True):
    """Pure-JAX reference mirroring the PyTorch module exactly."""
    freq_bands = _make_freq_bands(num_freq, log_sampling)
    parts = []
    if include_input:
        parts.append(x)
    for f in freq_bands:
        parts.append(jnp.sin(x * f))
        parts.append(jnp.cos(x * f))
    return jnp.concatenate(parts, axis=-1)


if __name__ == "__main__":
    key = jax.random.PRNGKey(0)

    # A batch of 3-D points, matching the module defaults (input_dims=3).
    x = jax.random.normal(key, (256, 3), dtype=jnp.float32)
    out = jax.block_until_ready(pe_embed(x))                 # (256, 63)
    ref = pe_embed_ref(x)
    assert out.shape == (256, 3 * (1 + 2 * 10)), out.shape
    assert jnp.allclose(out, ref, atol=1e-5, rtol=1e-5), "mismatch vs reference"

    # Multi-dim leading shape (rays x samples x 3), exercises the flatten path.
    x2 = jax.random.normal(jax.random.PRNGKey(1), (2, 128, 3), dtype=jnp.float32)
    out2 = jax.block_until_ready(pe_embed(x2))               # (2, 128, 63)
    ref2 = pe_embed_ref(x2)
    assert out2.shape == (2, 128, 63), out2.shape
    assert jnp.allclose(out2, ref2, atol=1e-5, rtol=1e-5), "mismatch vs reference"

    print("KERNEL_OK")
</pallas_src>

<mosaic_0001>
module attributes {stable_mosaic.version = 11 : i64} {
  func.func @_pe_kernel(%arg0: i32, %arg1: memref<32x128xf32, #tpu.memory_space<vmem>>, %arg2: memref<21x32x128xf32, #tpu.memory_space<vmem>>) attributes {dimension_semantics = [#tpu.dimension_semantics<parallel>], iteration_bounds = array<i64: 1>, scalar_prefetch = 0 : i64, scratch_operands = 0 : i64, tpu.core_type = #tpu.core_type<tc>, window_params = [{transform_indices = @transform_0, window_bounds = array<i64: 32, 128>}, {transform_indices = @transform_1, window_bounds = array<i64: 21, 32, 128>}]} {
    %c0 = arith.constant 0 : index
    %c0_0 = arith.constant 0 : index
    %0 = vector.load %arg1[%c0, %c0_0] : memref<32x128xf32, #tpu.memory_space<vmem>>, vector<32x128xf32>
    %c0_1 = arith.constant 0 : index
    %c0_2 = arith.constant 0 : index
    %c0_3 = arith.constant 0 : index
    %1 = vector.load %arg2[%c0_1, %c0_2, %c0_3] : memref<21x32x128xf32, #tpu.memory_space<vmem>>, vector<1x32x128xf32>
    %2 = vector.shape_cast %1 : vector<1x32x128xf32> to vector<32x128xf32>
    %3 = vector.shape_cast %0 : vector<32x128xf32> to vector<1x32x128xf32>
    tpu.vector_store %arg2[%c0_1, %c0_2, %c0_3], %3 {strides = array<i32>} : memref<21x32x128xf32, #tpu.memory_space<vmem>>, vector<1x32x128xf32>,
    %cst = arith.constant 1.000000e+00 : f32
    %4 = vector.broadcast %cst : f32 to vector<32x128xf32>
    %5 = arith.mulf %0, %4 : vector<32x128xf32>
    %6 = math.sin %5 : vector<32x128xf32>
    %c1 = arith.constant 1 : index
    %c0_4 = arith.constant 0 : index
    %c0_5 = arith.constant 0 : index
    %7 = vector.load %arg2[%c1, %c0_4, %c0_5] : memref<21x32x128xf32, #tpu.memory_space<vmem>>, vector<1x32x128xf32>
    %8 = vector.shape_cast %7 : vector<1x32x128xf32> to vector<32x128xf32>
    %9 = vector.shape_cast %6 : vector<32x128xf32> to vector<1x32x128xf32>
    tpu.vector_store %arg2[%c1, %c0_4, %c0_5], %9 {strides = array<i32>} : memref<21x32x128xf32, #tpu.memory_space<vmem>>, vector<1x32x128xf32>,
    %10 = math.cos %5 : vector<32x128xf32>
    %c2 = arith.constant 2 : index
    %c0_6 = arith.constant 0 : index
    %c0_7 = arith.constant 0 : index
    %11 = vector.load %arg2[%c2, %c0_6, %c0_7] : memref<21x32x128xf32, #tpu.memory_space<vmem>>, vector<1x32x128xf32>
    %12 = vector.shape_cast %11 : vector<1x32x128xf32> to vector<32x128xf32>
    %13 = vector.shape_cast %10 : vector<32x128xf32> to vector<1x32x128xf32>
    tpu.vector_store %arg2[%c2, %c0_6, %c0_7], %13 {strides = array<i32>} : memref<21x32x128xf32, #tpu.memory_space<vmem>>, vector<1x32x128xf32>,
    %cst_8 = arith.constant 2.000000e+00 : f32
    %14 = vector.broadcast %cst_8 : f32 to vector<32x128xf32>
    %15 = arith.mulf %0, %14 : vector<32x128xf32>
    %16 = math.sin %15 : vector<32x128xf32>
    %c3 = arith.constant 3 : index
    %c0_9 = arith.constant 0 : index
    %c0_10 = arith.constant 0 : index
    %17 = vector.load %arg2[%c3, %c0_9, %c0_10] : memref<21x32x128xf32, #tpu.memory_space<vmem>>, vector<1x32x128xf32>
    %18 = vector.shape_cast %17 : vector<1x32x128xf32> to vector<32x128xf32>
    %19 = vector.shape_cast %16 : vector<32x128xf32> to vector<1x32x128xf32>
    tpu.vector_store %arg2[%c3, %c0_9, %c0_10], %19 {strides = array<i32>} : memref<21x32x128xf32, #tpu.memory_space<vmem>>, vector<1x32x128xf32>,
    %20 = math.cos %15 : vector<32x128xf32>
    %c4 = arith.constant 4 : index
    %c0_11 = arith.constant 0 : index
    %c0_12 = arith.constant 0 : index
    %21 = vector.load %arg2[%c4, %c0_11, %c0_12] : memref<21x32x128xf32, #tpu.memory_space<vmem>>, vector<1x32x128xf32>
    %22 = vector.shape_cast %21 : vector<1x32x128xf32> to vector<32x128xf32>
    %23 = vector.shape_cast %20 : vector<32x128xf32> to vector<1x32x128xf32>
    tpu.vector_store %arg2[%c4, %c0_11, %c0_12], %23 {strides = array<i32>} : memref<21x32x128xf32, #tpu.memory_space<vmem>>, vector<1x32x128xf32>,
    %cst_13 = arith.constant 4.000000e+00 : f32
    %24 = vector.broadcast %cst_13 : f32 to vector<32x128xf32>
    %25 = arith.mulf %0, %24 : vector<32x128xf32>
    %26 = math.sin %25 : vector<32x128xf32>
    %c5 = arith.constant 5 : index
    %c0_14 = arith.constant 0 : index
    %c0_15 = arith.constant 0 : index
    %27 = vector.load %arg2[%c5, %c0_14, %c0_15] : memref<21x32x128xf32, #tpu.memory_space<vmem>>, vector<1x32x128xf32>
    %28 = vector.shape_cast %27 : vector<1x32x128xf32> to vector<32x128xf32>
    %29 = vector.shape_cast %26 : vector<32x128xf32> to vector<1x32x128xf32>
    tpu.vector_store %arg2[%c5, %c0_14, %c0_15], %29 {strides = array<i32>} : memref<21x32x128xf32, #tpu.memory_space<vmem>>, vector<1x32x128xf32>,
    %30 = math.cos %25 : vector<32x128xf32>
    %c6 = arith.constant 6 : index
    %c0_16 = arith.constant 0 : index
    %c0_17 = arith.constant 0 : index
    %31 = vector.load %arg2[%c6, %c0_16, %c0_17] : memref<21x32x128xf32, #tpu.memory_space<vmem>>, vector<1x32x128xf32>
    %32 = vector.shape_cast %31 : vector<1x32x128xf32> to vector<32x128xf32>
    %33 = vector.shape_cast %30 : vector<32x128xf32> to vector<1x32x128xf32>
    tpu.vector_store %arg2[%c6, %c0_16, %c0_17], %33 {strides = array<i32>} : memref<21x32x128xf32, #tpu.memory_space<vmem>>, vector<1x32x128xf32>,
    %cst_18 = arith.constant 8.000000e+00 : f32
    %34 = vector.broadcast %cst_18 : f32 to vector<32x128xf32>
    %35 = arith.mulf %0, %34 : vector<32x128xf32>
    %36 = math.sin %35 : vector<32x128xf32>
    %c7 = arith.constant 7 : index
    %c0_19 = arith.constant 0 : index
    %c0_20 = arith.constant 0 : index
    %37 = vector.load %arg2[%c7, %c0_19, %c0_20] : memref<21x32x128xf32, #tpu.memory_space<vmem>>, vector<1x32x128xf32>
    %38 = vector.shape_cast %37 : vector<1x32x128xf32> to vector<32x128xf32>
    %39 = vector.shape_cast %36 : vector<32x128xf32> to vector<1x32x128xf32>
    tpu.vector_store %arg2[%c7, %c0_19, %c0_20], %39 {strides = array<i32>} : memref<21x32x128xf32, #tpu.memory_space<vmem>>, vector<1x32x128xf32>,
    %40 = math.cos %35 : vector<32x128xf32>
    %c8 = arith.constant 8 : index
    %c0_21 = arith.constant 0 : index
    %c0_22 = arith.constant 0 : index
    %41 = vector.load %arg2[%c8, %c0_21, %c0_22] : memref<21x32x128xf32, #tpu.memory_space<vmem>>, vector<1x32x128xf32>
    %42 = vector.shape_cast %41 : vector<1x32x128xf32> to vector<32x128xf32>
    %43 = vector.shape_cast %40 : vector<32x128xf32> to vector<1x32x128xf32>
    tpu.vector_store %arg2[%c8, %c0_21, %c0_22], %43 {strides = array<i32>} : memref<21x32x128xf32, #tpu.memory_space<vmem>>, vector<1x32x128xf32>,
    %cst_23 = arith.constant 1.600000e+01 : f32
    %44 = vector.broadcast %cst_23 : f32 to vector<32x128xf32>
    %45 = arith.mulf %0, %44 : vector<32x128xf32>
    %46 = math.sin %45 : vector<32x128xf32>
    %c9 = arith.constant 9 : index
    %c0_24 = arith.constant 0 : index
    %c0_25 = arith.constant 0 : index
    %47 = vector.load %arg2[%c9, %c0_24, %c0_25] : memref<21x32x128xf32, #tpu.memory_space<vmem>>, vector<1x32x128xf32>
    %48 = vector.shape_cast %47 : vector<1x32x128xf32> to vector<32x128xf32>
    %49 = vector.shape_cast %46 : vector<32x128xf32> to vector<1x32x128xf32>
    tpu.vector_store %arg2[%c9, %c0_24, %c0_25], %49 {strides = array<i32>} : memref<21x32x128xf32, #tpu.memory_space<vmem>>, vector<1x32x128xf32>,
    %50 = math.cos %45 : vector<32x128xf32>
    %c10 = arith.constant 10 : index
    %c0_26 = arith.constant 0 : index
    %c0_27 = arith.constant 0 : index
    %51 = vector.load %arg2[%c10, %c0_26, %c0_27] : memref<21x32x128xf32, #tpu.memory_space<vmem>>, vector<1x32x128xf32>
    %52 = vector.shape_cast %51 : vector<1x32x128xf32> to vector<32x128xf32>
    %53 = vector.shape_cast %50 : vector<32x128xf32> to vector<1x32x128xf32>
    tpu.vector_store %arg2[%c10, %c0_26, %c0_27], %53 {strides = array<i32>} : memref<21x32x128xf32, #tpu.memory_space<vmem>>, vector<1x32x128xf32>,
    %cst_28 = arith.constant 3.200000e+01 : f32
    %54 = vector.broadcast %cst_28 : f32 to vector<32x128xf32>
    %55 = arith.mulf %0, %54 : vector<32x128xf32>
    %56 = math.sin %55 : vector<32x128xf32>
    %c11 = arith.constant 11 : index
    %c0_29 = arith.constant 0 : index
    %c0_30 = arith.constant 0 : index
    %57 = vector.load %arg2[%c11, %c0_29, %c0_30] : memref<21x32x128xf32, #tpu.memory_space<vmem>>, vector<1x32x128xf32>
    %58 = vector.shape_cast %57 : vector<1x32x128xf32> to vector<32x128xf32>
    %59 = vector.shape_cast %56 : vector<32x128xf32> to vector<1x32x128xf32>
    tpu.vector_store %arg2[%c11, %c0_29, %c0_30], %59 {strides = array<i32>} : memref<21x32x128xf32, #tpu.memory_space<vmem>>, vector<1x32x128xf32>,
    %60 = math.cos %55 : vector<32x128xf32>
    %c12 = arith.constant 12 : index
    %c0_31 = arith.constant 0 : index
    %c0_32 = arith.constant 0 : index
    %61 = vector.load %arg2[%c12, %c0_31, %c0_32] : memref<21x32x128xf32, #tpu.memory_space<vmem>>, vector<1x32x128xf32>
    %62 = vector.shape_cast %61 : vector<1x32x128xf32> to vector<32x128xf32>
    %63 = vector.shape_cast %60 : vector<32x128xf32> to vector<1x32x128xf32>
    tpu.vector_store %arg2[%c12, %c0_31, %c0_32], %63 {strides = array<i32>} : memref<21x32x128xf32, #tpu.memory_space<vmem>>, vector<1x32x128xf32>,
    %cst_33 = arith.constant 6.400000e+01 : f32
    %64 = vector.broadcast %cst_33 : f32 to vector<32x128xf32>
    %65 = arith.mulf %0, %64 : vector<32x128xf32>
    %66 = math.sin %65 : vector<32x128xf32>
    %c13 = arith.constant 13 : index
    %c0_34 = arith.constant 0 : index
    %c0_35 = arith.constant 0 : index
    %67 = vector.load %arg2[%c13, %c0_34, %c0_35] : memref<21x32x128xf32, #tpu.memory_space<vmem>>, vector<1x32x128xf32>
    %68 = vector.shape_cast %67 : vector<1x32x128xf32> to vector<32x128xf32>
    %69 = vector.shape_cast %66 : vector<32x128xf32> to vector<1x32x128xf32>
    tpu.vector_store %arg2[%c13, %c0_34, %c0_35], %69 {strides = array<i32>} : memref<21x32x128xf32, #tpu.memory_space<vmem>>, vector<1x32x128xf32>,
    %70 = math.cos %65 : vector<32x128xf32>
    %c14 = arith.constant 14 : index
    %c0_36 = arith.constant 0 : index
    %c0_37 = arith.constant 0 : index
    %71 = vector.load %arg2[%c14, %c0_36, %c0_37] : memref<21x32x128xf32, #tpu.memory_space<vmem>>, vector<1x32x128xf32>
    %72 = vector.shape_cast %71 : vector<1x32x128xf32> to vector<32x128xf32>
    %73 = vector.shape_cast %70 : vector<32x128xf32> to vector<1x32x128xf32>
    tpu.vector_store %arg2[%c14, %c0_36, %c0_37], %73 {strides = array<i32>} : memref<21x32x128xf32, #tpu.memory_space<vmem>>, vector<1x32x128xf32>,
    %cst_38 = arith.constant 1.280000e+02 : f32
    %74 = vector.broadcast %cst_38 : f32 to vector<32x128xf32>
    %75 = arith.mulf %0, %74 : vector<32x128xf32>
    %76 = math.sin %75 : vector<32x128xf32>
    %c15 = arith.constant 15 : index
    %c0_39 = arith.constant 0 : index
    %c0_40 = arith.constant 0 : index
    %77 = vector.load %arg2[%c15, %c0_39, %c0_40] : memref<21x32x128xf32, #tpu.memory_space<vmem>>, vector<1x32x128xf32>
    %78 = vector.shape_cast %77 : vector<1x32x128xf32> to vector<32x128xf32>
    %79 = vector.shape_cast %76 : vector<32x128xf32> to vector<1x32x128xf32>
    tpu.vector_store %arg2[%c15, %c0_39, %c0_40], %79 {strides = array<i32>} : memref<21x32x128xf32, #tpu.memory_space<vmem>>, vector<1x32x128xf32>,
    %80 = math.cos %75 : vector<32x128xf32>
    %c16 = arith.constant 16 : index
    %c0_41 = arith.constant 0 : index
    %c0_42 = arith.constant 0 : index
    %81 = vector.load %arg2[%c16, %c0_41, %c0_42] : memref<21x32x128xf32, #tpu.memory_space<vmem>>, vector<1x32x128xf32>
    %82 = vector.shape_cast %81 : vector<1x32x128xf32> to vector<32x128xf32>
    %83 = vector.shape_cast %80 : vector<32x128xf32> to vector<1x32x128xf32>
    tpu.vector_store %arg2[%c16, %c0_41, %c0_42], %83 {strides = array<i32>} : memref<21x32x128xf32, #tpu.memory_space<vmem>>, vector<1x32x128xf32>,
    %cst_43 = arith.constant 2.560000e+02 : f32
    %84 = vector.broadcast %cst_43 : f32 to vector<32x128xf32>
    %85 = arith.mulf %0, %84 : vector<32x128xf32>
    %86 = math.sin %85 : vector<32x128xf32>
    %c17 = arith.constant 17 : index
    %c0_44 = arith.constant 0 : index
    %c0_45 = arith.constant 0 : index
    %87 = vector.load %arg2[%c17, %c0_44, %c0_45] : memref<21x32x128xf32, #tpu.memory_space<vmem>>, vector<1x32x128xf32>
    %88 = vector.shape_cast %87 : vector<1x32x128xf32> to vector<32x128xf32>
    %89 = vector.shape_cast %86 : vector<32x128xf32> to vector<1x32x128xf32>
    tpu.vector_store %arg2[%c17, %c0_44, %c0_45], %89 {strides = array<i32>} : memref<21x32x128xf32, #tpu.memory_space<vmem>>, vector<1x32x128xf32>,
    %90 = math.cos %85 : vector<32x128xf32>
    %c18 = arith.constant 18 : index
    %c0_46 = arith.constant 0 : index
    %c0_47 = arith.constant 0 : index
    %91 = vector.load %arg2[%c18, %c0_46, %c0_47] : memref<21x32x128xf32, #tpu.memory_space<vmem>>, vector<1x32x128xf32>
    %92 = vector.shape_cast %91 : vector<1x32x128xf32> to vector<32x128xf32>
    %93 = vector.shape_cast %90 : vector<32x128xf32> to vector<1x32x128xf32>
    tpu.vector_store %arg2[%c18, %c0_46, %c0_47], %93 {strides = array<i32>} : memref<21x32x128xf32, #tpu.memory_space<vmem>>, vector<1x32x128xf32>,
    %cst_48 = arith.constant 5.120000e+02 : f32
    %94 = vector.broadcast %cst_48 : f32 to vector<32x128xf32>
    %95 = arith.mulf %0, %94 : vector<32x128xf32>
    %96 = math.sin %95 : vector<32x128xf32>
    %c19 = arith.constant 19 : index
    %c0_49 = arith.constant 0 : index
    %c0_50 = arith.constant 0 : index
    %97 = vector.load %arg2[%c19, %c0_49, %c0_50] : memref<21x32x128xf32, #tpu.memory_space<vmem>>, vector<1x32x128xf32>
    %98 = vector.shape_cast %97 : vector<1x32x128xf32> to vector<32x128xf32>
    %99 = vector.shape_cast %96 : vector<32x128xf32> to vector<1x32x128xf32>
    tpu.vector_store %arg2[%c19, %c0_49, %c0_50], %99 {strides = array<i32>} : memref<21x32x128xf32, #tpu.memory_space<vmem>>, vector<1x32x128xf32>,
    %100 = math.cos %95 : vector<32x128xf32>
    %c20 = arith.constant 20 : index
    %c0_51 = arith.constant 0 : index
    %c0_52 = arith.constant 0 : index
    %101 = vector.load %arg2[%c20, %c0_51, %c0_52] : memref<21x32x128xf32, #tpu.memory_space<vmem>>, vector<1x32x128xf32>
    %102 = vector.shape_cast %101 : vector<1x32x128xf32> to vector<32x128xf32>
    %103 = vector.shape_cast %100 : vector<32x128xf32> to vector<1x32x128xf32>
    tpu.vector_store %arg2[%c20, %c0_51, %c0_52], %103 {strides = array<i32>} : memref<21x32x128xf32, #tpu.memory_space<vmem>>, vector<1x32x128xf32>,
    return
  }
  func.func @transform_0(%arg0: i32) -> (i32, i32) {
    %c0_i32 = arith.constant 0 : i32
    %c0_i32_0 = arith.constant 0 : i32
    return %arg0, %c0_i32 : i32, i32
  }
  func.func @transform_1(%arg0: i32) -> (i32, i32, i32) {
    %c0_i32 = arith.constant 0 : i32
    %c0_i32_0 = arith.constant 0 : i32
    %c0_i32_1 = arith.constant 0 : i32
    return %c0_i32, %arg0, %c0_i32_0 : i32, i32, i32
  }
}

</mosaic_0001>

<llo_original>
// kernel: pe_embed.1
$region0: #{pe_embed.1}
  #allocation0 [shape = 'u32[]', space=smem, size = 0x4, offset = 0x4, fixed_abs, tag = 'smem constant byte address 0x4 - core index']
  #allocation1 [shape = 'u32[144,128]{1,0:T(1,128)}', space=vmem, size = 0x12000, scoped, tag = 'internal scratch']
  %s0 = inlined_call_operand.vmem [shape: f32[32,128], index: 0, kind: input, shape index: {}]
  %s1 = inlined_call_operand.vmem [shape: f32[21,32,128], index: 1, kind: output, shape index: {}]
  %s2 = sld [smem:[#allocation0]]
  $region14: #{pe_embed.1} parent=0
    _
  %s4 = ssub.s32 1, %s2
  %s5 = scalar_select 0, %s4, %s2
  // Predicated region
  $region2: #{pe_embed.1} parent=0 // pred_check
    _
  $region3: #{pe_embed.1} parent=0 // pred_check_branch
    %7 = sbr.rel (0) target = $region5
  $region4: #{pe_embed.1} parent=0 // pred_region
    _
  $region5: #{pe_embed.1} parent=0 // pred_fallthru
    _
  %v8 = vld [vmem:[%s0] sm:$0xff]
  %v9 = vld [vmem:[%s0 + $0x8] sm:$0xff]
  %v10 = vld [vmem:[%s0 + $0x10] sm:$0xff]
  %v11 = vld [vmem:[%s0 + $0x18] sm:$0xff]
  %12 = vst [vmem:[%s1] sm:$0xff] %v8
  %13 = vst [vmem:[%s1 + $0x8] sm:$0xff] %v9
  %14 = vst [vmem:[%s1 + $0x10] sm:$0xff] %v10
  %15 = vst [vmem:[%s1 + $0x18] sm:$0xff] %v11
  %v16 = vand.u32 2147483647, %v8
  %vm17 = vcmp.le.f32.partialorder %v16, 0.7853982
  %vm18 = vcmp.lt.s32.totalorder %v8, 0
  %v19 = vand.u32 %v8, 2139095040
  %v20 = vshrl.u32 %v19, 23
  %v21 = vsub.s32 %v20, 127
  %v22 = vand.u32 2147483647, %v8
  %v23 = vand.u32 %v22, 8388607
  %v24 = vor.u32 %v23, 8388608
  %v25 = vsub.s32 0, %v24
  %v26 = vadd.s32 %v21, 1
  %vm27 = vcmp.gt.s32.totalorder %v26, 0
  %v28 = vsel %vm27, %v26, 0
  %v29 = vshrl.u32 %v28, 5
  %v30 = vand.u32 %v28, 31
  %v31 = vsub.s32 32, %v30
  %v32 = vshrl.u32 683565275, %v31
  %v33 = vshll.u32 683565275, %v30
  %v34 = vshrl.u32 2475754826, %v31
  %v35 = vor.u32 %v33, %v34
  %v36 = vshll.u32 2475754826, %v30
  %v37 = vshrl.u32 2131351028, %v31
  %v38 = vor.u32 %v36, %v37
  %v39 = vshll.u32 2131351028, %v30
  %v40 = vshrl.u32 2102212464, %v31
  %v41 = vor.u32 %v39, %v40
  %v42 = vshll.u32 2102212464, %v30
  %v43 = vshrl.u32 920167782, %v31
  %v44 = vor.u32 %v42, %v43
  %v45 = vshll.u32 920167782, %v30
  %v46 = vshrl.u32 1326507024, %v31
  %v47 = vor.u32 %v45, %v46
  %vm48 = vcmp.lt.s32.totalorder %v29, 1
  %vm49 = vcmp.lt.s32.totalorder %v29, 2
  %vm50 = vcmp.lt.s32.totalorder %v29, 3
  %vm51 = vcmp.lt.s32.totalorder %v29, 4
  %v52 = vsel %vm48, %v32, %v35
  %v53 = vsel %vm51, %v41, 2102212464
  %v54 = vsel %vm50, %v38, %v53
  %v55 = vsel %vm49, %v52, %v54
  %v56 = vsel %vm48, %v35, %v38
  %v57 = vsel %vm51, %v44, 920167782
  %v58 = vsel %vm50, %v41, %v57
  %v59 = vsel %vm49, %v56, %v58
  %v60 = vsel %vm48, %v38, %v41
  %v61 = vsel %vm51, %v47, 1326507024
  %v62 = vsel %vm50, %v44, %v61
  %v63 = vsel %vm49, %v60, %v62
  %v64 = vshll.u32 %v24, 8
  %v65 = vmul.u32.u64.compose %v64, %v63
  %v66 = vextract.low.u32 %v65
  %v67 = vextract.high.u32 %v65
  %v68 = vmul.u32.u64.compose %v64, %v59
  %v69 = vextract.low.u32 %v68
  %v70 = vextract.high.u32 %v68
  %v71 = vmul.u32 %v64, %v55
  %v72 = vadd.s32 %v67, %v69
  %vm73 = vc.u32 %v67, %v69
  %v74 = vadd.s32 %v70, 1
  %v75 = vsel %vm73, %v74, %v70
  %v76 = vadd.s32 %v71, %v75
  %v77 = vadd.s32 %v76, 536870912
  %v78 = vshrl.u32 %v77, 30
  %v79 = vshll.u32 %v78, 30
  %v80 = vsub.s32 %v76, %v79
  %vm81 = vcmp.lt.s32.totalorder %v80, 0
  %v82 = vsub.s32 0, %v80
  %v83 = vsel %vm81, %v82, %v80
  %v84 = vclz %v83
  %v85 = vsub.s32 %v84, 2
  %vm86 = vcmp.gt.s32.totalorder 0, %v85
  %v87 = vsel %vm86, 0, %v85
  %v88 = vsub.s32 32, %v87
  %v89 = vshll.u32 %v80, %v87
  %v90 = vshrl.u32 %v72, %v88
  %v91 = vor.u32 %v89, %v90
  %v92 = vsub.s32 4294967266, %v87
  %v93 = vadd.s32 %v92, 127
  %v94 = vshll.u32 %v93, 23
  %v95 = vor.u32 4788187, %v94
  %v96 = vand.u32 2147483647, %v95
  %v98 = vcvt.s32.f32 %v91
  %v99 = vmul.f32 %v98, %v96
  %v100 = vxor.u32 %v99, 2147483648
  %v101 = vsel %vm18, %v100, %v99
  %v102 = vsub.s32 4, %v78
  %v103 = vsel %vm18, %v102, %v78
  %v104 = vsel %vm17, %v8, %v101
  %v105 = vsel %vm17, 0, %v103
  %v106 = vcosq.f32.pop %v104
  %v107 = vsinq.f32.pop %v104
  %vm108 = vweird.f32 %v8
  %v109 = vadd.s32 %v105, 3
  %v110 = vand.u32 %v109, 3
  %vm111 = vcmp.lt.s32.totalorder %v110, 2
  %vm112 = vcmp.eq.s32.totalorder %v110, 0
  %v113 = vxor.u32 %v107, 2147483648
  %v114 = vsel %vm112, %v106, %v113
  %vm115 = vcmp.eq.s32.totalorder %v110, 2
  %v116 = vxor.u32 %v106, 2147483648
  %v117 = vsel %vm115, %v116, %v107
  %v118 = vsel %vm111, %v114, %v117
  %v119 = vsel %vm108, nan, %v118
  %v120 = vand.u32 2147483647, %v9
  %vm121 = vcmp.le.f32.partialorder %v120, 0.7853982
  %vm122 = vcmp.lt.s32.totalorder %v9, 0
  %v123 = vand.u32 %v9, 2139095040
  %v124 = vshrl.u32 %v123, 23
  %v125 = vsub.s32 %v124, 127
  %v126 = vand.u32 2147483647, %v9
  %v127 = vand.u32 %v126, 8388607
  %v128 = vor.u32 %v127, 8388608
  %v129 = vsub.s32 0, %v128
  %v130 = vadd.s32 %v125, 1
  %vm131 = vcmp.gt.s32.totalorder %v130, 0
  %v132 = vsel %vm131, %v130, 0
  %v133 = vshrl.u32 %v132, 5
  %v134 = vand.u32 %v132, 31
  %v135 = vsub.s32 32, %v134
  %v136 = vshrl.u32 683565275, %v135
  %v137 = vshll.u32 683565275, %v134
  %v138 = vshrl.u32 2475754826, %v135
  %v139 = vor.u32 %v137, %v138
  %v140 = vshll.u32 2475754826, %v134
  %v141 = vshrl.u32 2131351028, %v135
  %v142 = vor.u32 %v140, %v141
  %v143 = vshll.u32 2131351028, %v134
  %v144 = vshrl.u32 2102212464, %v135
  %v145 = vor.u32 %v143, %v144
  %v146 = vshll.u32 2102212464, %v134
  %v147 = vshrl.u32 920167782, %v135
  %v148 = vor.u32 %v146, %v147
  %v149 = vshll.u32 920167782, %v134
  %v150 = vshrl.u32 1326507024, %v135
  %v151 = vor.u32 %v149, %v150
  %vm152 = vcmp.lt.s32.totalorder %v133, 1
  %vm153 = vcmp.lt.s32.totalorder %v133, 2
  %vm154 = vcmp.lt.s32.totalorder %v133, 3
  %vm155 = vcmp.lt.s32.totalorder %v133, 4
  %v156 = vsel %vm152, %v136, %v139
  %v157 = vsel %vm155, %v145, 2102212464
  %v158 = vsel %vm154, %v142, %v157
  %v159 = vsel %vm153, %v156, %v158
  %v160 = vsel %vm152, %v139, %v142
  %v161 = vsel %vm155, %v148, 920167782
  %v162 = vsel %vm154, %v145, %v161
  %v163 = vsel %vm153, %v160, %v162
  %v164 = vsel %vm152, %v142, %v145
  %v165 = vsel %vm155, %v151, 1326507024
  %v166 = vsel %vm154, %v148, %v165
  %v167 = vsel %vm153, %v164, %v166
  %v168 = vshll.u32 %v128, 8
  %v169 = vmul.u32.u64.compose %v168, %v167
  %v170 = vextract.low.u32 %v169
  %v171 = vextract.high.u32 %v169
  %v172 = vmul.u32.u64.compose %v168, %v163
  %v173 = vextract.low.u32 %v172
  %v174 = vextract.high.u32 %v172
  %v175 = vmul.u32 %v168, %v159
  %v176 = vadd.s32 %v171, %v173
  %vm177 = vc.u32 %v171, %v173
  %v178 = vadd.s32 %v174, 1
  %v179 = vsel %vm177, %v178, %v174
  %v180 = vadd.s32 %v175, %v179
  %v181 = vadd.s32 %v180, 536870912
  %v182 = vshrl.u32 %v181, 30
  %v183 = vshll.u32 %v182, 30
  %v184 = vsub.s32 %v180, %v183
  %vm185 = vcmp.lt.s32.totalorder %v184, 0
  %v186 = vsub.s32 0, %v184
  %v187 = vsel %vm185, %v186, %v184
  %v188 = vclz %v187
  %v189 = vsub.s32 %v188, 2
  %vm190 = vcmp.gt.s32.totalorder 0, %v189
  %v191 = vsel %vm190, 0, %v189
  %v192 = vsub.s32 32, %v191
  %v193 = vshll.u32 %v184, %v191
  %v194 = vshrl.u32 %v176, %v192
  %v195 = vor.u32 %v193, %v194
  %v196 = vsub.s32 4294967266, %v191
  %v197 = vadd.s32 %v196, 127
  %v198 = vshll.u32 %v197, 23
  %v199 = vor.u32 4788187, %v198
  %v200 = vand.u32 2147483647, %v199
  %v202 = vcvt.s32.f32 %v195
  %v203 = vmul.f32 %v202, %v200
  %v204 = vxor.u32 %v203, 2147483648
  %v205 = vsel %vm122, %v204, %v203
  %v206 = vsub.s32 4, %v182
  %v207 = vsel %vm122, %v206, %v182
  %v208 = vsel %vm121, %v9, %v205
  %v209 = vsel %vm121, 0, %v207
  %v210 = vcosq.f32.pop %v208
  %v211 = vsinq.f32.pop %v208
  %vm212 = vweird.f32 %v9
  %v213 = vadd.s32 %v209, 3
  %v214 = vand.u32 %v213, 3
  %vm215 = vcmp.lt.s32.totalorder %v214, 2
  %vm216 = vcmp.eq.s32.totalorder %v214, 0
  %v217 = vxor.u32 %v211, 2147483648
  %v218 = vsel %vm216, %v210, %v217
  %vm219 = vcmp.eq.s32.totalorder %v214, 2
  %v220 = vxor.u32 %v210, 2147483648
  %v221 = vsel %vm219, %v220, %v211
  %v222 = vsel %vm215, %v218, %v221
  %v223 = vsel %vm212, nan, %v222
  %v224 = vand.u32 2147483647, %v10
  %vm225 = vcmp.le.f32.partialorder %v224, 0.7853982
  %vm226 = vcmp.lt.s32.totalorder %v10, 0
  %v227 = vand.u32 %v10, 2139095040
  %v228 = vshrl.u32 %v227, 23
  %v229 = vsub.s32 %v228, 127
  %v230 = vand.u32 2147483647, %v10
  %v231 = vand.u32 %v230, 8388607
  %v232 = vor.u32 %v231, 8388608
  %v233 = vsub.s32 0, %v232
  %v234 = vadd.s32 %v229, 1
  %vm235 = vcmp.gt.s32.totalorder %v234, 0
  %v236 = vsel %vm235, %v234, 0
  %v237 = vshrl.u32 %v236, 5
  %v238 = vand.u32 %v236, 31
  %v239 = vsub.s32 32, %v238
  %v240 = vshrl.u32 683565275, %v239
  %v241 = vshll.u32 683565275, %v238
  %v242 = vshrl.u32 2475754826, %v239
  %v243 = vor.u32 %v241, %v242
  %v244 = vshll.u32 2475754826, %v238
  %v245 = vshrl.u32 2131351028, %v239
  %v246 = vor.u32 %v244, %v245
  %v247 = vshll.u32 2131351028, %v238
  %v248 = vshrl.u32 2102212464, %v239
  %v249 = vor.u32 %v247, %v248
  %v250 = vshll.u32 2102212464, %v238
  %v251 = vshrl.u32 920167782, %v239
  %v252 = vor.u32 %v250, %v251
  %v253 = vshll.u32 920167782, %v238
  %v254 = vshrl.u32 1326507024, %v239
  %v255 = vor.u32 %v253, %v254
  %vm256 = vcmp.lt.s32.totalorder %v237, 1
  %vm257 = vcmp.lt.s32.totalorder %v237, 2
  %vm258 = vcmp.lt.s32.totalorder %v237, 3
  %vm259 = vcmp.lt.s32.totalorder %v237, 4
  %v260 = vsel %vm256, %v240, %v243
  %v261 = vsel %vm259, %v249, 2102212464
  %v262 = vsel %vm258, %v246, %v261
  %v263 = vsel %vm257, %v260, %v262
  %v264 = vsel %vm256, %v243, %v246
  %v265 = vsel %vm259, %v252, 920167782
  %v266 = vsel %vm258, %v249, %v265
  %v267 = vsel %vm257, %v264, %v266
  %v268 = vsel %vm256, %v246, %v249
  %v269 = vsel %vm259, %v255, 1326507024
  %v270 = vsel %vm258, %v252, %v269
  %v271 = vsel %vm257, %v268, %v270
  %v272 = vshll.u32 %v232, 8
  %v273 = vmul.u32.u64.compose %v272, %v271
  %v274 = vextract.low.u32 %v273
  %v275 = vextract.high.u32 %v273
  %v276 = vmul.u32.u64.compose %v272, %v267
  %v277 = vextract.low.u32 %v276
  %v278 = vextract.high.u32 %v276
  %v279 = vmul.u32 %v272, %v263
  %v280 = vadd.s32 %v275, %v277
  %vm281 = vc.u32 %v275, %v277
  %v282 = vadd.s32 %v278, 1
  %v283 = vsel %vm281, %v282, %v278
  %v284 = vadd.s32 %v279, %v283
  %v285 = vadd.s32 %v284, 536870912
  %v286 = vshrl.u32 %v285, 30
  %v287 = vshll.u32 %v286, 30
  %v288 = vsub.s32 %v284, %v287
  %vm289 = vcmp.lt.s32.totalorder %v288, 0
  %v290 = vsub.s32 0, %v288
  %v291 = vsel %vm289, %v290, %v288
  %v292 = vclz %v291
  %v293 = vsub.s32 %v292, 2
  %vm294 = vcmp.gt.s32.totalorder 0, %v293
  %v295 = vsel %vm294, 0, %v293
  %v296 = vsub.s32 32, %v295
  %v297 = vshll.u32 %v288, %v295
  %v298 = vshrl.u32 %v280, %v296
  %v299 = vor.u32 %v297, %v298
  %v300 = vsub.s32 4294967266, %v295
  %v301 = vadd.s32 %v300, 127
  %v302 = vshll.u32 %v301, 23
  %v303 = vor.u32 4788187, %v302
  %v304 = vand.u32 2147483647, %v303
  %v306 = vcvt.s32.f32 %v299
  %v307 = vmul.f32 %v306, %v304
  %v308 = vxor.u32 %v307, 2147483648
  %v309 = vsel %vm226, %v308, %v307
  %v310 = vsub.s32 4, %v286
  %v311 = vsel %vm226, %v310, %v286
  %v312 = vsel %vm225, %v10, %v309
  %v313 = vsel %vm225, 0, %v311
  %v314 = vcosq.f32.pop %v312
  %v315 = vsinq.f32.pop %v312
  %vm316 = vweird.f32 %v10
  %v317 = vadd.s32 %v313, 3
  %v318 = vand.u32 %v317, 3
  %vm319 = vcmp.lt.s32.totalorder %v318, 2
  %vm320 = vcmp.eq.s32.totalorder %v318, 0
  %v321 = vxor.u32 %v315, 2147483648
  %v322 = vsel %vm320, %v314, %v321
  %vm323 = vcmp.eq.s32.totalorder %v318, 2
  %v324 = vxor.u32 %v314, 2147483648
  %v325 = vsel %vm323, %v324, %v315
  %v326 = vsel %vm319, %v322, %v325
  %v327 = vsel %vm316, nan, %v326
  %v328 = vand.u32 2147483647, %v11
  %vm329 = vcmp.le.f32.partialorder %v328, 0.7853982
  %vm330 = vcmp.lt.s32.totalorder %v11, 0
  %v331 = vand.u32 %v11, 2139095040
  %v332 = vshrl.u32 %v331, 23
  %v333 = vsub.s32 %v332, 127
  %v334 = vand.u32 2147483647, %v11
  %v335 = vand.u32 %v334, 8388607
  %v336 = vor.u32 %v335, 8388608
  %v337 = vsub.s32 0, %v336
  %v338 = vadd.s32 %v333, 1
  %vm339 = vcmp.gt.s32.totalorder %v338, 0
  %v340 = vsel %vm339, %v338, 0
  %v341 = vshrl.u32 %v340, 5
  %v342 = vand.u32 %v340, 31
  %v343 = vsub.s32 32, %v342
  %v344 = vshrl.u32 683565275, %v343
  %v345 = vshll.u32 683565275, %v342
  %v346 = vshrl.u32 2475754826, %v343
  %v347 = vor.u32 %v345, %v346
  %v348 = vshll.u32 2475754826, %v342
  %v349 = vshrl.u32 2131351028, %v343
  %v350 = vor.u32 %v348, %v349
  %v351 = vshll.u32 2131351028, %v342
  %v352 = vshrl.u32 2102212464, %v343
  %v353 = vor.u32 %v351, %v352
  %v354 = vshll.u32 2102212464, %v342
  %v355 = vshrl.u32 920167782, %v343
  %v356 = vor.u32 %v354, %v355
  %v357 = vshll.u32 920167782, %v342
  %v358 = vshrl.u32 1326507024, %v343
  %v359 = vor.u32 %v357, %v358
  %vm360 = vcmp.lt.s32.totalorder %v341, 1
  %vm361 = vcmp.lt.s32.totalorder %v341, 2
  %vm362 = vcmp.lt.s32.totalorder %v341, 3
  %vm363 = vcmp.lt.s32.totalorder %v341, 4
  %v364 = vsel %vm360, %v344, %v347
  %v365 = vsel %vm363, %v353, 2102212464
  %v366 = vsel %vm362, %v350, %v365
  %v367 = vsel %vm361, %v364, %v366
  %v368 = vsel %vm360, %v347, %v350
  %v369 = vsel %vm363, %v356, 920167782
  %v370 = vsel %vm362, %v353, %v369
  %v371 = vsel %vm361, %v368, %v370
  %v372 = vsel %vm360, %v350, %v353
  %v373 = vsel %vm363, %v359, 1326507024
  %v374 = vsel %vm362, %v356, %v373
  %v375 = vsel %vm361, %v372, %v374
  %v376 = vshll.u32 %v336, 8
  %v377 = vmul.u32.u64.compose %v376, %v375
  %v378 = vextract.low.u32 %v377
  %v379 = vextract.high.u32 %v377
  %v380 = vmul.u32.u64.compose %v376, %v371
  %v381 = vextract.low.u32 %v380
  %v382 = vextract.high.u32 %v380
  %v383 = vmul.u32 %v376, %v367
  %v384 = vadd.s32 %v379, %v381
  %vm385 = vc.u32 %v379, %v381
  %v386 = vadd.s32 %v382, 1
  %v387 = vsel %vm385, %v386, %v382
  %v388 = vadd.s32 %v383, %v387
  %v389 = vadd.s32 %v388, 536870912
  %v390 = vshrl.u32 %v389, 30
  %v391 = vshll.u32 %v390, 30
  %v392 = vsub.s32 %v388, %v391
  %vm393 = vcmp.lt.s32.totalorder %v392, 0
  %v394 = vsub.s32 0, %v392
  %v395 = vsel %vm393, %v394, %v392
  %v396 = vclz %v395
  %v397 = vsub.s32 %v396, 2
  %vm398 = vcmp.gt.s32.totalorder 0, %v397
  %v399 = vsel %vm398, 0, %v397
  %v400 = vsub.s32 32, %v399
  %v401 = vshll.u32 %v392, %v399
  %v402 = vshrl.u32 %v384, %v400
  %v403 = vor.u32 %v401, %v402
  %v404 = vsub.s32 4294967266, %v399
  %v405 = vadd.s32 %v404, 127
  %v406 = vshll.u32 %v405, 23
  %v407 = vor.u32 4788187, %v406
  %v408 = vand.u32 2147483647, %v407
  %v410 = vcvt.s32.f32 %v403
  %v411 = vmul.f32 %v410, %v408
  %v412 = vxor.u32 %v411, 2147483648
  %v413 = vsel %vm330, %v412, %v411
  %v414 = vsub.s32 4, %v390
  %v415 = vsel %vm330, %v414, %v390
  %v416 = vsel %vm329, %v11, %v413
  %v417 = vsel %vm329, 0, %v415
  %v418 = vcosq.f32.pop %v416
  %v419 = vsinq.f32.pop %v416
  %vm420 = vweird.f32 %v11
  %v421 = vadd.s32 %v417, 3
  %v422 = vand.u32 %v421, 3
  %vm423 = vcmp.lt.s32.totalorder %v422, 2
  %vm424 = vcmp.eq.s32.totalorder %v422, 0
  %v425 = vxor.u32 %v419, 2147483648
  %v426 = vsel %vm424, %v418, %v425
  %vm427 = vcmp.eq.s32.totalorder %v422, 2
  %v428 = vxor.u32 %v418, 2147483648
  %v429 = vsel %vm427, %v428, %v419
  %v430 = vsel %vm423, %v426, %v429
  %v431 = vsel %vm420, nan, %v430
  %s432 = scalar_lea.vmem %s1, 32
  %433 = vst [vmem:[%s432] sm:$0xff] %v119
  %434 = vst [vmem:[%s432 + $0x8] sm:$0xff] %v223
  %435 = vst [vmem:[%s432 + $0x10] sm:$0xff] %v327
  %436 = vst [vmem:[%s432 + $0x18] sm:$0xff] %v431
  %v437 = vand.u32 2147483647, %v8
  %vm438 = vcmp.le.f32.partialorder %v437, 0.7853982
  %vm439 = vcmp.lt.s32.totalorder %v8, 0
  %v440 = vand.u32 %v8, 2139095040
  %v441 = vshrl.u32 %v440, 23
  %v442 = vsub.s32 %v441, 127
  %v443 = vand.u32 2147483647, %v8
  %v444 = vand.u32 %v443, 8388607
  %v445 = vor.u32 %v444, 8388608
  %v446 = vsub.s32 0, %v445
  %v447 = vadd.s32 %v442, 1
  %vm448 = vcmp.gt.s32.totalorder %v447, 0
  %v449 = vsel %vm448, %v447, 0
  %v450 = vshrl.u32 %v449, 5
  %v451 = vand.u32 %v449, 31
  %v452 = vsub.s32 32, %v451
  %v453 = vshrl.u32 683565275, %v452
  %v454 = vshll.u32 683565275, %v451
  %v455 = vshrl.u32 2475754826, %v452
  %v456 = vor.u32 %v454, %v455
  %v457 = vshll.u32 2475754826, %v451
  %v458 = vshrl.u32 2131351028, %v452
  %v459 = vor.u32 %v457, %v458
  %v460 = vshll.u32 2131351028, %v451
  %v461 = vshrl.u32 2102212464, %v452
  %v462 = vor.u32 %v460, %v461
  %v463 = vshll.u32 2102212464, %v451
  %v464 = vshrl.u32 920167782, %v452
  %v465 = vor.u32 %v463, %v464
  %v466 = vshll.u32 920167782, %v451
  %v467 = vshrl.u32 1326507024, %v452
  %v468 = vor.u32 %v466, %v467
  %vm469 = vcmp.lt.s32.totalorder %v450, 1
  %vm470 = vcmp.lt.s32.totalorder %v450, 2
  %vm471 = vcmp.lt.s32.totalorder %v450, 3
  %vm472 = vcmp.lt.s32.totalorder %v450, 4
  %v473 = vsel %vm469, %v453, %v456
  %v474 = vsel %vm472, %v462, 2102212464
  %v475 = vsel %vm471, %v459, %v474
  %v476 = vsel %vm470, %v473, %v475
  %v477 = vsel %vm469, %v456, %v459
  %v478 = vsel %vm472, %v465, 920167782
  %v479 = vsel %vm471, %v462, %v478
  %v480 = vsel %vm470, %v477, %v479
  %v481 = vsel %vm469, %v459, %v462
  %v482 = vsel %vm472, %v468, 1326507024
  %v483 = vsel %vm471, %v465, %v482
  %v484 = vsel %vm470, %v481, %v483
  %v485 = vshll.u32 %v445, 8
  %v486 = vmul.u32.u64.compose %v485, %v484
  %v487 = vextract.low.u32 %v486
  %v488 = vextract.high.u32 %v486
  %v489 = vmul.u32.u64.compose %v485, %v480
  %v490 = vextract.low.u32 %v489
  %v491 = vextract.high.u32 %v489
  %v492 = vmul.u32 %v485, %v476
  %v493 = vadd.s32 %v488, %v490
  %vm494 = vc.u32 %v488, %v490
  %v495 = vadd.s32 %v491, 1
  %v496 = vsel %vm494, %v495, %v491
  %v497 = vadd.s32 %v492, %v496
  %v498 = vadd.s32 %v497, 536870912
  %v499 = vshrl.u32 %v498, 30
  %v500 = vshll.u32 %v499, 30
  %v501 = vsub.s32 %v497, %v500
  %vm502 = vcmp.lt.s32.totalorder %v501, 0
  %v503 = vsub.s32 0, %v501
  %v504 = vsel %vm502, %v503, %v501
  %v505 = vclz %v504
  %v506 = vsub.s32 %v505, 2
  %vm507 = vcmp.gt.s32.totalorder 0, %v506
  %v508 = vsel %vm507, 0, %v506
  %v509 = vsub.s32 32, %v508
  %v510 = vshll.u32 %v501, %v508
  %v511 = vshrl.u32 %v493, %v509
  %v512 = vor.u32 %v510, %v511
  %v513 = vsub.s32 4294967266, %v508
  %v514 = vadd.s32 %v513, 127
  %v515 = vshll.u32 %v514, 23
  %v516 = vor.u32 4788187, %v515
  %v517 = vand.u32 2147483647, %v516
  %v519 = vcvt.s32.f32 %v512
  %v520 = vmul.f32 %v519, %v517
  %v521 = vxor.u32 %v520, 2147483648
  %v522 = vsel %vm439, %v521, %v520
  %v523 = vsub.s32 4, %v499
  %v524 = vsel %vm439, %v523, %v499
  %v525 = vsel %vm438, %v8, %v522
  %v526 = vsel %vm438, 0, %v524
  %v527 = vcosq.f32.pop %v525
  %v528 = vsinq.f32.pop %v525
  %vm529 = vweird.f32 %v8
  %v530 = vand.u32 %v526, 3
  %vm531 = vcmp.lt.s32.totalorder %v530, 2
  %vm532 = vcmp.eq.s32.totalorder %v530, 0
  %v533 = vxor.u32 %v528, 2147483648
  %v534 = vsel %vm532, %v527, %v533
  %vm535 = vcmp.eq.s32.totalorder %v530, 2
  %v536 = vxor.u32 %v527, 2147483648
  %v537 = vsel %vm535, %v536, %v528
  %v538 = vsel %vm531, %v534, %v537
  %v539 = vsel %vm529, nan, %v538
  %v540 = vand.u32 2147483647, %v9
  %vm541 = vcmp.le.f32.partialorder %v540, 0.7853982
  %vm542 = vcmp.lt.s32.totalorder %v9, 0
  %v543 = vand.u32 %v9, 2139095040
  %v544 = vshrl.u32 %v543, 23
  %v545 = vsub.s32 %v544, 127
  %v546 = vand.u32 2147483647, %v9
  %v547 = vand.u32 %v546, 8388607
  %v548 = vor.u32 %v547, 8388608
  %v549 = vsub.s32 0, %v548
  %v550 = vadd.s32 %v545, 1
  %vm551 = vcmp.gt.s32.totalorder %v550, 0
  %v552 = vsel %vm551, %v550, 0
  %v553 = vshrl.u32 %v552, 5
  %v554 = vand.u32 %v552, 31
  %v555 = vsub.s32 32, %v554
  %v556 = vshrl.u32 683565275, %v555
  %v557 = vshll.u32 683565275, %v554
  %v558 = vshrl.u32 2475754826, %v555
  %v559 = vor.u32 %v557, %v558
  %v560 = vshll.u32 2475754826, %v554
  %v561 = vshrl.u32 2131351028, %v555
  %v562 = vor.u32 %v560, %v561
  %v563 = vshll.u32 2131351028, %v554
  %v564 = vshrl.u32 2102212464, %v555
  %v565 = vor.u32 %v563, %v564
  %v566 = vshll.u32 2102212464, %v554
  %v567 = vshrl.u32 920167782, %v555
  %v568 = vor.u32 %v566, %v567
  %v569 = vshll.u32 920167782, %v554
  %v570 = vshrl.u32 1326507024, %v555
  %v571 = vor.u32 %v569, %v570
  %vm572 = vcmp.lt.s32.totalorder %v553, 1
  %vm573 = vcmp.lt.s32.totalorder %v553, 2
  %vm574 = vcmp.lt.s32.totalorder %v553, 3
  %vm575 = vcmp.lt.s32.totalorder %v553, 4
  %v576 = vsel %vm572, %v556, %v559
  %v577 = vsel %vm575, %v565, 2102212464
  %v578 = vsel %vm574, %v562, %v577
  %v579 = vsel %vm573, %v576, %v578
  %v580 = vsel %vm572, %v559, %v562
  %v581 = vsel %vm575, %v568, 920167782
  %v582 = vsel %vm574, %v565, %v581
  %v583 = vsel %vm573, %v580, %v582
  %v584 = vsel %vm572, %v562, %v565
  %v585 = vsel %vm575, %v571, 1326507024
  %v586 = vsel %vm574, %v568, %v585
  %v587 = vsel %vm573, %v584, %v586
  %v588 = vshll.u32 %v548, 8
  %v589 = vmul.u32.u64.compose %v588, %v587
  %v590 = vextract.low.u32 %v589
  %v591 = vextract.high.u32 %v589
  %v592 = vmul.u32.u64.compose %v588, %v583
  %v593 = vextract.low.u32 %v592
  %v594 = vextract.high.u32 %v592
  %v595 = vmul.u32 %v588, %v579
  %v596 = vadd.s32 %v591, %v593
  %vm597 = vc.u32 %v591, %v593
  %v598 = vadd.s32 %v594, 1
  %v599 = vsel %vm597, %v598, %v594
  %v600 = vadd.s32 %v595, %v599
  %v601 = vadd.s32 %v600, 536870912
  %v602 = vshrl.u32 %v601, 30
  %v603 = vshll.u32 %v602, 30
  %v604 = vsub.s32 %v600, %v603
  %vm605 = vcmp.lt.s32.totalorder %v604, 0
  %v606 = vsub.s32 0, %v604
  %v607 = vsel %vm605, %v606, %v604
  %v608 = vclz %v607
  %v609 = vsub.s32 %v608, 2
  %vm610 = vcmp.gt.s32.totalorder 0, %v609
  %v611 = vsel %vm610, 0, %v609
  %v612 = vsub.s32 32, %v611
  %v613 = vshll.u32 %v604, %v611
  %v614 = vshrl.u32 %v596, %v612
  %v615 = vor.u32 %v613, %v614
  %v616 = vsub.s32 4294967266, %v611
  %v617 = vadd.s32 %v616, 127
  %v618 = vshll.u32 %v617, 23
  %v619 = vor.u32 4788187, %v618
  %v620 = vand.u32 2147483647, %v619
  %v622 = vcvt.s32.f32 %v615
  %v623 = vmul.f32 %v622, %v620
  %v624 = vxor.u32 %v623, 2147483648
  %v625 = vsel %vm542, %v624, %v623
  %v626 = vsub.s32 4, %v602
  %v627 = vsel %vm542, %v626, %v602
  %v628 = vsel %vm541, %v9, %v625
  %v629 = vsel %vm541, 0, %v627
  %v630 = vcosq.f32.pop %v628
  %v631 = vsinq.f32.pop %v628
  %vm632 = vweird.f32 %v9
  %v633 = vand.u32 %v629, 3
  %vm634 = vcmp.lt.s32.totalorder %v633, 2
  %vm635 = vcmp.eq.s32.totalorder %v633, 0
  %v636 = vxor.u32 %v631, 2147483648
  %v637 = vsel %vm635, %v630, %v636
  %vm638 = vcmp.eq.s32.totalorder %v633, 2
  %v639 = vxor.u32 %v630, 2147483648
  %v640 = vsel %vm638, %v639, %v631
  %v641 = vsel %vm634, %v637, %v640
  %v642 = vsel %vm632, nan, %v641
  %v643 = vand.u32 2147483647, %v10
  %vm644 = vcmp.le.f32.partialorder %v643, 0.7853982
  %vm645 = vcmp.lt.s32.totalorder %v10, 0
  %v646 = vand.u32 %v10, 2139095040
  %v647 = vshrl.u32 %v646, 23
  %v648 = vsub.s32 %v647, 127
  %v649 = vand.u32 2147483647, %v10
  %v650 = vand.u32 %v649, 8388607
  %v651 = vor.u32 %v650, 8388608
  %v652 = vsub.s32 0, %v651
  %v653 = vadd.s32 %v648, 1
  %vm654 = vcmp.gt.s32.totalorder %v653, 0
  %v655 = vsel %vm654, %v653, 0
  %v656 = vshrl.u32 %v655, 5
  %v657 = vand.u32 %v655, 31
  %v658 = vsub.s32 32, %v657
  %v659 = vshrl.u32 683565275, %v658
  %v660 = vshll.u32 683565275, %v657
  %v661 = vshrl.u32 2475754826, %v658
  %v662 = vor.u32 %v660, %v661
  %v663 = vshll.u32 2475754826, %v657
  %v664 = vshrl.u32 2131351028, %v658
  %v665 = vor.u32 %v663, %v664
  %v666 = vshll.u32 2131351028, %v657
  %v667 = vshrl.u32 2102212464, %v658
  %v668 = vor.u32 %v666, %v667
  %v669 = vshll.u32 2102212464, %v657
  %v670 = vshrl.u32 920167782, %v658
  %v671 = vor.u32 %v669, %v670
  %v672 = vshll.u32 920167782, %v657
  %v673 = vshrl.u32 1326507024, %v658
  %v674 = vor.u32 %v672, %v673
  %vm675 = vcmp.lt.s32.totalorder %v656, 1
  %vm676 = vcmp.lt.s32.totalorder %v656, 2
  %vm677 = vcmp.lt.s32.totalorder %v656, 3
  %vm678 = vcmp.lt.s32.totalorder %v656, 4
  %v679 = vsel %vm675, %v659, %v662
  %v680 = vsel %vm678, %v668, 2102212464
  %v681 = vsel %vm677, %v665, %v680
  %v682 = vsel %vm676, %v679, %v681
  %v683 = vsel %vm675, %v662, %v665
  %v684 = vsel %vm678, %v671, 920167782
  %v685 = vsel %vm677, %v668, %v684
  %v686 = vsel %vm676, %v683, %v685
  %v687 = vsel %vm675, %v665, %v668
  %v688 = vsel %vm678, %v674, 1326507024
  %v689 = vsel %vm677, %v671, %v688
  %v690 = vsel %vm676, %v687, %v689
  %v691 = vshll.u32 %v651, 8
  %v692 = vmul.u32.u64.compose %v691, %v690
  %v693 = vextract.low.u32 %v692
  %v694 = vextract.high.u32 %v692
  %v695 = vmul.u32.u64.compose %v691, %v686
  %v696 = vextract.low.u32 %v695
  %v697 = vextract.high.u32 %v695
  %v698 = vmul.u32 %v691, %v682
  %v699 = vadd.s32 %v694, %v696
  %vm700 = vc.u32 %v694, %v696
  %v701 = vadd.s32 %v697, 1
  %v702 = vsel %vm700, %v701, %v697
  %v703 = vadd.s32 %v698, %v702
  %v704 = vadd.s32 %v703, 536870912
  %v705 = vshrl.u32 %v704, 30
  %v706 = vshll.u32 %v705, 30
  %v707 = vsub.s32 %v703, %v706
  %vm708 = vcmp.lt.s32.totalorder %v707, 0
  %v709 = vsub.s32 0, %v707
  %v710 = vsel %vm708, %v709, %v707
  %v711 = vclz %v710
  %v712 = vsub.s32 %v711, 2
  %vm713 = vcmp.gt.s32.totalorder 0, %v712
  %v714 = vsel %vm713, 0, %v712
  %v715 = vsub.s32 32, %v714
  %v716 = vshll.u32 %v707, %v714
  %v717 = vshrl.u32 %v699, %v715
  %v718 = vor.u32 %v716, %v717
  %v719 = vsub.s32 4294967266, %v714
  %v720 = vadd.s32 %v719, 127
  %v721 = vshll.u32 %v720, 23
  %v722 = vor.u32 4788187, %v721
  %v723 = vand.u32 2147483647, %v722
  %v725 = vcvt.s32.f32 %v718
  %v726 = vmul.f32 %v725, %v723
  %v727 = vxor.u32 %v726, 2147483648
  %v728 = vsel %vm645, %v727, %v726
  %v729 = vsub.s32 4, %v705
  %v730 = vsel %vm645, %v729, %v705
  %v731 = vsel %vm644, %v10, %v728
  %v732 = vsel %vm644, 0, %v730
  %v733 = vcosq.f32.pop %v731
  %v734 = vsinq.f32.pop %v731
  %vm735 = vweird.f32 %v10
  %v736 = vand.u32 %v732, 3
  %vm737 = vcmp.lt.s32.totalorder %v736, 2
  %vm738 = vcmp.eq.s32.totalorder %v736, 0
  %v739 = vxor.u32 %v734, 2147483648
  %v740 = vsel %vm738, %v733, %v739
  %vm741 = vcmp.eq.s32.totalorder %v736, 2
  %v742 = vxor.u32 %v733, 2147483648
  %v743 = vsel %vm741, %v742, %v734
  %v744 = vsel %vm737, %v740, %v743
  %v745 = vsel %vm735, nan, %v744
  %v746 = vand.u32 2147483647, %v11
  %vm747 = vcmp.le.f32.partialorder %v746, 0.7853982
  %vm748 = vcmp.lt.s32.totalorder %v11, 0
  %v749 = vand.u32 %v11, 2139095040
  %v750 = vshrl.u32 %v749, 23
  %v751 = vsub.s32 %v750, 127
  %v752 = vand.u32 2147483647, %v11
  %v753 = vand.u32 %v752, 8388607
  %v754 = vor.u32 %v753, 8388608
  %v755 = vsub.s32 0, %v754
  %v756 = vadd.s32 %v751, 1
  %vm757 = vcmp.gt.s32.totalorder %v756, 0
  %v758 = vsel %vm757, %v756, 0
  %v759 = vshrl.u32 %v758, 5
  %v760 = vand.u32 %v758, 31
  %v761 = vsub.s32 32, %v760
  %v762 = vshrl.u32 683565275, %v761
  %v763 = vshll.u32 683565275, %v760
  %v764 = vshrl.u32 2475754826, %v761
  %v765 = vor.u32 %v763, %v764
  %v766 = vshll.u32 2475754826, %v760
  %v767 = vshrl.u32 2131351028, %v761
  %v768 = vor.u32 %v766, %v767
  %v769 = vshll.u32 2131351028, %v760
  %v770 = vshrl.u32 2102212464, %v761
  %v771 = vor.u32 %v769, %v770
  %v772 = vshll.u32 2102212464, %v760
  %v773 = vshrl.u32 920167782, %v761
  %v774 = vor.u32 %v772, %v773
  %v775 = vshll.u32 920167782, %v760
  %v776 = vshrl.u32 1326507024, %v761
  %v777 = vor.u32 %v775, %v776
  %vm778 = vcmp.lt.s32.totalorder %v759, 1
  %vm779 = vcmp.lt.s32.totalorder %v759, 2
  %vm780 = vcmp.lt.s32.totalorder %v759, 3
  %vm781 = vcmp.lt.s32.totalorder %v759, 4
  %v782 = vsel %vm778, %v762, %v765
  %v783 = vsel %vm781, %v771, 2102212464
  %v784 = vsel %vm780, %v768, %v783
  %v785 = vsel %vm779, %v782, %v784
  %v786 = vsel %vm778, %v765, %v768
  %v787 = vsel %vm781, %v774, 920167782
  %v788 = vsel %vm780, %v771, %v787
  %v789 = vsel %vm779, %v786, %v788
  %v790 = vsel %vm778, %v768, %v771
  %v791 = vsel %vm781, %v777, 1326507024
  %v792 = vsel %vm780, %v774, %v791
  %v793 = vsel %vm779, %v790, %v792
  %v794 = vshll.u32 %v754, 8
  %v795 = vmul.u32.u64.compose %v794, %v793
  %v796 = vextract.low.u32 %v795
  %v797 = vextract.high.u32 %v795
  %v798 = vmul.u32.u64.compose %v794, %v789
  %v799 = vextract.low.u32 %v798
  %v800 = vextract.high.u32 %v798
  %v801 = vmul.u32 %v794, %v785
  %v802 = vadd.s32 %v797, %v799
  %vm803 = vc.u32 %v797, %v799
  %v804 = vadd.s32 %v800, 1
  %v805 = vsel %vm803, %v804, %v800
  %v806 = vadd.s32 %v801, %v805
  %v807 = vadd.s32 %v806, 536870912
  %v808 = vshrl.u32 %v807, 30
  %v809 = vshll.u32 %v808, 30
  %v810 = vsub.s32 %v806, %v809
  %vm811 = vcmp.lt.s32.totalorder %v810, 0
  %v812 = vsub.s32 0, %v810
  %v813 = vsel %vm811, %v812, %v810
  %v814 = vclz %v813
  %v815 = vsub.s32 %v814, 2
  %vm816 = vcmp.gt.s32.totalorder 0, %v815
  %v817 = vsel %vm816, 0, %v815
  %v818 = vsub.s32 32, %v817
  %v819 = vshll.u32 %v810, %v817
  %v820 = vshrl.u32 %v802, %v818
  %v821 = vor.u32 %v819, %v820
  %v822 = vsub.s32 4294967266, %v817
  %v823 = vadd.s32 %v822, 127
  %v824 = vshll.u32 %v823, 23
  %v825 = vor.u32 4788187, %v824
  %v826 = vand.u32 2147483647, %v825
  %v828 = vcvt.s32.f32 %v821
  %v829 = vmul.f32 %v828, %v826
  %v830 = vxor.u32 %v829, 2147483648
  %v831 = vsel %vm748, %v830, %v829
  %v832 = vsub.s32 4, %v808
  %v833 = vsel %vm748, %v832, %v808
  %v834 = vsel %vm747, %v11, %v831
  %v835 = vsel %vm747, 0, %v833
  %v836 = vcosq.f32.pop %v834
  %v837 = vsinq.f32.pop %v834
  %vm838 = vweird.f32 %v11
  %v839 = vand.u32 %v835, 3
  %vm840 = vcmp.lt.s32.totalorder %v839, 2
  %vm841 = vcmp.eq.s32.totalorder %v839, 0
  %v842 = vxor.u32 %v837, 2147483648
  %v843 = vsel %vm841, %v836, %v842
  %vm844 = vcmp.eq.s32.totalorder %v839, 2
  %v845 = vxor.u32 %v836, 2147483648
  %v846 = vsel %vm844, %v845, %v837
  %v847 = vsel %vm840, %v843, %v846
  %v848 = vsel %vm838, nan, %v847
  %s849 = scalar_lea.vmem %s1, 64
  %850 = vst [vmem:[%s849] sm:$0xff] %v539
  %851 = vst [vmem:[%s849 + $0x8] sm:$0xff] %v642
  %852 = vst [vmem:[%s849 + $0x10] sm:$0xff] %v745
  %853 = vst [vmem:[%s849 + $0x18] sm:$0xff] %v848
  %v854 = vmul.f32 %v8, 2.0
  %v855 = vmul.f32 %v9, 2.0
  %v856 = vmul.f32 %v10, 2.0
  %v857 = vmul.f32 %v11, 2.0
  %v858 = vand.u32 2147483647, %v854
  %vm859 = vcmp.le.f32.partialorder %v858, 0.7853982
  %vm860 = vcmp.lt.s32.totalorder %v854, 0
  %v861 = vand.u32 %v854, 2139095040
  %v862 = vshrl.u32 %v861, 23
  %v863 = vsub.s32 %v862, 127
  %v864 = vand.u32 2147483647, %v854
  %v865 = vand.u32 %v864, 8388607
  %v866 = vor.u32 %v865, 8388608
  %v867 = vsub.s32 0, %v866
  %v868 = vadd.s32 %v863, 1
  %vm869 = vcmp.gt.s32.totalorder %v868, 0
  %v870 = vsel %vm869, %v868, 0
  %v871 = vshrl.u32 %v870, 5
  %v872 = vand.u32 %v870, 31
  %v873 = vsub.s32 32, %v872
  %v874 = vshrl.u32 683565275, %v873
  %v875 = vshll.u32 683565275, %v872
  %v876 = vshrl.u32 2475754826, %v873
  %v877 = vor.u32 %v875, %v876
  %v878 = vshll.u32 2475754826, %v872
  %v879 = vshrl.u32 2131351028, %v873
  %v880 = vor.u32 %v878, %v879
  %v881 = vshll.u32 2131351028, %v872
  %v882 = vshrl.u32 2102212464, %v873
  %v883 = vor.u32 %v881, %v882
  %v884 = vshll.u32 2102212464, %v872
  %v885 = vshrl.u32 920167782, %v873
  %v886 = vor.u32 %v884, %v885
  %v887 = vshll.u32 920167782, %v872
  %v888 = vshrl.u32 1326507024, %v873
  %v889 = vor.u32 %v887, %v888
  %vm890 = vcmp.lt.s32.totalorder %v871, 1
  %vm891 = vcmp.lt.s32.totalorder %v871, 2
  %vm892 = vcmp.lt.s32.totalorder %v871, 3
  %vm893 = vcmp.lt.s32.totalorder %v871, 4
  %v894 = vsel %vm890, %v874, %v877
  %v895 = vsel %vm893, %v883, 2102212464
  %v896 = vsel %vm892, %v880, %v895
  %v897 = vsel %vm891, %v894, %v896
  %v898 = vsel %vm890, %v877, %v880
  %v899 = vsel %vm893, %v886, 920167782
  %v900 = vsel %vm892, %v883, %v899
  %v901 = vsel %vm891, %v898, %v900
  %v902 = vsel %vm890, %v880, %v883
  %v903 = vsel %vm893, %v889, 1326507024
  %v904 = vsel %vm892, %v886, %v903
  %v905 = vsel %vm891, %v902, %v904
  %v906 = vshll.u32 %v866, 8
  %v907 = vmul.u32.u64.compose %v906, %v905
  %v908 = vextract.low.u32 %v907
  %v909 = vextract.high.u32 %v907
  %v910 = vmul.u32.u64.compose %v906, %v901
  %v911 = vextract.low.u32 %v910
  %v912 = vextract.high.u32 %v910
  %v913 = vmul.u32 %v906, %v897
  %v914 = vadd.s32 %v909, %v911
  %vm915 = vc.u32 %v909, %v911
  %v916 = vadd.s32 %v912, 1
  %v917 = vsel %vm915, %v916, %v912
  %v918 = vadd.s32 %v913, %v917
  %v919 = vadd.s32 %v918, 536870912
  %v920 = vshrl.u32 %v919, 30
  %v921 = vshll.u32 %v920, 30
  %v922 = vsub.s32 %v918, %v921
  %vm923 = vcmp.lt.s32.totalorder %v922, 0
  %v924 = vsub.s32 0, %v922
  %v925 = vsel %vm923, %v924, %v922
  %v926 = vclz %v925
  %v927 = vsub.s32 %v926, 2
  %vm928 = vcmp.gt.s32.totalorder 0, %v927
  %v929 = vsel %vm928, 0, %v927
  %v930 = vsub.s32 32, %v929
  %v931 = vshll.u32 %v922, %v929
  %v932 = vshrl.u32 %v914, %v930
  %v933 = vor.u32 %v931, %v932
  %v934 = vsub.s32 4294967266, %v929
  %v935 = vadd.s32 %v934, 127
  %v936 = vshll.u32 %v935, 23
  %v937 = vor.u32 4788187, %v936
  %v938 = vand.u32 2147483647, %v937
  %v940 = vcvt.s32.f32 %v933
  %v941 = vmul.f32 %v940, %v938
  %v942 = vxor.u32 %v941, 2147483648
  %v943 = vsel %vm860, %v942, %v941
  %v944 = vsub.s32 4, %v920
  %v945 = vsel %vm860, %v944, %v920
  %v946 = vsel %vm859, %v854, %v943
  %v947 = vsel %vm859, 0, %v945
  %v948 = vcosq.f32.pop %v946
  %v949 = vsinq.f32.pop %v946
  %vm950 = vweird.f32 %v854
  %v951 = vadd.s32 %v947, 3
  %v952 = vand.u32 %v951, 3
  %vm953 = vcmp.lt.s32.totalorder %v952, 2
  %vm954 = vcmp.eq.s32.totalorder %v952, 0
  %v955 = vxor.u32 %v949, 2147483648
  %v956 = vsel %vm954, %v948, %v955
  %vm957 = vcmp.eq.s32.totalorder %v952, 2
  %v958 = vxor.u32 %v948, 2147483648
  %v959 = vsel %vm957, %v958, %v949
  %v960 = vsel %vm953, %v956, %v959
  %v961 = vsel %vm950, nan, %v960
  %v962 = vand.u32 2147483647, %v855
  %vm963 = vcmp.le.f32.partialorder %v962, 0.7853982
  %vm964 = vcmp.lt.s32.totalorder %v855, 0
  %v965 = vand.u32 %v855, 2139095040
  %v966 = vshrl.u32 %v965, 23
  %v967 = vsub.s32 %v966, 127
  %v968 = vand.u32 2147483647, %v855
  %v969 = vand.u32 %v968, 8388607
  %v970 = vor.u32 %v969, 8388608
  %v971 = vsub.s32 0, %v970
  %v972 = vadd.s32 %v967, 1
  %vm973 = vcmp.gt.s32.totalorder %v972, 0
  %v974 = vsel %vm973, %v972, 0
  %v975 = vshrl.u32 %v974, 5
  %v976 = vand.u32 %v974, 31
  %v977 = vsub.s32 32, %v976
  %v978 = vshrl.u32 683565275, %v977
  %v979 = vshll.u32 683565275, %v976
  %v980 = vshrl.u32 2475754826, %v977
  %v981 = vor.u32 %v979, %v980
  %v982 = vshll.u32 2475754826, %v976
  %v983 = vshrl.u32 2131351028, %v977
  %v984 = vor.u32 %v982, %v983
  %v985 = vshll.u32 2131351028, %v976
  %v986 = vshrl.u32 2102212464, %v977
  %v987 = vor.u32 %v985, %v986
  %v988 = vshll.u32 2102212464, %v976
  %v989 = vshrl.u32 920167782, %v977
  %v990 = vor.u32 %v988, %v989
  %v991 = vshll.u32 920167782, %v976
  %v992 = vshrl.u32 1326507024, %v977
  %v993 = vor.u32 %v991, %v992
  %vm994 = vcmp.lt.s32.totalorder %v975, 1
  %vm995 = vcmp.lt.s32.totalorder %v975, 2
  %vm996 = vcmp.lt.s32.totalorder %v975, 3
  %vm997 = vcmp.lt.s32.totalorder %v975, 4
  %v998 = vsel %vm994, %v978, %v981
  %v999 = vsel %vm997, %v987, 2102212464
  %v1000 = vsel %vm996, %v984, %v999
  %v1001 = vsel %vm995, %v998, %v1000
  %v1002 = vsel %vm994, %v981, %v984
  %v1003 = vsel %vm997, %v990, 920167782
  %v1004 = vsel %vm996, %v987, %v1003
  %v1005 = vsel %vm995, %v1002, %v1004
  %v1006 = vsel %vm994, %v984, %v987
  %v1007 = vsel %vm997, %v993, 1326507024
  %v1008 = vsel %vm996, %v990, %v1007
  %v1009 = vsel %vm995, %v1006, %v1008
  %v1010 = vshll.u32 %v970, 8
  %v1011 = vmul.u32.u64.compose %v1010, %v1009
  %v1012 = vextract.low.u32 %v1011
  %v1013 = vextract.high.u32 %v1011
  %v1014 = vmul.u32.u64.compose %v1010, %v1005
  %v1015 = vextract.low.u32 %v1014
  %v1016 = vextract.high.u32 %v1014
  %v1017 = vmul.u32 %v1010, %v1001
  %v1018 = vadd.s32 %v1013, %v1015
  %vm1019 = vc.u32 %v1013, %v1015
  %v1020 = vadd.s32 %v1016, 1
  %v1021 = vsel %vm1019, %v1020, %v1016
  %v1022 = vadd.s32 %v1017, %v1021
  %v1023 = vadd.s32 %v1022, 536870912
  %v1024 = vshrl.u32 %v1023, 30
  %v1025 = vshll.u32 %v1024, 30
  %v1026 = vsub.s32 %v1022, %v1025
  %vm1027 = vcmp.lt.s32.totalorder %v1026, 0
  %v1028 = vsub.s32 0, %v1026
  %v1029 = vsel %vm1027, %v1028, %v1026
  %v1030 = vclz %v1029
  %v1031 = vsub.s32 %v1030, 2
  %vm1032 = vcmp.gt.s32.totalorder 0, %v1031
  %v1033 = vsel %vm1032, 0, %v1031
  %v1034 = vsub.s32 32, %v1033
  %v1035 = vshll.u32 %v1026, %v1033
  %v1036 = vshrl.u32 %v1018, %v1034
  %v1037 = vor.u32 %v1035, %v1036
  %v1038 = vsub.s32 4294967266, %v1033
  %v1039 = vadd.s32 %v1038, 127
  %v1040 = vshll.u32 %v1039, 23
  %v1041 = vor.u32 4788187, %v1040
  %v1042 = vand.u32 2147483647, %v1041
  %v1044 = vcvt.s32.f32 %v1037
  %v1045 = vmul.f32 %v1044, %v1042
  %v1046 = vxor.u32 %v1045, 2147483648
  %v1047 = vsel %vm964, %v1046, %v1045
  %v1048 = vsub.s32 4, %v1024
  %v1049 = vsel %vm964, %v1048, %v1024
  %v1050 = vsel %vm963, %v855, %v1047
  %v1051 = vsel %vm963, 0, %v1049
  %v1052 = vcosq.f32.pop %v1050
  %v1053 = vsinq.f32.pop %v1050
  %vm1054 = vweird.f32 %v855
  %v1055 = vadd.s32 %v1051, 3
  %v1056 = vand.u32 %v1055, 3
  %vm1057 = vcmp.lt.s32.totalorder %v1056, 2
  %vm1058 = vcmp.eq.s32.totalorder %v1056, 0
  %v1059 = vxor.u32 %v1053, 2147483648
  %v1060 = vsel %vm1058, %v1052, %v1059
  %vm1061 = vcmp.eq.s32.totalorder %v1056, 2
  %v1062 = vxor.u32 %v1052, 2147483648
  %v1063 = vsel %vm1061, %v1062, %v1053
  %v1064 = vsel %vm1057, %v1060, %v1063
  %v1065 = vsel %vm1054, nan, %v1064
  %v1066 = vand.u32 2147483647, %v856
  %vm1067 = vcmp.le.f32.partialorder %v1066, 0.7853982
  %vm1068 = vcmp.lt.s32.totalorder %v856, 0
  %v1069 = vand.u32 %v856, 2139095040
  %v1070 = vshrl.u32 %v1069, 23
  %v1071 = vsub.s32 %v1070, 127
  %v1072 = vand.u32 2147483647, %v856
  %v1073 = vand.u32 %v1072, 8388607
  %v1074 = vor.u32 %v1073, 8388608
  %v1075 = vsub.s32 0, %v1074
  %v1076 = vadd.s32 %v1071, 1
  %vm1077 = vcmp.gt.s32.totalorder %v1076, 0
  %v1078 = vsel %vm1077, %v1076, 0
  %v1079 = vshrl.u32 %v1078, 5
  %v1080 = vand.u32 %v1078, 31
  %v1081 = vsub.s32 32, %v1080
  %v1082 = vshrl.u32 683565275, %v1081
  %v1083 = vshll.u32 683565275, %v1080
  %v1084 = vshrl.u32 2475754826, %v1081
  %v1085 = vor.u32 %v1083, %v1084
  %v1086 = vshll.u32 2475754826, %v1080
  %v1087 = vshrl.u32 2131351028, %v1081
  %v1088 = vor.u32 %v1086, %v1087
  %v1089 = vshll.u32 2131351028, %v1080
  %v1090 = vshrl.u32 2102212464, %v1081
  %v1091 = vor.u32 %v1089, %v1090
  %v1092 = vshll.u32 2102212464, %v1080
  %v1093 = vshrl.u32 920167782, %v1081
  %v1094 = vor.u32 %v1092, %v1093
  %v1095 = vshll.u32 920167782, %v1080
  %v1096 = vshrl.u32 1326507024, %v1081
  %v1097 = vor.u32 %v1095, %v1096
  %vm1098 = vcmp.lt.s32.totalorder %v1079, 1
  %vm1099 = vcmp.lt.s32.totalorder %v1079, 2
  %vm1100 = vcmp.lt.s32.totalorder %v1079, 3
  %vm1101 = vcmp.lt.s32.totalorder %v1079, 4
  %v1102 = vsel %vm1098, %v1082, %v1085
  %v1103 = vsel %vm1101, %v1091, 2102212464
  %v1104 = vsel %vm1100, %v1088, %v1103
  %v1105 = vsel %vm1099, %v1102, %v1104
  %v1106 = vsel %vm1098, %v1085, %v1088
  %v1107 = vsel %vm1101, %v1094, 920167782
  %v1108 = vsel %vm1100, %v1091, %v1107
  %v1109 = vsel %vm1099, %v1106, %v1108
  %v1110 = vsel %vm1098, %v1088, %v1091
  %v1111 = vsel %vm1101, %v1097, 1326507024
  %v1112 = vsel %vm1100, %v1094, %v1111
  %v1113 = vsel %vm1099, %v1110, %v1112
  %v1114 = vshll.u32 %v1074, 8
  %v1115 = vmul.u32.u64.compose %v1114, %v1113
  %v1116 = vextract.low.u32 %v1115
  %v1117 = vextract.high.u32 %v1115
  %v1118 = vmul.u32.u64.compose %v1114, %v1109
  %v1119 = vextract.low.u32 %v1118
  %v1120 = vextract.high.u32 %v1118
  %v1121 = vmul.u32 %v1114, %v1105
  %v1122 = vadd.s32 %v1117, %v1119
  %vm1123 = vc.u32 %v1117, %v1119
  %v1124 = vadd.s32 %v1120, 1
  %v1125 = vsel %vm1123, %v1124, %v1120
  %v1126 = vadd.s32 %v1121, %v1125
  %v1127 = vadd.s32 %v1126, 536870912
  %v1128 = vshrl.u32 %v1127, 30
  %v1129 = vshll.u32 %v1128, 30
  %v1130 = vsub.s32 %v1126, %v1129
  %vm1131 = vcmp.lt.s32.totalorder %v1130, 0
  %v1132 = vsub.s32 0, %v1130
  %v1133 = vsel %vm1131, %v1132, %v1130
  %v1134 = vclz %v1133
  %v1135 = vsub.s32 %v1134, 2
  %vm1136 = vcmp.gt.s32.totalorder 0, %v1135
  %v1137 = vsel %vm1136, 0, %v1135
  %v1138 = vsub.s32 32, %v1137
  %v1139 = vshll.u32 %v1130, %v1137
  %v1140 = vshrl.u32 %v1122, %v1138
  %v1141 = vor.u32 %v1139, %v1140
  %v1142 = vsub.s32 4294967266, %v1137
  %v1143 = vadd.s32 %v1142, 127
  %v1144 = vshll.u32 %v1143, 23
  %v1145 = vor.u32 4788187, %v1144
  %v1146 = vand.u32 2147483647, %v1145
  %v1148 = vcvt.s32.f32 %v1141
  %v1149 = vmul.f32 %v1148, %v1146
  %v1150 = vxor.u32 %v1149, 2147483648
  %v1151 = vsel %vm1068, %v1150, %v1149
  %v1152 = vsub.s32 4, %v1128
  %v1153 = vsel %vm1068, %v1152, %v1128
  %v1154 = vsel %vm1067, %v856, %v1151
  %v1155 = vsel %vm1067, 0, %v1153
  %v1156 = vcosq.f32.pop %v1154
  %v1157 = vsinq.f32.pop %v1154
  %vm1158 = vweird.f32 %v856
  %v1159 = vadd.s32 %v1155, 3
  %v1160 = vand.u32 %v1159, 3
  %vm1161 = vcmp.lt.s32.totalorder %v1160, 2
  %vm1162 = vcmp.eq.s32.totalorder %v1160, 0
  %v1163 = vxor.u32 %v1157, 2147483648
  %v1164 = vsel %vm1162, %v1156, %v1163
  %vm1165 = vcmp.eq.s32.totalorder %v1160, 2
  %v1166 = vxor.u32 %v1156, 2147483648
  %v1167 = vsel %vm1165, %v1166, %v1157
  %v1168 = vsel %vm1161, %v1164, %v1167
  %v1169 = vsel %vm1158, nan, %v1168
  %v1170 = vand.u32 2147483647, %v857
  %vm1171 = vcmp.le.f32.partialorder %v1170, 0.7853982
  %vm1172 = vcmp.lt.s32.totalorder %v857, 0
  %v1173 = vand.u32 %v857, 2139095040
  %v1174 = vshrl.u32 %v1173, 23
  %v1175 = vsub.s32 %v1174, 127
  %v1176 = vand.u32 2147483647, %v857
  %v1177 = vand.u32 %v1176, 8388607
  %v1178 = vor.u32 %v1177, 8388608
  %v1179 = vsub.s32 0, %v1178
  %v1180 = vadd.s32 %v1175, 1
  %vm1181 = vcmp.gt.s32.totalorder %v1180, 0
  %v1182 = vsel %vm1181, %v1180, 0
  %v1183 = vshrl.u32 %v1182, 5
  %v1184 = vand.u32 %v1182, 31
  %v1185 = vsub.s32 32, %v1184
  %v1186 = vshrl.u32 683565275, %v1185
  %v1187 = vshll.u32 683565275, %v1184
  %v1188 = vshrl.u32 2475754826, %v1185
  %v1189 = vor.u32 %v1187, %v1188
  %v1190 = vshll.u32 2475754826, %v1184
  %v1191 = vshrl.u32 2131351028, %v1185
  %v1192 = vor.u32 %v1190, %v1191
  %v1193 = vshll.u32 2131351028, %v1184
  %v1194 = vshrl.u32 2102212464, %v1185
  %v1195 = vor.u32 %v1193, %v1194
  %v1196 = vshll.u32 2102212464, %v1184
  %v1197 = vshrl.u32 920167782, %v1185
  %v1198 = vor.u32 %v1196, %v1197
  %v1199 = vshll.u32 920167782, %v1184
  %v1200 = vshrl.u32 1326507024, %v1185
  %v1201 = vor.u32 %v1199, %v1200
  %vm1202 = vcmp.lt.s32.totalorder %v1183, 1
  %vm1203 = vcmp.lt.s32.totalorder %v1183, 2
  %vm1204 = vcmp.lt.s32.totalorder %v1183, 3
  %vm1205 = vcmp.lt.s32.totalorder %v1183, 4
  %v1206 = vsel %vm1202, %v1186, %v1189
  %v1207 = vsel %vm1205, %v1195, 2102212464
  %v1208 = vsel %vm1204, %v1192, %v1207
  %v1209 = vsel %vm1203, %v1206, %v1208
  %v1210 = vsel %vm1202, %v1189, %v1192
  %v1211 = vsel %vm1205, %v1198, 920167782
  %v1212 = vsel %vm1204, %v1195, %v1211
  %v1213 = vsel %vm1203, %v1210, %v1212
  %v1214 = vsel %vm1202, %v1192, %v1195
  %v1215 = vsel %vm1205, %v1201, 1326507024
  %v1216 = vsel %vm1204, %v1198, %v1215
  %v1217 = vsel %vm1203, %v1214, %v1216
  %v1218 = vshll.u32 %v1178, 8
  %v1219 = vmul.u32.u64.compose %v1218, %v1217
  %v1220 = vextract.low.u32 %v1219
  %v1221 = vextract.high.u32 %v1219
  %v1222 = vmul.u32.u64.compose %v1218, %v1213
  %v1223 = vextract.low.u32 %v1222
  %v1224 = vextract.high.u32 %v1222
  %v1225 = vmul.u32 %v1218, %v1209
  %v1226 = vadd.s32 %v1221, %v1223
  %vm1227 = vc.u32 %v1221, %v1223
  %v1228 = vadd.s32 %v1224, 1
  %v1229 = vsel %vm1227, %v1228, %v1224
  %v1230 = vadd.s32 %v1225, %v1229
  %v1231 = vadd.s32 %v1230, 536870912
  %v1232 = vshrl.u32 %v1231, 30
  %v1233 = vshll.u32 %v1232, 30
  %v1234 = vsub.s32 %v1230, %v1233
  %vm1235 = vcmp.lt.s32.totalorder %v1234, 0
  %v1236 = vsub.s32 0, %v1234
  %v1237 = vsel %vm1235, %v1236, %v1234
  %v1238 = vclz %v1237
  %v1239 = vsub.s32 %v1238, 2
  %vm1240 = vcmp.gt.s32.totalorder 0, %v1239
  %v1241 = vsel %vm1240, 0, %v1239
  %v1242 = vsub.s32 32, %v1241
  %v1243 = vshll.u32 %v1234, %v1241
  %v1244 = vshrl.u32 %v1226, %v1242
  %v1245 = vor.u32 %v1243, %v1244
  %v1246 = vsub.s32 4294967266, %v1241
  %v1247 = vadd.s32 %v1246, 127
  %v1248 = vshll.u32 %v1247, 23
  %v1249 = vor.u32 4788187, %v1248
  %v1250 = vand.u32 2147483647, %v1249
  %v1252 = vcvt.s32.f32 %v1245
  %v1253 = vmul.f32 %v1252, %v1250
  %v1254 = vxor.u32 %v1253, 2147483648
  %v1255 = vsel %vm1172, %v1254, %v1253
  %v1256 = vsub.s32 4, %v1232
  %v1257 = vsel %vm1172, %v1256, %v1232
  %v1258 = vsel %vm1171, %v857, %v1255
  %v1259 = vsel %vm1171, 0, %v1257
  %v1260 = vcosq.f32.pop %v1258
  %v1261 = vsinq.f32.pop %v1258
  %vm1262 = vweird.f32 %v857
  %v1263 = vadd.s32 %v1259, 3
  %v1264 = vand.u32 %v1263, 3
  %vm1265 = vcmp.lt.s32.totalorder %v1264, 2
  %vm1266 = vcmp.eq.s32.totalorder %v1264, 0
  %v1267 = vxor.u32 %v1261, 2147483648
  %v1268 = vsel %vm1266, %v1260, %v1267
  %vm1269 = vcmp.eq.s32.totalorder %v1264, 2
  %v1270 = vxor.u32 %v1260, 2147483648
  %v1271 = vsel %vm1269, %v1270, %v1261
  %v1272 = vsel %vm1265, %v1268, %v1271
  %v1273 = vsel %vm1262, nan, %v1272
  %s1274 = scalar_lea.vmem %s1, 96
  %1275 = vst [vmem:[%s1274] sm:$0xff] %v961
  %1276 = vst [vmem:[%s1274 + $0x8] sm:$0xff] %v1065
  %1277 = vst [vmem:[%s1274 + $0x10] sm:$0xff] %v1169
  %1278 = vst [vmem:[%s1274 + $0x18] sm:$0xff] %v1273
  %v1279 = vand.u32 2147483647, %v854
  %vm1280 = vcmp.le.f32.partialorder %v1279, 0.7853982
  %vm1281 = vcmp.lt.s32.totalorder %v854, 0
  %v1282 = vand.u32 %v854, 2139095040
  %v1283 = vshrl.u32 %v1282, 23
  %v1284 = vsub.s32 %v1283, 127
  %v1285 = vand.u32 2147483647, %v854
  %v1286 = vand.u32 %v1285, 8388607
  %v1287 = vor.u32 %v1286, 8388608
  %v1288 = vsub.s32 0, %v1287
  %v1289 = vadd.s32 %v1284, 1
  %vm1290 = vcmp.gt.s32.totalorder %v1289, 0
  %v1291 = vsel %vm1290, %v1289, 0
  %v1292 = vshrl.u32 %v1291, 5
  %v1293 = vand.u32 %v1291, 31
  %v1294 = vsub.s32 32, %v1293
  %v1295 = vshrl.u32 683565275, %v1294
  %v1296 = vshll.u32 683565275, %v1293
  %v1297 = vshrl.u32 2475754826, %v1294
  %v1298 = vor.u32 %v1296, %v1297
  %v1299 = vshll.u32 2475754826, %v1293
  %v1300 = vshrl.u32 2131351028, %v1294
  %v1301 = vor.u32 %v1299, %v1300
  %v1302 = vshll.u32 2131351028, %v1293
  %v1303 = vshrl.u32 2102212464, %v1294
  %v1304 = vor.u32 %v1302, %v1303
  %v1305 = vshll.u32 2102212464, %v1293
  %v1306 = vshrl.u32 920167782, %v1294
  %v1307 = vor.u32 %v1305, %v1306
  %v1308 = vshll.u32 920167782, %v1293
  %v1309 = vshrl.u32 1326507024, %v1294
  %v1310 = vor.u32 %v1308, %v1309
  %vm1311 = vcmp.lt.s32.totalorder %v1292, 1
  %vm1312 = vcmp.lt.s32.totalorder %v1292, 2
  %vm1313 = vcmp.lt.s32.totalorder %v1292, 3
  %vm1314 = vcmp.lt.s32.totalorder %v1292, 4
  %v1315 = vsel %vm1311, %v1295, %v1298
  %v1316 = vsel %vm1314, %v1304, 2102212464
  %v1317 = vsel %vm1313, %v1301, %v1316
  %v1318 = vsel %vm1312, %v1315, %v1317
  %v1319 = vsel %vm1311, %v1298, %v1301
  %v1320 = vsel %vm1314, %v1307, 920167782
  %v1321 = vsel %vm1313, %v1304, %v1320
  %v1322 = vsel %vm1312, %v1319, %v1321
  %v1323 = vsel %vm1311, %v1301, %v1304
  %v1324 = vsel %vm1314, %v1310, 1326507024
  %v1325 = vsel %vm1313, %v1307, %v1324
  %v1326 = vsel %vm1312, %v1323, %v1325
  %v1327 = vshll.u32 %v1287, 8
  %v1328 = vmul.u32.u64.compose %v1327, %v1326
  %v1329 = vextract.low.u32 %v1328
  %v1330 = vextract.high.u32 %v1328
  %v1331 = vmul.u32.u64.compose %v1327, %v1322
  %v1332 = vextract.low.u32 %v1331
  %v1333 = vextract.high.u32 %v1331
  %v1334 = vmul.u32 %v1327, %v1318
  %v1335 = vadd.s32 %v1330, %v1332
  %vm1336 = vc.u32 %v1330, %v1332
  %v1337 = vadd.s32 %v1333, 1
  %v1338 = vsel %vm1336, %v1337, %v1333
  %v1339 = vadd.s32 %v1334, %v1338
  %v1340 = vadd.s32 %v1339, 536870912
  %v1341 = vshrl.u32 %v1340, 30
  %v1342 = vshll.u32 %v1341, 30
  %v1343 = vsub.s32 %v1339, %v1342
  %vm1344 = vcmp.lt.s32.totalorder %v1343, 0
  %v1345 = vsub.s32 0, %v1343
  %v1346 = vsel %vm1344, %v1345, %v1343
  %v1347 = vclz %v1346
  %v1348 = vsub.s32 %v1347, 2
  %vm1349 = vcmp.gt.s32.totalorder 0, %v1348
  %v1350 = vsel %vm1349, 0, %v1348
  %v1351 = vsub.s32 32, %v1350
  %v1352 = vshll.u32 %v1343, %v1350
  %v1353 = vshrl.u32 %v1335, %v1351
  %v1354 = vor.u32 %v1352, %v1353
  %v1355 = vsub.s32 4294967266, %v1350
  %v1356 = vadd.s32 %v1355, 127
  %v1357 = vshll.u32 %v1356, 23
  %v1358 = vor.u32 4788187, %v1357
  %v1359 = vand.u32 2147483647, %v1358
  %v1361 = vcvt.s32.f32 %v1354
  %v1362 = vmul.f32 %v1361, %v1359
  %v1363 = vxor.u32 %v1362, 2147483648
  %v1364 = vsel %vm1281, %v1363, %v1362
  %v1365 = vsub.s32 4, %v1341
  %v1366 = vsel %vm1281, %v1365, %v1341
  %v1367 = vsel %vm1280, %v854, %v1364
  %v1368 = vsel %vm1280, 0, %v1366
  %v1369 = vcosq.f32.pop %v1367
  %v1370 = vsinq.f32.pop %v1367
  %vm1371 = vweird.f32 %v854
  %v1372 = vand.u32 %v1368, 3
  %vm1373 = vcmp.lt.s32.totalorder %v1372, 2
  %vm1374 = vcmp.eq.s32.totalorder %v1372, 0
  %v1375 = vxor.u32 %v1370, 2147483648
  %v1376 = vsel %vm1374, %v1369, %v1375
  %vm1377 = vcmp.eq.s32.totalorder %v1372, 2
  %v1378 = vxor.u32 %v1369, 2147483648
  %v1379 = vsel %vm1377, %v1378, %v1370
  %v1380 = vsel %vm1373, %v1376, %v1379
  %v1381 = vsel %vm1371, nan, %v1380
  %v1382 = vand.u32 2147483647, %v855
  %vm1383 = vcmp.le.f32.partialorder %v1382, 0.7853982
  %vm1384 = vcmp.lt.s32.totalorder %v855, 0
  %v1385 = vand.u32 %v855, 2139095040
  %v1386 = vshrl.u32 %v1385, 23
  %v1387 = vsub.s32 %v1386, 127
  %v1388 = vand.u32 2147483647, %v855
  %v1389 = vand.u32 %v1388, 8388607
  %v1390 = vor.u32 %v1389, 8388608
  %v1391 = vsub.s32 0, %v1390
  %v1392 = vadd.s32 %v1387, 1
  %vm1393 = vcmp.gt.s32.totalorder %v1392, 0
  %v1394 = vsel %vm1393, %v1392, 0
  %v1395 = vshrl.u32 %v1394, 5
  %v1396 = vand.u32 %v1394, 31
  %v1397 = vsub.s32 32, %v1396
  %v1398 = vshrl.u32 683565275, %v1397
  %v1399 = vshll.u32 683565275, %v1396
  %v1400 = vshrl.u32 2475754826, %v1397
  %v1401 = vor.u32 %v1399, %v1400
  %v1402 = vshll.u32 2475754826, %v1396
  %v1403 = vshrl.u32 2131351028, %v1397
  %v1404 = vor.u32 %v1402, %v1403
  %v1405 = vshll.u32 2131351028, %v1396
  %v1406 = vshrl.u32 2102212464, %v1397
  %v1407 = vor.u32 %v1405, %v1406
  %v1408 = vshll.u32 2102212464, %v1396
  %v1409 = vshrl.u32 920167782, %v1397
  %v1410 = vor.u32 %v1408, %v1409
  %v1411 = vshll.u32 920167782, %v1396
  %v1412 = vshrl.u32 1326507024, %v1397
  %v1413 = vor.u32 %v1411, %v1412
  %vm1414 = vcmp.lt.s32.totalorder %v1395, 1
  %vm1415 = vcmp.lt.s32.totalorder %v1395, 2
  %vm1416 = vcmp.lt.s32.totalorder %v1395, 3
  %vm1417 = vcmp.lt.s32.totalorder %v1395, 4
  %v1418 = vsel %vm1414, %v1398, %v1401
  %v1419 = vsel %vm1417, %v1407, 2102212464
  %v1420 = vsel %vm1416, %v1404, %v1419
  %v1421 = vsel %vm1415, %v1418, %v1420
  %v1422 = vsel %vm1414, %v1401, %v1404
  %v1423 = vsel %vm1417, %v1410, 920167782
  %v1424 = vsel %vm1416, %v1407, %v1423
  %v1425 = vsel %vm1415, %v1422, %v1424
  %v1426 = vsel %vm1414, %v1404, %v1407
  %v1427 = vsel %vm1417, %v1413, 1326507024
  %v1428 = vsel %vm1416, %v1410, %v1427
  %v1429 = vsel %vm1415, %v1426, %v1428
  %v1430 = vshll.u32 %v1390, 8
  %v1431 = vmul.u32.u64.compose %v1430, %v1429
  %v1432 = vextract.low.u32 %v1431
  %v1433 = vextract.high.u32 %v1431
  %v1434 = vmul.u32.u64.compose %v1430, %v1425
  %v1435 = vextract.low.u32 %v1434
  %v1436 = vextract.high.u32 %v1434
  %v1437 = vmul.u32 %v1430, %v1421
  %v1438 = vadd.s32 %v1433, %v1435
  %vm1439 = vc.u32 %v1433, %v1435
  %v1440 = vadd.s32 %v1436, 1
  %v1441 = vsel %vm1439, %v1440, %v1436
  %v1442 = vadd.s32 %v1437, %v1441
  %v1443 = vadd.s32 %v1442, 536870912
  %v1444 = vshrl.u32 %v1443, 30
  %v1445 = vshll.u32 %v1444, 30
  %v1446 = vsub.s32 %v1442, %v1445
  %vm1447 = vcmp.lt.s32.totalorder %v1446, 0
  %v1448 = vsub.s32 0, %v1446
  %v1449 = vsel %vm1447, %v1448, %v1446
  %v1450 = vclz %v1449
  %v1451 = vsub.s32 %v1450, 2
  %vm1452 = vcmp.gt.s32.totalorder 0, %v1451
  %v1453 = vsel %vm1452, 0, %v1451
  %v1454 = vsub.s32 32, %v1453
  %v1455 = vshll.u32 %v1446, %v1453
  %v1456 = vshrl.u32 %v1438, %v1454
  %v1457 = vor.u32 %v1455, %v1456
  %v1458 = vsub.s32 4294967266, %v1453
  %v1459 = vadd.s32 %v1458, 127
  %v1460 = vshll.u32 %v1459, 23
  %v1461 = vor.u32 4788187, %v1460
  %v1462 = vand.u32 2147483647, %v1461
  %v1464 = vcvt.s32.f32 %v1457
  %v1465 = vmul.f32 %v1464, %v1462
  %v1466 = vxor.u32 %v1465, 2147483648
  %v1467 = vsel %vm1384, %v1466, %v1465
  %v1468 = vsub.s32 4, %v1444
  %v1469 = vsel %vm1384, %v1468, %v1444
  %v1470 = vsel %vm1383, %v855, %v1467
  %v1471 = vsel %vm1383, 0, %v1469
  %v1472 = vcosq.f32.pop %v1470
  %v1473 = vsinq.f32.pop %v1470
  %vm1474 = vweird.f32 %v855
  %v1475 = vand.u32 %v1471, 3
  %vm1476 = vcmp.lt.s32.totalorder %v1475, 2
  %vm1477 = vcmp.eq.s32.totalorder %v1475, 0
  %v1478 = vxor.u32 %v1473, 2147483648
  %v1479 = vsel %vm1477, %v1472, %v1478
  %vm1480 = vcmp.eq.s32.totalorder %v1475, 2
  %v1481 = vxor.u32 %v1472, 2147483648
  %v1482 = vsel %vm1480, %v1481, %v1473
  %v1483 = vsel %vm1476, %v1479, %v1482
  %v1484 = vsel %vm1474, nan, %v1483
  %v1485 = vand.u32 2147483647, %v856
  %vm1486 = vcmp.le.f32.partialorder %v1485, 0.7853982
  %vm1487 = vcmp.lt.s32.totalorder %v856, 0
  %v1488 = vand.u32 %v856, 2139095040
  %v1489 = vshrl.u32 %v1488, 23
  %v1490 = vsub.s32 %v1489, 127
  %v1491 = vand.u32 2147483647, %v856
  %v1492 = vand.u32 %v1491, 8388607
  %v1493 = vor.u32 %v1492, 8388608
  %v1494 = vsub.s32 0, %v1493
  %v1495 = vadd.s32 %v1490, 1
  %vm1496 = vcmp.gt.s32.totalorder %v1495, 0
  %v1497 = vsel %vm1496, %v1495, 0
  %v1498 = vshrl.u32 %v1497, 5
  %v1499 = vand.u32 %v1497, 31
  %v1500 = vsub.s32 32, %v1499
  %v1501 = vshrl.u32 683565275, %v1500
  %v1502 = vshll.u32 683565275, %v1499
  %v1503 = vshrl.u32 2475754826, %v1500
  %v1504 = vor.u32 %v1502, %v1503
  %v1505 = vshll.u32 2475754826, %v1499
  %v1506 = vshrl.u32 2131351028, %v1500
  %v1507 = vor.u32 %v1505, %v1506
  %v1508 = vshll.u32 2131351028, %v1499
  %v1509 = vshrl.u32 2102212464, %v1500
  %v1510 = vor.u32 %v1508, %v1509
  %v1511 = vshll.u32 2102212464, %v1499
  %v1512 = vshrl.u32 920167782, %v1500
  %v1513 = vor.u32 %v1511, %v1512
  %v1514 = vshll.u32 920167782, %v1499
  %v1515 = vshrl.u32 1326507024, %v1500
  %v1516 = vor.u32 %v1514, %v1515
  %vm1517 = vcmp.lt.s32.totalorder %v1498, 1
  %vm1518 = vcmp.lt.s32.totalorder %v1498, 2
  %vm1519 = vcmp.lt.s32.totalorder %v1498, 3
  %vm1520 = vcmp.lt.s32.totalorder %v1498, 4
  %v1521 = vsel %vm1517, %v1501, %v1504
  %v1522 = vsel %vm1520, %v1510, 2102212464
  %v1523 = vsel %vm1519, %v1507, %v1522
  %v1524 = vsel %vm1518, %v1521, %v1523
  %v1525 = vsel %vm1517, %v1504, %v1507
  %v1526 = vsel %vm1520, %v1513, 920167782
  %v1527 = vsel %vm1519, %v1510, %v1526
  %v1528 = vsel %vm1518, %v1525, %v1527
  %v1529 = vsel %vm1517, %v1507, %v1510
  %v1530 = vsel %vm1520, %v1516, 1326507024
  %v1531 = vsel %vm1519, %v1513, %v1530
  %v1532 = vsel %vm1518, %v1529, %v1531
  %v1533 = vshll.u32 %v1493, 8
  %v1534 = vmul.u32.u64.compose %v1533, %v1532
  %v1535 = vextract.low.u32 %v1534
  %v1536 = vextract.high.u32 %v1534
  %v1537 = vmul.u32.u64.compose %v1533, %v1528
  %v1538 = vextract.low.u32 %v1537
  %v1539 = vextract.high.u32 %v1537
  %v1540 = vmul.u32 %v1533, %v1524
  %v1541 = vadd.s32 %v1536, %v1538
  %vm1542 = vc.u32 %v1536, %v1538
  %v1543 = vadd.s32 %v1539, 1
  %v1544 = vsel %vm1542, %v1543, %v1539
  %v1545 = vadd.s32 %v1540, %v1544
  %v1546 = vadd.s32 %v1545, 536870912
  %v1547 = vshrl.u32 %v1546, 30
  %v1548 = vshll.u32 %v1547, 30
  %v1549 = vsub.s32 %v1545, %v1548
  %vm1550 = vcmp.lt.s32.totalorder %v1549, 0
  %v1551 = vsub.s32 0, %v1549
  %v1552 = vsel %vm1550, %v1551, %v1549
  %v1553 = vclz %v1552
  %v1554 = vsub.s32 %v1553, 2
  %vm1555 = vcmp.gt.s32.totalorder 0, %v1554
  %v1556 = vsel %vm1555, 0, %v1554
  %v1557 = vsub.s32 32, %v1556
  %v1558 = vshll.u32 %v1549, %v1556
  %v1559 = vshrl.u32 %v1541, %v1557
  %v1560 = vor.u32 %v1558, %v1559
  %v1561 = vsub.s32 4294967266, %v1556
  %v1562 = vadd.s32 %v1561, 127
  %v1563 = vshll.u32 %v1562, 23
  %v1564 = vor.u32 4788187, %v1563
  %v1565 = vand.u32 2147483647, %v1564
  %v1567 = vcvt.s32.f32 %v1560
  %v1568 = vmul.f32 %v1567, %v1565
  %v1569 = vxor.u32 %v1568, 2147483648
  %v1570 = vsel %vm1487, %v1569, %v1568
  %v1571 = vsub.s32 4, %v1547
  %v1572 = vsel %vm1487, %v1571, %v1547
  %v1573 = vsel %vm1486, %v856, %v1570
  %v1574 = vsel %vm1486, 0, %v1572
  %v1575 = vcosq.f32.pop %v1573
  %v1576 = vsinq.f32.pop %v1573
  %vm1577 = vweird.f32 %v856
  %v1578 = vand.u32 %v1574, 3
  %vm1579 = vcmp.lt.s32.totalorder %v1578, 2
  %vm1580 = vcmp.eq.s32.totalorder %v1578, 0
  %v1581 = vxor.u32 %v1576, 2147483648
  %v1582 = vsel %vm1580, %v1575, %v1581
  %vm1583 = vcmp.eq.s32.totalorder %v1578, 2
  %v1584 = vxor.u32 %v1575, 2147483648
  %v1585 = vsel %vm1583, %v1584, %v1576
  %v1586 = vsel %vm1579, %v1582, %v1585
  %v1587 = vsel %vm1577, nan, %v1586
  %v1588 = vand.u32 2147483647, %v857
  %vm1589 = vcmp.le.f32.partialorder %v1588, 0.7853982
  %vm1590 = vcmp.lt.s32.totalorder %v857, 0
  %v1591 = vand.u32 %v857, 2139095040
  %v1592 = vshrl.u32 %v1591, 23
  %v1593 = vsub.s32 %v1592, 127
  %v1594 = vand.u32 2147483647, %v857
  %v1595 = vand.u32 %v1594, 8388607
  %v1596 = vor.u32 %v1595, 8388608
  %v1597 = vsub.s32 0, %v1596
  %v1598 = vadd.s32 %v1593, 1
  %vm1599 = vcmp.gt.s32.totalorder %v1598, 0
  %v1600 = vsel %vm1599, %v1598, 0
  %v1601 = vshrl.u32 %v1600, 5
  %v1602 = vand.u32 %v1600, 31
  %v1603 = vsub.s32 32, %v1602
  %v1604 = vshrl.u32 683565275, %v1603
  %v1605 = vshll.u32 683565275, %v1602
  %v1606 = vshrl.u32 2475754826, %v1603
  %v1607 = vor.u32 %v1605, %v1606
  %v1608 = vshll.u32 2475754826, %v1602
  %v1609 = vshrl.u32 2131351028, %v1603
  %v1610 = vor.u32 %v1608, %v1609
  %v1611 = vshll.u32 2131351028, %v1602
  %v1612 = vshrl.u32 2102212464, %v1603
  %v1613 = vor.u32 %v1611, %v1612
  %v1614 = vshll.u32 2102212464, %v1602
  %v1615 = vshrl.u32 920167782, %v1603
  %v1616 = vor.u32 %v1614, %v1615
  %v1617 = vshll.u32 920167782, %v1602
  %v1618 = vshrl.u32 1326507024, %v1603
  %v1619 = vor.u32 %v1617, %v1618
  %vm1620 = vcmp.lt.s32.totalorder %v1601, 1
  %vm1621 = vcmp.lt.s32.totalorder %v1601, 2
  %vm1622 = vcmp.lt.s32.totalorder %v1601, 3
  %vm1623 = vcmp.lt.s32.totalorder %v1601, 4
  %v1624 = vsel %vm1620, %v1604, %v1607
  %v1625 = vsel %vm1623, %v1613, 2102212464
  %v1626 = vsel %vm1622, %v1610, %v1625
  %v1627 = vsel %vm1621, %v1624, %v1626
  %v1628 = vsel %vm1620, %v1607, %v1610
  %v1629 = vsel %vm1623, %v1616, 920167782
  %v1630 = vsel %vm1622, %v1613, %v1629
  %v1631 = vsel %vm1621, %v1628, %v1630
  %v1632 = vsel %vm1620, %v1610, %v1613
  %v1633 = vsel %vm1623, %v1619, 1326507024
  %v1634 = vsel %vm1622, %v1616, %v1633
  %v1635 = vsel %vm1621, %v1632, %v1634
  %v1636 = vshll.u32 %v1596, 8
  %v1637 = vmul.u32.u64.compose %v1636, %v1635
  %v1638 = vextract.low.u32 %v1637
  %v1639 = vextract.high.u32 %v1637
  %v1640 = vmul.u32.u64.compose %v1636, %v1631
  %v1641 = vextract.low.u32 %v1640
  %v1642 = vextract.high.u32 %v1640
  %v1643 = vmul.u32 %v1636, %v1627
  %v1644 = vadd.s32 %v1639, %v1641
  %vm1645 = vc.u32 %v1639, %v1641
  %v1646 = vadd.s32 %v1642, 1
  %v1647 = vsel %vm1645, %v1646, %v1642
  %v1648 = vadd.s32 %v1643, %v1647
  %v1649 = vadd.s32 %v1648, 536870912
  %v1650 = vshrl.u32 %v1649, 30
  %v1651 = vshll.u32 %v1650, 30
  %v1652 = vsub.s32 %v1648, %v1651
  %vm1653 = vcmp.lt.s32.totalorder %v1652, 0
  %v1654 = vsub.s32 0, %v1652
  %v1655 = vsel %vm1653, %v1654, %v1652
  %v1656 = vclz %v1655
  %v1657 = vsub.s32 %v1656, 2
  %vm1658 = vcmp.gt.s32.totalorder 0, %v1657
  %v1659 = vsel %vm1658, 0, %v1657
  %v1660 = vsub.s32 32, %v1659
  %v1661 = vshll.u32 %v1652, %v1659
  %v1662 = vshrl.u32 %v1644, %v1660
  %v1663 = vor.u32 %v1661, %v1662
  %v1664 = vsub.s32 4294967266, %v1659
  %v1665 = vadd.s32 %v1664, 127
  %v1666 = vshll.u32 %v1665, 23
  %v1667 = vor.u32 4788187, %v1666
  %v1668 = vand.u32 2147483647, %v1667
  %v1670 = vcvt.s32.f32 %v1663
  %v1671 = vmul.f32 %v1670, %v1668
  %v1672 = vxor.u32 %v1671, 2147483648
  %v1673 = vsel %vm1590, %v1672, %v1671
  %v1674 = vsub.s32 4, %v1650
  %v1675 = vsel %vm1590, %v1674, %v1650
  %v1676 = vsel %vm1589, %v857, %v1673
  %v1677 = vsel %vm1589, 0, %v1675
  %v1678 = vcosq.f32.pop %v1676
  %v1679 = vsinq.f32.pop %v1676
  %vm1680 = vweird.f32 %v857
  %v1681 = vand.u32 %v1677, 3
  %vm1682 = vcmp.lt.s32.totalorder %v1681, 2
  %vm1683 = vcmp.eq.s32.totalorder %v1681, 0
  %v1684 = vxor.u32 %v1679, 2147483648
  %v1685 = vsel %vm1683, %v1678, %v1684
  %vm1686 = vcmp.eq.s32.totalorder %v1681, 2
  %v1687 = vxor.u32 %v1678, 2147483648
  %v1688 = vsel %vm1686, %v1687, %v1679
  %v1689 = vsel %vm1682, %v1685, %v1688
  %v1690 = vsel %vm1680, nan, %v1689
  %s1691 = scalar_lea.vmem %s1, 128
  %1692 = vst [vmem:[%s1691] sm:$0xff] %v1381
  %1693 = vst [vmem:[%s1691 + $0x8] sm:$0xff] %v1484
  %1694 = vst [vmem:[%s1691 + $0x10] sm:$0xff] %v1587
  %1695 = vst [vmem:[%s1691 + $0x18] sm:$0xff] %v1690
  %v1696 = vmul.f32 %v8, 4.0
  %v1697 = vmul.f32 %v9, 4.0
  %v1698 = vmul.f32 %v10, 4.0
  %v1699 = vmul.f32 %v11, 4.0
  %v1700 = vand.u32 2147483647, %v1696
  %vm1701 = vcmp.le.f32.partialorder %v1700, 0.7853982
  %vm1702 = vcmp.lt.s32.totalorder %v1696, 0
  %v1703 = vand.u32 %v1696, 2139095040
  %v1704 = vshrl.u32 %v1703, 23
  %v1705 = vsub.s32 %v1704, 127
  %v1706 = vand.u32 2147483647, %v1696
  %v1707 = vand.u32 %v1706, 8388607
  %v1708 = vor.u32 %v1707, 8388608
  %v1709 = vsub.s32 0, %v1708
  %v1710 = vadd.s32 %v1705, 1
  %vm1711 = vcmp.gt.s32.totalorder %v1710, 0
  %v1712 = vsel %vm1711, %v1710, 0
  %v1713 = vshrl.u32 %v1712, 5
  %v1714 = vand.u32 %v1712, 31
  %v1715 = vsub.s32 32, %v1714
  %v1716 = vshrl.u32 683565275, %v1715
  %v1717 = vshll.u32 683565275, %v1714
  %v1718 = vshrl.u32 2475754826, %v1715
  %v1719 = vor.u32 %v1717, %v1718
  %v1720 = vshll.u32 2475754826, %v1714
  %v1721 = vshrl.u32 2131351028, %v1715
  %v1722 = vor.u32 %v1720, %v1721
  %v1723 = vshll.u32 2131351028, %v1714
  %v1724 = vshrl.u32 2102212464, %v1715
  %v1725 = vor.u32 %v1723, %v1724
  %v1726 = vshll.u32 2102212464, %v1714
  %v1727 = vshrl.u32 920167782, %v1715
  %v1728 = vor.u32 %v1726, %v1727
  %v1729 = vshll.u32 920167782, %v1714
  %v1730 = vshrl.u32 1326507024, %v1715
  %v1731 = vor.u32 %v1729, %v1730
  %vm1732 = vcmp.lt.s32.totalorder %v1713, 1
  %vm1733 = vcmp.lt.s32.totalorder %v1713, 2
  %vm1734 = vcmp.lt.s32.totalorder %v1713, 3
  %vm1735 = vcmp.lt.s32.totalorder %v1713, 4
  %v1736 = vsel %vm1732, %v1716, %v1719
  %v1737 = vsel %vm1735, %v1725, 2102212464
  %v1738 = vsel %vm1734, %v1722, %v1737
  %v1739 = vsel %vm1733, %v1736, %v1738
  %v1740 = vsel %vm1732, %v1719, %v1722
  %v1741 = vsel %vm1735, %v1728, 920167782
  %v1742 = vsel %vm1734, %v1725, %v1741
  %v1743 = vsel %vm1733, %v1740, %v1742
  %v1744 = vsel %vm1732, %v1722, %v1725
  %v1745 = vsel %vm1735, %v1731, 1326507024
  %v1746 = vsel %vm1734, %v1728, %v1745
  %v1747 = vsel %vm1733, %v1744, %v1746
  %v1748 = vshll.u32 %v1708, 8
  %v1749 = vmul.u32.u64.compose %v1748, %v1747
  %v1750 = vextract.low.u32 %v1749
  %v1751 = vextract.high.u32 %v1749
  %v1752 = vmul.u32.u64.compose %v1748, %v1743
  %v1753 = vextract.low.u32 %v1752
  %v1754 = vextract.high.u32 %v1752
  %v1755 = vmul.u32 %v1748, %v1739
  %v1756 = vadd.s32 %v1751, %v1753
  %vm1757 = vc.u32 %v1751, %v1753
  %v1758 = vadd.s32 %v1754, 1
  %v1759 = vsel %vm1757, %v1758, %v1754
  %v1760 = vadd.s32 %v1755, %v1759
  %v1761 = vadd.s32 %v1760, 536870912
  %v1762 = vshrl.u32 %v1761, 30
  %v1763 = vshll.u32 %v1762, 30
  %v1764 = vsub.s32 %v1760, %v1763
  %vm1765 = vcmp.lt.s32.totalorder %v1764, 0
  %v1766 = vsub.s32 0, %v1764
  %v1767 = vsel %vm1765, %v1766, %v1764
  %v1768 = vclz %v1767
  %v1769 = vsub.s32 %v1768, 2
  %vm1770 = vcmp.gt.s32.totalorder 0, %v1769
  %v1771 = vsel %vm1770, 0, %v1769
  %v1772 = vsub.s32 32, %v1771
  %v1773 = vshll.u32 %v1764, %v1771
  %v1774 = vshrl.u32 %v1756, %v1772
  %v1775 = vor.u32 %v1773, %v1774
  %v1776 = vsub.s32 4294967266, %v1771
  %v1777 = vadd.s32 %v1776, 127
  %v1778 = vshll.u32 %v1777, 23
  %v1779 = vor.u32 4788187, %v1778
  %v1780 = vand.u32 2147483647, %v1779
  %v1782 = vcvt.s32.f32 %v1775
  %v1783 = vmul.f32 %v1782, %v1780
  %v1784 = vxor.u32 %v1783, 2147483648
  %v1785 = vsel %vm1702, %v1784, %v1783
  %v1786 = vsub.s32 4, %v1762
  %v1787 = vsel %vm1702, %v1786, %v1762
  %v1788 = vsel %vm1701, %v1696, %v1785
  %v1789 = vsel %vm1701, 0, %v1787
  %v1790 = vcosq.f32.pop %v1788
  %v1791 = vsinq.f32.pop %v1788
  %vm1792 = vweird.f32 %v1696
  %v1793 = vadd.s32 %v1789, 3
  %v1794 = vand.u32 %v1793, 3
  %vm1795 = vcmp.lt.s32.totalorder %v1794, 2
  %vm1796 = vcmp.eq.s32.totalorder %v1794, 0
  %v1797 = vxor.u32 %v1791, 2147483648
  %v1798 = vsel %vm1796, %v1790, %v1797
  %vm1799 = vcmp.eq.s32.totalorder %v1794, 2
  %v1800 = vxor.u32 %v1790, 2147483648
  %v1801 = vsel %vm1799, %v1800, %v1791
  %v1802 = vsel %vm1795, %v1798, %v1801
  %v1803 = vsel %vm1792, nan, %v1802
  %v1804 = vand.u32 2147483647, %v1697
  %vm1805 = vcmp.le.f32.partialorder %v1804, 0.7853982
  %vm1806 = vcmp.lt.s32.totalorder %v1697, 0
  %v1807 = vand.u32 %v1697, 2139095040
  %v1808 = vshrl.u32 %v1807, 23
  %v1809 = vsub.s32 %v1808, 127
  %v1810 = vand.u32 2147483647, %v1697
  %v1811 = vand.u32 %v1810, 8388607
  %v1812 = vor.u32 %v1811, 8388608
  %v1813 = vsub.s32 0, %v1812
  %v1814 = vadd.s32 %v1809, 1
  %vm1815 = vcmp.gt.s32.totalorder %v1814, 0
  %v1816 = vsel %vm1815, %v1814, 0
  %v1817 = vshrl.u32 %v1816, 5
  %v1818 = vand.u32 %v1816, 31
  %v1819 = vsub.s32 32, %v1818
  %v1820 = vshrl.u32 683565275, %v1819
  %v1821 = vshll.u32 683565275, %v1818
  %v1822 = vshrl.u32 2475754826, %v1819
  %v1823 = vor.u32 %v1821, %v1822
  %v1824 = vshll.u32 2475754826, %v1818
  %v1825 = vshrl.u32 2131351028, %v1819
  %v1826 = vor.u32 %v1824, %v1825
  %v1827 = vshll.u32 2131351028, %v1818
  %v1828 = vshrl.u32 2102212464, %v1819
  %v1829 = vor.u32 %v1827, %v1828
  %v1830 = vshll.u32 2102212464, %v1818
  %v1831 = vshrl.u32 920167782, %v1819
  %v1832 = vor.u32 %v1830, %v1831
  %v1833 = vshll.u32 920167782, %v1818
  %v1834 = vshrl.u32 1326507024, %v1819
  %v1835 = vor.u32 %v1833, %v1834
  %vm1836 = vcmp.lt.s32.totalorder %v1817, 1
  %vm1837 = vcmp.lt.s32.totalorder %v1817, 2
  %vm1838 = vcmp.lt.s32.totalorder %v1817, 3
  %vm1839 = vcmp.lt.s32.totalorder %v1817, 4
  %v1840 = vsel %vm1836, %v1820, %v1823
  %v1841 = vsel %vm1839, %v1829, 2102212464
  %v1842 = vsel %vm1838, %v1826, %v1841
  %v1843 = vsel %vm1837, %v1840, %v1842
  %v1844 = vsel %vm1836, %v1823, %v1826
  %v1845 = vsel %vm1839, %v1832, 920167782
  %v1846 = vsel %vm1838, %v1829, %v1845
  %v1847 = vsel %vm1837, %v1844, %v1846
  %v1848 = vsel %vm1836, %v1826, %v1829
  %v1849 = vsel %vm1839, %v1835, 1326507024
  %v1850 = vsel %vm1838, %v1832, %v1849
  %v1851 = vsel %vm1837, %v1848, %v1850
  %v1852 = vshll.u32 %v1812, 8
  %v1853 = vmul.u32.u64.compose %v1852, %v1851
  %v1854 = vextract.low.u32 %v1853
  %v1855 = vextract.high.u32 %v1853
  %v1856 = vmul.u32.u64.compose %v1852, %v1847
  %v1857 = vextract.low.u32 %v1856
  %v1858 = vextract.high.u32 %v1856
  %v1859 = vmul.u32 %v1852, %v1843
  %v1860 = vadd.s32 %v1855, %v1857
  %vm1861 = vc.u32 %v1855, %v1857
  %v1862 = vadd.s32 %v1858, 1
  %v1863 = vsel %vm1861, %v1862, %v1858
  %v1864 = vadd.s32 %v1859, %v1863
  %v1865 = vadd.s32 %v1864, 536870912
  %v1866 = vshrl.u32 %v1865, 30
  %v1867 = vshll.u32 %v1866, 30
  %v1868 = vsub.s32 %v1864, %v1867
  %vm1869 = vcmp.lt.s32.totalorder %v1868, 0
  %v1870 = vsub.s32 0, %v1868
  %v1871 = vsel %vm1869, %v1870, %v1868
  %v1872 = vclz %v1871
  %v1873 = vsub.s32 %v1872, 2
  %vm1874 = vcmp.gt.s32.totalorder 0, %v1873
  %v1875 = vsel %vm1874, 0, %v1873
  %v1876 = vsub.s32 32, %v1875
  %v1877 = vshll.u32 %v1868, %v1875
  %v1878 = vshrl.u32 %v1860, %v1876
  %v1879 = vor.u32 %v1877, %v1878
  %v1880 = vsub.s32 4294967266, %v1875
  %v1881 = vadd.s32 %v1880, 127
  %v1882 = vshll.u32 %v1881, 23
  %v1883 = vor.u32 4788187, %v1882
  %v1884 = vand.u32 2147483647, %v1883
  %v1886 = vcvt.s32.f32 %v1879
  %v1887 = vmul.f32 %v1886, %v1884
  %v1888 = vxor.u32 %v1887, 2147483648
  %v1889 = vsel %vm1806, %v1888, %v1887
  %v1890 = vsub.s32 4, %v1866
  %v1891 = vsel %vm1806, %v1890, %v1866
  %v1892 = vsel %vm1805, %v1697, %v1889
  %v1893 = vsel %vm1805, 0, %v1891
  %v1894 = vcosq.f32.pop %v1892
  %v1895 = vsinq.f32.pop %v1892
  %vm1896 = vweird.f32 %v1697
  %v1897 = vadd.s32 %v1893, 3
  %v1898 = vand.u32 %v1897, 3
  %vm1899 = vcmp.lt.s32.totalorder %v1898, 2
  %vm1900 = vcmp.eq.s32.totalorder %v1898, 0
  %v1901 = vxor.u32 %v1895, 2147483648
  %v1902 = vsel %vm1900, %v1894, %v1901
  %vm1903 = vcmp.eq.s32.totalorder %v1898, 2
  %v1904 = vxor.u32 %v1894, 2147483648
  %v1905 = vsel %vm1903, %v1904, %v1895
  %v1906 = vsel %vm1899, %v1902, %v1905
  %v1907 = vsel %vm1896, nan, %v1906
  %v1908 = vand.u32 2147483647, %v1698
  %vm1909 = vcmp.le.f32.partialorder %v1908, 0.7853982
  %vm1910 = vcmp.lt.s32.totalorder %v1698, 0
  %v1911 = vand.u32 %v1698, 2139095040
  %v1912 = vshrl.u32 %v1911, 23
  %v1913 = vsub.s32 %v1912, 127
  %v1914 = vand.u32 2147483647, %v1698
  %v1915 = vand.u32 %v1914, 8388607
  %v1916 = vor.u32 %v1915, 8388608
  %v1917 = vsub.s32 0, %v1916
  %v1918 = vadd.s32 %v1913, 1
  %vm1919 = vcmp.gt.s32.totalorder %v1918, 0
  %v1920 = vsel %vm1919, %v1918, 0
  %v1921 = vshrl.u32 %v1920, 5
  %v1922 = vand.u32 %v1920, 31
  %v1923 = vsub.s32 32, %v1922
  %v1924 = vshrl.u32 683565275, %v1923
  %v1925 = vshll.u32 683565275, %v1922
  %v1926 = vshrl.u32 2475754826, %v1923
  %v1927 = vor.u32 %v1925, %v1926
  %v1928 = vshll.u32 2475754826, %v1922
  %v1929 = vshrl.u32 2131351028, %v1923
  %v1930 = vor.u32 %v1928, %v1929
  %v1931 = vshll.u32 2131351028, %v1922
  %v1932 = vshrl.u32 2102212464, %v1923
  %v1933 = vor.u32 %v1931, %v1932
  %v1934 = vshll.u32 2102212464, %v1922
  %v1935 = vshrl.u32 920167782, %v1923
  %v1936 = vor.u32 %v1934, %v1935
  %v1937 = vshll.u32 920167782, %v1922
  %v1938 = vshrl.u32 1326507024, %v1923
  %v1939 = vor.u32 %v1937, %v1938
  %vm1940 = vcmp.lt.s32.totalorder %v1921, 1
  %vm1941 = vcmp.lt.s32.totalorder %v1921, 2
  %vm1942 = vcmp.lt.s32.totalorder %v1921, 3
  %vm1943 = vcmp.lt.s32.totalorder %v1921, 4
  %v1944 = vsel %vm1940, %v1924, %v1927
  %v1945 = vsel %vm1943, %v1933, 2102212464
  %v1946 = vsel %vm1942, %v1930, %v1945
  %v1947 = vsel %vm1941, %v1944, %v1946
  %v1948 = vsel %vm1940, %v1927, %v1930
  %v1949 = vsel %vm1943, %v1936, 920167782
  %v1950 = vsel %vm1942, %v1933, %v1949
  %v1951 = vsel %vm1941, %v1948, %v1950
  %v1952 = vsel %vm1940, %v1930, %v1933
  %v1953 = vsel %vm1943, %v1939, 1326507024
  %v1954 = vsel %vm1942, %v1936, %v1953
  %v1955 = vsel %vm1941, %v1952, %v1954
  %v1956 = vshll.u32 %v1916, 8
  %v1957 = vmul.u32.u64.compose %v1956, %v1955
  %v1958 = vextract.low.u32 %v1957
  %v1959 = vextract.high.u32 %v1957
  %v1960 = vmul.u32.u64.compose %v1956, %v1951
  %v1961 = vextract.low.u32 %v1960
  %v1962 = vextract.high.u32 %v1960
  %v1963 = vmul.u32 %v1956, %v1947
  %v1964 = vadd.s32 %v1959, %v1961
  %vm1965 = vc.u32 %v1959, %v1961
  %v1966 = vadd.s32 %v1962, 1
  %v1967 = vsel %vm1965, %v1966, %v1962
  %v1968 = vadd.s32 %v1963, %v1967
  %v1969 = vadd.s32 %v1968, 536870912
  %v1970 = vshrl.u32 %v1969, 30
  %v1971 = vshll.u32 %v1970, 30
  %v1972 = vsub.s32 %v1968, %v1971
  %vm1973 = vcmp.lt.s32.totalorder %v1972, 0
  %v1974 = vsub.s32 0, %v1972
  %v1975 = vsel %vm1973, %v1974, %v1972
  %v1976 = vclz %v1975
  %v1977 = vsub.s32 %v1976, 2
  %vm1978 = vcmp.gt.s32.totalorder 0, %v1977
  %v1979 = vsel %vm1978, 0, %v1977
  %v1980 = vsub.s32 32, %v1979
  %v1981 = vshll.u32 %v1972, %v1979
  %v1982 = vshrl.u32 %v1964, %v1980
  %v1983 = vor.u32 %v1981, %v1982
  %v1984 = vsub.s32 4294967266, %v1979
  %v1985 = vadd.s32 %v1984, 127
  %v1986 = vshll.u32 %v1985, 23
  %v1987 = vor.u32 4788187, %v1986
  %v1988 = vand.u32 2147483647, %v1987
  %v1990 = vcvt.s32.f32 %v1983
  %v1991 = vmul.f32 %v1990, %v1988
  %v1992 = vxor.u32 %v1991, 2147483648
  %v1993 = vsel %vm1910, %v1992, %v1991
  %v1994 = vsub.s32 4, %v1970
  %v1995 = vsel %vm1910, %v1994, %v1970
  %v1996 = vsel %vm1909, %v1698, %v1993
  %v1997 = vsel %vm1909, 0, %v1995
  %v1998 = vcosq.f32.pop %v1996
  %v1999 = vsinq.f32.pop %v1996
  %vm2000 = vweird.f32 %v1698
  %v2001 = vadd.s32 %v1997, 3
  %v2002 = vand.u32 %v2001, 3
  %vm2003 = vcmp.lt.s32.totalorder %v2002, 2
  %vm2004 = vcmp.eq.s32.totalorder %v2002, 0
  %v2005 = vxor.u32 %v1999, 2147483648
  %v2006 = vsel %vm2004, %v1998, %v2005
  %vm2007 = vcmp.eq.s32.totalorder %v2002, 2
  %v2008 = vxor.u32 %v1998, 2147483648
  %v2009 = vsel %vm2007, %v2008, %v1999
  %v2010 = vsel %vm2003, %v2006, %v2009
  %v2011 = vsel %vm2000, nan, %v2010
  %v2012 = vand.u32 2147483647, %v1699
  %vm2013 = vcmp.le.f32.partialorder %v2012, 0.7853982
  %vm2014 = vcmp.lt.s32.totalorder %v1699, 0
  %v2015 = vand.u32 %v1699, 2139095040
  %v2016 = vshrl.u32 %v2015, 23
  %v2017 = vsub.s32 %v2016, 127
  %v2018 = vand.u32 2147483647, %v1699
  %v2019 = vand.u32 %v2018, 8388607
  %v2020 = vor.u32 %v2019, 8388608
  %v2021 = vsub.s32 0, %v2020
  %v2022 = vadd.s32 %v2017, 1
  %vm2023 = vcmp.gt.s32.totalorder %v2022, 0
  %v2024 = vsel %vm2023, %v2022, 0
  %v2025 = vshrl.u32 %v2024, 5
  %v2026 = vand.u32 %v2024, 31
  %v2027 = vsub.s32 32, %v2026
  %v2028 = vshrl.u32 683565275, %v2027
  %v2029 = vshll.u32 683565275, %v2026
  %v2030 = vshrl.u32 2475754826, %v2027
  %v2031 = vor.u32 %v2029, %v2030
  %v2032 = vshll.u32 2475754826, %v2026
  %v2033 = vshrl.u32 2131351028, %v2027
  %v2034 = vor.u32 %v2032, %v2033
  %v2035 = vshll.u32 2131351028, %v2026
  %v2036 = vshrl.u32 2102212464, %v2027
  %v2037 = vor.u32 %v2035, %v2036
  %v2038 = vshll.u32 2102212464, %v2026
  %v2039 = vshrl.u32 920167782, %v2027
  %v2040 = vor.u32 %v2038, %v2039
  %v2041 = vshll.u32 920167782, %v2026
  %v2042 = vshrl.u32 1326507024, %v2027
  %v2043 = vor.u32 %v2041, %v2042
  %vm2044 = vcmp.lt.s32.totalorder %v2025, 1
  %vm2045 = vcmp.lt.s32.totalorder %v2025, 2
  %vm2046 = vcmp.lt.s32.totalorder %v2025, 3
  %vm2047 = vcmp.lt.s32.totalorder %v2025, 4
  %v2048 = vsel %vm2044, %v2028, %v2031
  %v2049 = vsel %vm2047, %v2037, 2102212464
  %v2050 = vsel %vm2046, %v2034, %v2049
  %v2051 = vsel %vm2045, %v2048, %v2050
  %v2052 = vsel %vm2044, %v2031, %v2034
  %v2053 = vsel %vm2047, %v2040, 920167782
  %v2054 = vsel %vm2046, %v2037, %v2053
  %v2055 = vsel %vm2045, %v2052, %v2054
  %v2056 = vsel %vm2044, %v2034, %v2037
  %v2057 = vsel %vm2047, %v2043, 1326507024
  %v2058 = vsel %vm2046, %v2040, %v2057
  %v2059 = vsel %vm2045, %v2056, %v2058
  %v2060 = vshll.u32 %v2020, 8
  %v2061 = vmul.u32.u64.compose %v2060, %v2059
  %v2062 = vextract.low.u32 %v2061
  %v2063 = vextract.high.u32 %v2061
  %v2064 = vmul.u32.u64.compose %v2060, %v2055
  %v2065 = vextract.low.u32 %v2064
  %v2066 = vextract.high.u32 %v2064
  %v2067 = vmul.u32 %v2060, %v2051
  %v2068 = vadd.s32 %v2063, %v2065
  %vm2069 = vc.u32 %v2063, %v2065
  %v2070 = vadd.s32 %v2066, 1
  %v2071 = vsel %vm2069, %v2070, %v2066
  %v2072 = vadd.s32 %v2067, %v2071
  %v2073 = vadd.s32 %v2072, 536870912
  %v2074 = vshrl.u32 %v2073, 30
  %v2075 = vshll.u32 %v2074, 30
  %v2076 = vsub.s32 %v2072, %v2075
  %vm2077 = vcmp.lt.s32.totalorder %v2076, 0
  %v2078 = vsub.s32 0, %v2076
  %v2079 = vsel %vm2077, %v2078, %v2076
  %v2080 = vclz %v2079
  %v2081 = vsub.s32 %v2080, 2
  %vm2082 = vcmp.gt.s32.totalorder 0, %v2081
  %v2083 = vsel %vm2082, 0, %v2081
  %v2084 = vsub.s32 32, %v2083
  %v2085 = vshll.u32 %v2076, %v2083
  %v2086 = vshrl.u32 %v2068, %v2084
  %v2087 = vor.u32 %v2085, %v2086
  %v2088 = vsub.s32 4294967266, %v2083
  %v2089 = vadd.s32 %v2088, 127
  %v2090 = vshll.u32 %v2089, 23
  %v2091 = vor.u32 4788187, %v2090
  %v2092 = vand.u32 2147483647, %v2091
  %v2094 = vcvt.s32.f32 %v2087
  %v2095 = vmul.f32 %v2094, %v2092
  %v2096 = vxor.u32 %v2095, 2147483648
  %v2097 = vsel %vm2014, %v2096, %v2095
  %v2098 = vsub.s32 4, %v2074
  %v2099 = vsel %vm2014, %v2098, %v2074
  %v2100 = vsel %vm2013, %v1699, %v2097
  %v2101 = vsel %vm2013, 0, %v2099
  %v2102 = vcosq.f32.pop %v2100
  %v2103 = vsinq.f32.pop %v2100
  %vm2104 = vweird.f32 %v1699
  %v2105 = vadd.s32 %v2101, 3
  %v2106 = vand.u32 %v2105, 3
  %vm2107 = vcmp.lt.s32.totalorder %v2106, 2
  %vm2108 = vcmp.eq.s32.totalorder %v2106, 0
  %v2109 = vxor.u32 %v2103, 2147483648
  %v2110 = vsel %vm2108, %v2102, %v2109
  %vm2111 = vcmp.eq.s32.totalorder %v2106, 2
  %v2112 = vxor.u32 %v2102, 2147483648
  %v2113 = vsel %vm2111, %v2112, %v2103
  %v2114 = vsel %vm2107, %v2110, %v2113
  %v2115 = vsel %vm2104, nan, %v2114
  %s2116 = scalar_lea.vmem %s1, 160
  %2117 = vst [vmem:[%s2116] sm:$0xff] %v1803
  %2118 = vst [vmem:[%s2116 + $0x8] sm:$0xff] %v1907
  %2119 = vst [vmem:[%s2116 + $0x10] sm:$0xff] %v2011
  %2120 = vst [vmem:[%s2116 + $0x18] sm:$0xff] %v2115
  %v2121 = vand.u32 2147483647, %v1696
  %vm2122 = vcmp.le.f32.partialorder %v2121, 0.7853982
  %vm2123 = vcmp.lt.s32.totalorder %v1696, 0
  %v2124 = vand.u32 %v1696, 2139095040
  %v2125 = vshrl.u32 %v2124, 23
  %v2126 = vsub.s32 %v2125, 127
  %v2127 = vand.u32 2147483647, %v1696
  %v2128 = vand.u32 %v2127, 8388607
  %v2129 = vor.u32 %v2128, 8388608
  %v2130 = vsub.s32 0, %v2129
  %v2131 = vadd.s32 %v2126, 1
  %vm2132 = vcmp.gt.s32.totalorder %v2131, 0
  %v2133 = vsel %vm2132, %v2131, 0
  %v2134 = vshrl.u32 %v2133, 5
  %v2135 = vand.u32 %v2133, 31
  %v2136 = vsub.s32 32, %v2135
  %v2137 = vshrl.u32 683565275, %v2136
  %v2138 = vshll.u32 683565275, %v2135
  %v2139 = vshrl.u32 2475754826, %v2136
  %v2140 = vor.u32 %v2138, %v2139
  %v2141 = vshll.u32 2475754826, %v2135
  %v2142 = vshrl.u32 2131351028, %v2136
  %v2143 = vor.u32 %v2141, %v2142
  %v2144 = vshll.u32 2131351028, %v2135
  %v2145 = vshrl.u32 2102212464, %v2136
  %v2146 = vor.u32 %v2144, %v2145
  %v2147 = vshll.u32 2102212464, %v2135
  %v2148 = vshrl.u32 920167782, %v2136
  %v2149 = vor.u32 %v2147, %v2148
  %v2150 = vshll.u32 920167782, %v2135
  %v2151 = vshrl.u32 1326507024, %v2136
  %v2152 = vor.u32 %v2150, %v2151
  %vm2153 = vcmp.lt.s32.totalorder %v2134, 1
  %vm2154 = vcmp.lt.s32.totalorder %v2134, 2
  %vm2155 = vcmp.lt.s32.totalorder %v2134, 3
  %vm2156 = vcmp.lt.s32.totalorder %v2134, 4
  %v2157 = vsel %vm2153, %v2137, %v2140
  %v2158 = vsel %vm2156, %v2146, 2102212464
  %v2159 = vsel %vm2155, %v2143, %v2158
  %v2160 = vsel %vm2154, %v2157, %v2159
  %v2161 = vsel %vm2153, %v2140, %v2143
  %v2162 = vsel %vm2156, %v2149, 920167782
  %v2163 = vsel %vm2155, %v2146, %v2162
  %v2164 = vsel %vm2154, %v2161, %v2163
  %v2165 = vsel %vm2153, %v2143, %v2146
  %v2166 = vsel %vm2156, %v2152, 1326507024
  %v2167 = vsel %vm2155, %v2149, %v2166
  %v2168 = vsel %vm2154, %v2165, %v2167
  %v2169 = vshll.u32 %v2129, 8
  %v2170 = vmul.u32.u64.compose %v2169, %v2168
  %v2171 = vextract.low.u32 %v2170
  %v2172 = vextract.high.u32 %v2170
  %v2173 = vmul.u32.u64.compose %v2169, %v2164
  %v2174 = vextract.low.u32 %v2173
  %v2175 = vextract.high.u32 %v2173
  %v2176 = vmul.u32 %v2169, %v2160
  %v2177 = vadd.s32 %v2172, %v2174
  %vm2178 = vc.u32 %v2172, %v2174
  %v2179 = vadd.s32 %v2175, 1
  %v2180 = vsel %vm2178, %v2179, %v2175
  %v2181 = vadd.s32 %v2176, %v2180
  %v2182 = vadd.s32 %v2181, 536870912
  %v2183 = vshrl.u32 %v2182, 30
  %v2184 = vshll.u32 %v2183, 30
  %v2185 = vsub.s32 %v2181, %v2184
  %vm2186 = vcmp.lt.s32.totalorder %v2185, 0
  %v2187 = vsub.s32 0, %v2185
  %v2188 = vsel %vm2186, %v2187, %v2185
  %v2189 = vclz %v2188
  %v2190 = vsub.s32 %v2189, 2
  %vm2191 = vcmp.gt.s32.totalorder 0, %v2190
  %v2192 = vsel %vm2191, 0, %v2190
  %v2193 = vsub.s32 32, %v2192
  %v2194 = vshll.u32 %v2185, %v2192
  %v2195 = vshrl.u32 %v2177, %v2193
  %v2196 = vor.u32 %v2194, %v2195
  %v2197 = vsub.s32 4294967266, %v2192
  %v2198 = vadd.s32 %v2197, 127
  %v2199 = vshll.u32 %v2198, 23
  %v2200 = vor.u32 4788187, %v2199
  %v2201 = vand.u32 2147483647, %v2200
  %v2203 = vcvt.s32.f32 %v2196
  %v2204 = vmul.f32 %v2203, %v2201
  %v2205 = vxor.u32 %v2204, 2147483648
  %v2206 = vsel %vm2123, %v2205, %v2204
  %v2207 = vsub.s32 4, %v2183
  %v2208 = vsel %vm2123, %v2207, %v2183
  %v2209 = vsel %vm2122, %v1696, %v2206
  %v2210 = vsel %vm2122, 0, %v2208
  %v2211 = vcosq.f32.pop %v2209
  %v2212 = vsinq.f32.pop %v2209
  %vm2213 = vweird.f32 %v1696
  %v2214 = vand.u32 %v2210, 3
  %vm2215 = vcmp.lt.s32.totalorder %v2214, 2
  %vm2216 = vcmp.eq.s32.totalorder %v2214, 0
  %v2217 = vxor.u32 %v2212, 2147483648
  %v2218 = vsel %vm2216, %v2211, %v2217
  %vm2219 = vcmp.eq.s32.totalorder %v2214, 2
  %v2220 = vxor.u32 %v2211, 2147483648
  %v2221 = vsel %vm2219, %v2220, %v2212
  %v2222 = vsel %vm2215, %v2218, %v2221
  %v2223 = vsel %vm2213, nan, %v2222
  %v2224 = vand.u32 2147483647, %v1697
  %vm2225 = vcmp.le.f32.partialorder %v2224, 0.7853982
  %vm2226 = vcmp.lt.s32.totalorder %v1697, 0
  %v2227 = vand.u32 %v1697, 2139095040
  %v2228 = vshrl.u32 %v2227, 23
  %v2229 = vsub.s32 %v2228, 127
  %v2230 = vand.u32 2147483647, %v1697
  %v2231 = vand.u32 %v2230, 8388607
  %v2232 = vor.u32 %v2231, 8388608
  %v2233 = vsub.s32 0, %v2232
  %v2234 = vadd.s32 %v2229, 1
  %vm2235 = vcmp.gt.s32.totalorder %v2234, 0
  %v2236 = vsel %vm2235, %v2234, 0
  %v2237 = vshrl.u32 %v2236, 5
  %v2238 = vand.u32 %v2236, 31
  %v2239 = vsub.s32 32, %v2238
  %v2240 = vshrl.u32 683565275, %v2239
  %v2241 = vshll.u32 683565275, %v2238
  %v2242 = vshrl.u32 2475754826, %v2239
  %v2243 = vor.u32 %v2241, %v2242
  %v2244 = vshll.u32 2475754826, %v2238
  %v2245 = vshrl.u32 2131351028, %v2239
  %v2246 = vor.u32 %v2244, %v2245
  %v2247 = vshll.u32 2131351028, %v2238
  %v2248 = vshrl.u32 2102212464, %v2239
  %v2249 = vor.u32 %v2247, %v2248
  %v2250 = vshll.u32 2102212464, %v2238
  %v2251 = vshrl.u32 920167782, %v2239
  %v2252 = vor.u32 %v2250, %v2251
  %v2253 = vshll.u32 920167782, %v2238
  %v2254 = vshrl.u32 1326507024, %v2239
  %v2255 = vor.u32 %v2253, %v2254
  %vm2256 = vcmp.lt.s32.totalorder %v2237, 1
  %vm2257 = vcmp.lt.s32.totalorder %v2237, 2
  %vm2258 = vcmp.lt.s32.totalorder %v2237, 3
  %vm2259 = vcmp.lt.s32.totalorder %v2237, 4
  %v2260 = vsel %vm2256, %v2240, %v2243
  %v2261 = vsel %vm2259, %v2249, 2102212464
  %v2262 = vsel %vm2258, %v2246, %v2261
  %v2263 = vsel %vm2257, %v2260, %v2262
  %v2264 = vsel %vm2256, %v2243, %v2246
  %v2265 = vsel %vm2259, %v2252, 920167782
  %v2266 = vsel %vm2258, %v2249, %v2265
  %v2267 = vsel %vm2257, %v2264, %v2266
  %v2268 = vsel %vm2256, %v2246, %v2249
  %v2269 = vsel %vm2259, %v2255, 1326507024
  %v2270 = vsel %vm2258, %v2252, %v2269
  %v2271 = vsel %vm2257, %v2268, %v2270
  %v2272 = vshll.u32 %v2232, 8
  %v2273 = vmul.u32.u64.compose %v2272, %v2271
  %v2274 = vextract.low.u32 %v2273
  %v2275 = vextract.high.u32 %v2273
  %v2276 = vmul.u32.u64.compose %v2272, %v2267
  %v2277 = vextract.low.u32 %v2276
  %v2278 = vextract.high.u32 %v2276
  %v2279 = vmul.u32 %v2272, %v2263
  %v2280 = vadd.s32 %v2275, %v2277
  %vm2281 = vc.u32 %v2275, %v2277
  %v2282 = vadd.s32 %v2278, 1
  %v2283 = vsel %vm2281, %v2282, %v2278
  %v2284 = vadd.s32 %v2279, %v2283
  %v2285 = vadd.s32 %v2284, 536870912
  %v2286 = vshrl.u32 %v2285, 30
  %v2287 = vshll.u32 %v2286, 30
  %v2288 = vsub.s32 %v2284, %v2287
  %vm2289 = vcmp.lt.s32.totalorder %v2288, 0
  %v2290 = vsub.s32 0, %v2288
  %v2291 = vsel %vm2289, %v2290, %v2288
  %v2292 = vclz %v2291
  %v2293 = vsub.s32 %v2292, 2
  %vm2294 = vcmp.gt.s32.totalorder 0, %v2293
  %v2295 = vsel %vm2294, 0, %v2293
  %v2296 = vsub.s32 32, %v2295
  %v2297 = vshll.u32 %v2288, %v2295
  %v2298 = vshrl.u32 %v2280, %v2296
  %v2299 = vor.u32 %v2297, %v2298
  %v2300 = vsub.s32 4294967266, %v2295
  %v2301 = vadd.s32 %v2300, 127
  %v2302 = vshll.u32 %v2301, 23
  %v2303 = vor.u32 4788187, %v2302
  %v2304 = vand.u32 2147483647, %v2303
  %v2306 = vcvt.s32.f32 %v2299
  %v2307 = vmul.f32 %v2306, %v2304
  %v2308 = vxor.u32 %v2307, 2147483648
  %v2309 = vsel %vm2226, %v2308, %v2307
  %v2310 = vsub.s32 4, %v2286
  %v2311 = vsel %vm2226, %v2310, %v2286
  %v2312 = vsel %vm2225, %v1697, %v2309
  %v2313 = vsel %vm2225, 0, %v2311
  %v2314 = vcosq.f32.pop %v2312
  %v2315 = vsinq.f32.pop %v2312
  %vm2316 = vweird.f32 %v1697
  %v2317 = vand.u32 %v2313, 3
  %vm2318 = vcmp.lt.s32.totalorder %v2317, 2
  %vm2319 = vcmp.eq.s32.totalorder %v2317, 0
  %v2320 = vxor.u32 %v2315, 2147483648
  %v2321 = vsel %vm2319, %v2314, %v2320
  %vm2322 = vcmp.eq.s32.totalorder %v2317, 2
  %v2323 = vxor.u32 %v2314, 2147483648
  %v2324 = vsel %vm2322, %v2323, %v2315
  %v2325 = vsel %vm2318, %v2321, %v2324
  %v2326 = vsel %vm2316, nan, %v2325
  %v2327 = vand.u32 2147483647, %v1698
  %vm2328 = vcmp.le.f32.partialorder %v2327, 0.7853982
  %vm2329 = vcmp.lt.s32.totalorder %v1698, 0
  %v2330 = vand.u32 %v1698, 2139095040
  %v2331 = vshrl.u32 %v2330, 23
  %v2332 = vsub.s32 %v2331, 127
  %v2333 = vand.u32 2147483647, %v1698
  %v2334 = vand.u32 %v2333, 8388607
  %v2335 = vor.u32 %v2334, 8388608
  %v2336 = vsub.s32 0, %v2335
  %v2337 = vadd.s32 %v2332, 1
  %vm2338 = vcmp.gt.s32.totalorder %v2337, 0
  %v2339 = vsel %vm2338, %v2337, 0
  %v2340 = vshrl.u32 %v2339, 5
  %v2341 = vand.u32 %v2339, 31
  %v2342 = vsub.s32 32, %v2341
  %v2343 = vshrl.u32 683565275, %v2342
  %v2344 = vshll.u32 683565275, %v2341
  %v2345 = vshrl.u32 2475754826, %v2342
  %v2346 = vor.u32 %v2344, %v2345
  %v2347 = vshll.u32 2475754826, %v2341
  %v2348 = vshrl.u32 2131351028, %v2342
  %v2349 = vor.u32 %v2347, %v2348
  %v2350 = vshll.u32 2131351028, %v2341
  %v2351 = vshrl.u32 2102212464, %v2342
  %v2352 = vor.u32 %v2350, %v2351
  %v2353 = vshll.u32 2102212464, %v2341
  %v2354 = vshrl.u32 920167782, %v2342
  %v2355 = vor.u32 %v2353, %v2354
  %v2356 = vshll.u32 920167782, %v2341
  %v2357 = vshrl.u32 1326507024, %v2342
  %v2358 = vor.u32 %v2356, %v2357
  %vm2359 = vcmp.lt.s32.totalorder %v2340, 1
  %vm2360 = vcmp.lt.s32.totalorder %v2340, 2
  %vm2361 = vcmp.lt.s32.totalorder %v2340, 3
  %vm2362 = vcmp.lt.s32.totalorder %v2340, 4
  %v2363 = vsel %vm2359, %v2343, %v2346
  %v2364 = vsel %vm2362, %v2352, 2102212464
  %v2365 = vsel %vm2361, %v2349, %v2364
  %v2366 = vsel %vm2360, %v2363, %v2365
  %v2367 = vsel %vm2359, %v2346, %v2349
  %v2368 = vsel %vm2362, %v2355, 920167782
  %v2369 = vsel %vm2361, %v2352, %v2368
  %v2370 = vsel %vm2360, %v2367, %v2369
  %v2371 = vsel %vm2359, %v2349, %v2352
  %v2372 = vsel %vm2362, %v2358, 1326507024
  %v2373 = vsel %vm2361, %v2355, %v2372
  %v2374 = vsel %vm2360, %v2371, %v2373
  %v2375 = vshll.u32 %v2335, 8
  %v2376 = vmul.u32.u64.compose %v2375, %v2374
  %v2377 = vextract.low.u32 %v2376
  %v2378 = vextract.high.u32 %v2376
  %v2379 = vmul.u32.u64.compose %v2375, %v2370
  %v2380 = vextract.low.u32 %v2379
  %v2381 = vextract.high.u32 %v2379
  %v2382 = vmul.u32 %v2375, %v2366
  %v2383 = vadd.s32 %v2378, %v2380
  %vm2384 = vc.u32 %v2378, %v2380
  %v2385 = vadd.s32 %v2381, 1
  %v2386 = vsel %vm2384, %v2385, %v2381
  %v2387 = vadd.s32 %v2382, %v2386
  %v2388 = vadd.s32 %v2387, 536870912
  %v2389 = vshrl.u32 %v2388, 30
  %v2390 = vshll.u32 %v2389, 30
  %v2391 = vsub.s32 %v2387, %v2390
  %vm2392 = vcmp.lt.s32.totalorder %v2391, 0
  %v2393 = vsub.s32 0, %v2391
  %v2394 = vsel %vm2392, %v2393, %v2391
  %v2395 = vclz %v2394
  %v2396 = vsub.s32 %v2395, 2
  %vm2397 = vcmp.gt.s32.totalorder 0, %v2396
  %v2398 = vsel %vm2397, 0, %v2396
  %v2399 = vsub.s32 32, %v2398
  %v2400 = vshll.u32 %v2391, %v2398
  %v2401 = vshrl.u32 %v2383, %v2399
  %v2402 = vor.u32 %v2400, %v2401
  %v2403 = vsub.s32 4294967266, %v2398
  %v2404 = vadd.s32 %v2403, 127
  %v2405 = vshll.u32 %v2404, 23
  %v2406 = vor.u32 4788187, %v2405
  %v2407 = vand.u32 2147483647, %v2406
  %v2409 = vcvt.s32.f32 %v2402
  %v2410 = vmul.f32 %v2409, %v2407
  %v2411 = vxor.u32 %v2410, 2147483648
  %v2412 = vsel %vm2329, %v2411, %v2410
  %v2413 = vsub.s32 4, %v2389
  %v2414 = vsel %vm2329, %v2413, %v2389
  %v2415 = vsel %vm2328, %v1698, %v2412
  %v2416 = vsel %vm2328, 0, %v2414
  %v2417 = vcosq.f32.pop %v2415
  %v2418 = vsinq.f32.pop %v2415
  %vm2419 = vweird.f32 %v1698
  %v2420 = vand.u32 %v2416, 3
  %vm2421 = vcmp.lt.s32.totalorder %v2420, 2
  %vm2422 = vcmp.eq.s32.totalorder %v2420, 0
  %v2423 = vxor.u32 %v2418, 2147483648
  %v2424 = vsel %vm2422, %v2417, %v2423
  %vm2425 = vcmp.eq.s32.totalorder %v2420, 2
  %v2426 = vxor.u32 %v2417, 2147483648
  %v2427 = vsel %vm2425, %v2426, %v2418
  %v2428 = vsel %vm2421, %v2424, %v2427
  %v2429 = vsel %vm2419, nan, %v2428
  %v2430 = vand.u32 2147483647, %v1699
  %vm2431 = vcmp.le.f32.partialorder %v2430, 0.7853982
  %vm2432 = vcmp.lt.s32.totalorder %v1699, 0
  %v2433 = vand.u32 %v1699, 2139095040
  %v2434 = vshrl.u32 %v2433, 23
  %v2435 = vsub.s32 %v2434, 127
  %v2436 = vand.u32 2147483647, %v1699
  %v2437 = vand.u32 %v2436, 8388607
  %v2438 = vor.u32 %v2437, 8388608
  %v2439 = vsub.s32 0, %v2438
  %v2440 = vadd.s32 %v2435, 1
  %vm2441 = vcmp.gt.s32.totalorder %v2440, 0
  %v2442 = vsel %vm2441, %v2440, 0
  %v2443 = vshrl.u32 %v2442, 5
  %v2444 = vand.u32 %v2442, 31
  %v2445 = vsub.s32 32, %v2444
  %v2446 = vshrl.u32 683565275, %v2445
  %v2447 = vshll.u32 683565275, %v2444
  %v2448 = vshrl.u32 2475754826, %v2445
  %v2449 = vor.u32 %v2447, %v2448
  %v2450 = vshll.u32 2475754826, %v2444
  %v2451 = vshrl.u32 2131351028, %v2445
  %v2452 = vor.u32 %v2450, %v2451
  %v2453 = vshll.u32 2131351028, %v2444
  %v2454 = vshrl.u32 2102212464, %v2445
  %v2455 = vor.u32 %v2453, %v2454
  %v2456 = vshll.u32 2102212464, %v2444
  %v2457 = vshrl.u32 920167782, %v2445
  %v2458 = vor.u32 %v2456, %v2457
  %v2459 = vshll.u32 920167782, %v2444
  %v2460 = vshrl.u32 1326507024, %v2445
  %v2461 = vor.u32 %v2459, %v2460
  %vm2462 = vcmp.lt.s32.totalorder %v2443, 1
  %vm2463 = vcmp.lt.s32.totalorder %v2443, 2
  %vm2464 = vcmp.lt.s32.totalorder %v2443, 3
  %vm2465 = vcmp.lt.s32.totalorder %v2443, 4
  %v2466 = vsel %vm2462, %v2446, %v2449
  %v2467 = vsel %vm2465, %v2455, 2102212464
  %v2468 = vsel %vm2464, %v2452, %v2467
  %v2469 = vsel %vm2463, %v2466, %v2468
  %v2470 = vsel %vm2462, %v2449, %v2452
  %v2471 = vsel %vm2465, %v2458, 920167782
  %v2472 = vsel %vm2464, %v2455, %v2471
  %v2473 = vsel %vm2463, %v2470, %v2472
  %v2474 = vsel %vm2462, %v2452, %v2455
  %v2475 = vsel %vm2465, %v2461, 1326507024
  %v2476 = vsel %vm2464, %v2458, %v2475
  %v2477 = vsel %vm2463, %v2474, %v2476
  %v2478 = vshll.u32 %v2438, 8
  %v2479 = vmul.u32.u64.compose %v2478, %v2477
  %v2480 = vextract.low.u32 %v2479
  %v2481 = vextract.high.u32 %v2479
  %v2482 = vmul.u32.u64.compose %v2478, %v2473
  %v2483 = vextract.low.u32 %v2482
  %v2484 = vextract.high.u32 %v2482
  %v2485 = vmul.u32 %v2478, %v2469
  %v2486 = vadd.s32 %v2481, %v2483
  %vm2487 = vc.u32 %v2481, %v2483
  %v2488 = vadd.s32 %v2484, 1
  %v2489 = vsel %vm2487, %v2488, %v2484
  %v2490 = vadd.s32 %v2485, %v2489
  %v2491 = vadd.s32 %v2490, 536870912
  %v2492 = vshrl.u32 %v2491, 30
  %v2493 = vshll.u32 %v2492, 30
  %v2494 = vsub.s32 %v2490, %v2493
  %vm2495 = vcmp.lt.s32.totalorder %v2494, 0
  %v2496 = vsub.s32 0, %v2494
  %v2497 = vsel %vm2495, %v2496, %v2494
  %v2498 = vclz %v2497
  %v2499 = vsub.s32 %v2498, 2
  %vm2500 = vcmp.gt.s32.totalorder 0, %v2499
  %v2501 = vsel %vm2500, 0, %v2499
  %v2502 = vsub.s32 32, %v2501
  %v2503 = vshll.u32 %v2494, %v2501
  %v2504 = vshrl.u32 %v2486, %v2502
  %v2505 = vor.u32 %v2503, %v2504
  %v2506 = vsub.s32 4294967266, %v2501
  %v2507 = vadd.s32 %v2506, 127
  %v2508 = vshll.u32 %v2507, 23
  %v2509 = vor.u32 4788187, %v2508
  %v2510 = vand.u32 2147483647, %v2509
  %v2512 = vcvt.s32.f32 %v2505
  %v2513 = vmul.f32 %v2512, %v2510
  %v2514 = vxor.u32 %v2513, 2147483648
  %v2515 = vsel %vm2432, %v2514, %v2513
  %v2516 = vsub.s32 4, %v2492
  %v2517 = vsel %vm2432, %v2516, %v2492
  %v2518 = vsel %vm2431, %v1699, %v2515
  %v2519 = vsel %vm2431, 0, %v2517
  %v2520 = vcosq.f32.pop %v2518
  %v2521 = vsinq.f32.pop %v2518
  %vm2522 = vweird.f32 %v1699
  %v2523 = vand.u32 %v2519, 3
  %vm2524 = vcmp.lt.s32.totalorder %v2523, 2
  %vm2525 = vcmp.eq.s32.totalorder %v2523, 0
  %v2526 = vxor.u32 %v2521, 2147483648
  %v2527 = vsel %vm2525, %v2520, %v2526
  %vm2528 = vcmp.eq.s32.totalorder %v2523, 2
  %v2529 = vxor.u32 %v2520, 2147483648
  %v2530 = vsel %vm2528, %v2529, %v2521
  %v2531 = vsel %vm2524, %v2527, %v2530
  %v2532 = vsel %vm2522, nan, %v2531
  %s2533 = scalar_lea.vmem %s1, 192
  %2534 = vst [vmem:[%s2533] sm:$0xff] %v2223
  %2535 = vst [vmem:[%s2533 + $0x8] sm:$0xff] %v2326
  %2536 = vst [vmem:[%s2533 + $0x10] sm:$0xff] %v2429
  %2537 = vst [vmem:[%s2533 + $0x18] sm:$0xff] %v2532
  %v2538 = vmul.f32 %v8, 8.0
  %v2539 = vmul.f32 %v9, 8.0
  %v2540 = vmul.f32 %v10, 8.0
  %v2541 = vmul.f32 %v11, 8.0
  %v2542 = vand.u32 2147483647, %v2538
  %vm2543 = vcmp.le.f32.partialorder %v2542, 0.7853982
  %vm2544 = vcmp.lt.s32.totalorder %v2538, 0
  %v2545 = vand.u32 %v2538, 2139095040
  %v2546 = vshrl.u32 %v2545, 23
  %v2547 = vsub.s32 %v2546, 127
  %v2548 = vand.u32 2147483647, %v2538
  %v2549 = vand.u32 %v2548, 8388607
  %v2550 = vor.u32 %v2549, 8388608
  %v2551 = vsub.s32 0, %v2550
  %v2552 = vadd.s32 %v2547, 1
  %vm2553 = vcmp.gt.s32.totalorder %v2552, 0
  %v2554 = vsel %vm2553, %v2552, 0
  %v2555 = vshrl.u32 %v2554, 5
  %v2556 = vand.u32 %v2554, 31
  %v2557 = vsub.s32 32, %v2556
  %v2558 = vshrl.u32 683565275, %v2557
  %v2559 = vshll.u32 683565275, %v2556
  %v2560 = vshrl.u32 2475754826, %v2557
  %v2561 = vor.u32 %v2559, %v2560
  %v2562 = vshll.u32 2475754826, %v2556
  %v2563 = vshrl.u32 2131351028, %v2557
  %v2564 = vor.u32 %v2562, %v2563
  %v2565 = vshll.u32 2131351028, %v2556
  %v2566 = vshrl.u32 2102212464, %v2557
  %v2567 = vor.u32 %v2565, %v2566
  %v2568 = vshll.u32 2102212464, %v2556
  %v2569 = vshrl.u32 920167782, %v2557
  %v2570 = vor.u32 %v2568, %v2569
  %v2571 = vshll.u32 920167782, %v2556
  %v2572 = vshrl.u32 1326507024, %v2557
  %v2573 = vor.u32 %v2571, %v2572
  %vm2574 = vcmp.lt.s32.totalorder %v2555, 1
  %vm2575 = vcmp.lt.s32.totalorder %v2555, 2
  %vm2576 = vcmp.lt.s32.totalorder %v2555, 3
  %vm2577 = vcmp.lt.s32.totalorder %v2555, 4
  %v2578 = vsel %vm2574, %v2558, %v2561
  %v2579 = vsel %vm2577, %v2567, 2102212464
  %v2580 = vsel %vm2576, %v2564, %v2579
  %v2581 = vsel %vm2575, %v2578, %v2580
  %v2582 = vsel %vm2574, %v2561, %v2564
  %v2583 = vsel %vm2577, %v2570, 920167782
  %v2584 = vsel %vm2576, %v2567, %v2583
  %v2585 = vsel %vm2575, %v2582, %v2584
  %v2586 = vsel %vm2574, %v2564, %v2567
  %v2587 = vsel %vm2577, %v2573, 1326507024
  %v2588 = vsel %vm2576, %v2570, %v2587
  %v2589 = vsel %vm2575, %v2586, %v2588
  %v2590 = vshll.u32 %v2550, 8
  %v2591 = vmul.u32.u64.compose %v2590, %v2589
  %v2592 = vextract.low.u32 %v2591
  %v2593 = vextract.high.u32 %v2591
  %v2594 = vmul.u32.u64.compose %v2590, %v2585
  %v2595 = vextract.low.u32 %v2594
  %v2596 = vextract.high.u32 %v2594
  %v2597 = vmul.u32 %v2590, %v2581
  %v2598 = vadd.s32 %v2593, %v2595
  %vm2599 = vc.u32 %v2593, %v2595
  %v2600 = vadd.s32 %v2596, 1
  %v2601 = vsel %vm2599, %v2600, %v2596
  %v2602 = vadd.s32 %v2597, %v2601
  %v2603 = vadd.s32 %v2602, 536870912
  %v2604 = vshrl.u32 %v2603, 30
  %v2605 = vshll.u32 %v2604, 30
  %v2606 = vsub.s32 %v2602, %v2605
  %vm2607 = vcmp.lt.s32.totalorder %v2606, 0
  %v2608 = vsub.s32 0, %v2606
  %v2609 = vsel %vm2607, %v2608, %v2606
  %v2610 = vclz %v2609
  %v2611 = vsub.s32 %v2610, 2
  %vm2612 = vcmp.gt.s32.totalorder 0, %v2611
  %v2613 = vsel %vm2612, 0, %v2611
  %v2614 = vsub.s32 32, %v2613
  %v2615 = vshll.u32 %v2606, %v2613
  %v2616 = vshrl.u32 %v2598, %v2614
  %v2617 = vor.u32 %v2615, %v2616
  %v2618 = vsub.s32 4294967266, %v2613
  %v2619 = vadd.s32 %v2618, 127
  %v2620 = vshll.u32 %v2619, 23
  %v2621 = vor.u32 4788187, %v2620
  %v2622 = vand.u32 2147483647, %v2621
  %v2624 = vcvt.s32.f32 %v2617
  %v2625 = vmul.f32 %v2624, %v2622
  %v2626 = vxor.u32 %v2625, 2147483648
  %v2627 = vsel %vm2544, %v2626, %v2625
  %v2628 = vsub.s32 4, %v2604
  %v2629 = vsel %vm2544, %v2628, %v2604
  %v2630 = vsel %vm2543, %v2538, %v2627
  %v2631 = vsel %vm2543, 0, %v2629
  %v2632 = vcosq.f32.pop %v2630
  %v2633 = vsinq.f32.pop %v2630
  %vm2634 = vweird.f32 %v2538
  %v2635 = vadd.s32 %v2631, 3
  %v2636 = vand.u32 %v2635, 3
  %vm2637 = vcmp.lt.s32.totalorder %v2636, 2
  %vm2638 = vcmp.eq.s32.totalorder %v2636, 0
  %v2639 = vxor.u32 %v2633, 2147483648
  %v2640 = vsel %vm2638, %v2632, %v2639
  %vm2641 = vcmp.eq.s32.totalorder %v2636, 2
  %v2642 = vxor.u32 %v2632, 2147483648
  %v2643 = vsel %vm2641, %v2642, %v2633
  %v2644 = vsel %vm2637, %v2640, %v2643
  %v2645 = vsel %vm2634, nan, %v2644
  %v2646 = vand.u32 2147483647, %v2539
  %vm2647 = vcmp.le.f32.partialorder %v2646, 0.7853982
  %vm2648 = vcmp.lt.s32.totalorder %v2539, 0
  %v2649 = vand.u32 %v2539, 2139095040
  %v2650 = vshrl.u32 %v2649, 23
  %v2651 = vsub.s32 %v2650, 127
  %v2652 = vand.u32 2147483647, %v2539
  %v2653 = vand.u32 %v2652, 8388607
  %v2654 = vor.u32 %v2653, 8388608
  %v2655 = vsub.s32 0, %v2654
  %v2656 = vadd.s32 %v2651, 1
  %vm2657 = vcmp.gt.s32.totalorder %v2656, 0
  %v2658 = vsel %vm2657, %v2656, 0
  %v2659 = vshrl.u32 %v2658, 5
  %v2660 = vand.u32 %v2658, 31
  %v2661 = vsub.s32 32, %v2660
  %v2662 = vshrl.u32 683565275, %v2661
  %v2663 = vshll.u32 683565275, %v2660
  %v2664 = vshrl.u32 2475754826, %v2661
  %v2665 = vor.u32 %v2663, %v2664
  %v2666 = vshll.u32 2475754826, %v2660
  %v2667 = vshrl.u32 2131351028, %v2661
  %v2668 = vor.u32 %v2666, %v2667
  %v2669 = vshll.u32 2131351028, %v2660
  %v2670 = vshrl.u32 2102212464, %v2661
  %v2671 = vor.u32 %v2669, %v2670
  %v2672 = vshll.u32 2102212464, %v2660
  %v2673 = vshrl.u32 920167782, %v2661
  %v2674 = vor.u32 %v2672, %v2673
  %v2675 = vshll.u32 920167782, %v2660
  %v2676 = vshrl.u32 1326507024, %v2661
  %v2677 = vor.u32 %v2675, %v2676
  %vm2678 = vcmp.lt.s32.totalorder %v2659, 1
  %vm2679 = vcmp.lt.s32.totalorder %v2659, 2
  %vm2680 = vcmp.lt.s32.totalorder %v2659, 3
  %vm2681 = vcmp.lt.s32.totalorder %v2659, 4
  %v2682 = vsel %vm2678, %v2662, %v2665
  %v2683 = vsel %vm2681, %v2671, 2102212464
  %v2684 = vsel %vm2680, %v2668, %v2683
  %v2685 = vsel %vm2679, %v2682, %v2684
  %v2686 = vsel %vm2678, %v2665, %v2668
  %v2687 = vsel %vm2681, %v2674, 920167782
  %v2688 = vsel %vm2680, %v2671, %v2687
  %v2689 = vsel %vm2679, %v2686, %v2688
  %v2690 = vsel %vm2678, %v2668, %v2671
  %v2691 = vsel %vm2681, %v2677, 1326507024
  %v2692 = vsel %vm2680, %v2674, %v2691
  %v2693 = vsel %vm2679, %v2690, %v2692
  %v2694 = vshll.u32 %v2654, 8
  %v2695 = vmul.u32.u64.compose %v2694, %v2693
  %v2696 = vextract.low.u32 %v2695
  %v2697 = vextract.high.u32 %v2695
  %v2698 = vmul.u32.u64.compose %v2694, %v2689
  %v2699 = vextract.low.u32 %v2698
  %v2700 = vextract.high.u32 %v2698
  %v2701 = vmul.u32 %v2694, %v2685
  %v2702 = vadd.s32 %v2697, %v2699
  %vm2703 = vc.u32 %v2697, %v2699
  %v2704 = vadd.s32 %v2700, 1
  %v2705 = vsel %vm2703, %v2704, %v2700
  %v2706 = vadd.s32 %v2701, %v2705
  %v2707 = vadd.s32 %v2706, 536870912
  %v2708 = vshrl.u32 %v2707, 30
  %v2709 = vshll.u32 %v2708, 30
  %v2710 = vsub.s32 %v2706, %v2709
  %vm2711 = vcmp.lt.s32.totalorder %v2710, 0
  %v2712 = vsub.s32 0, %v2710
  %v2713 = vsel %vm2711, %v2712, %v2710
  %v2714 = vclz %v2713
  %v2715 = vsub.s32 %v2714, 2
  %vm2716 = vcmp.gt.s32.totalorder 0, %v2715
  %v2717 = vsel %vm2716, 0, %v2715
  %v2718 = vsub.s32 32, %v2717
  %v2719 = vshll.u32 %v2710, %v2717
  %v2720 = vshrl.u32 %v2702, %v2718
  %v2721 = vor.u32 %v2719, %v2720
  %v2722 = vsub.s32 4294967266, %v2717
  %v2723 = vadd.s32 %v2722, 127
  %v2724 = vshll.u32 %v2723, 23
  %v2725 = vor.u32 4788187, %v2724
  %v2726 = vand.u32 2147483647, %v2725
  %v2728 = vcvt.s32.f32 %v2721
  %v2729 = vmul.f32 %v2728, %v2726
  %v2730 = vxor.u32 %v2729, 2147483648
  %v2731 = vsel %vm2648, %v2730, %v2729
  %v2732 = vsub.s32 4, %v2708
  %v2733 = vsel %vm2648, %v2732, %v2708
  %v2734 = vsel %vm2647, %v2539, %v2731
  %v2735 = vsel %vm2647, 0, %v2733
  %v2736 = vcosq.f32.pop %v2734
  %v2737 = vsinq.f32.pop %v2734
  %vm2738 = vweird.f32 %v2539
  %v2739 = vadd.s32 %v2735, 3
  %v2740 = vand.u32 %v2739, 3
  %vm2741 = vcmp.lt.s32.totalorder %v2740, 2
  %vm2742 = vcmp.eq.s32.totalorder %v2740, 0
  %v2743 = vxor.u32 %v2737, 2147483648
  %v2744 = vsel %vm2742, %v2736, %v2743
  %vm2745 = vcmp.eq.s32.totalorder %v2740, 2
  %v2746 = vxor.u32 %v2736, 2147483648
  %v2747 = vsel %vm2745, %v2746, %v2737
  %v2748 = vsel %vm2741, %v2744, %v2747
  %v2749 = vsel %vm2738, nan, %v2748
  %v2750 = vand.u32 2147483647, %v2540
  %vm2751 = vcmp.le.f32.partialorder %v2750, 0.7853982
  %vm2752 = vcmp.lt.s32.totalorder %v2540, 0
  %v2753 = vand.u32 %v2540, 2139095040
  %v2754 = vshrl.u32 %v2753, 23
  %v2755 = vsub.s32 %v2754, 127
  %v2756 = vand.u32 2147483647, %v2540
  %v2757 = vand.u32 %v2756, 8388607
  %v2758 = vor.u32 %v2757, 8388608
  %v2759 = vsub.s32 0, %v2758
  %v2760 = vadd.s32 %v2755, 1
  %vm2761 = vcmp.gt.s32.totalorder %v2760, 0
  %v2762 = vsel %vm2761, %v2760, 0
  %v2763 = vshrl.u32 %v2762, 5
  %v2764 = vand.u32 %v2762, 31
  %v2765 = vsub.s32 32, %v2764
  %v2766 = vshrl.u32 683565275, %v2765
  %v2767 = vshll.u32 683565275, %v2764
  %v2768 = vshrl.u32 2475754826, %v2765
  %v2769 = vor.u32 %v2767, %v2768
  %v2770 = vshll.u32 2475754826, %v2764
  %v2771 = vshrl.u32 2131351028, %v2765
  %v2772 = vor.u32 %v2770, %v2771
  %v2773 = vshll.u32 2131351028, %v2764
  %v2774 = vshrl.u32 2102212464, %v2765
  %v2775 = vor.u32 %v2773, %v2774
  %v2776 = vshll.u32 2102212464, %v2764
  %v2777 = vshrl.u32 920167782, %v2765
  %v2778 = vor.u32 %v2776, %v2777
  %v2779 = vshll.u32 920167782, %v2764
  %v2780 = vshrl.u32 1326507024, %v2765
  %v2781 = vor.u32 %v2779, %v2780
  %vm2782 = vcmp.lt.s32.totalorder %v2763, 1
  %vm2783 = vcmp.lt.s32.totalorder %v2763, 2
  %vm2784 = vcmp.lt.s32.totalorder %v2763, 3
  %vm2785 = vcmp.lt.s32.totalorder %v2763, 4
  %v2786 = vsel %vm2782, %v2766, %v2769
  %v2787 = vsel %vm2785, %v2775, 2102212464
  %v2788 = vsel %vm2784, %v2772, %v2787
  %v2789 = vsel %vm2783, %v2786, %v2788
  %v2790 = vsel %vm2782, %v2769, %v2772
  %v2791 = vsel %vm2785, %v2778, 920167782
  %v2792 = vsel %vm2784, %v2775, %v2791
  %v2793 = vsel %vm2783, %v2790, %v2792
  %v2794 = vsel %vm2782, %v2772, %v2775
  %v2795 = vsel %vm2785, %v2781, 1326507024
  %v2796 = vsel %vm2784, %v2778, %v2795
  %v2797 = vsel %vm2783, %v2794, %v2796
  %v2798 = vshll.u32 %v2758, 8
  %v2799 = vmul.u32.u64.compose %v2798, %v2797
  %v2800 = vextract.low.u32 %v2799
  %v2801 = vextract.high.u32 %v2799
  %v2802 = vmul.u32.u64.compose %v2798, %v2793
  %v2803 = vextract.low.u32 %v2802
  %v2804 = vextract.high.u32 %v2802
  %v2805 = vmul.u32 %v2798, %v2789
  %v2806 = vadd.s32 %v2801, %v2803
  %vm2807 = vc.u32 %v2801, %v2803
  %v2808 = vadd.s32 %v2804, 1
  %v2809 = vsel %vm2807, %v2808, %v2804
  %v2810 = vadd.s32 %v2805, %v2809
  %v2811 = vadd.s32 %v2810, 536870912
  %v2812 = vshrl.u32 %v2811, 30
  %v2813 = vshll.u32 %v2812, 30
  %v2814 = vsub.s32 %v2810, %v2813
  %vm2815 = vcmp.lt.s32.totalorder %v2814, 0
  %v2816 = vsub.s32 0, %v2814
  %v2817 = vsel %vm2815, %v2816, %v2814
  %v2818 = vclz %v2817
  %v2819 = vsub.s32 %v2818, 2
  %vm2820 = vcmp.gt.s32.totalorder 0, %v2819
  %v2821 = vsel %vm2820, 0, %v2819
  %v2822 = vsub.s32 32, %v2821
  %v2823 = vshll.u32 %v2814, %v2821
  %v2824 = vshrl.u32 %v2806, %v2822
  %v2825 = vor.u32 %v2823, %v2824
  %v2826 = vsub.s32 4294967266, %v2821
  %v2827 = vadd.s32 %v2826, 127
  %v2828 = vshll.u32 %v2827, 23
  %v2829 = vor.u32 4788187, %v2828
  %v2830 = vand.u32 2147483647, %v2829
  %v2832 = vcvt.s32.f32 %v2825
  %v2833 = vmul.f32 %v2832, %v2830
  %v2834 = vxor.u32 %v2833, 2147483648
  %v2835 = vsel %vm2752, %v2834, %v2833
  %v2836 = vsub.s32 4, %v2812
  %v2837 = vsel %vm2752, %v2836, %v2812
  %v2838 = vsel %vm2751, %v2540, %v2835
  %v2839 = vsel %vm2751, 0, %v2837
  %v2840 = vcosq.f32.pop %v2838
  %v2841 = vsinq.f32.pop %v2838
  %vm2842 = vweird.f32 %v2540
  %v2843 = vadd.s32 %v2839, 3
  %v2844 = vand.u32 %v2843, 3
  %vm2845 = vcmp.lt.s32.totalorder %v2844, 2
  %vm2846 = vcmp.eq.s32.totalorder %v2844, 0
  %v2847 = vxor.u32 %v2841, 2147483648
  %v2848 = vsel %vm2846, %v2840, %v2847
  %vm2849 = vcmp.eq.s32.totalorder %v2844, 2
  %v2850 = vxor.u32 %v2840, 2147483648
  %v2851 = vsel %vm2849, %v2850, %v2841
  %v2852 = vsel %vm2845, %v2848, %v2851
  %v2853 = vsel %vm2842, nan, %v2852
  %v2854 = vand.u32 2147483647, %v2541
  %vm2855 = vcmp.le.f32.partialorder %v2854, 0.7853982
  %vm2856 = vcmp.lt.s32.totalorder %v2541, 0
  %v2857 = vand.u32 %v2541, 2139095040
  %v2858 = vshrl.u32 %v2857, 23
  %v2859 = vsub.s32 %v2858, 127
  %v2860 = vand.u32 2147483647, %v2541
  %v2861 = vand.u32 %v2860, 8388607
  %v2862 = vor.u32 %v2861, 8388608
  %v2863 = vsub.s32 0, %v2862
  %v2864 = vadd.s32 %v2859, 1
  %vm2865 = vcmp.gt.s32.totalorder %v2864, 0
  %v2866 = vsel %vm2865, %v2864, 0
  %v2867 = vshrl.u32 %v2866, 5
  %v2868 = vand.u32 %v2866, 31
  %v2869 = vsub.s32 32, %v2868
  %v2870 = vshrl.u32 683565275, %v2869
  %v2871 = vshll.u32 683565275, %v2868
  %v2872 = vshrl.u32 2475754826, %v2869
  %v2873 = vor.u32 %v2871, %v2872
  %v2874 = vshll.u32 2475754826, %v2868
  %v2875 = vshrl.u32 2131351028, %v2869
  %v2876 = vor.u32 %v2874, %v2875
  %v2877 = vshll.u32 2131351028, %v2868
  %v2878 = vshrl.u32 2102212464, %v2869
  %v2879 = vor.u32 %v2877, %v2878
  %v2880 = vshll.u32 2102212464, %v2868
  %v2881 = vshrl.u32 920167782, %v2869
  %v2882 = vor.u32 %v2880, %v2881
  %v2883 = vshll.u32 920167782, %v2868
  %v2884 = vshrl.u32 1326507024, %v2869
  %v2885 = vor.u32 %v2883, %v2884
  %vm2886 = vcmp.lt.s32.totalorder %v2867, 1
  %vm2887 = vcmp.lt.s32.totalorder %v2867, 2
  %vm2888 = vcmp.lt.s32.totalorder %v2867, 3
  %vm2889 = vcmp.lt.s32.totalorder %v2867, 4
  %v2890 = vsel %vm2886, %v2870, %v2873
  %v2891 = vsel %vm2889, %v2879, 2102212464
  %v2892 = vsel %vm2888, %v2876, %v2891
  %v2893 = vsel %vm2887, %v2890, %v2892
  %v2894 = vsel %vm2886, %v2873, %v2876
  %v2895 = vsel %vm2889, %v2882, 920167782
  %v2896 = vsel %vm2888, %v2879, %v2895
  %v2897 = vsel %vm2887, %v2894, %v2896
  %v2898 = vsel %vm2886, %v2876, %v2879
  %v2899 = vsel %vm2889, %v2885, 1326507024
  %v2900 = vsel %vm2888, %v2882, %v2899
  %v2901 = vsel %vm2887, %v2898, %v2900
  %v2902 = vshll.u32 %v2862, 8
  %v2903 = vmul.u32.u64.compose %v2902, %v2901
  %v2904 = vextract.low.u32 %v2903
  %v2905 = vextract.high.u32 %v2903
  %v2906 = vmul.u32.u64.compose %v2902, %v2897
  %v2907 = vextract.low.u32 %v2906
  %v2908 = vextract.high.u32 %v2906
  %v2909 = vmul.u32 %v2902, %v2893
  %v2910 = vadd.s32 %v2905, %v2907
  %vm2911 = vc.u32 %v2905, %v2907
  %v2912 = vadd.s32 %v2908, 1
  %v2913 = vsel %vm2911, %v2912, %v2908
  %v2914 = vadd.s32 %v2909, %v2913
  %v2915 = vadd.s32 %v2914, 536870912
  %v2916 = vshrl.u32 %v2915, 30
  %v2917 = vshll.u32 %v2916, 30
  %v2918 = vsub.s32 %v2914, %v2917
  %vm2919 = vcmp.lt.s32.totalorder %v2918, 0
  %v2920 = vsub.s32 0, %v2918
  %v2921 = vsel %vm2919, %v2920, %v2918
  %v2922 = vclz %v2921
  %v2923 = vsub.s32 %v2922, 2
  %vm2924 = vcmp.gt.s32.totalorder 0, %v2923
  %v2925 = vsel %vm2924, 0, %v2923
  %v2926 = vsub.s32 32, %v2925
  %v2927 = vshll.u32 %v2918, %v2925
  %v2928 = vshrl.u32 %v2910, %v2926
  %v2929 = vor.u32 %v2927, %v2928
  %v2930 = vsub.s32 4294967266, %v2925
  %v2931 = vadd.s32 %v2930, 127
  %v2932 = vshll.u32 %v2931, 23
  %v2933 = vor.u32 4788187, %v2932
  %v2934 = vand.u32 2147483647, %v2933
  %v2936 = vcvt.s32.f32 %v2929
  %v2937 = vmul.f32 %v2936, %v2934
  %v2938 = vxor.u32 %v2937, 2147483648
  %v2939 = vsel %vm2856, %v2938, %v2937
  %v2940 = vsub.s32 4, %v2916
  %v2941 = vsel %vm2856, %v2940, %v2916
  %v2942 = vsel %vm2855, %v2541, %v2939
  %v2943 = vsel %vm2855, 0, %v2941
  %v2944 = vcosq.f32.pop %v2942
  %v2945 = vsinq.f32.pop %v2942
  %vm2946 = vweird.f32 %v2541
  %v2947 = vadd.s32 %v2943, 3
  %v2948 = vand.u32 %v2947, 3
  %vm2949 = vcmp.lt.s32.totalorder %v2948, 2
  %vm2950 = vcmp.eq.s32.totalorder %v2948, 0
  %v2951 = vxor.u32 %v2945, 2147483648
  %v2952 = vsel %vm2950, %v2944, %v2951
  %vm2953 = vcmp.eq.s32.totalorder %v2948, 2
  %v2954 = vxor.u32 %v2944, 2147483648
  %v2955 = vsel %vm2953, %v2954, %v2945
  %v2956 = vsel %vm2949, %v2952, %v2955
  %v2957 = vsel %vm2946, nan, %v2956
  %s2958 = scalar_lea.vmem %s1, 224
  %2959 = vst [vmem:[%s2958] sm:$0xff] %v2645
  %2960 = vst [vmem:[%s2958 + $0x8] sm:$0xff] %v2749
  %2961 = vst [vmem:[%s2958 + $0x10] sm:$0xff] %v2853
  %2962 = vst [vmem:[%s2958 + $0x18] sm:$0xff] %v2957
  %v2963 = vand.u32 2147483647, %v2538
  %vm2964 = vcmp.le.f32.partialorder %v2963, 0.7853982
  %vm2965 = vcmp.lt.s32.totalorder %v2538, 0
  %v2966 = vand.u32 %v2538, 2139095040
  %v2967 = vshrl.u32 %v2966, 23
  %v2968 = vsub.s32 %v2967, 127
  %v2969 = vand.u32 2147483647, %v2538
  %v2970 = vand.u32 %v2969, 8388607
  %v2971 = vor.u32 %v2970, 8388608
  %v2972 = vsub.s32 0, %v2971
  %v2973 = vadd.s32 %v2968, 1
  %vm2974 = vcmp.gt.s32.totalorder %v2973, 0
  %v2975 = vsel %vm2974, %v2973, 0
  %v2976 = vshrl.u32 %v2975, 5
  %v2977 = vand.u32 %v2975, 31
  %v2978 = vsub.s32 32, %v2977
  %v2979 = vshrl.u32 683565275, %v2978
  %v2980 = vshll.u32 683565275, %v2977
  %v2981 = vshrl.u32 2475754826, %v2978
  %v2982 = vor.u32 %v2980, %v2981
  %v2983 = vshll.u32 2475754826, %v2977
  %v2984 = vshrl.u32 2131351028, %v2978
  %v2985 = vor.u32 %v2983, %v2984
  %v2986 = vshll.u32 2131351028, %v2977
  %v2987 = vshrl.u32 2102212464, %v2978
  %v2988 = vor.u32 %v2986, %v2987
  %v2989 = vshll.u32 2102212464, %v2977
  %v2990 = vshrl.u32 920167782, %v2978
  %v2991 = vor.u32 %v2989, %v2990
  %v2992 = vshll.u32 920167782, %v2977
  %v2993 = vshrl.u32 1326507024, %v2978
  %v2994 = vor.u32 %v2992, %v2993
  %vm2995 = vcmp.lt.s32.totalorder %v2976, 1
  %vm2996 = vcmp.lt.s32.totalorder %v2976, 2
  %vm2997 = vcmp.lt.s32.totalorder %v2976, 3
  %vm2998 = vcmp.lt.s32.totalorder %v2976, 4
  %v2999 = vsel %vm2995, %v2979, %v2982
  %v3000 = vsel %vm2998, %v2988, 2102212464
  %v3001 = vsel %vm2997, %v2985, %v3000
  %v3002 = vsel %vm2996, %v2999, %v3001
  %v3003 = vsel %vm2995, %v2982, %v2985
  %v3004 = vsel %vm2998, %v2991, 920167782
  %v3005 = vsel %vm2997, %v2988, %v3004
  %v3006 = vsel %vm2996, %v3003, %v3005
  %v3007 = vsel %vm2995, %v2985, %v2988
  %v3008 = vsel %vm2998, %v2994, 1326507024
  %v3009 = vsel %vm2997, %v2991, %v3008
  %v3010 = vsel %vm2996, %v3007, %v3009
  %v3011 = vshll.u32 %v2971, 8
  %v3012 = vmul.u32.u64.compose %v3011, %v3010
  %v3013 = vextract.low.u32 %v3012
  %v3014 = vextract.high.u32 %v3012
  %v3015 = vmul.u32.u64.compose %v3011, %v3006
  %v3016 = vextract.low.u32 %v3015
  %v3017 = vextract.high.u32 %v3015
  %v3018 = vmul.u32 %v3011, %v3002
  %v3019 = vadd.s32 %v3014, %v3016
  %vm3020 = vc.u32 %v3014, %v3016
  %v3021 = vadd.s32 %v3017, 1
  %v3022 = vsel %vm3020, %v3021, %v3017
  %v3023 = vadd.s32 %v3018, %v3022
  %v3024 = vadd.s32 %v3023, 536870912
  %v3025 = vshrl.u32 %v3024, 30
  %v3026 = vshll.u32 %v3025, 30
  %v3027 = vsub.s32 %v3023, %v3026
  %vm3028 = vcmp.lt.s32.totalorder %v3027, 0
  %v3029 = vsub.s32 0, %v3027
  %v3030 = vsel %vm3028, %v3029, %v3027
  %v3031 = vclz %v3030
  %v3032 = vsub.s32 %v3031, 2
  %vm3033 = vcmp.gt.s32.totalorder 0, %v3032
  %v3034 = vsel %vm3033, 0, %v3032
  %v3035 = vsub.s32 32, %v3034
  %v3036 = vshll.u32 %v3027, %v3034
  %v3037 = vshrl.u32 %v3019, %v3035
  %v3038 = vor.u32 %v3036, %v3037
  %v3039 = vsub.s32 4294967266, %v3034
  %v3040 = vadd.s32 %v3039, 127
  %v3041 = vshll.u32 %v3040, 23
  %v3042 = vor.u32 4788187, %v3041
  %v3043 = vand.u32 2147483647, %v3042
  %v3045 = vcvt.s32.f32 %v3038
  %v3046 = vmul.f32 %v3045, %v3043
  %v3047 = vxor.u32 %v3046, 2147483648
  %v3048 = vsel %vm2965, %v3047, %v3046
  %v3049 = vsub.s32 4, %v3025
  %v3050 = vsel %vm2965, %v3049, %v3025
  %v3051 = vsel %vm2964, %v2538, %v3048
  %v3052 = vsel %vm2964, 0, %v3050
  %v3053 = vcosq.f32.pop %v3051
  %v3054 = vsinq.f32.pop %v3051
  %vm3055 = vweird.f32 %v2538
  %v3056 = vand.u32 %v3052, 3
  %vm3057 = vcmp.lt.s32.totalorder %v3056, 2
  %vm3058 = vcmp.eq.s32.totalorder %v3056, 0
  %v3059 = vxor.u32 %v3054, 2147483648
  %v3060 = vsel %vm3058, %v3053, %v3059
  %vm3061 = vcmp.eq.s32.totalorder %v3056, 2
  %v3062 = vxor.u32 %v3053, 2147483648
  %v3063 = vsel %vm3061, %v3062, %v3054
  %v3064 = vsel %vm3057, %v3060, %v3063
  %v3065 = vsel %vm3055, nan, %v3064
  %v3066 = vand.u32 2147483647, %v2539
  %vm3067 = vcmp.le.f32.partialorder %v3066, 0.7853982
  %vm3068 = vcmp.lt.s32.totalorder %v2539, 0
  %v3069 = vand.u32 %v2539, 2139095040
  %v3070 = vshrl.u32 %v3069, 23
  %v3071 = vsub.s32 %v3070, 127
  %v3072 = vand.u32 2147483647, %v2539
  %v3073 = vand.u32 %v3072, 8388607
  %v3074 = vor.u32 %v3073, 8388608
  %v3075 = vsub.s32 0, %v3074
  %v3076 = vadd.s32 %v3071, 1
  %vm3077 = vcmp.gt.s32.totalorder %v3076, 0
  %v3078 = vsel %vm3077, %v3076, 0
  %v3079 = vshrl.u32 %v3078, 5
  %v3080 = vand.u32 %v3078, 31
  %v3081 = vsub.s32 32, %v3080
  %v3082 = vshrl.u32 683565275, %v3081
  %v3083 = vshll.u32 683565275, %v3080
  %v3084 = vshrl.u32 2475754826, %v3081
  %v3085 = vor.u32 %v3083, %v3084
  %v3086 = vshll.u32 2475754826, %v3080
  %v3087 = vshrl.u32 2131351028, %v3081
  %v3088 = vor.u32 %v3086, %v3087
  %v3089 = vshll.u32 2131351028, %v3080
  %v3090 = vshrl.u32 2102212464, %v3081
  %v3091 = vor.u32 %v3089, %v3090
  %v3092 = vshll.u32 2102212464, %v3080
  %v3093 = vshrl.u32 920167782, %v3081
  %v3094 = vor.u32 %v3092, %v3093
  %v3095 = vshll.u32 920167782, %v3080
  %v3096 = vshrl.u32 1326507024, %v3081
  %v3097 = vor.u32 %v3095, %v3096
  %vm3098 = vcmp.lt.s32.totalorder %v3079, 1
  %vm3099 = vcmp.lt.s32.totalorder %v3079, 2
  %vm3100 = vcmp.lt.s32.totalorder %v3079, 3
  %vm3101 = vcmp.lt.s32.totalorder %v3079, 4
  %v3102 = vsel %vm3098, %v3082, %v3085
  %v3103 = vsel %vm3101, %v3091, 2102212464
  %v3104 = vsel %vm3100, %v3088, %v3103
  %v3105 = vsel %vm3099, %v3102, %v3104
  %v3106 = vsel %vm3098, %v3085, %v3088
  %v3107 = vsel %vm3101, %v3094, 920167782
  %v3108 = vsel %vm3100, %v3091, %v3107
  %v3109 = vsel %vm3099, %v3106, %v3108
  %v3110 = vsel %vm3098, %v3088, %v3091
  %v3111 = vsel %vm3101, %v3097, 1326507024
  %v3112 = vsel %vm3100, %v3094, %v3111
  %v3113 = vsel %vm3099, %v3110, %v3112
  %v3114 = vshll.u32 %v3074, 8
  %v3115 = vmul.u32.u64.compose %v3114, %v3113
  %v3116 = vextract.low.u32 %v3115
  %v3117 = vextract.high.u32 %v3115
  %v3118 = vmul.u32.u64.compose %v3114, %v3109
  %v3119 = vextract.low.u32 %v3118
  %v3120 = vextract.high.u32 %v3118
  %v3121 = vmul.u32 %v3114, %v3105
  %v3122 = vadd.s32 %v3117, %v3119
  %vm3123 = vc.u32 %v3117, %v3119
  %v3124 = vadd.s32 %v3120, 1
  %v3125 = vsel %vm3123, %v3124, %v3120
  %v3126 = vadd.s32 %v3121, %v3125
  %v3127 = vadd.s32 %v3126, 536870912
  %v3128 = vshrl.u32 %v3127, 30
  %v3129 = vshll.u32 %v3128, 30
  %v3130 = vsub.s32 %v3126, %v3129
  %vm3131 = vcmp.lt.s32.totalorder %v3130, 0
  %v3132 = vsub.s32 0, %v3130
  %v3133 = vsel %vm3131, %v3132, %v3130
  %v3134 = vclz %v3133
  %v3135 = vsub.s32 %v3134, 2
  %vm3136 = vcmp.gt.s32.totalorder 0, %v3135
  %v3137 = vsel %vm3136, 0, %v3135
  %v3138 = vsub.s32 32, %v3137
  %v3139 = vshll.u32 %v3130, %v3137
  %v3140 = vshrl.u32 %v3122, %v3138
  %v3141 = vor.u32 %v3139, %v3140
  %v3142 = vsub.s32 4294967266, %v3137
  %v3143 = vadd.s32 %v3142, 127
  %v3144 = vshll.u32 %v3143, 23
  %v3145 = vor.u32 4788187, %v3144
  %v3146 = vand.u32 2147483647, %v3145
  %v3148 = vcvt.s32.f32 %v3141
  %v3149 = vmul.f32 %v3148, %v3146
  %v3150 = vxor.u32 %v3149, 2147483648
  %v3151 = vsel %vm3068, %v3150, %v3149
  %v3152 = vsub.s32 4, %v3128
  %v3153 = vsel %vm3068, %v3152, %v3128
  %v3154 = vsel %vm3067, %v2539, %v3151
  %v3155 = vsel %vm3067, 0, %v3153
  %v3156 = vcosq.f32.pop %v3154
  %v3157 = vsinq.f32.pop %v3154
  %vm3158 = vweird.f32 %v2539
  %v3159 = vand.u32 %v3155, 3
  %vm3160 = vcmp.lt.s32.totalorder %v3159, 2
  %vm3161 = vcmp.eq.s32.totalorder %v3159, 0
  %v3162 = vxor.u32 %v3157, 2147483648
  %v3163 = vsel %vm3161, %v3156, %v3162
  %vm3164 = vcmp.eq.s32.totalorder %v3159, 2
  %v3165 = vxor.u32 %v3156, 2147483648
  %v3166 = vsel %vm3164, %v3165, %v3157
  %v3167 = vsel %vm3160, %v3163, %v3166
  %v3168 = vsel %vm3158, nan, %v3167
  %v3169 = vand.u32 2147483647, %v2540
  %vm3170 = vcmp.le.f32.partialorder %v3169, 0.7853982
  %vm3171 = vcmp.lt.s32.totalorder %v2540, 0
  %v3172 = vand.u32 %v2540, 2139095040
  %v3173 = vshrl.u32 %v3172, 23
  %v3174 = vsub.s32 %v3173, 127
  %v3175 = vand.u32 2147483647, %v2540
  %v3176 = vand.u32 %v3175, 8388607
  %v3177 = vor.u32 %v3176, 8388608
  %v3178 = vsub.s32 0, %v3177
  %v3179 = vadd.s32 %v3174, 1
  %vm3180 = vcmp.gt.s32.totalorder %v3179, 0
  %v3181 = vsel %vm3180, %v3179, 0
  %v3182 = vshrl.u32 %v3181, 5
  %v3183 = vand.u32 %v3181, 31
  %v3184 = vsub.s32 32, %v3183
  %v3185 = vshrl.u32 683565275, %v3184
  %v3186 = vshll.u32 683565275, %v3183
  %v3187 = vshrl.u32 2475754826, %v3184
  %v3188 = vor.u32 %v3186, %v3187
  %v3189 = vshll.u32 2475754826, %v3183
  %v3190 = vshrl.u32 2131351028, %v3184
  %v3191 = vor.u32 %v3189, %v3190
  %v3192 = vshll.u32 2131351028, %v3183
  %v3193 = vshrl.u32 2102212464, %v3184
  %v3194 = vor.u32 %v3192, %v3193
  %v3195 = vshll.u32 2102212464, %v3183
  %v3196 = vshrl.u32 920167782, %v3184
  %v3197 = vor.u32 %v3195, %v3196
  %v3198 = vshll.u32 920167782, %v3183
  %v3199 = vshrl.u32 1326507024, %v3184
  %v3200 = vor.u32 %v3198, %v3199
  %vm3201 = vcmp.lt.s32.totalorder %v3182, 1
  %vm3202 = vcmp.lt.s32.totalorder %v3182, 2
  %vm3203 = vcmp.lt.s32.totalorder %v3182, 3
  %vm3204 = vcmp.lt.s32.totalorder %v3182, 4
  %v3205 = vsel %vm3201, %v3185, %v3188
  %v3206 = vsel %vm3204, %v3194, 2102212464
  %v3207 = vsel %vm3203, %v3191, %v3206
  %v3208 = vsel %vm3202, %v3205, %v3207
  %v3209 = vsel %vm3201, %v3188, %v3191
  %v3210 = vsel %vm3204, %v3197, 920167782
  %v3211 = vsel %vm3203, %v3194, %v3210
  %v3212 = vsel %vm3202, %v3209, %v3211
  %v3213 = vsel %vm3201, %v3191, %v3194
  %v3214 = vsel %vm3204, %v3200, 1326507024
  %v3215 = vsel %vm3203, %v3197, %v3214
  %v3216 = vsel %vm3202, %v3213, %v3215
  %v3217 = vshll.u32 %v3177, 8
  %v3218 = vmul.u32.u64.compose %v3217, %v3216
  %v3219 = vextract.low.u32 %v3218
  %v3220 = vextract.high.u32 %v3218
  %v3221 = vmul.u32.u64.compose %v3217, %v3212
  %v3222 = vextract.low.u32 %v3221
  %v3223 = vextract.high.u32 %v3221
  %v3224 = vmul.u32 %v3217, %v3208
  %v3225 = vadd.s32 %v3220, %v3222
  %vm3226 = vc.u32 %v3220, %v3222
  %v3227 = vadd.s32 %v3223, 1
  %v3228 = vsel %vm3226, %v3227, %v3223
  %v3229 = vadd.s32 %v3224, %v3228
  %v3230 = vadd.s32 %v3229, 536870912
  %v3231 = vshrl.u32 %v3230, 30
  %v3232 = vshll.u32 %v3231, 30
  %v3233 = vsub.s32 %v3229, %v3232
  %vm3234 = vcmp.lt.s32.totalorder %v3233, 0
  %v3235 = vsub.s32 0, %v3233
  %v3236 = vsel %vm3234, %v3235, %v3233
  %v3237 = vclz %v3236
  %v3238 = vsub.s32 %v3237, 2
  %vm3239 = vcmp.gt.s32.totalorder 0, %v3238
  %v3240 = vsel %vm3239, 0, %v3238
  %v3241 = vsub.s32 32, %v3240
  %v3242 = vshll.u32 %v3233, %v3240
  %v3243 = vshrl.u32 %v3225, %v3241
  %v3244 = vor.u32 %v3242, %v3243
  %v3245 = vsub.s32 4294967266, %v3240
  %v3246 = vadd.s32 %v3245, 127
  %v3247 = vshll.u32 %v3246, 23
  %v3248 = vor.u32 4788187, %v3247
  %v3249 = vand.u32 2147483647, %v3248
  %v3251 = vcvt.s32.f32 %v3244
  %v3252 = vmul.f32 %v3251, %v3249
  %v3253 = vxor.u32 %v3252, 2147483648
  %v3254 = vsel %vm3171, %v3253, %v3252
  %v3255 = vsub.s32 4, %v3231
  %v3256 = vsel %vm3171, %v3255, %v3231
  %v3257 = vsel %vm3170, %v2540, %v3254
  %v3258 = vsel %vm3170, 0, %v3256
  %v3259 = vcosq.f32.pop %v3257
  %v3260 = vsinq.f32.pop %v3257
  %vm3261 = vweird.f32 %v2540
  %v3262 = vand.u32 %v3258, 3
  %vm3263 = vcmp.lt.s32.totalorder %v3262, 2
  %vm3264 = vcmp.eq.s32.totalorder %v3262, 0
  %v3265 = vxor.u32 %v3260, 2147483648
  %v3266 = vsel %vm3264, %v3259, %v3265
  %vm3267 = vcmp.eq.s32.totalorder %v3262, 2
  %v3268 = vxor.u32 %v3259, 2147483648
  %v3269 = vsel %vm3267, %v3268, %v3260
  %v3270 = vsel %vm3263, %v3266, %v3269
  %v3271 = vsel %vm3261, nan, %v3270
  %v3272 = vand.u32 2147483647, %v2541
  %vm3273 = vcmp.le.f32.partialorder %v3272, 0.7853982
  %vm3274 = vcmp.lt.s32.totalorder %v2541, 0
  %v3275 = vand.u32 %v2541, 2139095040
  %v3276 = vshrl.u32 %v3275, 23
  %v3277 = vsub.s32 %v3276, 127
  %v3278 = vand.u32 2147483647, %v2541
  %v3279 = vand.u32 %v3278, 8388607
  %v3280 = vor.u32 %v3279, 8388608
  %v3281 = vsub.s32 0, %v3280
  %v3282 = vadd.s32 %v3277, 1
  %vm3283 = vcmp.gt.s32.totalorder %v3282, 0
  %v3284 = vsel %vm3283, %v3282, 0
  %v3285 = vshrl.u32 %v3284, 5
  %v3286 = vand.u32 %v3284, 31
  %v3287 = vsub.s32 32, %v3286
  %v3288 = vshrl.u32 683565275, %v3287
  %v3289 = vshll.u32 683565275, %v3286
  %v3290 = vshrl.u32 2475754826, %v3287
  %v3291 = vor.u32 %v3289, %v3290
  %v3292 = vshll.u32 2475754826, %v3286
  %v3293 = vshrl.u32 2131351028, %v3287
  %v3294 = vor.u32 %v3292, %v3293
  %v3295 = vshll.u32 2131351028, %v3286
  %v3296 = vshrl.u32 2102212464, %v3287
  %v3297 = vor.u32 %v3295, %v3296
  %v3298 = vshll.u32 2102212464, %v3286
  %v3299 = vshrl.u32 920167782, %v3287
  %v3300 = vor.u32 %v3298, %v3299
  %v3301 = vshll.u32 920167782, %v3286
  %v3302 = vshrl.u32 1326507024, %v3287
  %v3303 = vor.u32 %v3301, %v3302
  %vm3304 = vcmp.lt.s32.totalorder %v3285, 1
  %vm3305 = vcmp.lt.s32.totalorder %v3285, 2
  %vm3306 = vcmp.lt.s32.totalorder %v3285, 3
  %vm3307 = vcmp.lt.s32.totalorder %v3285, 4
  %v3308 = vsel %vm3304, %v3288, %v3291
  %v3309 = vsel %vm3307, %v3297, 2102212464
  %v3310 = vsel %vm3306, %v3294, %v3309
  %v3311 = vsel %vm3305, %v3308, %v3310
  %v3312 = vsel %vm3304, %v3291, %v3294
  %v3313 = vsel %vm3307, %v3300, 920167782
  %v3314 = vsel %vm3306, %v3297, %v3313
  %v3315 = vsel %vm3305, %v3312, %v3314
  %v3316 = vsel %vm3304, %v3294, %v3297
  %v3317 = vsel %vm3307, %v3303, 1326507024
  %v3318 = vsel %vm3306, %v3300, %v3317
  %v3319 = vsel %vm3305, %v3316, %v3318
  %v3320 = vshll.u32 %v3280, 8
  %v3321 = vmul.u32.u64.compose %v3320, %v3319
  %v3322 = vextract.low.u32 %v3321
  %v3323 = vextract.high.u32 %v3321
  %v3324 = vmul.u32.u64.compose %v3320, %v3315
  %v3325 = vextract.low.u32 %v3324
  %v3326 = vextract.high.u32 %v3324
  %v3327 = vmul.u32 %v3320, %v3311
  %v3328 = vadd.s32 %v3323, %v3325
  %vm3329 = vc.u32 %v3323, %v3325
  %v3330 = vadd.s32 %v3326, 1
  %v3331 = vsel %vm3329, %v3330, %v3326
  %v3332 = vadd.s32 %v3327, %v3331
  %v3333 = vadd.s32 %v3332, 536870912
  %v3334 = vshrl.u32 %v3333, 30
  %v3335 = vshll.u32 %v3334, 30
  %v3336 = vsub.s32 %v3332, %v3335
  %vm3337 = vcmp.lt.s32.totalorder %v3336, 0
  %v3338 = vsub.s32 0, %v3336
  %v3339 = vsel %vm3337, %v3338, %v3336
  %v3340 = vclz %v3339
  %v3341 = vsub.s32 %v3340, 2
  %vm3342 = vcmp.gt.s32.totalorder 0, %v3341
  %v3343 = vsel %vm3342, 0, %v3341
  %v3344 = vsub.s32 32, %v3343
  %v3345 = vshll.u32 %v3336, %v3343
  %v3346 = vshrl.u32 %v3328, %v3344
  %v3347 = vor.u32 %v3345, %v3346
  %v3348 = vsub.s32 4294967266, %v3343
  %v3349 = vadd.s32 %v3348, 127
  %v3350 = vshll.u32 %v3349, 23
  %v3351 = vor.u32 4788187, %v3350
  %v3352 = vand.u32 2147483647, %v3351
  %v3354 = vcvt.s32.f32 %v3347
  %v3355 = vmul.f32 %v3354, %v3352
  %v3356 = vxor.u32 %v3355, 2147483648
  %v3357 = vsel %vm3274, %v3356, %v3355
  %v3358 = vsub.s32 4, %v3334
  %v3359 = vsel %vm3274, %v3358, %v3334
  %v3360 = vsel %vm3273, %v2541, %v3357
  %v3361 = vsel %vm3273, 0, %v3359
  %v3362 = vcosq.f32.pop %v3360
  %v3363 = vsinq.f32.pop %v3360
  %vm3364 = vweird.f32 %v2541
  %v3365 = vand.u32 %v3361, 3
  %vm3366 = vcmp.lt.s32.totalorder %v3365, 2
  %vm3367 = vcmp.eq.s32.totalorder %v3365, 0
  %v3368 = vxor.u32 %v3363, 2147483648
  %v3369 = vsel %vm3367, %v3362, %v3368
  %vm3370 = vcmp.eq.s32.totalorder %v3365, 2
  %v3371 = vxor.u32 %v3362, 2147483648
  %v3372 = vsel %vm3370, %v3371, %v3363
  %v3373 = vsel %vm3366, %v3369, %v3372
  %v3374 = vsel %vm3364, nan, %v3373
  %s3375 = scalar_lea.vmem %s1, 256
  %3376 = vst [vmem:[%s3375] sm:$0xff] %v3065
  %3377 = vst [vmem:[%s3375 + $0x8] sm:$0xff] %v3168
  %3378 = vst [vmem:[%s3375 + $0x10] sm:$0xff] %v3271
  %3379 = vst [vmem:[%s3375 + $0x18] sm:$0xff] %v3374
  %v3380 = vmul.f32 %v8, 16.0
  %v3381 = vmul.f32 %v9, 16.0
  %v3382 = vmul.f32 %v10, 16.0
  %v3383 = vmul.f32 %v11, 16.0
  %v3384 = vand.u32 2147483647, %v3380
  %vm3385 = vcmp.le.f32.partialorder %v3384, 0.7853982
  %vm3386 = vcmp.lt.s32.totalorder %v3380, 0
  %v3387 = vand.u32 %v3380, 2139095040
  %v3388 = vshrl.u32 %v3387, 23
  %v3389 = vsub.s32 %v3388, 127
  %v3390 = vand.u32 2147483647, %v3380
  %v3391 = vand.u32 %v3390, 8388607
  %v3392 = vor.u32 %v3391, 8388608
  %v3393 = vsub.s32 0, %v3392
  %v3394 = vadd.s32 %v3389, 1
  %vm3395 = vcmp.gt.s32.totalorder %v3394, 0
  %v3396 = vsel %vm3395, %v3394, 0
  %v3397 = vshrl.u32 %v3396, 5
  %v3398 = vand.u32 %v3396, 31
  %v3399 = vsub.s32 32, %v3398
  %v3400 = vshrl.u32 683565275, %v3399
  %v3401 = vshll.u32 683565275, %v3398
  %v3402 = vshrl.u32 2475754826, %v3399
  %v3403 = vor.u32 %v3401, %v3402
  %v3404 = vshll.u32 2475754826, %v3398
  %v3405 = vshrl.u32 2131351028, %v3399
  %v3406 = vor.u32 %v3404, %v3405
  %v3407 = vshll.u32 2131351028, %v3398
  %v3408 = vshrl.u32 2102212464, %v3399
  %v3409 = vor.u32 %v3407, %v3408
  %v3410 = vshll.u32 2102212464, %v3398
  %v3411 = vshrl.u32 920167782, %v3399
  %v3412 = vor.u32 %v3410, %v3411
  %v3413 = vshll.u32 920167782, %v3398
  %v3414 = vshrl.u32 1326507024, %v3399
  %v3415 = vor.u32 %v3413, %v3414
  %vm3416 = vcmp.lt.s32.totalorder %v3397, 1
  %vm3417 = vcmp.lt.s32.totalorder %v3397, 2
  %vm3418 = vcmp.lt.s32.totalorder %v3397, 3
  %vm3419 = vcmp.lt.s32.totalorder %v3397, 4
  %v3420 = vsel %vm3416, %v3400, %v3403
  %v3421 = vsel %vm3419, %v3409, 2102212464
  %v3422 = vsel %vm3418, %v3406, %v3421
  %v3423 = vsel %vm3417, %v3420, %v3422
  %v3424 = vsel %vm3416, %v3403, %v3406
  %v3425 = vsel %vm3419, %v3412, 920167782
  %v3426 = vsel %vm3418, %v3409, %v3425
  %v3427 = vsel %vm3417, %v3424, %v3426
  %v3428 = vsel %vm3416, %v3406, %v3409
  %v3429 = vsel %vm3419, %v3415, 1326507024
  %v3430 = vsel %vm3418, %v3412, %v3429
  %v3431 = vsel %vm3417, %v3428, %v3430
  %v3432 = vshll.u32 %v3392, 8
  %v3433 = vmul.u32.u64.compose %v3432, %v3431
  %v3434 = vextract.low.u32 %v3433
  %v3435 = vextract.high.u32 %v3433
  %v3436 = vmul.u32.u64.compose %v3432, %v3427
  %v3437 = vextract.low.u32 %v3436
  %v3438 = vextract.high.u32 %v3436
  %v3439 = vmul.u32 %v3432, %v3423
  %v3440 = vadd.s32 %v3435, %v3437
  %vm3441 = vc.u32 %v3435, %v3437
  %v3442 = vadd.s32 %v3438, 1
  %v3443 = vsel %vm3441, %v3442, %v3438
  %v3444 = vadd.s32 %v3439, %v3443
  %v3445 = vadd.s32 %v3444, 536870912
  %v3446 = vshrl.u32 %v3445, 30
  %v3447 = vshll.u32 %v3446, 30
  %v3448 = vsub.s32 %v3444, %v3447
  %vm3449 = vcmp.lt.s32.totalorder %v3448, 0
  %v3450 = vsub.s32 0, %v3448
  %v3451 = vsel %vm3449, %v3450, %v3448
  %v3452 = vclz %v3451
  %v3453 = vsub.s32 %v3452, 2
  %vm3454 = vcmp.gt.s32.totalorder 0, %v3453
  %v3455 = vsel %vm3454, 0, %v3453
  %v3456 = vsub.s32 32, %v3455
  %v3457 = vshll.u32 %v3448, %v3455
  %v3458 = vshrl.u32 %v3440, %v3456
  %v3459 = vor.u32 %v3457, %v3458
  %v3460 = vsub.s32 4294967266, %v3455
  %v3461 = vadd.s32 %v3460, 127
  %v3462 = vshll.u32 %v3461, 23
  %v3463 = vor.u32 4788187, %v3462
  %v3464 = vand.u32 2147483647, %v3463
  %v3466 = vcvt.s32.f32 %v3459
  %v3467 = vmul.f32 %v3466, %v3464
  %v3468 = vxor.u32 %v3467, 2147483648
  %v3469 = vsel %vm3386, %v3468, %v3467
  %v3470 = vsub.s32 4, %v3446
  %v3471 = vsel %vm3386, %v3470, %v3446
  %v3472 = vsel %vm3385, %v3380, %v3469
  %v3473 = vsel %vm3385, 0, %v3471
  %v3474 = vcosq.f32.pop %v3472
  %v3475 = vsinq.f32.pop %v3472
  %vm3476 = vweird.f32 %v3380
  %v3477 = vadd.s32 %v3473, 3
  %v3478 = vand.u32 %v3477, 3
  %vm3479 = vcmp.lt.s32.totalorder %v3478, 2
  %vm3480 = vcmp.eq.s32.totalorder %v3478, 0
  %v3481 = vxor.u32 %v3475, 2147483648
  %v3482 = vsel %vm3480, %v3474, %v3481
  %vm3483 = vcmp.eq.s32.totalorder %v3478, 2
  %v3484 = vxor.u32 %v3474, 2147483648
  %v3485 = vsel %vm3483, %v3484, %v3475
  %v3486 = vsel %vm3479, %v3482, %v3485
  %v3487 = vsel %vm3476, nan, %v3486
  %v3488 = vand.u32 2147483647, %v3381
  %vm3489 = vcmp.le.f32.partialorder %v3488, 0.7853982
  %vm3490 = vcmp.lt.s32.totalorder %v3381, 0
  %v3491 = vand.u32 %v3381, 2139095040
  %v3492 = vshrl.u32 %v3491, 23
  %v3493 = vsub.s32 %v3492, 127
  %v3494 = vand.u32 2147483647, %v3381
  %v3495 = vand.u32 %v3494, 8388607
  %v3496 = vor.u32 %v3495, 8388608
  %v3497 = vsub.s32 0, %v3496
  %v3498 = vadd.s32 %v3493, 1
  %vm3499 = vcmp.gt.s32.totalorder %v3498, 0
  %v3500 = vsel %vm3499, %v3498, 0
  %v3501 = vshrl.u32 %v3500, 5
  %v3502 = vand.u32 %v3500, 31
  %v3503 = vsub.s32 32, %v3502
  %v3504 = vshrl.u32 683565275, %v3503
  %v3505 = vshll.u32 683565275, %v3502
  %v3506 = vshrl.u32 2475754826, %v3503
  %v3507 = vor.u32 %v3505, %v3506
  %v3508 = vshll.u32 2475754826, %v3502
  %v3509 = vshrl.u32 2131351028, %v3503
  %v3510 = vor.u32 %v3508, %v3509
  %v3511 = vshll.u32 2131351028, %v3502
  %v3512 = vshrl.u32 2102212464, %v3503
  %v3513 = vor.u32 %v3511, %v3512
  %v3514 = vshll.u32 2102212464, %v3502
  %v3515 = vshrl.u32 920167782, %v3503
  %v3516 = vor.u32 %v3514, %v3515
  %v3517 = vshll.u32 920167782, %v3502
  %v3518 = vshrl.u32 1326507024, %v3503
  %v3519 = vor.u32 %v3517, %v3518
  %vm3520 = vcmp.lt.s32.totalorder %v3501, 1
  %vm3521 = vcmp.lt.s32.totalorder %v3501, 2
  %vm3522 = vcmp.lt.s32.totalorder %v3501, 3
  %vm3523 = vcmp.lt.s32.totalorder %v3501, 4
  %v3524 = vsel %vm3520, %v3504, %v3507
  %v3525 = vsel %vm3523, %v3513, 2102212464
  %v3526 = vsel %vm3522, %v3510, %v3525
  %v3527 = vsel %vm3521, %v3524, %v3526
  %v3528 = vsel %vm3520, %v3507, %v3510
  %v3529 = vsel %vm3523, %v3516, 920167782
  %v3530 = vsel %vm3522, %v3513, %v3529
  %v3531 = vsel %vm3521, %v3528, %v3530
  %v3532 = vsel %vm3520, %v3510, %v3513
  %v3533 = vsel %vm3523, %v3519, 1326507024
  %v3534 = vsel %vm3522, %v3516, %v3533
  %v3535 = vsel %vm3521, %v3532, %v3534
  %v3536 = vshll.u32 %v3496, 8
  %v3537 = vmul.u32.u64.compose %v3536, %v3535
  %v3538 = vextract.low.u32 %v3537
  %v3539 = vextract.high.u32 %v3537
  %v3540 = vmul.u32.u64.compose %v3536, %v3531
  %v3541 = vextract.low.u32 %v3540
  %v3542 = vextract.high.u32 %v3540
  %v3543 = vmul.u32 %v3536, %v3527
  %v3544 = vadd.s32 %v3539, %v3541
  %vm3545 = vc.u32 %v3539, %v3541
  %v3546 = vadd.s32 %v3542, 1
  %v3547 = vsel %vm3545, %v3546, %v3542
  %v3548 = vadd.s32 %v3543, %v3547
  %v3549 = vadd.s32 %v3548, 536870912
  %v3550 = vshrl.u32 %v3549, 30
  %v3551 = vshll.u32 %v3550, 30
  %v3552 = vsub.s32 %v3548, %v3551
  %vm3553 = vcmp.lt.s32.totalorder %v3552, 0
  %v3554 = vsub.s32 0, %v3552
  %v3555 = vsel %vm3553, %v3554, %v3552
  %v3556 = vclz %v3555
  %v3557 = vsub.s32 %v3556, 2
  %vm3558 = vcmp.gt.s32.totalorder 0, %v3557
  %v3559 = vsel %vm3558, 0, %v3557
  %v3560 = vsub.s32 32, %v3559
  %v3561 = vshll.u32 %v3552, %v3559
  %v3562 = vshrl.u32 %v3544, %v3560
  %v3563 = vor.u32 %v3561, %v3562
  %v3564 = vsub.s32 4294967266, %v3559
  %v3565 = vadd.s32 %v3564, 127
  %v3566 = vshll.u32 %v3565, 23
  %v3567 = vor.u32 4788187, %v3566
  %v3568 = vand.u32 2147483647, %v3567
  %v3570 = vcvt.s32.f32 %v3563
  %v3571 = vmul.f32 %v3570, %v3568
  %v3572 = vxor.u32 %v3571, 2147483648
  %v3573 = vsel %vm3490, %v3572, %v3571
  %v3574 = vsub.s32 4, %v3550
  %v3575 = vsel %vm3490, %v3574, %v3550
  %v3576 = vsel %vm3489, %v3381, %v3573
  %v3577 = vsel %vm3489, 0, %v3575
  %v3578 = vcosq.f32.pop %v3576
  %v3579 = vsinq.f32.pop %v3576
  %vm3580 = vweird.f32 %v3381
  %v3581 = vadd.s32 %v3577, 3
  %v3582 = vand.u32 %v3581, 3
  %vm3583 = vcmp.lt.s32.totalorder %v3582, 2
  %vm3584 = vcmp.eq.s32.totalorder %v3582, 0
  %v3585 = vxor.u32 %v3579, 2147483648
  %v3586 = vsel %vm3584, %v3578, %v3585
  %vm3587 = vcmp.eq.s32.totalorder %v3582, 2
  %v3588 = vxor.u32 %v3578, 2147483648
  %v3589 = vsel %vm3587, %v3588, %v3579
  %v3590 = vsel %vm3583, %v3586, %v3589
  %v3591 = vsel %vm3580, nan, %v3590
  %v3592 = vand.u32 2147483647, %v3382
  %vm3593 = vcmp.le.f32.partialorder %v3592, 0.7853982
  %vm3594 = vcmp.lt.s32.totalorder %v3382, 0
  %v3595 = vand.u32 %v3382, 2139095040
  %v3596 = vshrl.u32 %v3595, 23
  %v3597 = vsub.s32 %v3596, 127
  %v3598 = vand.u32 2147483647, %v3382
  %v3599 = vand.u32 %v3598, 8388607
  %v3600 = vor.u32 %v3599, 8388608
  %v3601 = vsub.s32 0, %v3600
  %v3602 = vadd.s32 %v3597, 1
  %vm3603 = vcmp.gt.s32.totalorder %v3602, 0
  %v3604 = vsel %vm3603, %v3602, 0
  %v3605 = vshrl.u32 %v3604, 5
  %v3606 = vand.u32 %v3604, 31
  %v3607 = vsub.s32 32, %v3606
  %v3608 = vshrl.u32 683565275, %v3607
  %v3609 = vshll.u32 683565275, %v3606
  %v3610 = vshrl.u32 2475754826, %v3607
  %v3611 = vor.u32 %v3609, %v3610
  %v3612 = vshll.u32 2475754826, %v3606
  %v3613 = vshrl.u32 2131351028, %v3607
  %v3614 = vor.u32 %v3612, %v3613
  %v3615 = vshll.u32 2131351028, %v3606
  %v3616 = vshrl.u32 2102212464, %v3607
  %v3617 = vor.u32 %v3615, %v3616
  %v3618 = vshll.u32 2102212464, %v3606
  %v3619 = vshrl.u32 920167782, %v3607
  %v3620 = vor.u32 %v3618, %v3619
  %v3621 = vshll.u32 920167782, %v3606
  %v3622 = vshrl.u32 1326507024, %v3607
  %v3623 = vor.u32 %v3621, %v3622
  %vm3624 = vcmp.lt.s32.totalorder %v3605, 1
  %vm3625 = vcmp.lt.s32.totalorder %v3605, 2
  %vm3626 = vcmp.lt.s32.totalorder %v3605, 3
  %vm3627 = vcmp.lt.s32.totalorder %v3605, 4
  %v3628 = vsel %vm3624, %v3608, %v3611
  %v3629 = vsel %vm3627, %v3617, 2102212464
  %v3630 = vsel %vm3626, %v3614, %v3629
  %v3631 = vsel %vm3625, %v3628, %v3630
  %v3632 = vsel %vm3624, %v3611, %v3614
  %v3633 = vsel %vm3627, %v3620, 920167782
  %v3634 = vsel %vm3626, %v3617, %v3633
  %v3635 = vsel %vm3625, %v3632, %v3634
  %v3636 = vsel %vm3624, %v3614, %v3617
  %v3637 = vsel %vm3627, %v3623, 1326507024
  %v3638 = vsel %vm3626, %v3620, %v3637
  %v3639 = vsel %vm3625, %v3636, %v3638
  %v3640 = vshll.u32 %v3600, 8
  %v3641 = vmul.u32.u64.compose %v3640, %v3639
  %v3642 = vextract.low.u32 %v3641
  %v3643 = vextract.high.u32 %v3641
  %v3644 = vmul.u32.u64.compose %v3640, %v3635
  %v3645 = vextract.low.u32 %v3644
  %v3646 = vextract.high.u32 %v3644
  %v3647 = vmul.u32 %v3640, %v3631
  %v3648 = vadd.s32 %v3643, %v3645
  %vm3649 = vc.u32 %v3643, %v3645
  %v3650 = vadd.s32 %v3646, 1
  %v3651 = vsel %vm3649, %v3650, %v3646
  %v3652 = vadd.s32 %v3647, %v3651
  %v3653 = vadd.s32 %v3652, 536870912
  %v3654 = vshrl.u32 %v3653, 30
  %v3655 = vshll.u32 %v3654, 30
  %v3656 = vsub.s32 %v3652, %v3655
  %vm3657 = vcmp.lt.s32.totalorder %v3656, 0
  %v3658 = vsub.s32 0, %v3656
  %v3659 = vsel %vm3657, %v3658, %v3656
  %v3660 = vclz %v3659
  %v3661 = vsub.s32 %v3660, 2
  %vm3662 = vcmp.gt.s32.totalorder 0, %v3661
  %v3663 = vsel %vm3662, 0, %v3661
  %v3664 = vsub.s32 32, %v3663
  %v3665 = vshll.u32 %v3656, %v3663
  %v3666 = vshrl.u32 %v3648, %v3664
  %v3667 = vor.u32 %v3665, %v3666
  %v3668 = vsub.s32 4294967266, %v3663
  %v3669 = vadd.s32 %v3668, 127
  %v3670 = vshll.u32 %v3669, 23
  %v3671 = vor.u32 4788187, %v3670
  %v3672 = vand.u32 2147483647, %v3671
  %v3674 = vcvt.s32.f32 %v3667
  %v3675 = vmul.f32 %v3674, %v3672
  %v3676 = vxor.u32 %v3675, 2147483648
  %v3677 = vsel %vm3594, %v3676, %v3675
  %v3678 = vsub.s32 4, %v3654
  %v3679 = vsel %vm3594, %v3678, %v3654
  %v3680 = vsel %vm3593, %v3382, %v3677
  %v3681 = vsel %vm3593, 0, %v3679
  %v3682 = vcosq.f32.pop %v3680
  %v3683 = vsinq.f32.pop %v3680
  %vm3684 = vweird.f32 %v3382
  %v3685 = vadd.s32 %v3681, 3
  %v3686 = vand.u32 %v3685, 3
  %vm3687 = vcmp.lt.s32.totalorder %v3686, 2
  %vm3688 = vcmp.eq.s32.totalorder %v3686, 0
  %v3689 = vxor.u32 %v3683, 2147483648
  %v3690 = vsel %vm3688, %v3682, %v3689
  %vm3691 = vcmp.eq.s32.totalorder %v3686, 2
  %v3692 = vxor.u32 %v3682, 2147483648
  %v3693 = vsel %vm3691, %v3692, %v3683
  %v3694 = vsel %vm3687, %v3690, %v3693
  %v3695 = vsel %vm3684, nan, %v3694
  %v3696 = vand.u32 2147483647, %v3383
  %vm3697 = vcmp.le.f32.partialorder %v3696, 0.7853982
  %vm3698 = vcmp.lt.s32.totalorder %v3383, 0
  %v3699 = vand.u32 %v3383, 2139095040
  %v3700 = vshrl.u32 %v3699, 23
  %v3701 = vsub.s32 %v3700, 127
  %v3702 = vand.u32 2147483647, %v3383
  %v3703 = vand.u32 %v3702, 8388607
  %v3704 = vor.u32 %v3703, 8388608
  %v3705 = vsub.s32 0, %v3704
  %v3706 = vadd.s32 %v3701, 1
  %vm3707 = vcmp.gt.s32.totalorder %v3706, 0
  %v3708 = vsel %vm3707, %v3706, 0
  %v3709 = vshrl.u32 %v3708, 5
  %v3710 = vand.u32 %v3708, 31
  %v3711 = vsub.s32 32, %v3710
  %v3712 = vshrl.u32 683565275, %v3711
  %v3713 = vshll.u32 683565275, %v3710
  %v3714 = vshrl.u32 2475754826, %v3711
  %v3715 = vor.u32 %v3713, %v3714
  %v3716 = vshll.u32 2475754826, %v3710
  %v3717 = vshrl.u32 2131351028, %v3711
  %v3718 = vor.u32 %v3716, %v3717
  %v3719 = vshll.u32 2131351028, %v3710
  %v3720 = vshrl.u32 2102212464, %v3711
  %v3721 = vor.u32 %v3719, %v3720
  %v3722 = vshll.u32 2102212464, %v3710
  %v3723 = vshrl.u32 920167782, %v3711
  %v3724 = vor.u32 %v3722, %v3723
  %v3725 = vshll.u32 920167782, %v3710
  %v3726 = vshrl.u32 1326507024, %v3711
  %v3727 = vor.u32 %v3725, %v3726
  %vm3728 = vcmp.lt.s32.totalorder %v3709, 1
  %vm3729 = vcmp.lt.s32.totalorder %v3709, 2
  %vm3730 = vcmp.lt.s32.totalorder %v3709, 3
  %vm3731 = vcmp.lt.s32.totalorder %v3709, 4
  %v3732 = vsel %vm3728, %v3712, %v3715
  %v3733 = vsel %vm3731, %v3721, 2102212464
  %v3734 = vsel %vm3730, %v3718, %v3733
  %v3735 = vsel %vm3729, %v3732, %v3734
  %v3736 = vsel %vm3728, %v3715, %v3718
  %v3737 = vsel %vm3731, %v3724, 920167782
  %v3738 = vsel %vm3730, %v3721, %v3737
  %v3739 = vsel %vm3729, %v3736, %v3738
  %v3740 = vsel %vm3728, %v3718, %v3721
  %v3741 = vsel %vm3731, %v3727, 1326507024
  %v3742 = vsel %vm3730, %v3724, %v3741
  %v3743 = vsel %vm3729, %v3740, %v3742
  %v3744 = vshll.u32 %v3704, 8
  %v3745 = vmul.u32.u64.compose %v3744, %v3743
  %v3746 = vextract.low.u32 %v3745
  %v3747 = vextract.high.u32 %v3745
  %v3748 = vmul.u32.u64.compose %v3744, %v3739
  %v3749 = vextract.low.u32 %v3748
  %v3750 = vextract.high.u32 %v3748
  %v3751 = vmul.u32 %v3744, %v3735
  %v3752 = vadd.s32 %v3747, %v3749
  %vm3753 = vc.u32 %v3747, %v3749
  %v3754 = vadd.s32 %v3750, 1
  %v3755 = vsel %vm3753, %v3754, %v3750
  %v3756 = vadd.s32 %v3751, %v3755
  %v3757 = vadd.s32 %v3756, 536870912
  %v3758 = vshrl.u32 %v3757, 30
  %v3759 = vshll.u32 %v3758, 30
  %v3760 = vsub.s32 %v3756, %v3759
  %vm3761 = vcmp.lt.s32.totalorder %v3760, 0
  %v3762 = vsub.s32 0, %v3760
  %v3763 = vsel %vm3761, %v3762, %v3760
  %v3764 = vclz %v3763
  %v3765 = vsub.s32 %v3764, 2
  %vm3766 = vcmp.gt.s32.totalorder 0, %v3765
  %v3767 = vsel %vm3766, 0, %v3765
  %v3768 = vsub.s32 32, %v3767
  %v3769 = vshll.u32 %v3760, %v3767
  %v3770 = vshrl.u32 %v3752, %v3768
  %v3771 = vor.u32 %v3769, %v3770
  %v3772 = vsub.s32 4294967266, %v3767
  %v3773 = vadd.s32 %v3772, 127
  %v3774 = vshll.u32 %v3773, 23
  %v3775 = vor.u32 4788187, %v3774
  %v3776 = vand.u32 2147483647, %v3775
  %v3778 = vcvt.s32.f32 %v3771
  %v3779 = vmul.f32 %v3778, %v3776
  %v3780 = vxor.u32 %v3779, 2147483648
  %v3781 = vsel %vm3698, %v3780, %v3779
  %v3782 = vsub.s32 4, %v3758
  %v3783 = vsel %vm3698, %v3782, %v3758
  %v3784 = vsel %vm3697, %v3383, %v3781
  %v3785 = vsel %vm3697, 0, %v3783
  %v3786 = vcosq.f32.pop %v3784
  %v3787 = vsinq.f32.pop %v3784
  %vm3788 = vweird.f32 %v3383
  %v3789 = vadd.s32 %v3785, 3
  %v3790 = vand.u32 %v3789, 3
  %vm3791 = vcmp.lt.s32.totalorder %v3790, 2
  %vm3792 = vcmp.eq.s32.totalorder %v3790, 0
  %v3793 = vxor.u32 %v3787, 2147483648
  %v3794 = vsel %vm3792, %v3786, %v3793
  %vm3795 = vcmp.eq.s32.totalorder %v3790, 2
  %v3796 = vxor.u32 %v3786, 2147483648
  %v3797 = vsel %vm3795, %v3796, %v3787
  %v3798 = vsel %vm3791, %v3794, %v3797
  %v3799 = vsel %vm3788, nan, %v3798
  %s3800 = scalar_lea.vmem %s1, 288
  %3801 = vst [vmem:[%s3800] sm:$0xff] %v3487
  %3802 = vst [vmem:[%s3800 + $0x8] sm:$0xff] %v3591
  %3803 = vst [vmem:[%s3800 + $0x10] sm:$0xff] %v3695
  %3804 = vst [vmem:[%s3800 + $0x18] sm:$0xff] %v3799
  %v3805 = vand.u32 2147483647, %v3380
  %vm3806 = vcmp.le.f32.partialorder %v3805, 0.7853982
  %vm3807 = vcmp.lt.s32.totalorder %v3380, 0
  %v3808 = vand.u32 %v3380, 2139095040
  %v3809 = vshrl.u32 %v3808, 23
  %v3810 = vsub.s32 %v3809, 127
  %v3811 = vand.u32 2147483647, %v3380
  %v3812 = vand.u32 %v3811, 8388607
  %v3813 = vor.u32 %v3812, 8388608
  %v3814 = vsub.s32 0, %v3813
  %v3815 = vadd.s32 %v3810, 1
  %vm3816 = vcmp.gt.s32.totalorder %v3815, 0
  %v3817 = vsel %vm3816, %v3815, 0
  %v3818 = vshrl.u32 %v3817, 5
  %v3819 = vand.u32 %v3817, 31
  %v3820 = vsub.s32 32, %v3819
  %v3821 = vshrl.u32 683565275, %v3820
  %v3822 = vshll.u32 683565275, %v3819
  %v3823 = vshrl.u32 2475754826, %v3820
  %v3824 = vor.u32 %v3822, %v3823
  %v3825 = vshll.u32 2475754826, %v3819
  %v3826 = vshrl.u32 2131351028, %v3820
  %v3827 = vor.u32 %v3825, %v3826
  %v3828 = vshll.u32 2131351028, %v3819
  %v3829 = vshrl.u32 2102212464, %v3820
  %v3830 = vor.u32 %v3828, %v3829
  %v3831 = vshll.u32 2102212464, %v3819
  %v3832 = vshrl.u32 920167782, %v3820
  %v3833 = vor.u32 %v3831, %v3832
  %v3834 = vshll.u32 920167782, %v3819
  %v3835 = vshrl.u32 1326507024, %v3820
  %v3836 = vor.u32 %v3834, %v3835
  %vm3837 = vcmp.lt.s32.totalorder %v3818, 1
  %vm3838 = vcmp.lt.s32.totalorder %v3818, 2
  %vm3839 = vcmp.lt.s32.totalorder %v3818, 3
  %vm3840 = vcmp.lt.s32.totalorder %v3818, 4
  %v3841 = vsel %vm3837, %v3821, %v3824
  %v3842 = vsel %vm3840, %v3830, 2102212464
  %v3843 = vsel %vm3839, %v3827, %v3842
  %v3844 = vsel %vm3838, %v3841, %v3843
  %v3845 = vsel %vm3837, %v3824, %v3827
  %v3846 = vsel %vm3840, %v3833, 920167782
  %v3847 = vsel %vm3839, %v3830, %v3846
  %v3848 = vsel %vm3838, %v3845, %v3847
  %v3849 = vsel %vm3837, %v3827, %v3830
  %v3850 = vsel %vm3840, %v3836, 1326507024
  %v3851 = vsel %vm3839, %v3833, %v3850
  %v3852 = vsel %vm3838, %v3849, %v3851
  %v3853 = vshll.u32 %v3813, 8
  %v3854 = vmul.u32.u64.compose %v3853, %v3852
  %v3855 = vextract.low.u32 %v3854
  %v3856 = vextract.high.u32 %v3854
  %v3857 = vmul.u32.u64.compose %v3853, %v3848
  %v3858 = vextract.low.u32 %v3857
  %v3859 = vextract.high.u32 %v3857
  %v3860 = vmul.u32 %v3853, %v3844
  %v3861 = vadd.s32 %v3856, %v3858
  %vm3862 = vc.u32 %v3856, %v3858
  %v3863 = vadd.s32 %v3859, 1
  %v3864 = vsel %vm3862, %v3863, %v3859
  %v3865 = vadd.s32 %v3860, %v3864
  %v3866 = vadd.s32 %v3865, 536870912
  %v3867 = vshrl.u32 %v3866, 30
  %v3868 = vshll.u32 %v3867, 30
  %v3869 = vsub.s32 %v3865, %v3868
  %vm3870 = vcmp.lt.s32.totalorder %v3869, 0
  %v3871 = vsub.s32 0, %v3869
  %v3872 = vsel %vm3870, %v3871, %v3869
  %v3873 = vclz %v3872
  %v3874 = vsub.s32 %v3873, 2
  %vm3875 = vcmp.gt.s32.totalorder 0, %v3874
  %v3876 = vsel %vm3875, 0, %v3874
  %v3877 = vsub.s32 32, %v3876
  %v3878 = vshll.u32 %v3869, %v3876
  %v3879 = vshrl.u32 %v3861, %v3877
  %v3880 = vor.u32 %v3878, %v3879
  %v3881 = vsub.s32 4294967266, %v3876
  %v3882 = vadd.s32 %v3881, 127
  %v3883 = vshll.u32 %v3882, 23
  %v3884 = vor.u32 4788187, %v3883
  %v3885 = vand.u32 2147483647, %v3884
  %v3887 = vcvt.s32.f32 %v3880
  %v3888 = vmul.f32 %v3887, %v3885
  %v3889 = vxor.u32 %v3888, 2147483648
  %v3890 = vsel %vm3807, %v3889, %v3888
  %v3891 = vsub.s32 4, %v3867
  %v3892 = vsel %vm3807, %v3891, %v3867
  %v3893 = vsel %vm3806, %v3380, %v3890
  %v3894 = vsel %vm3806, 0, %v3892
  %v3895 = vcosq.f32.pop %v3893
  %v3896 = vsinq.f32.pop %v3893
  %vm3897 = vweird.f32 %v3380
  %v3898 = vand.u32 %v3894, 3
  %vm3899 = vcmp.lt.s32.totalorder %v3898, 2
  %vm3900 = vcmp.eq.s32.totalorder %v3898, 0
  %v3901 = vxor.u32 %v3896, 2147483648
  %v3902 = vsel %vm3900, %v3895, %v3901
  %vm3903 = vcmp.eq.s32.totalorder %v3898, 2
  %v3904 = vxor.u32 %v3895, 2147483648
  %v3905 = vsel %vm3903, %v3904, %v3896
  %v3906 = vsel %vm3899, %v3902, %v3905
  %v3907 = vsel %vm3897, nan, %v3906
  %v3908 = vand.u32 2147483647, %v3381
  %vm3909 = vcmp.le.f32.partialorder %v3908, 0.7853982
  %vm3910 = vcmp.lt.s32.totalorder %v3381, 0
  %v3911 = vand.u32 %v3381, 2139095040
  %v3912 = vshrl.u32 %v3911, 23
  %v3913 = vsub.s32 %v3912, 127
  %v3914 = vand.u32 2147483647, %v3381
  %v3915 = vand.u32 %v3914, 8388607
  %v3916 = vor.u32 %v3915, 8388608
  %v3917 = vsub.s32 0, %v3916
  %v3918 = vadd.s32 %v3913, 1
  %vm3919 = vcmp.gt.s32.totalorder %v3918, 0
  %v3920 = vsel %vm3919, %v3918, 0
  %v3921 = vshrl.u32 %v3920, 5
  %v3922 = vand.u32 %v3920, 31
  %v3923 = vsub.s32 32, %v3922
  %v3924 = vshrl.u32 683565275, %v3923
  %v3925 = vshll.u32 683565275, %v3922
  %v3926 = vshrl.u32 2475754826, %v3923
  %v3927 = vor.u32 %v3925, %v3926
  %v3928 = vshll.u32 2475754826, %v3922
  %v3929 = vshrl.u32 2131351028, %v3923
  %v3930 = vor.u32 %v3928, %v3929
  %v3931 = vshll.u32 2131351028, %v3922
  %v3932 = vshrl.u32 2102212464, %v3923
  %v3933 = vor.u32 %v3931, %v3932
  %v3934 = vshll.u32 2102212464, %v3922
  %v3935 = vshrl.u32 920167782, %v3923
  %v3936 = vor.u32 %v3934, %v3935
  %v3937 = vshll.u32 920167782, %v3922
  %v3938 = vshrl.u32 1326507024, %v3923
  %v3939 = vor.u32 %v3937, %v3938
  %vm3940 = vcmp.lt.s32.totalorder %v3921, 1
  %vm3941 = vcmp.lt.s32.totalorder %v3921, 2
  %vm3942 = vcmp.lt.s32.totalorder %v3921, 3
  %vm3943 = vcmp.lt.s32.totalorder %v3921, 4
  %v3944 = vsel %vm3940, %v3924, %v3927
  %v3945 = vsel %vm3943, %v3933, 2102212464
  %v3946 = vsel %vm3942, %v3930, %v3945
  %v3947 = vsel %vm3941, %v3944, %v3946
  %v3948 = vsel %vm3940, %v3927, %v3930
  %v3949 = vsel %vm3943, %v3936, 920167782
  %v3950 = vsel %vm3942, %v3933, %v3949
  %v3951 = vsel %vm3941, %v3948, %v3950
  %v3952 = vsel %vm3940, %v3930, %v3933
  %v3953 = vsel %vm3943, %v3939, 1326507024
  %v3954 = vsel %vm3942, %v3936, %v3953
  %v3955 = vsel %vm3941, %v3952, %v3954
  %v3956 = vshll.u32 %v3916, 8
  %v3957 = vmul.u32.u64.compose %v3956, %v3955
  %v3958 = vextract.low.u32 %v3957
  %v3959 = vextract.high.u32 %v3957
  %v3960 = vmul.u32.u64.compose %v3956, %v3951
  %v3961 = vextract.low.u32 %v3960
  %v3962 = vextract.high.u32 %v3960
  %v3963 = vmul.u32 %v3956, %v3947
  %v3964 = vadd.s32 %v3959, %v3961
  %vm3965 = vc.u32 %v3959, %v3961
  %v3966 = vadd.s32 %v3962, 1
  %v3967 = vsel %vm3965, %v3966, %v3962
  %v3968 = vadd.s32 %v3963, %v3967
  %v3969 = vadd.s32 %v3968, 536870912
  %v3970 = vshrl.u32 %v3969, 30
  %v3971 = vshll.u32 %v3970, 30
  %v3972 = vsub.s32 %v3968, %v3971
  %vm3973 = vcmp.lt.s32.totalorder %v3972, 0
  %v3974 = vsub.s32 0, %v3972
  %v3975 = vsel %vm3973, %v3974, %v3972
  %v3976 = vclz %v3975
  %v3977 = vsub.s32 %v3976, 2
  %vm3978 = vcmp.gt.s32.totalorder 0, %v3977
  %v3979 = vsel %vm3978, 0, %v3977
  %v3980 = vsub.s32 32, %v3979
  %v3981 = vshll.u32 %v3972, %v3979
  %v3982 = vshrl.u32 %v3964, %v3980
  %v3983 = vor.u32 %v3981, %v3982
  %v3984 = vsub.s32 4294967266, %v3979
  %v3985 = vadd.s32 %v3984, 127
  %v3986 = vshll.u32 %v3985, 23
  %v3987 = vor.u32 4788187, %v3986
  %v3988 = vand.u32 2147483647, %v3987
  %v3990 = vcvt.s32.f32 %v3983
  %v3991 = vmul.f32 %v3990, %v3988
  %v3992 = vxor.u32 %v3991, 2147483648
  %v3993 = vsel %vm3910, %v3992, %v3991
  %v3994 = vsub.s32 4, %v3970
  %v3995 = vsel %vm3910, %v3994, %v3970
  %v3996 = vsel %vm3909, %v3381, %v3993
  %v3997 = vsel %vm3909, 0, %v3995
  %v3998 = vcosq.f32.pop %v3996
  %v3999 = vsinq.f32.pop %v3996
  %vm4000 = vweird.f32 %v3381
  %v4001 = vand.u32 %v3997, 3
  %vm4002 = vcmp.lt.s32.totalorder %v4001, 2
  %vm4003 = vcmp.eq.s32.totalorder %v4001, 0
  %v4004 = vxor.u32 %v3999, 2147483648
  %v4005 = vsel %vm4003, %v3998, %v4004
  %vm4006 = vcmp.eq.s32.totalorder %v4001, 2
  %v4007 = vxor.u32 %v3998, 2147483648
  %v4008 = vsel %vm4006, %v4007, %v3999
  %v4009 = vsel %vm4002, %v4005, %v4008
  %v4010 = vsel %vm4000, nan, %v4009
  %v4011 = vand.u32 2147483647, %v3382
  %vm4012 = vcmp.le.f32.partialorder %v4011, 0.7853982
  %vm4013 = vcmp.lt.s32.totalorder %v3382, 0
  %v4014 = vand.u32 %v3382, 2139095040
  %v4015 = vshrl.u32 %v4014, 23
  %v4016 = vsub.s32 %v4015, 127
  %v4017 = vand.u32 2147483647, %v3382
  %v4018 = vand.u32 %v4017, 8388607
  %v4019 = vor.u32 %v4018, 8388608
  %v4020 = vsub.s32 0, %v4019
  %v4021 = vadd.s32 %v4016, 1
  %vm4022 = vcmp.gt.s32.totalorder %v4021, 0
  %v4023 = vsel %vm4022, %v4021, 0
  %v4024 = vshrl.u32 %v4023, 5
  %v4025 = vand.u32 %v4023, 31
  %v4026 = vsub.s32 32, %v4025
  %v4027 = vshrl.u32 683565275, %v4026
  %v4028 = vshll.u32 683565275, %v4025
  %v4029 = vshrl.u32 2475754826, %v4026
  %v4030 = vor.u32 %v4028, %v4029
  %v4031 = vshll.u32 2475754826, %v4025
  %v4032 = vshrl.u32 2131351028, %v4026
  %v4033 = vor.u32 %v4031, %v4032
  %v4034 = vshll.u32 2131351028, %v4025
  %v4035 = vshrl.u32 2102212464, %v4026
  %v4036 = vor.u32 %v4034, %v4035
  %v4037 = vshll.u32 2102212464, %v4025
  %v4038 = vshrl.u32 920167782, %v4026
  %v4039 = vor.u32 %v4037, %v4038
  %v4040 = vshll.u32 920167782, %v4025
  %v4041 = vshrl.u32 1326507024, %v4026
  %v4042 = vor.u32 %v4040, %v4041
  %vm4043 = vcmp.lt.s32.totalorder %v4024, 1
  %vm4044 = vcmp.lt.s32.totalorder %v4024, 2
  %vm4045 = vcmp.lt.s32.totalorder %v4024, 3
  %vm4046 = vcmp.lt.s32.totalorder %v4024, 4
  %v4047 = vsel %vm4043, %v4027, %v4030
  %v4048 = vsel %vm4046, %v4036, 2102212464
  %v4049 = vsel %vm4045, %v4033, %v4048
  %v4050 = vsel %vm4044, %v4047, %v4049
  %v4051 = vsel %vm4043, %v4030, %v4033
  %v4052 = vsel %vm4046, %v4039, 920167782
  %v4053 = vsel %vm4045, %v4036, %v4052
  %v4054 = vsel %vm4044, %v4051, %v4053
  %v4055 = vsel %vm4043, %v4033, %v4036
  %v4056 = vsel %vm4046, %v4042, 1326507024
  %v4057 = vsel %vm4045, %v4039, %v4056
  %v4058 = vsel %vm4044, %v4055, %v4057
  %v4059 = vshll.u32 %v4019, 8
  %v4060 = vmul.u32.u64.compose %v4059, %v4058
  %v4061 = vextract.low.u32 %v4060
  %v4062 = vextract.high.u32 %v4060
  %v4063 = vmul.u32.u64.compose %v4059, %v4054
  %v4064 = vextract.low.u32 %v4063
  %v4065 = vextract.high.u32 %v4063
  %v4066 = vmul.u32 %v4059, %v4050
  %v4067 = vadd.s32 %v4062, %v4064
  %vm4068 = vc.u32 %v4062, %v4064
  %v4069 = vadd.s32 %v4065, 1
  %v4070 = vsel %vm4068, %v4069, %v4065
  %v4071 = vadd.s32 %v4066, %v4070
  %v4072 = vadd.s32 %v4071, 536870912
  %v4073 = vshrl.u32 %v4072, 30
  %v4074 = vshll.u32 %v4073, 30
  %v4075 = vsub.s32 %v4071, %v4074
  %vm4076 = vcmp.lt.s32.totalorder %v4075, 0
  %v4077 = vsub.s32 0, %v4075
  %v4078 = vsel %vm4076, %v4077, %v4075
  %v4079 = vclz %v4078
  %v4080 = vsub.s32 %v4079, 2
  %vm4081 = vcmp.gt.s32.totalorder 0, %v4080
  %v4082 = vsel %vm4081, 0, %v4080
  %v4083 = vsub.s32 32, %v4082
  %v4084 = vshll.u32 %v4075, %v4082
  %v4085 = vshrl.u32 %v4067, %v4083
  %v4086 = vor.u32 %v4084, %v4085
  %v4087 = vsub.s32 4294967266, %v4082
  %v4088 = vadd.s32 %v4087, 127
  %v4089 = vshll.u32 %v4088, 23
  %v4090 = vor.u32 4788187, %v4089
  %v4091 = vand.u32 2147483647, %v4090
  %v4093 = vcvt.s32.f32 %v4086
  %v4094 = vmul.f32 %v4093, %v4091
  %v4095 = vxor.u32 %v4094, 2147483648
  %v4096 = vsel %vm4013, %v4095, %v4094
  %v4097 = vsub.s32 4, %v4073
  %v4098 = vsel %vm4013, %v4097, %v4073
  %v4099 = vsel %vm4012, %v3382, %v4096
  %v4100 = vsel %vm4012, 0, %v4098
  %v4101 = vcosq.f32.pop %v4099
  %v4102 = vsinq.f32.pop %v4099
  %vm4103 = vweird.f32 %v3382
  %v4104 = vand.u32 %v4100, 3
  %vm4105 = vcmp.lt.s32.totalorder %v4104, 2
  %vm4106 = vcmp.eq.s32.totalorder %v4104, 0
  %v4107 = vxor.u32 %v4102, 2147483648
  %v4108 = vsel %vm4106, %v4101, %v4107
  %vm4109 = vcmp.eq.s32.totalorder %v4104, 2
  %v4110 = vxor.u32 %v4101, 2147483648
  %v4111 = vsel %vm4109, %v4110, %v4102
  %v4112 = vsel %vm4105, %v4108, %v4111
  %v4113 = vsel %vm4103, nan, %v4112
  %v4114 = vand.u32 2147483647, %v3383
  %vm4115 = vcmp.le.f32.partialorder %v4114, 0.7853982
  %vm4116 = vcmp.lt.s32.totalorder %v3383, 0
  %v4117 = vand.u32 %v3383, 2139095040
  %v4118 = vshrl.u32 %v4117, 23
  %v4119 = vsub.s32 %v4118, 127
  %v4120 = vand.u32 2147483647, %v3383
  %v4121 = vand.u32 %v4120, 8388607
  %v4122 = vor.u32 %v4121, 8388608
  %v4123 = vsub.s32 0, %v4122
  %v4124 = vadd.s32 %v4119, 1
  %vm4125 = vcmp.gt.s32.totalorder %v4124, 0
  %v4126 = vsel %vm4125, %v4124, 0
  %v4127 = vshrl.u32 %v4126, 5
  %v4128 = vand.u32 %v4126, 31
  %v4129 = vsub.s32 32, %v4128
  %v4130 = vshrl.u32 683565275, %v4129
  %v4131 = vshll.u32 683565275, %v4128
  %v4132 = vshrl.u32 2475754826, %v4129
  %v4133 = vor.u32 %v4131, %v4132
  %v4134 = vshll.u32 2475754826, %v4128
  %v4135 = vshrl.u32 2131351028, %v4129
  %v4136 = vor.u32 %v4134, %v4135
  %v4137 = vshll.u32 2131351028, %v4128
  %v4138 = vshrl.u32 2102212464, %v4129
  %v4139 = vor.u32 %v4137, %v4138
  %v4140 = vshll.u32 2102212464, %v4128
  %v4141 = vshrl.u32 920167782, %v4129
  %v4142 = vor.u32 %v4140, %v4141
  %v4143 = vshll.u32 920167782, %v4128
  %v4144 = vshrl.u32 1326507024, %v4129
  %v4145 = vor.u32 %v4143, %v4144
  %vm4146 = vcmp.lt.s32.totalorder %v4127, 1
  %vm4147 = vcmp.lt.s32.totalorder %v4127, 2
  %vm4148 = vcmp.lt.s32.totalorder %v4127, 3
  %vm4149 = vcmp.lt.s32.totalorder %v4127, 4
  %v4150 = vsel %vm4146, %v4130, %v4133
  %v4151 = vsel %vm4149, %v4139, 2102212464
  %v4152 = vsel %vm4148, %v4136, %v4151
  %v4153 = vsel %vm4147, %v4150, %v4152
  %v4154 = vsel %vm4146, %v4133, %v4136
  %v4155 = vsel %vm4149, %v4142, 920167782
  %v4156 = vsel %vm4148, %v4139, %v4155
  %v4157 = vsel %vm4147, %v4154, %v4156
  %v4158 = vsel %vm4146, %v4136, %v4139
  %v4159 = vsel %vm4149, %v4145, 1326507024
  %v4160 = vsel %vm4148, %v4142, %v4159
  %v4161 = vsel %vm4147, %v4158, %v4160
  %v4162 = vshll.u32 %v4122, 8
  %v4163 = vmul.u32.u64.compose %v4162, %v4161
  %v4164 = vextract.low.u32 %v4163
  %v4165 = vextract.high.u32 %v4163
  %v4166 = vmul.u32.u64.compose %v4162, %v4157
  %v4167 = vextract.low.u32 %v4166
  %v4168 = vextract.high.u32 %v4166
  %v4169 = vmul.u32 %v4162, %v4153
  %v4170 = vadd.s32 %v4165, %v4167
  %vm4171 = vc.u32 %v4165, %v4167
  %v4172 = vadd.s32 %v4168, 1
  %v4173 = vsel %vm4171, %v4172, %v4168
  %v4174 = vadd.s32 %v4169, %v4173
  %v4175 = vadd.s32 %v4174, 536870912
  %v4176 = vshrl.u32 %v4175, 30
  %v4177 = vshll.u32 %v4176, 30
  %v4178 = vsub.s32 %v4174, %v4177
  %vm4179 = vcmp.lt.s32.totalorder %v4178, 0
  %v4180 = vsub.s32 0, %v4178
  %v4181 = vsel %vm4179, %v4180, %v4178
  %v4182 = vclz %v4181
  %v4183 = vsub.s32 %v4182, 2
  %vm4184 = vcmp.gt.s32.totalorder 0, %v4183
  %v4185 = vsel %vm4184, 0, %v4183
  %v4186 = vsub.s32 32, %v4185
  %v4187 = vshll.u32 %v4178, %v4185
  %v4188 = vshrl.u32 %v4170, %v4186
  %v4189 = vor.u32 %v4187, %v4188
  %v4190 = vsub.s32 4294967266, %v4185
  %v4191 = vadd.s32 %v4190, 127
  %v4192 = vshll.u32 %v4191, 23
  %v4193 = vor.u32 4788187, %v4192
  %v4194 = vand.u32 2147483647, %v4193
  %v4196 = vcvt.s32.f32 %v4189
  %v4197 = vmul.f32 %v4196, %v4194
  %v4198 = vxor.u32 %v4197, 2147483648
  %v4199 = vsel %vm4116, %v4198, %v4197
  %v4200 = vsub.s32 4, %v4176
  %v4201 = vsel %vm4116, %v4200, %v4176
  %v4202 = vsel %vm4115, %v3383, %v4199
  %v4203 = vsel %vm4115, 0, %v4201
  %v4204 = vcosq.f32.pop %v4202
  %v4205 = vsinq.f32.pop %v4202
  %vm4206 = vweird.f32 %v3383
  %v4207 = vand.u32 %v4203, 3
  %vm4208 = vcmp.lt.s32.totalorder %v4207, 2
  %vm4209 = vcmp.eq.s32.totalorder %v4207, 0
  %v4210 = vxor.u32 %v4205, 2147483648
  %v4211 = vsel %vm4209, %v4204, %v4210
  %vm4212 = vcmp.eq.s32.totalorder %v4207, 2
  %v4213 = vxor.u32 %v4204, 2147483648
  %v4214 = vsel %vm4212, %v4213, %v4205
  %v4215 = vsel %vm4208, %v4211, %v4214
  %v4216 = vsel %vm4206, nan, %v4215
  %s4217 = scalar_lea.vmem %s1, 320
  %4218 = vst [vmem:[%s4217] sm:$0xff] %v3907
  %4219 = vst [vmem:[%s4217 + $0x8] sm:$0xff] %v4010
  %4220 = vst [vmem:[%s4217 + $0x10] sm:$0xff] %v4113
  %4221 = vst [vmem:[%s4217 + $0x18] sm:$0xff] %v4216
  %v4222 = vmul.f32 %v8, 32.0
  %v4223 = vmul.f32 %v9, 32.0
  %v4224 = vmul.f32 %v10, 32.0
  %v4225 = vmul.f32 %v11, 32.0
  %v4226 = vand.u32 2147483647, %v4222
  %vm4227 = vcmp.le.f32.partialorder %v4226, 0.7853982
  %vm4228 = vcmp.lt.s32.totalorder %v4222, 0
  %v4229 = vand.u32 %v4222, 2139095040
  %v4230 = vshrl.u32 %v4229, 23
  %v4231 = vsub.s32 %v4230, 127
  %v4232 = vand.u32 2147483647, %v4222
  %v4233 = vand.u32 %v4232, 8388607
  %v4234 = vor.u32 %v4233, 8388608
  %v4235 = vsub.s32 0, %v4234
  %v4236 = vadd.s32 %v4231, 1
  %vm4237 = vcmp.gt.s32.totalorder %v4236, 0
  %v4238 = vsel %vm4237, %v4236, 0
  %v4239 = vshrl.u32 %v4238, 5
  %v4240 = vand.u32 %v4238, 31
  %v4241 = vsub.s32 32, %v4240
  %v4242 = vshrl.u32 683565275, %v4241
  %v4243 = vshll.u32 683565275, %v4240
  %v4244 = vshrl.u32 2475754826, %v4241
  %v4245 = vor.u32 %v4243, %v4244
  %v4246 = vshll.u32 2475754826, %v4240
  %v4247 = vshrl.u32 2131351028, %v4241
  %v4248 = vor.u32 %v4246, %v4247
  %v4249 = vshll.u32 2131351028, %v4240
  %v4250 = vshrl.u32 2102212464, %v4241
  %v4251 = vor.u32 %v4249, %v4250
  %v4252 = vshll.u32 2102212464, %v4240
  %v4253 = vshrl.u32 920167782, %v4241
  %v4254 = vor.u32 %v4252, %v4253
  %v4255 = vshll.u32 920167782, %v4240
  %v4256 = vshrl.u32 1326507024, %v4241
  %v4257 = vor.u32 %v4255, %v4256
  %vm4258 = vcmp.lt.s32.totalorder %v4239, 1
  %vm4259 = vcmp.lt.s32.totalorder %v4239, 2
  %vm4260 = vcmp.lt.s32.totalorder %v4239, 3
  %vm4261 = vcmp.lt.s32.totalorder %v4239, 4
  %v4262 = vsel %vm4258, %v4242, %v4245
  %v4263 = vsel %vm4261, %v4251, 2102212464
  %v4264 = vsel %vm4260, %v4248, %v4263
  %v4265 = vsel %vm4259, %v4262, %v4264
  %v4266 = vsel %vm4258, %v4245, %v4248
  %v4267 = vsel %vm4261, %v4254, 920167782
  %v4268 = vsel %vm4260, %v4251, %v4267
  %v4269 = vsel %vm4259, %v4266, %v4268
  %v4270 = vsel %vm4258, %v4248, %v4251
  %v4271 = vsel %vm4261, %v4257, 1326507024
  %v4272 = vsel %vm4260, %v4254, %v4271
  %v4273 = vsel %vm4259, %v4270, %v4272
  %v4274 = vshll.u32 %v4234, 8
  %v4275 = vmul.u32.u64.compose %v4274, %v4273
  %v4276 = vextract.low.u32 %v4275
  %v4277 = vextract.high.u32 %v4275
  %v4278 = vmul.u32.u64.compose %v4274, %v4269
  %v4279 = vextract.low.u32 %v4278
  %v4280 = vextract.high.u32 %v4278
  %v4281 = vmul.u32 %v4274, %v4265
  %v4282 = vadd.s32 %v4277, %v4279
  %vm4283 = vc.u32 %v4277, %v4279
  %v4284 = vadd.s32 %v4280, 1
  %v4285 = vsel %vm4283, %v4284, %v4280
  %v4286 = vadd.s32 %v4281, %v4285
  %v4287 = vadd.s32 %v4286, 536870912
  %v4288 = vshrl.u32 %v4287, 30
  %v4289 = vshll.u32 %v4288, 30
  %v4290 = vsub.s32 %v4286, %v4289
  %vm4291 = vcmp.lt.s32.totalorder %v4290, 0
  %v4292 = vsub.s32 0, %v4290
  %v4293 = vsel %vm4291, %v4292, %v4290
  %v4294 = vclz %v4293
  %v4295 = vsub.s32 %v4294, 2
  %vm4296 = vcmp.gt.s32.totalorder 0, %v4295
  %v4297 = vsel %vm4296, 0, %v4295
  %v4298 = vsub.s32 32, %v4297
  %v4299 = vshll.u32 %v4290, %v4297
  %v4300 = vshrl.u32 %v4282, %v4298
  %v4301 = vor.u32 %v4299, %v4300
  %v4302 = vsub.s32 4294967266, %v4297
  %v4303 = vadd.s32 %v4302, 127
  %v4304 = vshll.u32 %v4303, 23
  %v4305 = vor.u32 4788187, %v4304
  %v4306 = vand.u32 2147483647, %v4305
  %v4308 = vcvt.s32.f32 %v4301
  %v4309 = vmul.f32 %v4308, %v4306
  %v4310 = vxor.u32 %v4309, 2147483648
  %v4311 = vsel %vm4228, %v4310, %v4309
  %v4312 = vsub.s32 4, %v4288
  %v4313 = vsel %vm4228, %v4312, %v4288
  %v4314 = vsel %vm4227, %v4222, %v4311
  %v4315 = vsel %vm4227, 0, %v4313
  %v4316 = vcosq.f32.pop %v4314
  %v4317 = vsinq.f32.pop %v4314
  %vm4318 = vweird.f32 %v4222
  %v4319 = vadd.s32 %v4315, 3
  %v4320 = vand.u32 %v4319, 3
  %vm4321 = vcmp.lt.s32.totalorder %v4320, 2
  %vm4322 = vcmp.eq.s32.totalorder %v4320, 0
  %v4323 = vxor.u32 %v4317, 2147483648
  %v4324 = vsel %vm4322, %v4316, %v4323
  %vm4325 = vcmp.eq.s32.totalorder %v4320, 2
  %v4326 = vxor.u32 %v4316, 2147483648
  %v4327 = vsel %vm4325, %v4326, %v4317
  %v4328 = vsel %vm4321, %v4324, %v4327
  %v4329 = vsel %vm4318, nan, %v4328
  %v4330 = vand.u32 2147483647, %v4223
  %vm4331 = vcmp.le.f32.partialorder %v4330, 0.7853982
  %vm4332 = vcmp.lt.s32.totalorder %v4223, 0
  %v4333 = vand.u32 %v4223, 2139095040
  %v4334 = vshrl.u32 %v4333, 23
  %v4335 = vsub.s32 %v4334, 127
  %v4336 = vand.u32 2147483647, %v4223
  %v4337 = vand.u32 %v4336, 8388607
  %v4338 = vor.u32 %v4337, 8388608
  %v4339 = vsub.s32 0, %v4338
  %v4340 = vadd.s32 %v4335, 1
  %vm4341 = vcmp.gt.s32.totalorder %v4340, 0
  %v4342 = vsel %vm4341, %v4340, 0
  %v4343 = vshrl.u32 %v4342, 5
  %v4344 = vand.u32 %v4342, 31
  %v4345 = vsub.s32 32, %v4344
  %v4346 = vshrl.u32 683565275, %v4345
  %v4347 = vshll.u32 683565275, %v4344
  %v4348 = vshrl.u32 2475754826, %v4345
  %v4349 = vor.u32 %v4347, %v4348
  %v4350 = vshll.u32 2475754826, %v4344
  %v4351 = vshrl.u32 2131351028, %v4345
  %v4352 = vor.u32 %v4350, %v4351
  %v4353 = vshll.u32 2131351028, %v4344
  %v4354 = vshrl.u32 2102212464, %v4345
  %v4355 = vor.u32 %v4353, %v4354
  %v4356 = vshll.u32 2102212464, %v4344
  %v4357 = vshrl.u32 920167782, %v4345
  %v4358 = vor.u32 %v4356, %v4357
  %v4359 = vshll.u32 920167782, %v4344
  %v4360 = vshrl.u32 1326507024, %v4345
  %v4361 = vor.u32 %v4359, %v4360
  %vm4362 = vcmp.lt.s32.totalorder %v4343, 1
  %vm4363 = vcmp.lt.s32.totalorder %v4343, 2
  %vm4364 = vcmp.lt.s32.totalorder %v4343, 3
  %vm4365 = vcmp.lt.s32.totalorder %v4343, 4
  %v4366 = vsel %vm4362, %v4346, %v4349
  %v4367 = vsel %vm4365, %v4355, 2102212464
  %v4368 = vsel %vm4364, %v4352, %v4367
  %v4369 = vsel %vm4363, %v4366, %v4368
  %v4370 = vsel %vm4362, %v4349, %v4352
  %v4371 = vsel %vm4365, %v4358, 920167782
  %v4372 = vsel %vm4364, %v4355, %v4371
  %v4373 = vsel %vm4363, %v4370, %v4372
  %v4374 = vsel %vm4362, %v4352, %v4355
  %v4375 = vsel %vm4365, %v4361, 1326507024
  %v4376 = vsel %vm4364, %v4358, %v4375
  %v4377 = vsel %vm4363, %v4374, %v4376
  %v4378 = vshll.u32 %v4338, 8
  %v4379 = vmul.u32.u64.compose %v4378, %v4377
  %v4380 = vextract.low.u32 %v4379
  %v4381 = vextract.high.u32 %v4379
  %v4382 = vmul.u32.u64.compose %v4378, %v4373
  %v4383 = vextract.low.u32 %v4382
  %v4384 = vextract.high.u32 %v4382
  %v4385 = vmul.u32 %v4378, %v4369
  %v4386 = vadd.s32 %v4381, %v4383
  %vm4387 = vc.u32 %v4381, %v4383
  %v4388 = vadd.s32 %v4384, 1
  %v4389 = vsel %vm4387, %v4388, %v4384
  %v4390 = vadd.s32 %v4385, %v4389
  %v4391 = vadd.s32 %v4390, 536870912
  %v4392 = vshrl.u32 %v4391, 30
  %v4393 = vshll.u32 %v4392, 30
  %v4394 = vsub.s32 %v4390, %v4393
  %vm4395 = vcmp.lt.s32.totalorder %v4394, 0
  %v4396 = vsub.s32 0, %v4394
  %v4397 = vsel %vm4395, %v4396, %v4394
  %v4398 = vclz %v4397
  %v4399 = vsub.s32 %v4398, 2
  %vm4400 = vcmp.gt.s32.totalorder 0, %v4399
  %v4401 = vsel %vm4400, 0, %v4399
  %v4402 = vsub.s32 32, %v4401
  %v4403 = vshll.u32 %v4394, %v4401
  %v4404 = vshrl.u32 %v4386, %v4402
  %v4405 = vor.u32 %v4403, %v4404
  %v4406 = vsub.s32 4294967266, %v4401
  %v4407 = vadd.s32 %v4406, 127
  %v4408 = vshll.u32 %v4407, 23
  %v4409 = vor.u32 4788187, %v4408
  %v4410 = vand.u32 2147483647, %v4409
  %v4412 = vcvt.s32.f32 %v4405
  %v4413 = vmul.f32 %v4412, %v4410
  %v4414 = vxor.u32 %v4413, 2147483648
  %v4415 = vsel %vm4332, %v4414, %v4413
  %v4416 = vsub.s32 4, %v4392
  %v4417 = vsel %vm4332, %v4416, %v4392
  %v4418 = vsel %vm4331, %v4223, %v4415
  %v4419 = vsel %vm4331, 0, %v4417
  %v4420 = vcosq.f32.pop %v4418
  %v4421 = vsinq.f32.pop %v4418
  %vm4422 = vweird.f32 %v4223
  %v4423 = vadd.s32 %v4419, 3
  %v4424 = vand.u32 %v4423, 3
  %vm4425 = vcmp.lt.s32.totalorder %v4424, 2
  %vm4426 = vcmp.eq.s32.totalorder %v4424, 0
  %v4427 = vxor.u32 %v4421, 2147483648
  %v4428 = vsel %vm4426, %v4420, %v4427
  %vm4429 = vcmp.eq.s32.totalorder %v4424, 2
  %v4430 = vxor.u32 %v4420, 2147483648
  %v4431 = vsel %vm4429, %v4430, %v4421
  %v4432 = vsel %vm4425, %v4428, %v4431
  %v4433 = vsel %vm4422, nan, %v4432
  %v4434 = vand.u32 2147483647, %v4224
  %vm4435 = vcmp.le.f32.partialorder %v4434, 0.7853982
  %vm4436 = vcmp.lt.s32.totalorder %v4224, 0
  %v4437 = vand.u32 %v4224, 2139095040
  %v4438 = vshrl.u32 %v4437, 23
  %v4439 = vsub.s32 %v4438, 127
  %v4440 = vand.u32 2147483647, %v4224
  %v4441 = vand.u32 %v4440, 8388607
  %v4442 = vor.u32 %v4441, 8388608
  %v4443 = vsub.s32 0, %v4442
  %v4444 = vadd.s32 %v4439, 1
  %vm4445 = vcmp.gt.s32.totalorder %v4444, 0
  %v4446 = vsel %vm4445, %v4444, 0
  %v4447 = vshrl.u32 %v4446, 5
  %v4448 = vand.u32 %v4446, 31
  %v4449 = vsub.s32 32, %v4448
  %v4450 = vshrl.u32 683565275, %v4449
  %v4451 = vshll.u32 683565275, %v4448
  %v4452 = vshrl.u32 2475754826, %v4449
  %v4453 = vor.u32 %v4451, %v4452
  %v4454 = vshll.u32 2475754826, %v4448
  %v4455 = vshrl.u32 2131351028, %v4449
  %v4456 = vor.u32 %v4454, %v4455
  %v4457 = vshll.u32 2131351028, %v4448
  %v4458 = vshrl.u32 2102212464, %v4449
  %v4459 = vor.u32 %v4457, %v4458
  %v4460 = vshll.u32 2102212464, %v4448
  %v4461 = vshrl.u32 920167782, %v4449
  %v4462 = vor.u32 %v4460, %v4461
  %v4463 = vshll.u32 920167782, %v4448
  %v4464 = vshrl.u32 1326507024, %v4449
  %v4465 = vor.u32 %v4463, %v4464
  %vm4466 = vcmp.lt.s32.totalorder %v4447, 1
  %vm4467 = vcmp.lt.s32.totalorder %v4447, 2
  %vm4468 = vcmp.lt.s32.totalorder %v4447, 3
  %vm4469 = vcmp.lt.s32.totalorder %v4447, 4
  %v4470 = vsel %vm4466, %v4450, %v4453
  %v4471 = vsel %vm4469, %v4459, 2102212464
  %v4472 = vsel %vm4468, %v4456, %v4471
  %v4473 = vsel %vm4467, %v4470, %v4472
  %v4474 = vsel %vm4466, %v4453, %v4456
  %v4475 = vsel %vm4469, %v4462, 920167782
  %v4476 = vsel %vm4468, %v4459, %v4475
  %v4477 = vsel %vm4467, %v4474, %v4476
  %v4478 = vsel %vm4466, %v4456, %v4459
  %v4479 = vsel %vm4469, %v4465, 1326507024
  %v4480 = vsel %vm4468, %v4462, %v4479
  %v4481 = vsel %vm4467, %v4478, %v4480
  %v4482 = vshll.u32 %v4442, 8
  %v4483 = vmul.u32.u64.compose %v4482, %v4481
  %v4484 = vextract.low.u32 %v4483
  %v4485 = vextract.high.u32 %v4483
  %v4486 = vmul.u32.u64.compose %v4482, %v4477
  %v4487 = vextract.low.u32 %v4486
  %v4488 = vextract.high.u32 %v4486
  %v4489 = vmul.u32 %v4482, %v4473
  %v4490 = vadd.s32 %v4485, %v4487
  %vm4491 = vc.u32 %v4485, %v4487
  %v4492 = vadd.s32 %v4488, 1
  %v4493 = vsel %vm4491, %v4492, %v4488
  %v4494 = vadd.s32 %v4489, %v4493
  %v4495 = vadd.s32 %v4494, 536870912
  %v4496 = vshrl.u32 %v4495, 30
  %v4497 = vshll.u32 %v4496, 30
  %v4498 = vsub.s32 %v4494, %v4497
  %vm4499 = vcmp.lt.s32.totalorder %v4498, 0
  %v4500 = vsub.s32 0, %v4498
  %v4501 = vsel %vm4499, %v4500, %v4498
  %v4502 = vclz %v4501
  %v4503 = vsub.s32 %v4502, 2
  %vm4504 = vcmp.gt.s32.totalorder 0, %v4503
  %v4505 = vsel %vm4504, 0, %v4503
  %v4506 = vsub.s32 32, %v4505
  %v4507 = vshll.u32 %v4498, %v4505
  %v4508 = vshrl.u32 %v4490, %v4506
  %v4509 = vor.u32 %v4507, %v4508
  %v4510 = vsub.s32 4294967266, %v4505
  %v4511 = vadd.s32 %v4510, 127
  %v4512 = vshll.u32 %v4511, 23
  %v4513 = vor.u32 4788187, %v4512
  %v4514 = vand.u32 2147483647, %v4513
  %v4516 = vcvt.s32.f32 %v4509
  %v4517 = vmul.f32 %v4516, %v4514
  %v4518 = vxor.u32 %v4517, 2147483648
  %v4519 = vsel %vm4436, %v4518, %v4517
  %v4520 = vsub.s32 4, %v4496
  %v4521 = vsel %vm4436, %v4520, %v4496
  %v4522 = vsel %vm4435, %v4224, %v4519
  %v4523 = vsel %vm4435, 0, %v4521
  %v4524 = vcosq.f32.pop %v4522
  %v4525 = vsinq.f32.pop %v4522
  %vm4526 = vweird.f32 %v4224
  %v4527 = vadd.s32 %v4523, 3
  %v4528 = vand.u32 %v4527, 3
  %vm4529 = vcmp.lt.s32.totalorder %v4528, 2
  %vm4530 = vcmp.eq.s32.totalorder %v4528, 0
  %v4531 = vxor.u32 %v4525, 2147483648
  %v4532 = vsel %vm4530, %v4524, %v4531
  %vm4533 = vcmp.eq.s32.totalorder %v4528, 2
  %v4534 = vxor.u32 %v4524, 2147483648
  %v4535 = vsel %vm4533, %v4534, %v4525
  %v4536 = vsel %vm4529, %v4532, %v4535
  %v4537 = vsel %vm4526, nan, %v4536
  %v4538 = vand.u32 2147483647, %v4225
  %vm4539 = vcmp.le.f32.partialorder %v4538, 0.7853982
  %vm4540 = vcmp.lt.s32.totalorder %v4225, 0
  %v4541 = vand.u32 %v4225, 2139095040
  %v4542 = vshrl.u32 %v4541, 23
  %v4543 = vsub.s32 %v4542, 127
  %v4544 = vand.u32 2147483647, %v4225
  %v4545 = vand.u32 %v4544, 8388607
  %v4546 = vor.u32 %v4545, 8388608
  %v4547 = vsub.s32 0, %v4546
  %v4548 = vadd.s32 %v4543, 1
  %vm4549 = vcmp.gt.s32.totalorder %v4548, 0
  %v4550 = vsel %vm4549, %v4548, 0
  %v4551 = vshrl.u32 %v4550, 5
  %v4552 = vand.u32 %v4550, 31
  %v4553 = vsub.s32 32, %v4552
  %v4554 = vshrl.u32 683565275, %v4553
  %v4555 = vshll.u32 683565275, %v4552
  %v4556 = vshrl.u32 2475754826, %v4553
  %v4557 = vor.u32 %v4555, %v4556
  %v4558 = vshll.u32 2475754826, %v4552
  %v4559 = vshrl.u32 2131351028, %v4553
  %v4560 = vor.u32 %v4558, %v4559
  %v4561 = vshll.u32 2131351028, %v4552
  %v4562 = vshrl.u32 2102212464, %v4553
  %v4563 = vor.u32 %v4561, %v4562
  %v4564 = vshll.u32 2102212464, %v4552
  %v4565 = vshrl.u32 920167782, %v4553
  %v4566 = vor.u32 %v4564, %v4565
  %v4567 = vshll.u32 920167782, %v4552
  %v4568 = vshrl.u32 1326507024, %v4553
  %v4569 = vor.u32 %v4567, %v4568
  %vm4570 = vcmp.lt.s32.totalorder %v4551, 1
  %vm4571 = vcmp.lt.s32.totalorder %v4551, 2
  %vm4572 = vcmp.lt.s32.totalorder %v4551, 3
  %vm4573 = vcmp.lt.s32.totalorder %v4551, 4
  %v4574 = vsel %vm4570, %v4554, %v4557
  %v4575 = vsel %vm4573, %v4563, 2102212464
  %v4576 = vsel %vm4572, %v4560, %v4575
  %v4577 = vsel %vm4571, %v4574, %v4576
  %v4578 = vsel %vm4570, %v4557, %v4560
  %v4579 = vsel %vm4573, %v4566, 920167782
  %v4580 = vsel %vm4572, %v4563, %v4579
  %v4581 = vsel %vm4571, %v4578, %v4580
  %v4582 = vsel %vm4570, %v4560, %v4563
  %v4583 = vsel %vm4573, %v4569, 1326507024
  %v4584 = vsel %vm4572, %v4566, %v4583
  %v4585 = vsel %vm4571, %v4582, %v4584
  %v4586 = vshll.u32 %v4546, 8
  %v4587 = vmul.u32.u64.compose %v4586, %v4585
  %v4588 = vextract.low.u32 %v4587
  %v4589 = vextract.high.u32 %v4587
  %v4590 = vmul.u32.u64.compose %v4586, %v4581
  %v4591 = vextract.low.u32 %v4590
  %v4592 = vextract.high.u32 %v4590
  %v4593 = vmul.u32 %v4586, %v4577
  %v4594 = vadd.s32 %v4589, %v4591
  %vm4595 = vc.u32 %v4589, %v4591
  %v4596 = vadd.s32 %v4592, 1
  %v4597 = vsel %vm4595, %v4596, %v4592
  %v4598 = vadd.s32 %v4593, %v4597
  %v4599 = vadd.s32 %v4598, 536870912
  %v4600 = vshrl.u32 %v4599, 30
  %v4601 = vshll.u32 %v4600, 30
  %v4602 = vsub.s32 %v4598, %v4601
  %vm4603 = vcmp.lt.s32.totalorder %v4602, 0
  %v4604 = vsub.s32 0, %v4602
  %v4605 = vsel %vm4603, %v4604, %v4602
  %v4606 = vclz %v4605
  %v4607 = vsub.s32 %v4606, 2
  %vm4608 = vcmp.gt.s32.totalorder 0, %v4607
  %v4609 = vsel %vm4608, 0, %v4607
  %v4610 = vsub.s32 32, %v4609
  %v4611 = vshll.u32 %v4602, %v4609
  %v4612 = vshrl.u32 %v4594, %v4610
  %v4613 = vor.u32 %v4611, %v4612
  %v4614 = vsub.s32 4294967266, %v4609
  %v4615 = vadd.s32 %v4614, 127
  %v4616 = vshll.u32 %v4615, 23
  %v4617 = vor.u32 4788187, %v4616
  %v4618 = vand.u32 2147483647, %v4617
  %v4620 = vcvt.s32.f32 %v4613
  %v4621 = vmul.f32 %v4620, %v4618
  %v4622 = vxor.u32 %v4621, 2147483648
  %v4623 = vsel %vm4540, %v4622, %v4621
  %v4624 = vsub.s32 4, %v4600
  %v4625 = vsel %vm4540, %v4624, %v4600
  %v4626 = vsel %vm4539, %v4225, %v4623
  %v4627 = vsel %vm4539, 0, %v4625
  %v4628 = vcosq.f32.pop %v4626
  %v4629 = vsinq.f32.pop %v4626
  %vm4630 = vweird.f32 %v4225
  %v4631 = vadd.s32 %v4627, 3
  %v4632 = vand.u32 %v4631, 3
  %vm4633 = vcmp.lt.s32.totalorder %v4632, 2
  %vm4634 = vcmp.eq.s32.totalorder %v4632, 0
  %v4635 = vxor.u32 %v4629, 2147483648
  %v4636 = vsel %vm4634, %v4628, %v4635
  %vm4637 = vcmp.eq.s32.totalorder %v4632, 2
  %v4638 = vxor.u32 %v4628, 2147483648
  %v4639 = vsel %vm4637, %v4638, %v4629
  %v4640 = vsel %vm4633, %v4636, %v4639
  %v4641 = vsel %vm4630, nan, %v4640
  %s4642 = scalar_lea.vmem %s1, 352
  %4643 = vst [vmem:[%s4642] sm:$0xff] %v4329
  %4644 = vst [vmem:[%s4642 + $0x8] sm:$0xff] %v4433
  %4645 = vst [vmem:[%s4642 + $0x10] sm:$0xff] %v4537
  %4646 = vst [vmem:[%s4642 + $0x18] sm:$0xff] %v4641
  %v4647 = vand.u32 2147483647, %v4222
  %vm4648 = vcmp.le.f32.partialorder %v4647, 0.7853982
  %vm4649 = vcmp.lt.s32.totalorder %v4222, 0
  %v4650 = vand.u32 %v4222, 2139095040
  %v4651 = vshrl.u32 %v4650, 23
  %v4652 = vsub.s32 %v4651, 127
  %v4653 = vand.u32 2147483647, %v4222
  %v4654 = vand.u32 %v4653, 8388607
  %v4655 = vor.u32 %v4654, 8388608
  %v4656 = vsub.s32 0, %v4655
  %v4657 = vadd.s32 %v4652, 1
  %vm4658 = vcmp.gt.s32.totalorder %v4657, 0
  %v4659 = vsel %vm4658, %v4657, 0
  %v4660 = vshrl.u32 %v4659, 5
  %v4661 = vand.u32 %v4659, 31
  %v4662 = vsub.s32 32, %v4661
  %v4663 = vshrl.u32 683565275, %v4662
  %v4664 = vshll.u32 683565275, %v4661
  %v4665 = vshrl.u32 2475754826, %v4662
  %v4666 = vor.u32 %v4664, %v4665
  %v4667 = vshll.u32 2475754826, %v4661
  %v4668 = vshrl.u32 2131351028, %v4662
  %v4669 = vor.u32 %v4667, %v4668
  %v4670 = vshll.u32 2131351028, %v4661
  %v4671 = vshrl.u32 2102212464, %v4662
  %v4672 = vor.u32 %v4670, %v4671
  %v4673 = vshll.u32 2102212464, %v4661
  %v4674 = vshrl.u32 920167782, %v4662
  %v4675 = vor.u32 %v4673, %v4674
  %v4676 = vshll.u32 920167782, %v4661
  %v4677 = vshrl.u32 1326507024, %v4662
  %v4678 = vor.u32 %v4676, %v4677
  %vm4679 = vcmp.lt.s32.totalorder %v4660, 1
  %vm4680 = vcmp.lt.s32.totalorder %v4660, 2
  %vm4681 = vcmp.lt.s32.totalorder %v4660, 3
  %vm4682 = vcmp.lt.s32.totalorder %v4660, 4
  %v4683 = vsel %vm4679, %v4663, %v4666
  %v4684 = vsel %vm4682, %v4672, 2102212464
  %v4685 = vsel %vm4681, %v4669, %v4684
  %v4686 = vsel %vm4680, %v4683, %v4685
  %v4687 = vsel %vm4679, %v4666, %v4669
  %v4688 = vsel %vm4682, %v4675, 920167782
  %v4689 = vsel %vm4681, %v4672, %v4688
  %v4690 = vsel %vm4680, %v4687, %v4689
  %v4691 = vsel %vm4679, %v4669, %v4672
  %v4692 = vsel %vm4682, %v4678, 1326507024
  %v4693 = vsel %vm4681, %v4675, %v4692
  %v4694 = vsel %vm4680, %v4691, %v4693
  %v4695 = vshll.u32 %v4655, 8
  %v4696 = vmul.u32.u64.compose %v4695, %v4694
  %v4697 = vextract.low.u32 %v4696
  %v4698 = vextract.high.u32 %v4696
  %v4699 = vmul.u32.u64.compose %v4695, %v4690
  %v4700 = vextract.low.u32 %v4699
  %v4701 = vextract.high.u32 %v4699
  %v4702 = vmul.u32 %v4695, %v4686
  %v4703 = vadd.s32 %v4698, %v4700
  %vm4704 = vc.u32 %v4698, %v4700
  %v4705 = vadd.s32 %v4701, 1
  %v4706 = vsel %vm4704, %v4705, %v4701
  %v4707 = vadd.s32 %v4702, %v4706
  %v4708 = vadd.s32 %v4707, 536870912
  %v4709 = vshrl.u32 %v4708, 30
  %v4710 = vshll.u32 %v4709, 30
  %v4711 = vsub.s32 %v4707, %v4710
  %vm4712 = vcmp.lt.s32.totalorder %v4711, 0
  %v4713 = vsub.s32 0, %v4711
  %v4714 = vsel %vm4712, %v4713, %v4711
  %v4715 = vclz %v4714
  %v4716 = vsub.s32 %v4715, 2
  %vm4717 = vcmp.gt.s32.totalorder 0, %v4716
  %v4718 = vsel %vm4717, 0, %v4716
  %v4719 = vsub.s32 32, %v4718
  %v4720 = vshll.u32 %v4711, %v4718
  %v4721 = vshrl.u32 %v4703, %v4719
  %v4722 = vor.u32 %v4720, %v4721
  %v4723 = vsub.s32 4294967266, %v4718
  %v4724 = vadd.s32 %v4723, 127
  %v4725 = vshll.u32 %v4724, 23
  %v4726 = vor.u32 4788187, %v4725
  %v4727 = vand.u32 2147483647, %v4726
  %v4729 = vcvt.s32.f32 %v4722
  %v4730 = vmul.f32 %v4729, %v4727
  %v4731 = vxor.u32 %v4730, 2147483648
  %v4732 = vsel %vm4649, %v4731, %v4730
  %v4733 = vsub.s32 4, %v4709
  %v4734 = vsel %vm4649, %v4733, %v4709
  %v4735 = vsel %vm4648, %v4222, %v4732
  %v4736 = vsel %vm4648, 0, %v4734
  %v4737 = vcosq.f32.pop %v4735
  %v4738 = vsinq.f32.pop %v4735
  %vm4739 = vweird.f32 %v4222
  %v4740 = vand.u32 %v4736, 3
  %vm4741 = vcmp.lt.s32.totalorder %v4740, 2
  %vm4742 = vcmp.eq.s32.totalorder %v4740, 0
  %v4743 = vxor.u32 %v4738, 2147483648
  %v4744 = vsel %vm4742, %v4737, %v4743
  %vm4745 = vcmp.eq.s32.totalorder %v4740, 2
  %v4746 = vxor.u32 %v4737, 2147483648
  %v4747 = vsel %vm4745, %v4746, %v4738
  %v4748 = vsel %vm4741, %v4744, %v4747
  %v4749 = vsel %vm4739, nan, %v4748
  %v4750 = vand.u32 2147483647, %v4223
  %vm4751 = vcmp.le.f32.partialorder %v4750, 0.7853982
  %vm4752 = vcmp.lt.s32.totalorder %v4223, 0
  %v4753 = vand.u32 %v4223, 2139095040
  %v4754 = vshrl.u32 %v4753, 23
  %v4755 = vsub.s32 %v4754, 127
  %v4756 = vand.u32 2147483647, %v4223
  %v4757 = vand.u32 %v4756, 8388607
  %v4758 = vor.u32 %v4757, 8388608
  %v4759 = vsub.s32 0, %v4758
  %v4760 = vadd.s32 %v4755, 1
  %vm4761 = vcmp.gt.s32.totalorder %v4760, 0
  %v4762 = vsel %vm4761, %v4760, 0
  %v4763 = vshrl.u32 %v4762, 5
  %v4764 = vand.u32 %v4762, 31
  %v4765 = vsub.s32 32, %v4764
  %v4766 = vshrl.u32 683565275, %v4765
  %v4767 = vshll.u32 683565275, %v4764
  %v4768 = vshrl.u32 2475754826, %v4765
  %v4769 = vor.u32 %v4767, %v4768
  %v4770 = vshll.u32 2475754826, %v4764
  %v4771 = vshrl.u32 2131351028, %v4765
  %v4772 = vor.u32 %v4770, %v4771
  %v4773 = vshll.u32 2131351028, %v4764
  %v4774 = vshrl.u32 2102212464, %v4765
  %v4775 = vor.u32 %v4773, %v4774
  %v4776 = vshll.u32 2102212464, %v4764
  %v4777 = vshrl.u32 920167782, %v4765
  %v4778 = vor.u32 %v4776, %v4777
  %v4779 = vshll.u32 920167782, %v4764
  %v4780 = vshrl.u32 1326507024, %v4765
  %v4781 = vor.u32 %v4779, %v4780
  %vm4782 = vcmp.lt.s32.totalorder %v4763, 1
  %vm4783 = vcmp.lt.s32.totalorder %v4763, 2
  %vm4784 = vcmp.lt.s32.totalorder %v4763, 3
  %vm4785 = vcmp.lt.s32.totalorder %v4763, 4
  %v4786 = vsel %vm4782, %v4766, %v4769
  %v4787 = vsel %vm4785, %v4775, 2102212464
  %v4788 = vsel %vm4784, %v4772, %v4787
  %v4789 = vsel %vm4783, %v4786, %v4788
  %v4790 = vsel %vm4782, %v4769, %v4772
  %v4791 = vsel %vm4785, %v4778, 920167782
  %v4792 = vsel %vm4784, %v4775, %v4791
  %v4793 = vsel %vm4783, %v4790, %v4792
  %v4794 = vsel %vm4782, %v4772, %v4775
  %v4795 = vsel %vm4785, %v4781, 1326507024
  %v4796 = vsel %vm4784, %v4778, %v4795
  %v4797 = vsel %vm4783, %v4794, %v4796
  %v4798 = vshll.u32 %v4758, 8
  %v4799 = vmul.u32.u64.compose %v4798, %v4797
  %v4800 = vextract.low.u32 %v4799
  %v4801 = vextract.high.u32 %v4799
  %v4802 = vmul.u32.u64.compose %v4798, %v4793
  %v4803 = vextract.low.u32 %v4802
  %v4804 = vextract.high.u32 %v4802
  %v4805 = vmul.u32 %v4798, %v4789
  %v4806 = vadd.s32 %v4801, %v4803
  %vm4807 = vc.u32 %v4801, %v4803
  %v4808 = vadd.s32 %v4804, 1
  %v4809 = vsel %vm4807, %v4808, %v4804
  %v4810 = vadd.s32 %v4805, %v4809
  %v4811 = vadd.s32 %v4810, 536870912
  %v4812 = vshrl.u32 %v4811, 30
  %v4813 = vshll.u32 %v4812, 30
  %v4814 = vsub.s32 %v4810, %v4813
  %vm4815 = vcmp.lt.s32.totalorder %v4814, 0
  %v4816 = vsub.s32 0, %v4814
  %v4817 = vsel %vm4815, %v4816, %v4814
  %v4818 = vclz %v4817
  %v4819 = vsub.s32 %v4818, 2
  %vm4820 = vcmp.gt.s32.totalorder 0, %v4819
  %v4821 = vsel %vm4820, 0, %v4819
  %v4822 = vsub.s32 32, %v4821
  %v4823 = vshll.u32 %v4814, %v4821
  %v4824 = vshrl.u32 %v4806, %v4822
  %v4825 = vor.u32 %v4823, %v4824
  %v4826 = vsub.s32 4294967266, %v4821
  %v4827 = vadd.s32 %v4826, 127
  %v4828 = vshll.u32 %v4827, 23
  %v4829 = vor.u32 4788187, %v4828
  %v4830 = vand.u32 2147483647, %v4829
  %v4832 = vcvt.s32.f32 %v4825
  %v4833 = vmul.f32 %v4832, %v4830
  %v4834 = vxor.u32 %v4833, 2147483648
  %v4835 = vsel %vm4752, %v4834, %v4833
  %v4836 = vsub.s32 4, %v4812
  %v4837 = vsel %vm4752, %v4836, %v4812
  %v4838 = vsel %vm4751, %v4223, %v4835
  %v4839 = vsel %vm4751, 0, %v4837
  %v4840 = vcosq.f32.pop %v4838
  %v4841 = vsinq.f32.pop %v4838
  %vm4842 = vweird.f32 %v4223
  %v4843 = vand.u32 %v4839, 3
  %vm4844 = vcmp.lt.s32.totalorder %v4843, 2
  %vm4845 = vcmp.eq.s32.totalorder %v4843, 0
  %v4846 = vxor.u32 %v4841, 2147483648
  %v4847 = vsel %vm4845, %v4840, %v4846
  %vm4848 = vcmp.eq.s32.totalorder %v4843, 2
  %v4849 = vxor.u32 %v4840, 2147483648
  %v4850 = vsel %vm4848, %v4849, %v4841
  %v4851 = vsel %vm4844, %v4847, %v4850
  %v4852 = vsel %vm4842, nan, %v4851
  %v4853 = vand.u32 2147483647, %v4224
  %vm4854 = vcmp.le.f32.partialorder %v4853, 0.7853982
  %vm4855 = vcmp.lt.s32.totalorder %v4224, 0
  %v4856 = vand.u32 %v4224, 2139095040
  %v4857 = vshrl.u32 %v4856, 23
  %v4858 = vsub.s32 %v4857, 127
  %v4859 = vand.u32 2147483647, %v4224
  %v4860 = vand.u32 %v4859, 8388607
  %v4861 = vor.u32 %v4860, 8388608
  %v4862 = vsub.s32 0, %v4861
  %v4863 = vadd.s32 %v4858, 1
  %vm4864 = vcmp.gt.s32.totalorder %v4863, 0
  %v4865 = vsel %vm4864, %v4863, 0
  %v4866 = vshrl.u32 %v4865, 5
  %v4867 = vand.u32 %v4865, 31
  %v4868 = vsub.s32 32, %v4867
  %v4869 = vshrl.u32 683565275, %v4868
  %v4870 = vshll.u32 683565275, %v4867
  %v4871 = vshrl.u32 2475754826, %v4868
  %v4872 = vor.u32 %v4870, %v4871
  %v4873 = vshll.u32 2475754826, %v4867
  %v4874 = vshrl.u32 2131351028, %v4868
  %v4875 = vor.u32 %v4873, %v4874
  %v4876 = vshll.u32 2131351028, %v4867
  %v4877 = vshrl.u32 2102212464, %v4868
  %v4878 = vor.u32 %v4876, %v4877
  %v4879 = vshll.u32 2102212464, %v4867
  %v4880 = vshrl.u32 920167782, %v4868
  %v4881 = vor.u32 %v4879, %v4880
  %v4882 = vshll.u32 920167782, %v4867
  %v4883 = vshrl.u32 1326507024, %v4868
  %v4884 = vor.u32 %v4882, %v4883
  %vm4885 = vcmp.lt.s32.totalorder %v4866, 1
  %vm4886 = vcmp.lt.s32.totalorder %v4866, 2
  %vm4887 = vcmp.lt.s32.totalorder %v4866, 3
  %vm4888 = vcmp.lt.s32.totalorder %v4866, 4
  %v4889 = vsel %vm4885, %v4869, %v4872
  %v4890 = vsel %vm4888, %v4878, 2102212464
  %v4891 = vsel %vm4887, %v4875, %v4890
  %v4892 = vsel %vm4886, %v4889, %v4891
  %v4893 = vsel %vm4885, %v4872, %v4875
  %v4894 = vsel %vm4888, %v4881, 920167782
  %v4895 = vsel %vm4887, %v4878, %v4894
  %v4896 = vsel %vm4886, %v4893, %v4895
  %v4897 = vsel %vm4885, %v4875, %v4878
  %v4898 = vsel %vm4888, %v4884, 1326507024
  %v4899 = vsel %vm4887, %v4881, %v4898
  %v4900 = vsel %vm4886, %v4897, %v4899
  %v4901 = vshll.u32 %v4861, 8
  %v4902 = vmul.u32.u64.compose %v4901, %v4900
  %v4903 = vextract.low.u32 %v4902
  %v4904 = vextract.high.u32 %v4902
  %v4905 = vmul.u32.u64.compose %v4901, %v4896
  %v4906 = vextract.low.u32 %v4905
  %v4907 = vextract.high.u32 %v4905
  %v4908 = vmul.u32 %v4901, %v4892
  %v4909 = vadd.s32 %v4904, %v4906
  %vm4910 = vc.u32 %v4904, %v4906
  %v4911 = vadd.s32 %v4907, 1
  %v4912 = vsel %vm4910, %v4911, %v4907
  %v4913 = vadd.s32 %v4908, %v4912
  %v4914 = vadd.s32 %v4913, 536870912
  %v4915 = vshrl.u32 %v4914, 30
  %v4916 = vshll.u32 %v4915, 30
  %v4917 = vsub.s32 %v4913, %v4916
  %vm4918 = vcmp.lt.s32.totalorder %v4917, 0
  %v4919 = vsub.s32 0, %v4917
  %v4920 = vsel %vm4918, %v4919, %v4917
  %v4921 = vclz %v4920
  %v4922 = vsub.s32 %v4921, 2
  %vm4923 = vcmp.gt.s32.totalorder 0, %v4922
  %v4924 = vsel %vm4923, 0, %v4922
  %v4925 = vsub.s32 32, %v4924
  %v4926 = vshll.u32 %v4917, %v4924
  %v4927 = vshrl.u32 %v4909, %v4925
  %v4928 = vor.u32 %v4926, %v4927
  %v4929 = vsub.s32 4294967266, %v4924
  %v4930 = vadd.s32 %v4929, 127
  %v4931 = vshll.u32 %v4930, 23
  %v4932 = vor.u32 4788187, %v4931
  %v4933 = vand.u32 2147483647, %v4932
  %v4935 = vcvt.s32.f32 %v4928
  %v4936 = vmul.f32 %v4935, %v4933
  %v4937 = vxor.u32 %v4936, 2147483648
  %v4938 = vsel %vm4855, %v4937, %v4936
  %v4939 = vsub.s32 4, %v4915
  %v4940 = vsel %vm4855, %v4939, %v4915
  %v4941 = vsel %vm4854, %v4224, %v4938
  %v4942 = vsel %vm4854, 0, %v4940
  %v4943 = vcosq.f32.pop %v4941
  %v4944 = vsinq.f32.pop %v4941
  %vm4945 = vweird.f32 %v4224
  %v4946 = vand.u32 %v4942, 3
  %vm4947 = vcmp.lt.s32.totalorder %v4946, 2
  %vm4948 = vcmp.eq.s32.totalorder %v4946, 0
  %v4949 = vxor.u32 %v4944, 2147483648
  %v4950 = vsel %vm4948, %v4943, %v4949
  %vm4951 = vcmp.eq.s32.totalorder %v4946, 2
  %v4952 = vxor.u32 %v4943, 2147483648
  %v4953 = vsel %vm4951, %v4952, %v4944
  %v4954 = vsel %vm4947, %v4950, %v4953
  %v4955 = vsel %vm4945, nan, %v4954
  %v4956 = vand.u32 2147483647, %v4225
  %vm4957 = vcmp.le.f32.partialorder %v4956, 0.7853982
  %vm4958 = vcmp.lt.s32.totalorder %v4225, 0
  %v4959 = vand.u32 %v4225, 2139095040
  %v4960 = vshrl.u32 %v4959, 23
  %v4961 = vsub.s32 %v4960, 127
  %v4962 = vand.u32 2147483647, %v4225
  %v4963 = vand.u32 %v4962, 8388607
  %v4964 = vor.u32 %v4963, 8388608
  %v4965 = vsub.s32 0, %v4964
  %v4966 = vadd.s32 %v4961, 1
  %vm4967 = vcmp.gt.s32.totalorder %v4966, 0
  %v4968 = vsel %vm4967, %v4966, 0
  %v4969 = vshrl.u32 %v4968, 5
  %v4970 = vand.u32 %v4968, 31
  %v4971 = vsub.s32 32, %v4970
  %v4972 = vshrl.u32 683565275, %v4971
  %v4973 = vshll.u32 683565275, %v4970
  %v4974 = vshrl.u32 2475754826, %v4971
  %v4975 = vor.u32 %v4973, %v4974
  %v4976 = vshll.u32 2475754826, %v4970
  %v4977 = vshrl.u32 2131351028, %v4971
  %v4978 = vor.u32 %v4976, %v4977
  %v4979 = vshll.u32 2131351028, %v4970
  %v4980 = vshrl.u32 2102212464, %v4971
  %v4981 = vor.u32 %v4979, %v4980
  %v4982 = vshll.u32 2102212464, %v4970
  %v4983 = vshrl.u32 920167782, %v4971
  %v4984 = vor.u32 %v4982, %v4983
  %v4985 = vshll.u32 920167782, %v4970
  %v4986 = vshrl.u32 1326507024, %v4971
  %v4987 = vor.u32 %v4985, %v4986
  %vm4988 = vcmp.lt.s32.totalorder %v4969, 1
  %vm4989 = vcmp.lt.s32.totalorder %v4969, 2
  %vm4990 = vcmp.lt.s32.totalorder %v4969, 3
  %vm4991 = vcmp.lt.s32.totalorder %v4969, 4
  %v4992 = vsel %vm4988, %v4972, %v4975
  %v4993 = vsel %vm4991, %v4981, 2102212464
  %v4994 = vsel %vm4990, %v4978, %v4993
  %v4995 = vsel %vm4989, %v4992, %v4994
  %v4996 = vsel %vm4988, %v4975, %v4978
  %v4997 = vsel %vm4991, %v4984, 920167782
  %v4998 = vsel %vm4990, %v4981, %v4997
  %v4999 = vsel %vm4989, %v4996, %v4998
  %v5000 = vsel %vm4988, %v4978, %v4981
  %v5001 = vsel %vm4991, %v4987, 1326507024
  %v5002 = vsel %vm4990, %v4984, %v5001
  %v5003 = vsel %vm4989, %v5000, %v5002
  %v5004 = vshll.u32 %v4964, 8
  %v5005 = vmul.u32.u64.compose %v5004, %v5003
  %v5006 = vextract.low.u32 %v5005
  %v5007 = vextract.high.u32 %v5005
  %v5008 = vmul.u32.u64.compose %v5004, %v4999
  %v5009 = vextract.low.u32 %v5008
  %v5010 = vextract.high.u32 %v5008
  %v5011 = vmul.u32 %v5004, %v4995
  %v5012 = vadd.s32 %v5007, %v5009
  %vm5013 = vc.u32 %v5007, %v5009
  %v5014 = vadd.s32 %v5010, 1
  %v5015 = vsel %vm5013, %v5014, %v5010
  %v5016 = vadd.s32 %v5011, %v5015
  %v5017 = vadd.s32 %v5016, 536870912
  %v5018 = vshrl.u32 %v5017, 30
  %v5019 = vshll.u32 %v5018, 30
  %v5020 = vsub.s32 %v5016, %v5019
  %vm5021 = vcmp.lt.s32.totalorder %v5020, 0
  %v5022 = vsub.s32 0, %v5020
  %v5023 = vsel %vm5021, %v5022, %v5020
  %v5024 = vclz %v5023
  %v5025 = vsub.s32 %v5024, 2
  %vm5026 = vcmp.gt.s32.totalorder 0, %v5025
  %v5027 = vsel %vm5026, 0, %v5025
  %v5028 = vsub.s32 32, %v5027
  %v5029 = vshll.u32 %v5020, %v5027
  %v5030 = vshrl.u32 %v5012, %v5028
  %v5031 = vor.u32 %v5029, %v5030
  %v5032 = vsub.s32 4294967266, %v5027
  %v5033 = vadd.s32 %v5032, 127
  %v5034 = vshll.u32 %v5033, 23
  %v5035 = vor.u32 4788187, %v5034
  %v5036 = vand.u32 2147483647, %v5035
  %v5038 = vcvt.s32.f32 %v5031
  %v5039 = vmul.f32 %v5038, %v5036
  %v5040 = vxor.u32 %v5039, 2147483648
  %v5041 = vsel %vm4958, %v5040, %v5039
  %v5042 = vsub.s32 4, %v5018
  %v5043 = vsel %vm4958, %v5042, %v5018
  %v5044 = vsel %vm4957, %v4225, %v5041
  %v5045 = vsel %vm4957, 0, %v5043
  %v5046 = vcosq.f32.pop %v5044
  %v5047 = vsinq.f32.pop %v5044
  %vm5048 = vweird.f32 %v4225
  %v5049 = vand.u32 %v5045, 3
  %vm5050 = vcmp.lt.s32.totalorder %v5049, 2
  %vm5051 = vcmp.eq.s32.totalorder %v5049, 0
  %v5052 = vxor.u32 %v5047, 2147483648
  %v5053 = vsel %vm5051, %v5046, %v5052
  %vm5054 = vcmp.eq.s32.totalorder %v5049, 2
  %v5055 = vxor.u32 %v5046, 2147483648
  %v5056 = vsel %vm5054, %v5055, %v5047
  %v5057 = vsel %vm5050, %v5053, %v5056
  %v5058 = vsel %vm5048, nan, %v5057
  %s5059 = scalar_lea.vmem %s1, 384
  %5060 = vst [vmem:[%s5059] sm:$0xff] %v4749
  %5061 = vst [vmem:[%s5059 + $0x8] sm:$0xff] %v4852
  %5062 = vst [vmem:[%s5059 + $0x10] sm:$0xff] %v4955
  %5063 = vst [vmem:[%s5059 + $0x18] sm:$0xff] %v5058
  %v5064 = vmul.f32 %v8, 64.0
  %v5065 = vmul.f32 %v9, 64.0
  %v5066 = vmul.f32 %v10, 64.0
  %v5067 = vmul.f32 %v11, 64.0
  %v5068 = vand.u32 2147483647, %v5064
  %vm5069 = vcmp.le.f32.partialorder %v5068, 0.7853982
  %vm5070 = vcmp.lt.s32.totalorder %v5064, 0
  %v5071 = vand.u32 %v5064, 2139095040
  %v5072 = vshrl.u32 %v5071, 23
  %v5073 = vsub.s32 %v5072, 127
  %v5074 = vand.u32 2147483647, %v5064
  %v5075 = vand.u32 %v5074, 8388607
  %v5076 = vor.u32 %v5075, 8388608
  %v5077 = vsub.s32 0, %v5076
  %v5078 = vadd.s32 %v5073, 1
  %vm5079 = vcmp.gt.s32.totalorder %v5078, 0
  %v5080 = vsel %vm5079, %v5078, 0
  %v5081 = vshrl.u32 %v5080, 5
  %v5082 = vand.u32 %v5080, 31
  %v5083 = vsub.s32 32, %v5082
  %v5084 = vshrl.u32 683565275, %v5083
  %v5085 = vshll.u32 683565275, %v5082
  %v5086 = vshrl.u32 2475754826, %v5083
  %v5087 = vor.u32 %v5085, %v5086
  %v5088 = vshll.u32 2475754826, %v5082
  %v5089 = vshrl.u32 2131351028, %v5083
  %v5090 = vor.u32 %v5088, %v5089
  %v5091 = vshll.u32 2131351028, %v5082
  %v5092 = vshrl.u32 2102212464, %v5083
  %v5093 = vor.u32 %v5091, %v5092
  %v5094 = vshll.u32 2102212464, %v5082
  %v5095 = vshrl.u32 920167782, %v5083
  %v5096 = vor.u32 %v5094, %v5095
  %v5097 = vshll.u32 920167782, %v5082
  %v5098 = vshrl.u32 1326507024, %v5083
  %v5099 = vor.u32 %v5097, %v5098
  %vm5100 = vcmp.lt.s32.totalorder %v5081, 1
  %vm5101 = vcmp.lt.s32.totalorder %v5081, 2
  %vm5102 = vcmp.lt.s32.totalorder %v5081, 3
  %vm5103 = vcmp.lt.s32.totalorder %v5081, 4
  %v5104 = vsel %vm5100, %v5084, %v5087
  %v5105 = vsel %vm5103, %v5093, 2102212464
  %v5106 = vsel %vm5102, %v5090, %v5105
  %v5107 = vsel %vm5101, %v5104, %v5106
  %v5108 = vsel %vm5100, %v5087, %v5090
  %v5109 = vsel %vm5103, %v5096, 920167782
  %v5110 = vsel %vm5102, %v5093, %v5109
  %v5111 = vsel %vm5101, %v5108, %v5110
  %v5112 = vsel %vm5100, %v5090, %v5093
  %v5113 = vsel %vm5103, %v5099, 1326507024
  %v5114 = vsel %vm5102, %v5096, %v5113
  %v5115 = vsel %vm5101, %v5112, %v5114
  %v5116 = vshll.u32 %v5076, 8
  %v5117 = vmul.u32.u64.compose %v5116, %v5115
  %v5118 = vextract.low.u32 %v5117
  %v5119 = vextract.high.u32 %v5117
  %v5120 = vmul.u32.u64.compose %v5116, %v5111
  %v5121 = vextract.low.u32 %v5120
  %v5122 = vextract.high.u32 %v5120
  %v5123 = vmul.u32 %v5116, %v5107
  %v5124 = vadd.s32 %v5119, %v5121
  %vm5125 = vc.u32 %v5119, %v5121
  %v5126 = vadd.s32 %v5122, 1
  %v5127 = vsel %vm5125, %v5126, %v5122
  %v5128 = vadd.s32 %v5123, %v5127
  %v5129 = vadd.s32 %v5128, 536870912
  %v5130 = vshrl.u32 %v5129, 30
  %v5131 = vshll.u32 %v5130, 30
  %v5132 = vsub.s32 %v5128, %v5131
  %vm5133 = vcmp.lt.s32.totalorder %v5132, 0
  %v5134 = vsub.s32 0, %v5132
  %v5135 = vsel %vm5133, %v5134, %v5132
  %v5136 = vclz %v5135
  %v5137 = vsub.s32 %v5136, 2
  %vm5138 = vcmp.gt.s32.totalorder 0, %v5137
  %v5139 = vsel %vm5138, 0, %v5137
  %v5140 = vsub.s32 32, %v5139
  %v5141 = vshll.u32 %v5132, %v5139
  %v5142 = vshrl.u32 %v5124, %v5140
  %v5143 = vor.u32 %v5141, %v5142
  %v5144 = vsub.s32 4294967266, %v5139
  %v5145 = vadd.s32 %v5144, 127
  %v5146 = vshll.u32 %v5145, 23
  %v5147 = vor.u32 4788187, %v5146
  %v5148 = vand.u32 2147483647, %v5147
  %v5150 = vcvt.s32.f32 %v5143
  %v5151 = vmul.f32 %v5150, %v5148
  %v5152 = vxor.u32 %v5151, 2147483648
  %v5153 = vsel %vm5070, %v5152, %v5151
  %v5154 = vsub.s32 4, %v5130
  %v5155 = vsel %vm5070, %v5154, %v5130
  %v5156 = vsel %vm5069, %v5064, %v5153
  %v5157 = vsel %vm5069, 0, %v5155
  %v5158 = vcosq.f32.pop %v5156
  %v5159 = vsinq.f32.pop %v5156
  %vm5160 = vweird.f32 %v5064
  %v5161 = vadd.s32 %v5157, 3
  %v5162 = vand.u32 %v5161, 3
  %vm5163 = vcmp.lt.s32.totalorder %v5162, 2
  %vm5164 = vcmp.eq.s32.totalorder %v5162, 0
  %v5165 = vxor.u32 %v5159, 2147483648
  %v5166 = vsel %vm5164, %v5158, %v5165
  %vm5167 = vcmp.eq.s32.totalorder %v5162, 2
  %v5168 = vxor.u32 %v5158, 2147483648
  %v5169 = vsel %vm5167, %v5168, %v5159
  %v5170 = vsel %vm5163, %v5166, %v5169
  %v5171 = vsel %vm5160, nan, %v5170
  %v5172 = vand.u32 2147483647, %v5065
  %vm5173 = vcmp.le.f32.partialorder %v5172, 0.7853982
  %vm5174 = vcmp.lt.s32.totalorder %v5065, 0
  %v5175 = vand.u32 %v5065, 2139095040
  %v5176 = vshrl.u32 %v5175, 23
  %v5177 = vsub.s32 %v5176, 127
  %v5178 = vand.u32 2147483647, %v5065
  %v5179 = vand.u32 %v5178, 8388607
  %v5180 = vor.u32 %v5179, 8388608
  %v5181 = vsub.s32 0, %v5180
  %v5182 = vadd.s32 %v5177, 1
  %vm5183 = vcmp.gt.s32.totalorder %v5182, 0
  %v5184 = vsel %vm5183, %v5182, 0
  %v5185 = vshrl.u32 %v5184, 5
  %v5186 = vand.u32 %v5184, 31
  %v5187 = vsub.s32 32, %v5186
  %v5188 = vshrl.u32 683565275, %v5187
  %v5189 = vshll.u32 683565275, %v5186
  %v5190 = vshrl.u32 2475754826, %v5187
  %v5191 = vor.u32 %v5189, %v5190
  %v5192 = vshll.u32 2475754826, %v5186
  %v5193 = vshrl.u32 2131351028, %v5187
  %v5194 = vor.u32 %v5192, %v5193
  %v5195 = vshll.u32 2131351028, %v5186
  %v5196 = vshrl.u32 2102212464, %v5187
  %v5197 = vor.u32 %v5195, %v5196
  %v5198 = vshll.u32 2102212464, %v5186
  %v5199 = vshrl.u32 920167782, %v5187
  %v5200 = vor.u32 %v5198, %v5199
  %v5201 = vshll.u32 920167782, %v5186
  %v5202 = vshrl.u32 1326507024, %v5187
  %v5203 = vor.u32 %v5201, %v5202
  %vm5204 = vcmp.lt.s32.totalorder %v5185, 1
  %vm5205 = vcmp.lt.s32.totalorder %v5185, 2
  %vm5206 = vcmp.lt.s32.totalorder %v5185, 3
  %vm5207 = vcmp.lt.s32.totalorder %v5185, 4
  %v5208 = vsel %vm5204, %v5188, %v5191
  %v5209 = vsel %vm5207, %v5197, 2102212464
  %v5210 = vsel %vm5206, %v5194, %v5209
  %v5211 = vsel %vm5205, %v5208, %v5210
  %v5212 = vsel %vm5204, %v5191, %v5194
  %v5213 = vsel %vm5207, %v5200, 920167782
  %v5214 = vsel %vm5206, %v5197, %v5213
  %v5215 = vsel %vm5205, %v5212, %v5214
  %v5216 = vsel %vm5204, %v5194, %v5197
  %v5217 = vsel %vm5207, %v5203, 1326507024
  %v5218 = vsel %vm5206, %v5200, %v5217
  %v5219 = vsel %vm5205, %v5216, %v5218
  %v5220 = vshll.u32 %v5180, 8
  %v5221 = vmul.u32.u64.compose %v5220, %v5219
  %v5222 = vextract.low.u32 %v5221
  %v5223 = vextract.high.u32 %v5221
  %v5224 = vmul.u32.u64.compose %v5220, %v5215
  %v5225 = vextract.low.u32 %v5224
  %v5226 = vextract.high.u32 %v5224
  %v5227 = vmul.u32 %v5220, %v5211
  %v5228 = vadd.s32 %v5223, %v5225
  %vm5229 = vc.u32 %v5223, %v5225
  %v5230 = vadd.s32 %v5226, 1
  %v5231 = vsel %vm5229, %v5230, %v5226
  %v5232 = vadd.s32 %v5227, %v5231
  %v5233 = vadd.s32 %v5232, 536870912
  %v5234 = vshrl.u32 %v5233, 30
  %v5235 = vshll.u32 %v5234, 30
  %v5236 = vsub.s32 %v5232, %v5235
  %vm5237 = vcmp.lt.s32.totalorder %v5236, 0
  %v5238 = vsub.s32 0, %v5236
  %v5239 = vsel %vm5237, %v5238, %v5236
  %v5240 = vclz %v5239
  %v5241 = vsub.s32 %v5240, 2
  %vm5242 = vcmp.gt.s32.totalorder 0, %v5241
  %v5243 = vsel %vm5242, 0, %v5241
  %v5244 = vsub.s32 32, %v5243
  %v5245 = vshll.u32 %v5236, %v5243
  %v5246 = vshrl.u32 %v5228, %v5244
  %v5247 = vor.u32 %v5245, %v5246
  %v5248 = vsub.s32 4294967266, %v5243
  %v5249 = vadd.s32 %v5248, 127
  %v5250 = vshll.u32 %v5249, 23
  %v5251 = vor.u32 4788187, %v5250
  %v5252 = vand.u32 2147483647, %v5251
  %v5254 = vcvt.s32.f32 %v5247
  %v5255 = vmul.f32 %v5254, %v5252
  %v5256 = vxor.u32 %v5255, 2147483648
  %v5257 = vsel %vm5174, %v5256, %v5255
  %v5258 = vsub.s32 4, %v5234
  %v5259 = vsel %vm5174, %v5258, %v5234
  %v5260 = vsel %vm5173, %v5065, %v5257
  %v5261 = vsel %vm5173, 0, %v5259
  %v5262 = vcosq.f32.pop %v5260
  %v5263 = vsinq.f32.pop %v5260
  %vm5264 = vweird.f32 %v5065
  %v5265 = vadd.s32 %v5261, 3
  %v5266 = vand.u32 %v5265, 3
  %vm5267 = vcmp.lt.s32.totalorder %v5266, 2
  %vm5268 = vcmp.eq.s32.totalorder %v5266, 0
  %v5269 = vxor.u32 %v5263, 2147483648
  %v5270 = vsel %vm5268, %v5262, %v5269
  %vm5271 = vcmp.eq.s32.totalorder %v5266, 2
  %v5272 = vxor.u32 %v5262, 2147483648
  %v5273 = vsel %vm5271, %v5272, %v5263
  %v5274 = vsel %vm5267, %v5270, %v5273
  %v5275 = vsel %vm5264, nan, %v5274
  %v5276 = vand.u32 2147483647, %v5066
  %vm5277 = vcmp.le.f32.partialorder %v5276, 0.7853982
  %vm5278 = vcmp.lt.s32.totalorder %v5066, 0
  %v5279 = vand.u32 %v5066, 2139095040
  %v5280 = vshrl.u32 %v5279, 23
  %v5281 = vsub.s32 %v5280, 127
  %v5282 = vand.u32 2147483647, %v5066
  %v5283 = vand.u32 %v5282, 8388607
  %v5284 = vor.u32 %v5283, 8388608
  %v5285 = vsub.s32 0, %v5284
  %v5286 = vadd.s32 %v5281, 1
  %vm5287 = vcmp.gt.s32.totalorder %v5286, 0
  %v5288 = vsel %vm5287, %v5286, 0
  %v5289 = vshrl.u32 %v5288, 5
  %v5290 = vand.u32 %v5288, 31
  %v5291 = vsub.s32 32, %v5290
  %v5292 = vshrl.u32 683565275, %v5291
  %v5293 = vshll.u32 683565275, %v5290
  %v5294 = vshrl.u32 2475754826, %v5291
  %v5295 = vor.u32 %v5293, %v5294
  %v5296 = vshll.u32 2475754826, %v5290
  %v5297 = vshrl.u32 2131351028, %v5291
  %v5298 = vor.u32 %v5296, %v5297
  %v5299 = vshll.u32 2131351028, %v5290
  %v5300 = vshrl.u32 2102212464, %v5291
  %v5301 = vor.u32 %v5299, %v5300
  %v5302 = vshll.u32 2102212464, %v5290
  %v5303 = vshrl.u32 920167782, %v5291
  %v5304 = vor.u32 %v5302, %v5303
  %v5305 = vshll.u32 920167782, %v5290
  %v5306 = vshrl.u32 1326507024, %v5291
  %v5307 = vor.u32 %v5305, %v5306
  %vm5308 = vcmp.lt.s32.totalorder %v5289, 1
  %vm5309 = vcmp.lt.s32.totalorder %v5289, 2
  %vm5310 = vcmp.lt.s32.totalorder %v5289, 3
  %vm5311 = vcmp.lt.s32.totalorder %v5289, 4
  %v5312 = vsel %vm5308, %v5292, %v5295
  %v5313 = vsel %vm5311, %v5301, 2102212464
  %v5314 = vsel %vm5310, %v5298, %v5313
  %v5315 = vsel %vm5309, %v5312, %v5314
  %v5316 = vsel %vm5308, %v5295, %v5298
  %v5317 = vsel %vm5311, %v5304, 920167782
  %v5318 = vsel %vm5310, %v5301, %v5317
  %v5319 = vsel %vm5309, %v5316, %v5318
  %v5320 = vsel %vm5308, %v5298, %v5301
  %v5321 = vsel %vm5311, %v5307, 1326507024
  %v5322 = vsel %vm5310, %v5304, %v5321
  %v5323 = vsel %vm5309, %v5320, %v5322
  %v5324 = vshll.u32 %v5284, 8
  %v5325 = vmul.u32.u64.compose %v5324, %v5323
  %v5326 = vextract.low.u32 %v5325
  %v5327 = vextract.high.u32 %v5325
  %v5328 = vmul.u32.u64.compose %v5324, %v5319
  %v5329 = vextract.low.u32 %v5328
  %v5330 = vextract.high.u32 %v5328
  %v5331 = vmul.u32 %v5324, %v5315
  %v5332 = vadd.s32 %v5327, %v5329
  %vm5333 = vc.u32 %v5327, %v5329
  %v5334 = vadd.s32 %v5330, 1
  %v5335 = vsel %vm5333, %v5334, %v5330
  %v5336 = vadd.s32 %v5331, %v5335
  %v5337 = vadd.s32 %v5336, 536870912
  %v5338 = vshrl.u32 %v5337, 30
  %v5339 = vshll.u32 %v5338, 30
  %v5340 = vsub.s32 %v5336, %v5339
  %vm5341 = vcmp.lt.s32.totalorder %v5340, 0
  %v5342 = vsub.s32 0, %v5340
  %v5343 = vsel %vm5341, %v5342, %v5340
  %v5344 = vclz %v5343
  %v5345 = vsub.s32 %v5344, 2
  %vm5346 = vcmp.gt.s32.totalorder 0, %v5345
  %v5347 = vsel %vm5346, 0, %v5345
  %v5348 = vsub.s32 32, %v5347
  %v5349 = vshll.u32 %v5340, %v5347
  %v5350 = vshrl.u32 %v5332, %v5348
  %v5351 = vor.u32 %v5349, %v5350
  %v5352 = vsub.s32 4294967266, %v5347
  %v5353 = vadd.s32 %v5352, 127
  %v5354 = vshll.u32 %v5353, 23
  %v5355 = vor.u32 4788187, %v5354
  %v5356 = vand.u32 2147483647, %v5355
  %v5358 = vcvt.s32.f32 %v5351
  %v5359 = vmul.f32 %v5358, %v5356
  %v5360 = vxor.u32 %v5359, 2147483648
  %v5361 = vsel %vm5278, %v5360, %v5359
  %v5362 = vsub.s32 4, %v5338
  %v5363 = vsel %vm5278, %v5362, %v5338
  %v5364 = vsel %vm5277, %v5066, %v5361
  %v5365 = vsel %vm5277, 0, %v5363
  %v5366 = vcosq.f32.pop %v5364
  %v5367 = vsinq.f32.pop %v5364
  %vm5368 = vweird.f32 %v5066
  %v5369 = vadd.s32 %v5365, 3
  %v5370 = vand.u32 %v5369, 3
  %vm5371 = vcmp.lt.s32.totalorder %v5370, 2
  %vm5372 = vcmp.eq.s32.totalorder %v5370, 0
  %v5373 = vxor.u32 %v5367, 2147483648
  %v5374 = vsel %vm5372, %v5366, %v5373
  %vm5375 = vcmp.eq.s32.totalorder %v5370, 2
  %v5376 = vxor.u32 %v5366, 2147483648
  %v5377 = vsel %vm5375, %v5376, %v5367
  %v5378 = vsel %vm5371, %v5374, %v5377
  %v5379 = vsel %vm5368, nan, %v5378
  %v5380 = vand.u32 2147483647, %v5067
  %vm5381 = vcmp.le.f32.partialorder %v5380, 0.7853982
  %vm5382 = vcmp.lt.s32.totalorder %v5067, 0
  %v5383 = vand.u32 %v5067, 2139095040
  %v5384 = vshrl.u32 %v5383, 23
  %v5385 = vsub.s32 %v5384, 127
  %v5386 = vand.u32 2147483647, %v5067
  %v5387 = vand.u32 %v5386, 8388607
  %v5388 = vor.u32 %v5387, 8388608
  %v5389 = vsub.s32 0, %v5388
  %v5390 = vadd.s32 %v5385, 1
  %vm5391 = vcmp.gt.s32.totalorder %v5390, 0
  %v5392 = vsel %vm5391, %v5390, 0
  %v5393 = vshrl.u32 %v5392, 5
  %v5394 = vand.u32 %v5392, 31
  %v5395 = vsub.s32 32, %v5394
  %v5396 = vshrl.u32 683565275, %v5395
  %v5397 = vshll.u32 683565275, %v5394
  %v5398 = vshrl.u32 2475754826, %v5395
  %v5399 = vor.u32 %v5397, %v5398
  %v5400 = vshll.u32 2475754826, %v5394
  %v5401 = vshrl.u32 2131351028, %v5395
  %v5402 = vor.u32 %v5400, %v5401
  %v5403 = vshll.u32 2131351028, %v5394
  %v5404 = vshrl.u32 2102212464, %v5395
  %v5405 = vor.u32 %v5403, %v5404
  %v5406 = vshll.u32 2102212464, %v5394
  %v5407 = vshrl.u32 920167782, %v5395
  %v5408 = vor.u32 %v5406, %v5407
  %v5409 = vshll.u32 920167782, %v5394
  %v5410 = vshrl.u32 1326507024, %v5395
  %v5411 = vor.u32 %v5409, %v5410
  %vm5412 = vcmp.lt.s32.totalorder %v5393, 1
  %vm5413 = vcmp.lt.s32.totalorder %v5393, 2
  %vm5414 = vcmp.lt.s32.totalorder %v5393, 3
  %vm5415 = vcmp.lt.s32.totalorder %v5393, 4
  %v5416 = vsel %vm5412, %v5396, %v5399
  %v5417 = vsel %vm5415, %v5405, 2102212464
  %v5418 = vsel %vm5414, %v5402, %v5417
  %v5419 = vsel %vm5413, %v5416, %v5418
  %v5420 = vsel %vm5412, %v5399, %v5402
  %v5421 = vsel %vm5415, %v5408, 920167782
  %v5422 = vsel %vm5414, %v5405, %v5421
  %v5423 = vsel %vm5413, %v5420, %v5422
  %v5424 = vsel %vm5412, %v5402, %v5405
  %v5425 = vsel %vm5415, %v5411, 1326507024
  %v5426 = vsel %vm5414, %v5408, %v5425
  %v5427 = vsel %vm5413, %v5424, %v5426
  %v5428 = vshll.u32 %v5388, 8
  %v5429 = vmul.u32.u64.compose %v5428, %v5427
  %v5430 = vextract.low.u32 %v5429
  %v5431 = vextract.high.u32 %v5429
  %v5432 = vmul.u32.u64.compose %v5428, %v5423
  %v5433 = vextract.low.u32 %v5432
  %v5434 = vextract.high.u32 %v5432
  %v5435 = vmul.u32 %v5428, %v5419
  %v5436 = vadd.s32 %v5431, %v5433
  %vm5437 = vc.u32 %v5431, %v5433
  %v5438 = vadd.s32 %v5434, 1
  %v5439 = vsel %vm5437, %v5438, %v5434
  %v5440 = vadd.s32 %v5435, %v5439
  %v5441 = vadd.s32 %v5440, 536870912
  %v5442 = vshrl.u32 %v5441, 30
  %v5443 = vshll.u32 %v5442, 30
  %v5444 = vsub.s32 %v5440, %v5443
  %vm5445 = vcmp.lt.s32.totalorder %v5444, 0
  %v5446 = vsub.s32 0, %v5444
  %v5447 = vsel %vm5445, %v5446, %v5444
  %v5448 = vclz %v5447
  %v5449 = vsub.s32 %v5448, 2
  %vm5450 = vcmp.gt.s32.totalorder 0, %v5449
  %v5451 = vsel %vm5450, 0, %v5449
  %v5452 = vsub.s32 32, %v5451
  %v5453 = vshll.u32 %v5444, %v5451
  %v5454 = vshrl.u32 %v5436, %v5452
  %v5455 = vor.u32 %v5453, %v5454
  %v5456 = vsub.s32 4294967266, %v5451
  %v5457 = vadd.s32 %v5456, 127
  %v5458 = vshll.u32 %v5457, 23
  %v5459 = vor.u32 4788187, %v5458
  %v5460 = vand.u32 2147483647, %v5459
  %v5462 = vcvt.s32.f32 %v5455
  %v5463 = vmul.f32 %v5462, %v5460
  %v5464 = vxor.u32 %v5463, 2147483648
  %v5465 = vsel %vm5382, %v5464, %v5463
  %v5466 = vsub.s32 4, %v5442
  %v5467 = vsel %vm5382, %v5466, %v5442
  %v5468 = vsel %vm5381, %v5067, %v5465
  %v5469 = vsel %vm5381, 0, %v5467
  %v5470 = vcosq.f32.pop %v5468
  %v5471 = vsinq.f32.pop %v5468
  %vm5472 = vweird.f32 %v5067
  %v5473 = vadd.s32 %v5469, 3
  %v5474 = vand.u32 %v5473, 3
  %vm5475 = vcmp.lt.s32.totalorder %v5474, 2
  %vm5476 = vcmp.eq.s32.totalorder %v5474, 0
  %v5477 = vxor.u32 %v5471, 2147483648
  %v5478 = vsel %vm5476, %v5470, %v5477
  %vm5479 = vcmp.eq.s32.totalorder %v5474, 2
  %v5480 = vxor.u32 %v5470, 2147483648
  %v5481 = vsel %vm5479, %v5480, %v5471
  %v5482 = vsel %vm5475, %v5478, %v5481
  %v5483 = vsel %vm5472, nan, %v5482
  %s5484 = scalar_lea.vmem %s1, 416
  %5485 = vst [vmem:[%s5484] sm:$0xff] %v5171
  %5486 = vst [vmem:[%s5484 + $0x8] sm:$0xff] %v5275
  %5487 = vst [vmem:[%s5484 + $0x10] sm:$0xff] %v5379
  %5488 = vst [vmem:[%s5484 + $0x18] sm:$0xff] %v5483
  %v5489 = vand.u32 2147483647, %v5064
  %vm5490 = vcmp.le.f32.partialorder %v5489, 0.7853982
  %vm5491 = vcmp.lt.s32.totalorder %v5064, 0
  %v5492 = vand.u32 %v5064, 2139095040
  %v5493 = vshrl.u32 %v5492, 23
  %v5494 = vsub.s32 %v5493, 127
  %v5495 = vand.u32 2147483647, %v5064
  %v5496 = vand.u32 %v5495, 8388607
  %v5497 = vor.u32 %v5496, 8388608
  %v5498 = vsub.s32 0, %v5497
  %v5499 = vadd.s32 %v5494, 1
  %vm5500 = vcmp.gt.s32.totalorder %v5499, 0
  %v5501 = vsel %vm5500, %v5499, 0
  %v5502 = vshrl.u32 %v5501, 5
  %v5503 = vand.u32 %v5501, 31
  %v5504 = vsub.s32 32, %v5503
  %v5505 = vshrl.u32 683565275, %v5504
  %v5506 = vshll.u32 683565275, %v5503
  %v5507 = vshrl.u32 2475754826, %v5504
  %v5508 = vor.u32 %v5506, %v5507
  %v5509 = vshll.u32 2475754826, %v5503
  %v5510 = vshrl.u32 2131351028, %v5504
  %v5511 = vor.u32 %v5509, %v5510
  %v5512 = vshll.u32 2131351028, %v5503
  %v5513 = vshrl.u32 2102212464, %v5504
  %v5514 = vor.u32 %v5512, %v5513
  %v5515 = vshll.u32 2102212464, %v5503
  %v5516 = vshrl.u32 920167782, %v5504
  %v5517 = vor.u32 %v5515, %v5516
  %v5518 = vshll.u32 920167782, %v5503
  %v5519 = vshrl.u32 1326507024, %v5504
  %v5520 = vor.u32 %v5518, %v5519
  %vm5521 = vcmp.lt.s32.totalorder %v5502, 1
  %vm5522 = vcmp.lt.s32.totalorder %v5502, 2
  %vm5523 = vcmp.lt.s32.totalorder %v5502, 3
  %vm5524 = vcmp.lt.s32.totalorder %v5502, 4
  %v5525 = vsel %vm5521, %v5505, %v5508
  %v5526 = vsel %vm5524, %v5514, 2102212464
  %v5527 = vsel %vm5523, %v5511, %v5526
  %v5528 = vsel %vm5522, %v5525, %v5527
  %v5529 = vsel %vm5521, %v5508, %v5511
  %v5530 = vsel %vm5524, %v5517, 920167782
  %v5531 = vsel %vm5523, %v5514, %v5530
  %v5532 = vsel %vm5522, %v5529, %v5531
  %v5533 = vsel %vm5521, %v5511, %v5514
  %v5534 = vsel %vm5524, %v5520, 1326507024
  %v5535 = vsel %vm5523, %v5517, %v5534
  %v5536 = vsel %vm5522, %v5533, %v5535
  %v5537 = vshll.u32 %v5497, 8
  %v5538 = vmul.u32.u64.compose %v5537, %v5536
  %v5539 = vextract.low.u32 %v5538
  %v5540 = vextract.high.u32 %v5538
  %v5541 = vmul.u32.u64.compose %v5537, %v5532
  %v5542 = vextract.low.u32 %v5541
  %v5543 = vextract.high.u32 %v5541
  %v5544 = vmul.u32 %v5537, %v5528
  %v5545 = vadd.s32 %v5540, %v5542
  %vm5546 = vc.u32 %v5540, %v5542
  %v5547 = vadd.s32 %v5543, 1
  %v5548 = vsel %vm5546, %v5547, %v5543
  %v5549 = vadd.s32 %v5544, %v5548
  %v5550 = vadd.s32 %v5549, 536870912
  %v5551 = vshrl.u32 %v5550, 30
  %v5552 = vshll.u32 %v5551, 30
  %v5553 = vsub.s32 %v5549, %v5552
  %vm5554 = vcmp.lt.s32.totalorder %v5553, 0
  %v5555 = vsub.s32 0, %v5553
  %v5556 = vsel %vm5554, %v5555, %v5553
  %v5557 = vclz %v5556
  %v5558 = vsub.s32 %v5557, 2
  %vm5559 = vcmp.gt.s32.totalorder 0, %v5558
  %v5560 = vsel %vm5559, 0, %v5558
  %v5561 = vsub.s32 32, %v5560
  %v5562 = vshll.u32 %v5553, %v5560
  %v5563 = vshrl.u32 %v5545, %v5561
  %v5564 = vor.u32 %v5562, %v5563
  %v5565 = vsub.s32 4294967266, %v5560
  %v5566 = vadd.s32 %v5565, 127
  %v5567 = vshll.u32 %v5566, 23
  %v5568 = vor.u32 4788187, %v5567
  %v5569 = vand.u32 2147483647, %v5568
  %v5571 = vcvt.s32.f32 %v5564
  %v5572 = vmul.f32 %v5571, %v5569
  %v5573 = vxor.u32 %v5572, 2147483648
  %v5574 = vsel %vm5491, %v5573, %v5572
  %v5575 = vsub.s32 4, %v5551
  %v5576 = vsel %vm5491, %v5575, %v5551
  %v5577 = vsel %vm5490, %v5064, %v5574
  %v5578 = vsel %vm5490, 0, %v5576
  %v5579 = vcosq.f32.pop %v5577
  %v5580 = vsinq.f32.pop %v5577
  %vm5581 = vweird.f32 %v5064
  %v5582 = vand.u32 %v5578, 3
  %vm5583 = vcmp.lt.s32.totalorder %v5582, 2
  %vm5584 = vcmp.eq.s32.totalorder %v5582, 0
  %v5585 = vxor.u32 %v5580, 2147483648
  %v5586 = vsel %vm5584, %v5579, %v5585
  %vm5587 = vcmp.eq.s32.totalorder %v5582, 2
  %v5588 = vxor.u32 %v5579, 2147483648
  %v5589 = vsel %vm5587, %v5588, %v5580
  %v5590 = vsel %vm5583, %v5586, %v5589
  %v5591 = vsel %vm5581, nan, %v5590
  %v5592 = vand.u32 2147483647, %v5065
  %vm5593 = vcmp.le.f32.partialorder %v5592, 0.7853982
  %vm5594 = vcmp.lt.s32.totalorder %v5065, 0
  %v5595 = vand.u32 %v5065, 2139095040
  %v5596 = vshrl.u32 %v5595, 23
  %v5597 = vsub.s32 %v5596, 127
  %v5598 = vand.u32 2147483647, %v5065
  %v5599 = vand.u32 %v5598, 8388607
  %v5600 = vor.u32 %v5599, 8388608
  %v5601 = vsub.s32 0, %v5600
  %v5602 = vadd.s32 %v5597, 1
  %vm5603 = vcmp.gt.s32.totalorder %v5602, 0
  %v5604 = vsel %vm5603, %v5602, 0
  %v5605 = vshrl.u32 %v5604, 5
  %v5606 = vand.u32 %v5604, 31
  %v5607 = vsub.s32 32, %v5606
  %v5608 = vshrl.u32 683565275, %v5607
  %v5609 = vshll.u32 683565275, %v5606
  %v5610 = vshrl.u32 2475754826, %v5607
  %v5611 = vor.u32 %v5609, %v5610
  %v5612 = vshll.u32 2475754826, %v5606
  %v5613 = vshrl.u32 2131351028, %v5607
  %v5614 = vor.u32 %v5612, %v5613
  %v5615 = vshll.u32 2131351028, %v5606
  %v5616 = vshrl.u32 2102212464, %v5607
  %v5617 = vor.u32 %v5615, %v5616
  %v5618 = vshll.u32 2102212464, %v5606
  %v5619 = vshrl.u32 920167782, %v5607
  %v5620 = vor.u32 %v5618, %v5619
  %v5621 = vshll.u32 920167782, %v5606
  %v5622 = vshrl.u32 1326507024, %v5607
  %v5623 = vor.u32 %v5621, %v5622
  %vm5624 = vcmp.lt.s32.totalorder %v5605, 1
  %vm5625 = vcmp.lt.s32.totalorder %v5605, 2
  %vm5626 = vcmp.lt.s32.totalorder %v5605, 3
  %vm5627 = vcmp.lt.s32.totalorder %v5605, 4
  %v5628 = vsel %vm5624, %v5608, %v5611
  %v5629 = vsel %vm5627, %v5617, 2102212464
  %v5630 = vsel %vm5626, %v5614, %v5629
  %v5631 = vsel %vm5625, %v5628, %v5630
  %v5632 = vsel %vm5624, %v5611, %v5614
  %v5633 = vsel %vm5627, %v5620, 920167782
  %v5634 = vsel %vm5626, %v5617, %v5633
  %v5635 = vsel %vm5625, %v5632, %v5634
  %v5636 = vsel %vm5624, %v5614, %v5617
  %v5637 = vsel %vm5627, %v5623, 1326507024
  %v5638 = vsel %vm5626, %v5620, %v5637
  %v5639 = vsel %vm5625, %v5636, %v5638
  %v5640 = vshll.u32 %v5600, 8
  %v5641 = vmul.u32.u64.compose %v5640, %v5639
  %v5642 = vextract.low.u32 %v5641
  %v5643 = vextract.high.u32 %v5641
  %v5644 = vmul.u32.u64.compose %v5640, %v5635
  %v5645 = vextract.low.u32 %v5644
  %v5646 = vextract.high.u32 %v5644
  %v5647 = vmul.u32 %v5640, %v5631
  %v5648 = vadd.s32 %v5643, %v5645
  %vm5649 = vc.u32 %v5643, %v5645
  %v5650 = vadd.s32 %v5646, 1
  %v5651 = vsel %vm5649, %v5650, %v5646
  %v5652 = vadd.s32 %v5647, %v5651
  %v5653 = vadd.s32 %v5652, 536870912
  %v5654 = vshrl.u32 %v5653, 30
  %v5655 = vshll.u32 %v5654, 30
  %v5656 = vsub.s32 %v5652, %v5655
  %vm5657 = vcmp.lt.s32.totalorder %v5656, 0
  %v5658 = vsub.s32 0, %v5656
  %v5659 = vsel %vm5657, %v5658, %v5656
  %v5660 = vclz %v5659
  %v5661 = vsub.s32 %v5660, 2
  %vm5662 = vcmp.gt.s32.totalorder 0, %v5661
  %v5663 = vsel %vm5662, 0, %v5661
  %v5664 = vsub.s32 32, %v5663
  %v5665 = vshll.u32 %v5656, %v5663
  %v5666 = vshrl.u32 %v5648, %v5664
  %v5667 = vor.u32 %v5665, %v5666
  %v5668 = vsub.s32 4294967266, %v5663
  %v5669 = vadd.s32 %v5668, 127
  %v5670 = vshll.u32 %v5669, 23
  %v5671 = vor.u32 4788187, %v5670
  %v5672 = vand.u32 2147483647, %v5671
  %v5674 = vcvt.s32.f32 %v5667
  %v5675 = vmul.f32 %v5674, %v5672
  %v5676 = vxor.u32 %v5675, 2147483648
  %v5677 = vsel %vm5594, %v5676, %v5675
  %v5678 = vsub.s32 4, %v5654
  %v5679 = vsel %vm5594, %v5678, %v5654
  %v5680 = vsel %vm5593, %v5065, %v5677
  %v5681 = vsel %vm5593, 0, %v5679
  %v5682 = vcosq.f32.pop %v5680
  %v5683 = vsinq.f32.pop %v5680
  %vm5684 = vweird.f32 %v5065
  %v5685 = vand.u32 %v5681, 3
  %vm5686 = vcmp.lt.s32.totalorder %v5685, 2
  %vm5687 = vcmp.eq.s32.totalorder %v5685, 0
  %v5688 = vxor.u32 %v5683, 2147483648
  %v5689 = vsel %vm5687, %v5682, %v5688
  %vm5690 = vcmp.eq.s32.totalorder %v5685, 2
  %v5691 = vxor.u32 %v5682, 2147483648
  %v5692 = vsel %vm5690, %v5691, %v5683
  %v5693 = vsel %vm5686, %v5689, %v5692
  %v5694 = vsel %vm5684, nan, %v5693
  %v5695 = vand.u32 2147483647, %v5066
  %vm5696 = vcmp.le.f32.partialorder %v5695, 0.7853982
  %vm5697 = vcmp.lt.s32.totalorder %v5066, 0
  %v5698 = vand.u32 %v5066, 2139095040
  %v5699 = vshrl.u32 %v5698, 23
  %v5700 = vsub.s32 %v5699, 127
  %v5701 = vand.u32 2147483647, %v5066
  %v5702 = vand.u32 %v5701, 8388607
  %v5703 = vor.u32 %v5702, 8388608
  %v5704 = vsub.s32 0, %v5703
  %v5705 = vadd.s32 %v5700, 1
  %vm5706 = vcmp.gt.s32.totalorder %v5705, 0
  %v5707 = vsel %vm5706, %v5705, 0
  %v5708 = vshrl.u32 %v5707, 5
  %v5709 = vand.u32 %v5707, 31
  %v5710 = vsub.s32 32, %v5709
  %v5711 = vshrl.u32 683565275, %v5710
  %v5712 = vshll.u32 683565275, %v5709
  %v5713 = vshrl.u32 2475754826, %v5710
  %v5714 = vor.u32 %v5712, %v5713
  %v5715 = vshll.u32 2475754826, %v5709
  %v5716 = vshrl.u32 2131351028, %v5710
  %v5717 = vor.u32 %v5715, %v5716
  %v5718 = vshll.u32 2131351028, %v5709
  %v5719 = vshrl.u32 2102212464, %v5710
  %v5720 = vor.u32 %v5718, %v5719
  %v5721 = vshll.u32 2102212464, %v5709
  %v5722 = vshrl.u32 920167782, %v5710
  %v5723 = vor.u32 %v5721, %v5722
  %v5724 = vshll.u32 920167782, %v5709
  %v5725 = vshrl.u32 1326507024, %v5710
  %v5726 = vor.u32 %v5724, %v5725
  %vm5727 = vcmp.lt.s32.totalorder %v5708, 1
  %vm5728 = vcmp.lt.s32.totalorder %v5708, 2
  %vm5729 = vcmp.lt.s32.totalorder %v5708, 3
  %vm5730 = vcmp.lt.s32.totalorder %v5708, 4
  %v5731 = vsel %vm5727, %v5711, %v5714
  %v5732 = vsel %vm5730, %v5720, 2102212464
  %v5733 = vsel %vm5729, %v5717, %v5732
  %v5734 = vsel %vm5728, %v5731, %v5733
  %v5735 = vsel %vm5727, %v5714, %v5717
  %v5736 = vsel %vm5730, %v5723, 920167782
  %v5737 = vsel %vm5729, %v5720, %v5736
  %v5738 = vsel %vm5728, %v5735, %v5737
  %v5739 = vsel %vm5727, %v5717, %v5720
  %v5740 = vsel %vm5730, %v5726, 1326507024
  %v5741 = vsel %vm5729, %v5723, %v5740
  %v5742 = vsel %vm5728, %v5739, %v5741
  %v5743 = vshll.u32 %v5703, 8
  %v5744 = vmul.u32.u64.compose %v5743, %v5742
  %v5745 = vextract.low.u32 %v5744
  %v5746 = vextract.high.u32 %v5744
  %v5747 = vmul.u32.u64.compose %v5743, %v5738
  %v5748 = vextract.low.u32 %v5747
  %v5749 = vextract.high.u32 %v5747
  %v5750 = vmul.u32 %v5743, %v5734
  %v5751 = vadd.s32 %v5746, %v5748
  %vm5752 = vc.u32 %v5746, %v5748
  %v5753 = vadd.s32 %v5749, 1
  %v5754 = vsel %vm5752, %v5753, %v5749
  %v5755 = vadd.s32 %v5750, %v5754
  %v5756 = vadd.s32 %v5755, 536870912
  %v5757 = vshrl.u32 %v5756, 30
  %v5758 = vshll.u32 %v5757, 30
  %v5759 = vsub.s32 %v5755, %v5758
  %vm5760 = vcmp.lt.s32.totalorder %v5759, 0
  %v5761 = vsub.s32 0, %v5759
  %v5762 = vsel %vm5760, %v5761, %v5759
  %v5763 = vclz %v5762
  %v5764 = vsub.s32 %v5763, 2
  %vm5765 = vcmp.gt.s32.totalorder 0, %v5764
  %v5766 = vsel %vm5765, 0, %v5764
  %v5767 = vsub.s32 32, %v5766
  %v5768 = vshll.u32 %v5759, %v5766
  %v5769 = vshrl.u32 %v5751, %v5767
  %v5770 = vor.u32 %v5768, %v5769
  %v5771 = vsub.s32 4294967266, %v5766
  %v5772 = vadd.s32 %v5771, 127
  %v5773 = vshll.u32 %v5772, 23
  %v5774 = vor.u32 4788187, %v5773
  %v5775 = vand.u32 2147483647, %v5774
  %v5777 = vcvt.s32.f32 %v5770
  %v5778 = vmul.f32 %v5777, %v5775
  %v5779 = vxor.u32 %v5778, 2147483648
  %v5780 = vsel %vm5697, %v5779, %v5778
  %v5781 = vsub.s32 4, %v5757
  %v5782 = vsel %vm5697, %v5781, %v5757
  %v5783 = vsel %vm5696, %v5066, %v5780
  %v5784 = vsel %vm5696, 0, %v5782
  %v5785 = vcosq.f32.pop %v5783
  %v5786 = vsinq.f32.pop %v5783
  %vm5787 = vweird.f32 %v5066
  %v5788 = vand.u32 %v5784, 3
  %vm5789 = vcmp.lt.s32.totalorder %v5788, 2
  %vm5790 = vcmp.eq.s32.totalorder %v5788, 0
  %v5791 = vxor.u32 %v5786, 2147483648
  %v5792 = vsel %vm5790, %v5785, %v5791
  %vm5793 = vcmp.eq.s32.totalorder %v5788, 2
  %v5794 = vxor.u32 %v5785, 2147483648
  %v5795 = vsel %vm5793, %v5794, %v5786
  %v5796 = vsel %vm5789, %v5792, %v5795
  %v5797 = vsel %vm5787, nan, %v5796
  %v5798 = vand.u32 2147483647, %v5067
  %vm5799 = vcmp.le.f32.partialorder %v5798, 0.7853982
  %vm5800 = vcmp.lt.s32.totalorder %v5067, 0
  %v5801 = vand.u32 %v5067, 2139095040
  %v5802 = vshrl.u32 %v5801, 23
  %v5803 = vsub.s32 %v5802, 127
  %v5804 = vand.u32 2147483647, %v5067
  %v5805 = vand.u32 %v5804, 8388607
  %v5806 = vor.u32 %v5805, 8388608
  %v5807 = vsub.s32 0, %v5806
  %v5808 = vadd.s32 %v5803, 1
  %vm5809 = vcmp.gt.s32.totalorder %v5808, 0
  %v5810 = vsel %vm5809, %v5808, 0
  %v5811 = vshrl.u32 %v5810, 5
  %v5812 = vand.u32 %v5810, 31
  %v5813 = vsub.s32 32, %v5812
  %v5814 = vshrl.u32 683565275, %v5813
  %v5815 = vshll.u32 683565275, %v5812
  %v5816 = vshrl.u32 2475754826, %v5813
  %v5817 = vor.u32 %v5815, %v5816
  %v5818 = vshll.u32 2475754826, %v5812
  %v5819 = vshrl.u32 2131351028, %v5813
  %v5820 = vor.u32 %v5818, %v5819
  %v5821 = vshll.u32 2131351028, %v5812
  %v5822 = vshrl.u32 2102212464, %v5813
  %v5823 = vor.u32 %v5821, %v5822
  %v5824 = vshll.u32 2102212464, %v5812
  %v5825 = vshrl.u32 920167782, %v5813
  %v5826 = vor.u32 %v5824, %v5825
  %v5827 = vshll.u32 920167782, %v5812
  %v5828 = vshrl.u32 1326507024, %v5813
  %v5829 = vor.u32 %v5827, %v5828
  %vm5830 = vcmp.lt.s32.totalorder %v5811, 1
  %vm5831 = vcmp.lt.s32.totalorder %v5811, 2
  %vm5832 = vcmp.lt.s32.totalorder %v5811, 3
  %vm5833 = vcmp.lt.s32.totalorder %v5811, 4
  %v5834 = vsel %vm5830, %v5814, %v5817
  %v5835 = vsel %vm5833, %v5823, 2102212464
  %v5836 = vsel %vm5832, %v5820, %v5835
  %v5837 = vsel %vm5831, %v5834, %v5836
  %v5838 = vsel %vm5830, %v5817, %v5820
  %v5839 = vsel %vm5833, %v5826, 920167782
  %v5840 = vsel %vm5832, %v5823, %v5839
  %v5841 = vsel %vm5831, %v5838, %v5840
  %v5842 = vsel %vm5830, %v5820, %v5823
  %v5843 = vsel %vm5833, %v5829, 1326507024
  %v5844 = vsel %vm5832, %v5826, %v5843
  %v5845 = vsel %vm5831, %v5842, %v5844
  %v5846 = vshll.u32 %v5806, 8
  %v5847 = vmul.u32.u64.compose %v5846, %v5845
  %v5848 = vextract.low.u32 %v5847
  %v5849 = vextract.high.u32 %v5847
  %v5850 = vmul.u32.u64.compose %v5846, %v5841
  %v5851 = vextract.low.u32 %v5850
  %v5852 = vextract.high.u32 %v5850
  %v5853 = vmul.u32 %v5846, %v5837
  %v5854 = vadd.s32 %v5849, %v5851
  %vm5855 = vc.u32 %v5849, %v5851
  %v5856 = vadd.s32 %v5852, 1
  %v5857 = vsel %vm5855, %v5856, %v5852
  %v5858 = vadd.s32 %v5853, %v5857
  %v5859 = vadd.s32 %v5858, 536870912
  %v5860 = vshrl.u32 %v5859, 30
  %v5861 = vshll.u32 %v5860, 30
  %v5862 = vsub.s32 %v5858, %v5861
  %vm5863 = vcmp.lt.s32.totalorder %v5862, 0
  %v5864 = vsub.s32 0, %v5862
  %v5865 = vsel %vm5863, %v5864, %v5862
  %v5866 = vclz %v5865
  %v5867 = vsub.s32 %v5866, 2
  %vm5868 = vcmp.gt.s32.totalorder 0, %v5867
  %v5869 = vsel %vm5868, 0, %v5867
  %v5870 = vsub.s32 32, %v5869
  %v5871 = vshll.u32 %v5862, %v5869
  %v5872 = vshrl.u32 %v5854, %v5870
  %v5873 = vor.u32 %v5871, %v5872
  %v5874 = vsub.s32 4294967266, %v5869
  %v5875 = vadd.s32 %v5874, 127
  %v5876 = vshll.u32 %v5875, 23
  %v5877 = vor.u32 4788187, %v5876
  %v5878 = vand.u32 2147483647, %v5877
  %v5880 = vcvt.s32.f32 %v5873
  %v5881 = vmul.f32 %v5880, %v5878
  %v5882 = vxor.u32 %v5881, 2147483648
  %v5883 = vsel %vm5800, %v5882, %v5881
  %v5884 = vsub.s32 4, %v5860
  %v5885 = vsel %vm5800, %v5884, %v5860
  %v5886 = vsel %vm5799, %v5067, %v5883
  %v5887 = vsel %vm5799, 0, %v5885
  %v5888 = vcosq.f32.pop %v5886
  %v5889 = vsinq.f32.pop %v5886
  %vm5890 = vweird.f32 %v5067
  %v5891 = vand.u32 %v5887, 3
  %vm5892 = vcmp.lt.s32.totalorder %v5891, 2
  %vm5893 = vcmp.eq.s32.totalorder %v5891, 0
  %v5894 = vxor.u32 %v5889, 2147483648
  %v5895 = vsel %vm5893, %v5888, %v5894
  %vm5896 = vcmp.eq.s32.totalorder %v5891, 2
  %v5897 = vxor.u32 %v5888, 2147483648
  %v5898 = vsel %vm5896, %v5897, %v5889
  %v5899 = vsel %vm5892, %v5895, %v5898
  %v5900 = vsel %vm5890, nan, %v5899
  %s5901 = scalar_lea.vmem %s1, 448
  %5902 = vst [vmem:[%s5901] sm:$0xff] %v5591
  %5903 = vst [vmem:[%s5901 + $0x8] sm:$0xff] %v5694
  %5904 = vst [vmem:[%s5901 + $0x10] sm:$0xff] %v5797
  %5905 = vst [vmem:[%s5901 + $0x18] sm:$0xff] %v5900
  %v5906 = vmul.f32 %v8, 128.0
  %v5907 = vmul.f32 %v9, 128.0
  %v5908 = vmul.f32 %v10, 128.0
  %v5909 = vmul.f32 %v11, 128.0
  %v5910 = vand.u32 2147483647, %v5906
  %vm5911 = vcmp.le.f32.partialorder %v5910, 0.7853982
  %vm5912 = vcmp.lt.s32.totalorder %v5906, 0
  %v5913 = vand.u32 %v5906, 2139095040
  %v5914 = vshrl.u32 %v5913, 23
  %v5915 = vsub.s32 %v5914, 127
  %v5916 = vand.u32 2147483647, %v5906
  %v5917 = vand.u32 %v5916, 8388607
  %v5918 = vor.u32 %v5917, 8388608
  %v5919 = vsub.s32 0, %v5918
  %v5920 = vadd.s32 %v5915, 1
  %vm5921 = vcmp.gt.s32.totalorder %v5920, 0
  %v5922 = vsel %vm5921, %v5920, 0
  %v5923 = vshrl.u32 %v5922, 5
  %v5924 = vand.u32 %v5922, 31
  %v5925 = vsub.s32 32, %v5924
  %v5926 = vshrl.u32 683565275, %v5925
  %v5927 = vshll.u32 683565275, %v5924
  %v5928 = vshrl.u32 2475754826, %v5925
  %v5929 = vor.u32 %v5927, %v5928
  %v5930 = vshll.u32 2475754826, %v5924
  %v5931 = vshrl.u32 2131351028, %v5925
  %v5932 = vor.u32 %v5930, %v5931
  %v5933 = vshll.u32 2131351028, %v5924
  %v5934 = vshrl.u32 2102212464, %v5925
  %v5935 = vor.u32 %v5933, %v5934
  %v5936 = vshll.u32 2102212464, %v5924
  %v5937 = vshrl.u32 920167782, %v5925
  %v5938 = vor.u32 %v5936, %v5937
  %v5939 = vshll.u32 920167782, %v5924
  %v5940 = vshrl.u32 1326507024, %v5925
  %v5941 = vor.u32 %v5939, %v5940
  %vm5942 = vcmp.lt.s32.totalorder %v5923, 1
  %vm5943 = vcmp.lt.s32.totalorder %v5923, 2
  %vm5944 = vcmp.lt.s32.totalorder %v5923, 3
  %vm5945 = vcmp.lt.s32.totalorder %v5923, 4
  %v5946 = vsel %vm5942, %v5926, %v5929
  %v5947 = vsel %vm5945, %v5935, 2102212464
  %v5948 = vsel %vm5944, %v5932, %v5947
  %v5949 = vsel %vm5943, %v5946, %v5948
  %v5950 = vsel %vm5942, %v5929, %v5932
  %v5951 = vsel %vm5945, %v5938, 920167782
  %v5952 = vsel %vm5944, %v5935, %v5951
  %v5953 = vsel %vm5943, %v5950, %v5952
  %v5954 = vsel %vm5942, %v5932, %v5935
  %v5955 = vsel %vm5945, %v5941, 1326507024
  %v5956 = vsel %vm5944, %v5938, %v5955
  %v5957 = vsel %vm5943, %v5954, %v5956
  %v5958 = vshll.u32 %v5918, 8
  %v5959 = vmul.u32.u64.compose %v5958, %v5957
  %v5960 = vextract.low.u32 %v5959
  %v5961 = vextract.high.u32 %v5959
  %v5962 = vmul.u32.u64.compose %v5958, %v5953
  %v5963 = vextract.low.u32 %v5962
  %v5964 = vextract.high.u32 %v5962
  %v5965 = vmul.u32 %v5958, %v5949
  %v5966 = vadd.s32 %v5961, %v5963
  %vm5967 = vc.u32 %v5961, %v5963
  %v5968 = vadd.s32 %v5964, 1
  %v5969 = vsel %vm5967, %v5968, %v5964
  %v5970 = vadd.s32 %v5965, %v5969
  %v5971 = vadd.s32 %v5970, 536870912
  %v5972 = vshrl.u32 %v5971, 30
  %v5973 = vshll.u32 %v5972, 30
  %v5974 = vsub.s32 %v5970, %v5973
  %vm5975 = vcmp.lt.s32.totalorder %v5974, 0
  %v5976 = vsub.s32 0, %v5974
  %v5977 = vsel %vm5975, %v5976, %v5974
  %v5978 = vclz %v5977
  %v5979 = vsub.s32 %v5978, 2
  %vm5980 = vcmp.gt.s32.totalorder 0, %v5979
  %v5981 = vsel %vm5980, 0, %v5979
  %v5982 = vsub.s32 32, %v5981
  %v5983 = vshll.u32 %v5974, %v5981
  %v5984 = vshrl.u32 %v5966, %v5982
  %v5985 = vor.u32 %v5983, %v5984
  %v5986 = vsub.s32 4294967266, %v5981
  %v5987 = vadd.s32 %v5986, 127
  %v5988 = vshll.u32 %v5987, 23
  %v5989 = vor.u32 4788187, %v5988
  %v5990 = vand.u32 2147483647, %v5989
  %v5992 = vcvt.s32.f32 %v5985
  %v5993 = vmul.f32 %v5992, %v5990
  %v5994 = vxor.u32 %v5993, 2147483648
  %v5995 = vsel %vm5912, %v5994, %v5993
  %v5996 = vsub.s32 4, %v5972
  %v5997 = vsel %vm5912, %v5996, %v5972
  %v5998 = vsel %vm5911, %v5906, %v5995
  %v5999 = vsel %vm5911, 0, %v5997
  %v6000 = vcosq.f32.pop %v5998
  %v6001 = vsinq.f32.pop %v5998
  %vm6002 = vweird.f32 %v5906
  %v6003 = vadd.s32 %v5999, 3
  %v6004 = vand.u32 %v6003, 3
  %vm6005 = vcmp.lt.s32.totalorder %v6004, 2
  %vm6006 = vcmp.eq.s32.totalorder %v6004, 0
  %v6007 = vxor.u32 %v6001, 2147483648
  %v6008 = vsel %vm6006, %v6000, %v6007
  %vm6009 = vcmp.eq.s32.totalorder %v6004, 2
  %v6010 = vxor.u32 %v6000, 2147483648
  %v6011 = vsel %vm6009, %v6010, %v6001
  %v6012 = vsel %vm6005, %v6008, %v6011
  %v6013 = vsel %vm6002, nan, %v6012
  %v6014 = vand.u32 2147483647, %v5907
  %vm6015 = vcmp.le.f32.partialorder %v6014, 0.7853982
  %vm6016 = vcmp.lt.s32.totalorder %v5907, 0
  %v6017 = vand.u32 %v5907, 2139095040
  %v6018 = vshrl.u32 %v6017, 23
  %v6019 = vsub.s32 %v6018, 127
  %v6020 = vand.u32 2147483647, %v5907
  %v6021 = vand.u32 %v6020, 8388607
  %v6022 = vor.u32 %v6021, 8388608
  %v6023 = vsub.s32 0, %v6022
  %v6024 = vadd.s32 %v6019, 1
  %vm6025 = vcmp.gt.s32.totalorder %v6024, 0
  %v6026 = vsel %vm6025, %v6024, 0
  %v6027 = vshrl.u32 %v6026, 5
  %v6028 = vand.u32 %v6026, 31
  %v6029 = vsub.s32 32, %v6028
  %v6030 = vshrl.u32 683565275, %v6029
  %v6031 = vshll.u32 683565275, %v6028
  %v6032 = vshrl.u32 2475754826, %v6029
  %v6033 = vor.u32 %v6031, %v6032
  %v6034 = vshll.u32 2475754826, %v6028
  %v6035 = vshrl.u32 2131351028, %v6029
  %v6036 = vor.u32 %v6034, %v6035
  %v6037 = vshll.u32 2131351028, %v6028
  %v6038 = vshrl.u32 2102212464, %v6029
  %v6039 = vor.u32 %v6037, %v6038
  %v6040 = vshll.u32 2102212464, %v6028
  %v6041 = vshrl.u32 920167782, %v6029
  %v6042 = vor.u32 %v6040, %v6041
  %v6043 = vshll.u32 920167782, %v6028
  %v6044 = vshrl.u32 1326507024, %v6029
  %v6045 = vor.u32 %v6043, %v6044
  %vm6046 = vcmp.lt.s32.totalorder %v6027, 1
  %vm6047 = vcmp.lt.s32.totalorder %v6027, 2
  %vm6048 = vcmp.lt.s32.totalorder %v6027, 3
  %vm6049 = vcmp.lt.s32.totalorder %v6027, 4
  %v6050 = vsel %vm6046, %v6030, %v6033
  %v6051 = vsel %vm6049, %v6039, 2102212464
  %v6052 = vsel %vm6048, %v6036, %v6051
  %v6053 = vsel %vm6047, %v6050, %v6052
  %v6054 = vsel %vm6046, %v6033, %v6036
  %v6055 = vsel %vm6049, %v6042, 920167782
  %v6056 = vsel %vm6048, %v6039, %v6055
  %v6057 = vsel %vm6047, %v6054, %v6056
  %v6058 = vsel %vm6046, %v6036, %v6039
  %v6059 = vsel %vm6049, %v6045, 1326507024
  %v6060 = vsel %vm6048, %v6042, %v6059
  %v6061 = vsel %vm6047, %v6058, %v6060
  %v6062 = vshll.u32 %v6022, 8
  %v6063 = vmul.u32.u64.compose %v6062, %v6061
  %v6064 = vextract.low.u32 %v6063
  %v6065 = vextract.high.u32 %v6063
  %v6066 = vmul.u32.u64.compose %v6062, %v6057
  %v6067 = vextract.low.u32 %v6066
  %v6068 = vextract.high.u32 %v6066
  %v6069 = vmul.u32 %v6062, %v6053
  %v6070 = vadd.s32 %v6065, %v6067
  %vm6071 = vc.u32 %v6065, %v6067
  %v6072 = vadd.s32 %v6068, 1
  %v6073 = vsel %vm6071, %v6072, %v6068
  %v6074 = vadd.s32 %v6069, %v6073
  %v6075 = vadd.s32 %v6074, 536870912
  %v6076 = vshrl.u32 %v6075, 30
  %v6077 = vshll.u32 %v6076, 30
  %v6078 = vsub.s32 %v6074, %v6077
  %vm6079 = vcmp.lt.s32.totalorder %v6078, 0
  %v6080 = vsub.s32 0, %v6078
  %v6081 = vsel %vm6079, %v6080, %v6078
  %v6082 = vclz %v6081
  %v6083 = vsub.s32 %v6082, 2
  %vm6084 = vcmp.gt.s32.totalorder 0, %v6083
  %v6085 = vsel %vm6084, 0, %v6083
  %v6086 = vsub.s32 32, %v6085
  %v6087 = vshll.u32 %v6078, %v6085
  %v6088 = vshrl.u32 %v6070, %v6086
  %v6089 = vor.u32 %v6087, %v6088
  %v6090 = vsub.s32 4294967266, %v6085
  %v6091 = vadd.s32 %v6090, 127
  %v6092 = vshll.u32 %v6091, 23
  %v6093 = vor.u32 4788187, %v6092
  %v6094 = vand.u32 2147483647, %v6093
  %v6096 = vcvt.s32.f32 %v6089
  %v6097 = vmul.f32 %v6096, %v6094
  %v6098 = vxor.u32 %v6097, 2147483648
  %v6099 = vsel %vm6016, %v6098, %v6097
  %v6100 = vsub.s32 4, %v6076
  %v6101 = vsel %vm6016, %v6100, %v6076
  %v6102 = vsel %vm6015, %v5907, %v6099
  %v6103 = vsel %vm6015, 0, %v6101
  %v6104 = vcosq.f32.pop %v6102
  %v6105 = vsinq.f32.pop %v6102
  %vm6106 = vweird.f32 %v5907
  %v6107 = vadd.s32 %v6103, 3
  %v6108 = vand.u32 %v6107, 3
  %vm6109 = vcmp.lt.s32.totalorder %v6108, 2
  %vm6110 = vcmp.eq.s32.totalorder %v6108, 0
  %v6111 = vxor.u32 %v6105, 2147483648
  %v6112 = vsel %vm6110, %v6104, %v6111
  %vm6113 = vcmp.eq.s32.totalorder %v6108, 2
  %v6114 = vxor.u32 %v6104, 2147483648
  %v6115 = vsel %vm6113, %v6114, %v6105
  %v6116 = vsel %vm6109, %v6112, %v6115
  %v6117 = vsel %vm6106, nan, %v6116
  %v6118 = vand.u32 2147483647, %v5908
  %vm6119 = vcmp.le.f32.partialorder %v6118, 0.7853982
  %vm6120 = vcmp.lt.s32.totalorder %v5908, 0
  %v6121 = vand.u32 %v5908, 2139095040
  %v6122 = vshrl.u32 %v6121, 23
  %v6123 = vsub.s32 %v6122, 127
  %v6124 = vand.u32 2147483647, %v5908
  %v6125 = vand.u32 %v6124, 8388607
  %v6126 = vor.u32 %v6125, 8388608
  %v6127 = vsub.s32 0, %v6126
  %v6128 = vadd.s32 %v6123, 1
  %vm6129 = vcmp.gt.s32.totalorder %v6128, 0
  %v6130 = vsel %vm6129, %v6128, 0
  %v6131 = vshrl.u32 %v6130, 5
  %v6132 = vand.u32 %v6130, 31
  %v6133 = vsub.s32 32, %v6132
  %v6134 = vshrl.u32 683565275, %v6133
  %v6135 = vshll.u32 683565275, %v6132
  %v6136 = vshrl.u32 2475754826, %v6133
  %v6137 = vor.u32 %v6135, %v6136
  %v6138 = vshll.u32 2475754826, %v6132
  %v6139 = vshrl.u32 2131351028, %v6133
  %v6140 = vor.u32 %v6138, %v6139
  %v6141 = vshll.u32 2131351028, %v6132
  %v6142 = vshrl.u32 2102212464, %v6133
  %v6143 = vor.u32 %v6141, %v6142
  %v6144 = vshll.u32 2102212464, %v6132
  %v6145 = vshrl.u32 920167782, %v6133
  %v6146 = vor.u32 %v6144, %v6145
  %v6147 = vshll.u32 920167782, %v6132
  %v6148 = vshrl.u32 1326507024, %v6133
  %v6149 = vor.u32 %v6147, %v6148
  %vm6150 = vcmp.lt.s32.totalorder %v6131, 1
  %vm6151 = vcmp.lt.s32.totalorder %v6131, 2
  %vm6152 = vcmp.lt.s32.totalorder %v6131, 3
  %vm6153 = vcmp.lt.s32.totalorder %v6131, 4
  %v6154 = vsel %vm6150, %v6134, %v6137
  %v6155 = vsel %vm6153, %v6143, 2102212464
  %v6156 = vsel %vm6152, %v6140, %v6155
  %v6157 = vsel %vm6151, %v6154, %v6156
  %v6158 = vsel %vm6150, %v6137, %v6140
  %v6159 = vsel %vm6153, %v6146, 920167782
  %v6160 = vsel %vm6152, %v6143, %v6159
  %v6161 = vsel %vm6151, %v6158, %v6160
  %v6162 = vsel %vm6150, %v6140, %v6143
  %v6163 = vsel %vm6153, %v6149, 1326507024
  %v6164 = vsel %vm6152, %v6146, %v6163
  %v6165 = vsel %vm6151, %v6162, %v6164
  %v6166 = vshll.u32 %v6126, 8
  %v6167 = vmul.u32.u64.compose %v6166, %v6165
  %v6168 = vextract.low.u32 %v6167
  %v6169 = vextract.high.u32 %v6167
  %v6170 = vmul.u32.u64.compose %v6166, %v6161
  %v6171 = vextract.low.u32 %v6170
  %v6172 = vextract.high.u32 %v6170
  %v6173 = vmul.u32 %v6166, %v6157
  %v6174 = vadd.s32 %v6169, %v6171
  %vm6175 = vc.u32 %v6169, %v6171
  %v6176 = vadd.s32 %v6172, 1
  %v6177 = vsel %vm6175, %v6176, %v6172
  %v6178 = vadd.s32 %v6173, %v6177
  %v6179 = vadd.s32 %v6178, 536870912
  %v6180 = vshrl.u32 %v6179, 30
  %v6181 = vshll.u32 %v6180, 30
  %v6182 = vsub.s32 %v6178, %v6181
  %vm6183 = vcmp.lt.s32.totalorder %v6182, 0
  %v6184 = vsub.s32 0, %v6182
  %v6185 = vsel %vm6183, %v6184, %v6182
  %v6186 = vclz %v6185
  %v6187 = vsub.s32 %v6186, 2
  %vm6188 = vcmp.gt.s32.totalorder 0, %v6187
  %v6189 = vsel %vm6188, 0, %v6187
  %v6190 = vsub.s32 32, %v6189
  %v6191 = vshll.u32 %v6182, %v6189
  %v6192 = vshrl.u32 %v6174, %v6190
  %v6193 = vor.u32 %v6191, %v6192
  %v6194 = vsub.s32 4294967266, %v6189
  %v6195 = vadd.s32 %v6194, 127
  %v6196 = vshll.u32 %v6195, 23
  %v6197 = vor.u32 4788187, %v6196
  %v6198 = vand.u32 2147483647, %v6197
  %v6200 = vcvt.s32.f32 %v6193
  %v6201 = vmul.f32 %v6200, %v6198
  %v6202 = vxor.u32 %v6201, 2147483648
  %v6203 = vsel %vm6120, %v6202, %v6201
  %v6204 = vsub.s32 4, %v6180
  %v6205 = vsel %vm6120, %v6204, %v6180
  %v6206 = vsel %vm6119, %v5908, %v6203
  %v6207 = vsel %vm6119, 0, %v6205
  %v6208 = vcosq.f32.pop %v6206
  %v6209 = vsinq.f32.pop %v6206
  %vm6210 = vweird.f32 %v5908
  %v6211 = vadd.s32 %v6207, 3
  %v6212 = vand.u32 %v6211, 3
  %vm6213 = vcmp.lt.s32.totalorder %v6212, 2
  %vm6214 = vcmp.eq.s32.totalorder %v6212, 0
  %v6215 = vxor.u32 %v6209, 2147483648
  %v6216 = vsel %vm6214, %v6208, %v6215
  %vm6217 = vcmp.eq.s32.totalorder %v6212, 2
  %v6218 = vxor.u32 %v6208, 2147483648
  %v6219 = vsel %vm6217, %v6218, %v6209
  %v6220 = vsel %vm6213, %v6216, %v6219
  %v6221 = vsel %vm6210, nan, %v6220
  %v6222 = vand.u32 2147483647, %v5909
  %vm6223 = vcmp.le.f32.partialorder %v6222, 0.7853982
  %vm6224 = vcmp.lt.s32.totalorder %v5909, 0
  %v6225 = vand.u32 %v5909, 2139095040
  %v6226 = vshrl.u32 %v6225, 23
  %v6227 = vsub.s32 %v6226, 127
  %v6228 = vand.u32 2147483647, %v5909
  %v6229 = vand.u32 %v6228, 8388607
  %v6230 = vor.u32 %v6229, 8388608
  %v6231 = vsub.s32 0, %v6230
  %v6232 = vadd.s32 %v6227, 1
  %vm6233 = vcmp.gt.s32.totalorder %v6232, 0
  %v6234 = vsel %vm6233, %v6232, 0
  %v6235 = vshrl.u32 %v6234, 5
  %v6236 = vand.u32 %v6234, 31
  %v6237 = vsub.s32 32, %v6236
  %v6238 = vshrl.u32 683565275, %v6237
  %v6239 = vshll.u32 683565275, %v6236
  %v6240 = vshrl.u32 2475754826, %v6237
  %v6241 = vor.u32 %v6239, %v6240
  %v6242 = vshll.u32 2475754826, %v6236
  %v6243 = vshrl.u32 2131351028, %v6237
  %v6244 = vor.u32 %v6242, %v6243
  %v6245 = vshll.u32 2131351028, %v6236
  %v6246 = vshrl.u32 2102212464, %v6237
  %v6247 = vor.u32 %v6245, %v6246
  %v6248 = vshll.u32 2102212464, %v6236
  %v6249 = vshrl.u32 920167782, %v6237
  %v6250 = vor.u32 %v6248, %v6249
  %v6251 = vshll.u32 920167782, %v6236
  %v6252 = vshrl.u32 1326507024, %v6237
  %v6253 = vor.u32 %v6251, %v6252
  %vm6254 = vcmp.lt.s32.totalorder %v6235, 1
  %vm6255 = vcmp.lt.s32.totalorder %v6235, 2
  %vm6256 = vcmp.lt.s32.totalorder %v6235, 3
  %vm6257 = vcmp.lt.s32.totalorder %v6235, 4
  %v6258 = vsel %vm6254, %v6238, %v6241
  %v6259 = vsel %vm6257, %v6247, 2102212464
  %v6260 = vsel %vm6256, %v6244, %v6259
  %v6261 = vsel %vm6255, %v6258, %v6260
  %v6262 = vsel %vm6254, %v6241, %v6244
  %v6263 = vsel %vm6257, %v6250, 920167782
  %v6264 = vsel %vm6256, %v6247, %v6263
  %v6265 = vsel %vm6255, %v6262, %v6264
  %v6266 = vsel %vm6254, %v6244, %v6247
  %v6267 = vsel %vm6257, %v6253, 1326507024
  %v6268 = vsel %vm6256, %v6250, %v6267
  %v6269 = vsel %vm6255, %v6266, %v6268
  %v6270 = vshll.u32 %v6230, 8
  %v6271 = vmul.u32.u64.compose %v6270, %v6269
  %v6272 = vextract.low.u32 %v6271
  %v6273 = vextract.high.u32 %v6271
  %v6274 = vmul.u32.u64.compose %v6270, %v6265
  %v6275 = vextract.low.u32 %v6274
  %v6276 = vextract.high.u32 %v6274
  %v6277 = vmul.u32 %v6270, %v6261
  %v6278 = vadd.s32 %v6273, %v6275
  %vm6279 = vc.u32 %v6273, %v6275
  %v6280 = vadd.s32 %v6276, 1
  %v6281 = vsel %vm6279, %v6280, %v6276
  %v6282 = vadd.s32 %v6277, %v6281
  %v6283 = vadd.s32 %v6282, 536870912
  %v6284 = vshrl.u32 %v6283, 30
  %v6285 = vshll.u32 %v6284, 30
  %v6286 = vsub.s32 %v6282, %v6285
  %vm6287 = vcmp.lt.s32.totalorder %v6286, 0
  %v6288 = vsub.s32 0, %v6286
  %v6289 = vsel %vm6287, %v6288, %v6286
  %v6290 = vclz %v6289
  %v6291 = vsub.s32 %v6290, 2
  %vm6292 = vcmp.gt.s32.totalorder 0, %v6291
  %v6293 = vsel %vm6292, 0, %v6291
  %v6294 = vsub.s32 32, %v6293
  %v6295 = vshll.u32 %v6286, %v6293
  %v6296 = vshrl.u32 %v6278, %v6294
  %v6297 = vor.u32 %v6295, %v6296
  %v6298 = vsub.s32 4294967266, %v6293
  %v6299 = vadd.s32 %v6298, 127
  %v6300 = vshll.u32 %v6299, 23
  %v6301 = vor.u32 4788187, %v6300
  %v6302 = vand.u32 2147483647, %v6301
  %v6304 = vcvt.s32.f32 %v6297
  %v6305 = vmul.f32 %v6304, %v6302
  %v6306 = vxor.u32 %v6305, 2147483648
  %v6307 = vsel %vm6224, %v6306, %v6305
  %v6308 = vsub.s32 4, %v6284
  %v6309 = vsel %vm6224, %v6308, %v6284
  %v6310 = vsel %vm6223, %v5909, %v6307
  %v6311 = vsel %vm6223, 0, %v6309
  %v6312 = vcosq.f32.pop %v6310
  %v6313 = vsinq.f32.pop %v6310
  %vm6314 = vweird.f32 %v5909
  %v6315 = vadd.s32 %v6311, 3
  %v6316 = vand.u32 %v6315, 3
  %vm6317 = vcmp.lt.s32.totalorder %v6316, 2
  %vm6318 = vcmp.eq.s32.totalorder %v6316, 0
  %v6319 = vxor.u32 %v6313, 2147483648
  %v6320 = vsel %vm6318, %v6312, %v6319
  %vm6321 = vcmp.eq.s32.totalorder %v6316, 2
  %v6322 = vxor.u32 %v6312, 2147483648
  %v6323 = vsel %vm6321, %v6322, %v6313
  %v6324 = vsel %vm6317, %v6320, %v6323
  %v6325 = vsel %vm6314, nan, %v6324
  %s6326 = scalar_lea.vmem %s1, 480
  %6327 = vst [vmem:[%s6326] sm:$0xff] %v6013
  %6328 = vst [vmem:[%s6326 + $0x8] sm:$0xff] %v6117
  %6329 = vst [vmem:[%s6326 + $0x10] sm:$0xff] %v6221
  %6330 = vst [vmem:[%s6326 + $0x18] sm:$0xff] %v6325
  %v6331 = vand.u32 2147483647, %v5906
  %vm6332 = vcmp.le.f32.partialorder %v6331, 0.7853982
  %vm6333 = vcmp.lt.s32.totalorder %v5906, 0
  %v6334 = vand.u32 %v5906, 2139095040
  %v6335 = vshrl.u32 %v6334, 23
  %v6336 = vsub.s32 %v6335, 127
  %v6337 = vand.u32 2147483647, %v5906
  %v6338 = vand.u32 %v6337, 8388607
  %v6339 = vor.u32 %v6338, 8388608
  %v6340 = vsub.s32 0, %v6339
  %v6341 = vadd.s32 %v6336, 1
  %vm6342 = vcmp.gt.s32.totalorder %v6341, 0
  %v6343 = vsel %vm6342, %v6341, 0
  %v6344 = vshrl.u32 %v6343, 5
  %v6345 = vand.u32 %v6343, 31
  %v6346 = vsub.s32 32, %v6345
  %v6347 = vshrl.u32 683565275, %v6346
  %v6348 = vshll.u32 683565275, %v6345
  %v6349 = vshrl.u32 2475754826, %v6346
  %v6350 = vor.u32 %v6348, %v6349
  %v6351 = vshll.u32 2475754826, %v6345
  %v6352 = vshrl.u32 2131351028, %v6346
  %v6353 = vor.u32 %v6351, %v6352
  %v6354 = vshll.u32 2131351028, %v6345
  %v6355 = vshrl.u32 2102212464, %v6346
  %v6356 = vor.u32 %v6354, %v6355
  %v6357 = vshll.u32 2102212464, %v6345
  %v6358 = vshrl.u32 920167782, %v6346
  %v6359 = vor.u32 %v6357, %v6358
  %v6360 = vshll.u32 920167782, %v6345
  %v6361 = vshrl.u32 1326507024, %v6346
  %v6362 = vor.u32 %v6360, %v6361
  %vm6363 = vcmp.lt.s32.totalorder %v6344, 1
  %vm6364 = vcmp.lt.s32.totalorder %v6344, 2
  %vm6365 = vcmp.lt.s32.totalorder %v6344, 3
  %vm6366 = vcmp.lt.s32.totalorder %v6344, 4
  %v6367 = vsel %vm6363, %v6347, %v6350
  %v6368 = vsel %vm6366, %v6356, 2102212464
  %v6369 = vsel %vm6365, %v6353, %v6368
  %v6370 = vsel %vm6364, %v6367, %v6369
  %v6371 = vsel %vm6363, %v6350, %v6353
  %v6372 = vsel %vm6366, %v6359, 920167782
  %v6373 = vsel %vm6365, %v6356, %v6372
  %v6374 = vsel %vm6364, %v6371, %v6373
  %v6375 = vsel %vm6363, %v6353, %v6356
  %v6376 = vsel %vm6366, %v6362, 1326507024
  %v6377 = vsel %vm6365, %v6359, %v6376
  %v6378 = vsel %vm6364, %v6375, %v6377
  %v6379 = vshll.u32 %v6339, 8
  %v6380 = vmul.u32.u64.compose %v6379, %v6378
  %v6381 = vextract.low.u32 %v6380
  %v6382 = vextract.high.u32 %v6380
  %v6383 = vmul.u32.u64.compose %v6379, %v6374
  %v6384 = vextract.low.u32 %v6383
  %v6385 = vextract.high.u32 %v6383
  %v6386 = vmul.u32 %v6379, %v6370
  %v6387 = vadd.s32 %v6382, %v6384
  %vm6388 = vc.u32 %v6382, %v6384
  %v6389 = vadd.s32 %v6385, 1
  %v6390 = vsel %vm6388, %v6389, %v6385
  %v6391 = vadd.s32 %v6386, %v6390
  %v6392 = vadd.s32 %v6391, 536870912
  %v6393 = vshrl.u32 %v6392, 30
  %v6394 = vshll.u32 %v6393, 30
  %v6395 = vsub.s32 %v6391, %v6394
  %vm6396 = vcmp.lt.s32.totalorder %v6395, 0
  %v6397 = vsub.s32 0, %v6395
  %v6398 = vsel %vm6396, %v6397, %v6395
  %v6399 = vclz %v6398
  %v6400 = vsub.s32 %v6399, 2
  %vm6401 = vcmp.gt.s32.totalorder 0, %v6400
  %v6402 = vsel %vm6401, 0, %v6400
  %v6403 = vsub.s32 32, %v6402
  %v6404 = vshll.u32 %v6395, %v6402
  %v6405 = vshrl.u32 %v6387, %v6403
  %v6406 = vor.u32 %v6404, %v6405
  %v6407 = vsub.s32 4294967266, %v6402
  %v6408 = vadd.s32 %v6407, 127
  %v6409 = vshll.u32 %v6408, 23
  %v6410 = vor.u32 4788187, %v6409
  %v6411 = vand.u32 2147483647, %v6410
  %v6413 = vcvt.s32.f32 %v6406
  %v6414 = vmul.f32 %v6413, %v6411
  %v6415 = vxor.u32 %v6414, 2147483648
  %v6416 = vsel %vm6333, %v6415, %v6414
  %v6417 = vsub.s32 4, %v6393
  %v6418 = vsel %vm6333, %v6417, %v6393
  %v6419 = vsel %vm6332, %v5906, %v6416
  %v6420 = vsel %vm6332, 0, %v6418
  %v6421 = vcosq.f32.pop %v6419
  %v6422 = vsinq.f32.pop %v6419
  %vm6423 = vweird.f32 %v5906
  %v6424 = vand.u32 %v6420, 3
  %vm6425 = vcmp.lt.s32.totalorder %v6424, 2
  %vm6426 = vcmp.eq.s32.totalorder %v6424, 0
  %v6427 = vxor.u32 %v6422, 2147483648
  %v6428 = vsel %vm6426, %v6421, %v6427
  %vm6429 = vcmp.eq.s32.totalorder %v6424, 2
  %v6430 = vxor.u32 %v6421, 2147483648
  %v6431 = vsel %vm6429, %v6430, %v6422
  %v6432 = vsel %vm6425, %v6428, %v6431
  %v6433 = vsel %vm6423, nan, %v6432
  %v6434 = vand.u32 2147483647, %v5907
  %vm6435 = vcmp.le.f32.partialorder %v6434, 0.7853982
  %vm6436 = vcmp.lt.s32.totalorder %v5907, 0
  %v6437 = vand.u32 %v5907, 2139095040
  %v6438 = vshrl.u32 %v6437, 23
  %v6439 = vsub.s32 %v6438, 127
  %v6440 = vand.u32 2147483647, %v5907
  %v6441 = vand.u32 %v6440, 8388607
  %v6442 = vor.u32 %v6441, 8388608
  %v6443 = vsub.s32 0, %v6442
  %v6444 = vadd.s32 %v6439, 1
  %vm6445 = vcmp.gt.s32.totalorder %v6444, 0
  %v6446 = vsel %vm6445, %v6444, 0
  %v6447 = vshrl.u32 %v6446, 5
  %v6448 = vand.u32 %v6446, 31
  %v6449 = vsub.s32 32, %v6448
  %v6450 = vshrl.u32 683565275, %v6449
  %v6451 = vshll.u32 683565275, %v6448
  %v6452 = vshrl.u32 2475754826, %v6449
  %v6453 = vor.u32 %v6451, %v6452
  %v6454 = vshll.u32 2475754826, %v6448
  %v6455 = vshrl.u32 2131351028, %v6449
  %v6456 = vor.u32 %v6454, %v6455
  %v6457 = vshll.u32 2131351028, %v6448
  %v6458 = vshrl.u32 2102212464, %v6449
  %v6459 = vor.u32 %v6457, %v6458
  %v6460 = vshll.u32 2102212464, %v6448
  %v6461 = vshrl.u32 920167782, %v6449
  %v6462 = vor.u32 %v6460, %v6461
  %v6463 = vshll.u32 920167782, %v6448
  %v6464 = vshrl.u32 1326507024, %v6449
  %v6465 = vor.u32 %v6463, %v6464
  %vm6466 = vcmp.lt.s32.totalorder %v6447, 1
  %vm6467 = vcmp.lt.s32.totalorder %v6447, 2
  %vm6468 = vcmp.lt.s32.totalorder %v6447, 3
  %vm6469 = vcmp.lt.s32.totalorder %v6447, 4
  %v6470 = vsel %vm6466, %v6450, %v6453
  %v6471 = vsel %vm6469, %v6459, 2102212464
  %v6472 = vsel %vm6468, %v6456, %v6471
  %v6473 = vsel %vm6467, %v6470, %v6472
  %v6474 = vsel %vm6466, %v6453, %v6456
  %v6475 = vsel %vm6469, %v6462, 920167782
  %v6476 = vsel %vm6468, %v6459, %v6475
  %v6477 = vsel %vm6467, %v6474, %v6476
  %v6478 = vsel %vm6466, %v6456, %v6459
  %v6479 = vsel %vm6469, %v6465, 1326507024
  %v6480 = vsel %vm6468, %v6462, %v6479
  %v6481 = vsel %vm6467, %v6478, %v6480
  %v6482 = vshll.u32 %v6442, 8
  %v6483 = vmul.u32.u64.compose %v6482, %v6481
  %v6484 = vextract.low.u32 %v6483
  %v6485 = vextract.high.u32 %v6483
  %v6486 = vmul.u32.u64.compose %v6482, %v6477
  %v6487 = vextract.low.u32 %v6486
  %v6488 = vextract.high.u32 %v6486
  %v6489 = vmul.u32 %v6482, %v6473
  %v6490 = vadd.s32 %v6485, %v6487
  %vm6491 = vc.u32 %v6485, %v6487
  %v6492 = vadd.s32 %v6488, 1
  %v6493 = vsel %vm6491, %v6492, %v6488
  %v6494 = vadd.s32 %v6489, %v6493
  %v6495 = vadd.s32 %v6494, 536870912
  %v6496 = vshrl.u32 %v6495, 30
  %v6497 = vshll.u32 %v6496, 30
  %v6498 = vsub.s32 %v6494, %v6497
  %vm6499 = vcmp.lt.s32.totalorder %v6498, 0
  %v6500 = vsub.s32 0, %v6498
  %v6501 = vsel %vm6499, %v6500, %v6498
  %v6502 = vclz %v6501
  %v6503 = vsub.s32 %v6502, 2
  %vm6504 = vcmp.gt.s32.totalorder 0, %v6503
  %v6505 = vsel %vm6504, 0, %v6503
  %v6506 = vsub.s32 32, %v6505
  %v6507 = vshll.u32 %v6498, %v6505
  %v6508 = vshrl.u32 %v6490, %v6506
  %v6509 = vor.u32 %v6507, %v6508
  %v6510 = vsub.s32 4294967266, %v6505
  %v6511 = vadd.s32 %v6510, 127
  %v6512 = vshll.u32 %v6511, 23
  %v6513 = vor.u32 4788187, %v6512
  %v6514 = vand.u32 2147483647, %v6513
  %v6516 = vcvt.s32.f32 %v6509
  %v6517 = vmul.f32 %v6516, %v6514
  %v6518 = vxor.u32 %v6517, 2147483648
  %v6519 = vsel %vm6436, %v6518, %v6517
  %v6520 = vsub.s32 4, %v6496
  %v6521 = vsel %vm6436, %v6520, %v6496
  %v6522 = vsel %vm6435, %v5907, %v6519
  %v6523 = vsel %vm6435, 0, %v6521
  %v6524 = vcosq.f32.pop %v6522
  %v6525 = vsinq.f32.pop %v6522
  %vm6526 = vweird.f32 %v5907
  %v6527 = vand.u32 %v6523, 3
  %vm6528 = vcmp.lt.s32.totalorder %v6527, 2
  %vm6529 = vcmp.eq.s32.totalorder %v6527, 0
  %v6530 = vxor.u32 %v6525, 2147483648
  %v6531 = vsel %vm6529, %v6524, %v6530
  %vm6532 = vcmp.eq.s32.totalorder %v6527, 2
  %v6533 = vxor.u32 %v6524, 2147483648
  %v6534 = vsel %vm6532, %v6533, %v6525
  %v6535 = vsel %vm6528, %v6531, %v6534
  %v6536 = vsel %vm6526, nan, %v6535
  %v6537 = vand.u32 2147483647, %v5908
  %vm6538 = vcmp.le.f32.partialorder %v6537, 0.7853982
  %vm6539 = vcmp.lt.s32.totalorder %v5908, 0
  %v6540 = vand.u32 %v5908, 2139095040
  %v6541 = vshrl.u32 %v6540, 23
  %v6542 = vsub.s32 %v6541, 127
  %v6543 = vand.u32 2147483647, %v5908
  %v6544 = vand.u32 %v6543, 8388607
  %v6545 = vor.u32 %v6544, 8388608
  %v6546 = vsub.s32 0, %v6545
  %v6547 = vadd.s32 %v6542, 1
  %vm6548 = vcmp.gt.s32.totalorder %v6547, 0
  %v6549 = vsel %vm6548, %v6547, 0
  %v6550 = vshrl.u32 %v6549, 5
  %v6551 = vand.u32 %v6549, 31
  %v6552 = vsub.s32 32, %v6551
  %v6553 = vshrl.u32 683565275, %v6552
  %v6554 = vshll.u32 683565275, %v6551
  %v6555 = vshrl.u32 2475754826, %v6552
  %v6556 = vor.u32 %v6554, %v6555
  %v6557 = vshll.u32 2475754826, %v6551
  %v6558 = vshrl.u32 2131351028, %v6552
  %v6559 = vor.u32 %v6557, %v6558
  %v6560 = vshll.u32 2131351028, %v6551
  %v6561 = vshrl.u32 2102212464, %v6552
  %v6562 = vor.u32 %v6560, %v6561
  %v6563 = vshll.u32 2102212464, %v6551
  %v6564 = vshrl.u32 920167782, %v6552
  %v6565 = vor.u32 %v6563, %v6564
  %v6566 = vshll.u32 920167782, %v6551
  %v6567 = vshrl.u32 1326507024, %v6552
  %v6568 = vor.u32 %v6566, %v6567
  %vm6569 = vcmp.lt.s32.totalorder %v6550, 1
  %vm6570 = vcmp.lt.s32.totalorder %v6550, 2
  %vm6571 = vcmp.lt.s32.totalorder %v6550, 3
  %vm6572 = vcmp.lt.s32.totalorder %v6550, 4
  %v6573 = vsel %vm6569, %v6553, %v6556
  %v6574 = vsel %vm6572, %v6562, 2102212464
  %v6575 = vsel %vm6571, %v6559, %v6574
  %v6576 = vsel %vm6570, %v6573, %v6575
  %v6577 = vsel %vm6569, %v6556, %v6559
  %v6578 = vsel %vm6572, %v6565, 920167782
  %v6579 = vsel %vm6571, %v6562, %v6578
  %v6580 = vsel %vm6570, %v6577, %v6579
  %v6581 = vsel %vm6569, %v6559, %v6562
  %v6582 = vsel %vm6572, %v6568, 1326507024
  %v6583 = vsel %vm6571, %v6565, %v6582
  %v6584 = vsel %vm6570, %v6581, %v6583
  %v6585 = vshll.u32 %v6545, 8
  %v6586 = vmul.u32.u64.compose %v6585, %v6584
  %v6587 = vextract.low.u32 %v6586
  %v6588 = vextract.high.u32 %v6586
  %v6589 = vmul.u32.u64.compose %v6585, %v6580
  %v6590 = vextract.low.u32 %v6589
  %v6591 = vextract.high.u32 %v6589
  %v6592 = vmul.u32 %v6585, %v6576
  %v6593 = vadd.s32 %v6588, %v6590
  %vm6594 = vc.u32 %v6588, %v6590
  %v6595 = vadd.s32 %v6591, 1
  %v6596 = vsel %vm6594, %v6595, %v6591
  %v6597 = vadd.s32 %v6592, %v6596
  %v6598 = vadd.s32 %v6597, 536870912
  %v6599 = vshrl.u32 %v6598, 30
  %v6600 = vshll.u32 %v6599, 30
  %v6601 = vsub.s32 %v6597, %v6600
  %vm6602 = vcmp.lt.s32.totalorder %v6601, 0
  %v6603 = vsub.s32 0, %v6601
  %v6604 = vsel %vm6602, %v6603, %v6601
  %v6605 = vclz %v6604
  %v6606 = vsub.s32 %v6605, 2
  %vm6607 = vcmp.gt.s32.totalorder 0, %v6606
  %v6608 = vsel %vm6607, 0, %v6606
  %v6609 = vsub.s32 32, %v6608
  %v6610 = vshll.u32 %v6601, %v6608
  %v6611 = vshrl.u32 %v6593, %v6609
  %v6612 = vor.u32 %v6610, %v6611
  %v6613 = vsub.s32 4294967266, %v6608
  %v6614 = vadd.s32 %v6613, 127
  %v6615 = vshll.u32 %v6614, 23
  %v6616 = vor.u32 4788187, %v6615
  %v6617 = vand.u32 2147483647, %v6616
  %v6619 = vcvt.s32.f32 %v6612
  %v6620 = vmul.f32 %v6619, %v6617
  %v6621 = vxor.u32 %v6620, 2147483648
  %v6622 = vsel %vm6539, %v6621, %v6620
  %v6623 = vsub.s32 4, %v6599
  %v6624 = vsel %vm6539, %v6623, %v6599
  %v6625 = vsel %vm6538, %v5908, %v6622
  %v6626 = vsel %vm6538, 0, %v6624
  %v6627 = vcosq.f32.pop %v6625
  %v6628 = vsinq.f32.pop %v6625
  %vm6629 = vweird.f32 %v5908
  %v6630 = vand.u32 %v6626, 3
  %vm6631 = vcmp.lt.s32.totalorder %v6630, 2
  %vm6632 = vcmp.eq.s32.totalorder %v6630, 0
  %v6633 = vxor.u32 %v6628, 2147483648
  %v6634 = vsel %vm6632, %v6627, %v6633
  %vm6635 = vcmp.eq.s32.totalorder %v6630, 2
  %v6636 = vxor.u32 %v6627, 2147483648
  %v6637 = vsel %vm6635, %v6636, %v6628
  %v6638 = vsel %vm6631, %v6634, %v6637
  %v6639 = vsel %vm6629, nan, %v6638
  %v6640 = vand.u32 2147483647, %v5909
  %vm6641 = vcmp.le.f32.partialorder %v6640, 0.7853982
  %vm6642 = vcmp.lt.s32.totalorder %v5909, 0
  %v6643 = vand.u32 %v5909, 2139095040
  %v6644 = vshrl.u32 %v6643, 23
  %v6645 = vsub.s32 %v6644, 127
  %v6646 = vand.u32 2147483647, %v5909
  %v6647 = vand.u32 %v6646, 8388607
  %v6648 = vor.u32 %v6647, 8388608
  %v6649 = vsub.s32 0, %v6648
  %v6650 = vadd.s32 %v6645, 1
  %vm6651 = vcmp.gt.s32.totalorder %v6650, 0
  %v6652 = vsel %vm6651, %v6650, 0
  %v6653 = vshrl.u32 %v6652, 5
  %v6654 = vand.u32 %v6652, 31
  %v6655 = vsub.s32 32, %v6654
  %v6656 = vshrl.u32 683565275, %v6655
  %v6657 = vshll.u32 683565275, %v6654
  %v6658 = vshrl.u32 2475754826, %v6655
  %v6659 = vor.u32 %v6657, %v6658
  %v6660 = vshll.u32 2475754826, %v6654
  %v6661 = vshrl.u32 2131351028, %v6655
  %v6662 = vor.u32 %v6660, %v6661
  %v6663 = vshll.u32 2131351028, %v6654
  %v6664 = vshrl.u32 2102212464, %v6655
  %v6665 = vor.u32 %v6663, %v6664
  %v6666 = vshll.u32 2102212464, %v6654
  %v6667 = vshrl.u32 920167782, %v6655
  %v6668 = vor.u32 %v6666, %v6667
  %v6669 = vshll.u32 920167782, %v6654
  %v6670 = vshrl.u32 1326507024, %v6655
  %v6671 = vor.u32 %v6669, %v6670
  %vm6672 = vcmp.lt.s32.totalorder %v6653, 1
  %vm6673 = vcmp.lt.s32.totalorder %v6653, 2
  %vm6674 = vcmp.lt.s32.totalorder %v6653, 3
  %vm6675 = vcmp.lt.s32.totalorder %v6653, 4
  %v6676 = vsel %vm6672, %v6656, %v6659
  %v6677 = vsel %vm6675, %v6665, 2102212464
  %v6678 = vsel %vm6674, %v6662, %v6677
  %v6679 = vsel %vm6673, %v6676, %v6678
  %v6680 = vsel %vm6672, %v6659, %v6662
  %v6681 = vsel %vm6675, %v6668, 920167782
  %v6682 = vsel %vm6674, %v6665, %v6681
  %v6683 = vsel %vm6673, %v6680, %v6682
  %v6684 = vsel %vm6672, %v6662, %v6665
  %v6685 = vsel %vm6675, %v6671, 1326507024
  %v6686 = vsel %vm6674, %v6668, %v6685
  %v6687 = vsel %vm6673, %v6684, %v6686
  %v6688 = vshll.u32 %v6648, 8
  %v6689 = vmul.u32.u64.compose %v6688, %v6687
  %v6690 = vextract.low.u32 %v6689
  %v6691 = vextract.high.u32 %v6689
  %v6692 = vmul.u32.u64.compose %v6688, %v6683
  %v6693 = vextract.low.u32 %v6692
  %v6694 = vextract.high.u32 %v6692
  %v6695 = vmul.u32 %v6688, %v6679
  %v6696 = vadd.s32 %v6691, %v6693
  %vm6697 = vc.u32 %v6691, %v6693
  %v6698 = vadd.s32 %v6694, 1
  %v6699 = vsel %vm6697, %v6698, %v6694
  %v6700 = vadd.s32 %v6695, %v6699
  %v6701 = vadd.s32 %v6700, 536870912
  %v6702 = vshrl.u32 %v6701, 30
  %v6703 = vshll.u32 %v6702, 30
  %v6704 = vsub.s32 %v6700, %v6703
  %vm6705 = vcmp.lt.s32.totalorder %v6704, 0
  %v6706 = vsub.s32 0, %v6704
  %v6707 = vsel %vm6705, %v6706, %v6704
  %v6708 = vclz %v6707
  %v6709 = vsub.s32 %v6708, 2
  %vm6710 = vcmp.gt.s32.totalorder 0, %v6709
  %v6711 = vsel %vm6710, 0, %v6709
  %v6712 = vsub.s32 32, %v6711
  %v6713 = vshll.u32 %v6704, %v6711
  %v6714 = vshrl.u32 %v6696, %v6712
  %v6715 = vor.u32 %v6713, %v6714
  %v6716 = vsub.s32 4294967266, %v6711
  %v6717 = vadd.s32 %v6716, 127
  %v6718 = vshll.u32 %v6717, 23
  %v6719 = vor.u32 4788187, %v6718
  %v6720 = vand.u32 2147483647, %v6719
  %v6722 = vcvt.s32.f32 %v6715
  %v6723 = vmul.f32 %v6722, %v6720
  %v6724 = vxor.u32 %v6723, 2147483648
  %v6725 = vsel %vm6642, %v6724, %v6723
  %v6726 = vsub.s32 4, %v6702
  %v6727 = vsel %vm6642, %v6726, %v6702
  %v6728 = vsel %vm6641, %v5909, %v6725
  %v6729 = vsel %vm6641, 0, %v6727
  %v6730 = vcosq.f32.pop %v6728
  %v6731 = vsinq.f32.pop %v6728
  %vm6732 = vweird.f32 %v5909
  %v6733 = vand.u32 %v6729, 3
  %vm6734 = vcmp.lt.s32.totalorder %v6733, 2
  %vm6735 = vcmp.eq.s32.totalorder %v6733, 0
  %v6736 = vxor.u32 %v6731, 2147483648
  %v6737 = vsel %vm6735, %v6730, %v6736
  %vm6738 = vcmp.eq.s32.totalorder %v6733, 2
  %v6739 = vxor.u32 %v6730, 2147483648
  %v6740 = vsel %vm6738, %v6739, %v6731
  %v6741 = vsel %vm6734, %v6737, %v6740
  %v6742 = vsel %vm6732, nan, %v6741
  %s6743 = scalar_lea.vmem %s1, 512
  %6744 = vst [vmem:[%s6743] sm:$0xff] %v6433
  %6745 = vst [vmem:[%s6743 + $0x8] sm:$0xff] %v6536
  %6746 = vst [vmem:[%s6743 + $0x10] sm:$0xff] %v6639
  %6747 = vst [vmem:[%s6743 + $0x18] sm:$0xff] %v6742
  %v6748 = vmul.f32 %v8, 256.0
  %v6749 = vmul.f32 %v9, 256.0
  %v6750 = vmul.f32 %v10, 256.0
  %v6751 = vmul.f32 %v11, 256.0
  %v6752 = vand.u32 2147483647, %v6748
  %vm6753 = vcmp.le.f32.partialorder %v6752, 0.7853982
  %vm6754 = vcmp.lt.s32.totalorder %v6748, 0
  %v6755 = vand.u32 %v6748, 2139095040
  %v6756 = vshrl.u32 %v6755, 23
  %v6757 = vsub.s32 %v6756, 127
  %v6758 = vand.u32 2147483647, %v6748
  %v6759 = vand.u32 %v6758, 8388607
  %v6760 = vor.u32 %v6759, 8388608
  %v6761 = vsub.s32 0, %v6760
  %v6762 = vadd.s32 %v6757, 1
  %vm6763 = vcmp.gt.s32.totalorder %v6762, 0
  %v6764 = vsel %vm6763, %v6762, 0
  %v6765 = vshrl.u32 %v6764, 5
  %v6766 = vand.u32 %v6764, 31
  %v6767 = vsub.s32 32, %v6766
  %v6768 = vshrl.u32 683565275, %v6767
  %v6769 = vshll.u32 683565275, %v6766
  %v6770 = vshrl.u32 2475754826, %v6767
  %v6771 = vor.u32 %v6769, %v6770
  %v6772 = vshll.u32 2475754826, %v6766
  %v6773 = vshrl.u32 2131351028, %v6767
  %v6774 = vor.u32 %v6772, %v6773
  %v6775 = vshll.u32 2131351028, %v6766
  %v6776 = vshrl.u32 2102212464, %v6767
  %v6777 = vor.u32 %v6775, %v6776
  %v6778 = vshll.u32 2102212464, %v6766
  %v6779 = vshrl.u32 920167782, %v6767
  %v6780 = vor.u32 %v6778, %v6779
  %v6781 = vshll.u32 920167782, %v6766
  %v6782 = vshrl.u32 1326507024, %v6767
  %v6783 = vor.u32 %v6781, %v6782
  %vm6784 = vcmp.lt.s32.totalorder %v6765, 1
  %vm6785 = vcmp.lt.s32.totalorder %v6765, 2
  %vm6786 = vcmp.lt.s32.totalorder %v6765, 3
  %vm6787 = vcmp.lt.s32.totalorder %v6765, 4
  %v6788 = vsel %vm6784, %v6768, %v6771
  %v6789 = vsel %vm6787, %v6777, 2102212464
  %v6790 = vsel %vm6786, %v6774, %v6789
  %v6791 = vsel %vm6785, %v6788, %v6790
  %v6792 = vsel %vm6784, %v6771, %v6774
  %v6793 = vsel %vm6787, %v6780, 920167782
  %v6794 = vsel %vm6786, %v6777, %v6793
  %v6795 = vsel %vm6785, %v6792, %v6794
  %v6796 = vsel %vm6784, %v6774, %v6777
  %v6797 = vsel %vm6787, %v6783, 1326507024
  %v6798 = vsel %vm6786, %v6780, %v6797
  %v6799 = vsel %vm6785, %v6796, %v6798
  %v6800 = vshll.u32 %v6760, 8
  %v6801 = vmul.u32.u64.compose %v6800, %v6799
  %v6802 = vextract.low.u32 %v6801
  %v6803 = vextract.high.u32 %v6801
  %v6804 = vmul.u32.u64.compose %v6800, %v6795
  %v6805 = vextract.low.u32 %v6804
  %v6806 = vextract.high.u32 %v6804
  %v6807 = vmul.u32 %v6800, %v6791
  %v6808 = vadd.s32 %v6803, %v6805
  %vm6809 = vc.u32 %v6803, %v6805
  %v6810 = vadd.s32 %v6806, 1
  %v6811 = vsel %vm6809, %v6810, %v6806
  %v6812 = vadd.s32 %v6807, %v6811
  %v6813 = vadd.s32 %v6812, 536870912
  %v6814 = vshrl.u32 %v6813, 30
  %v6815 = vshll.u32 %v6814, 30
  %v6816 = vsub.s32 %v6812, %v6815
  %vm6817 = vcmp.lt.s32.totalorder %v6816, 0
  %v6818 = vsub.s32 0, %v6816
  %v6819 = vsel %vm6817, %v6818, %v6816
  %v6820 = vclz %v6819
  %v6821 = vsub.s32 %v6820, 2
  %vm6822 = vcmp.gt.s32.totalorder 0, %v6821
  %v6823 = vsel %vm6822, 0, %v6821
  %v6824 = vsub.s32 32, %v6823
  %v6825 = vshll.u32 %v6816, %v6823
  %v6826 = vshrl.u32 %v6808, %v6824
  %v6827 = vor.u32 %v6825, %v6826
  %v6828 = vsub.s32 4294967266, %v6823
  %v6829 = vadd.s32 %v6828, 127
  %v6830 = vshll.u32 %v6829, 23
  %v6831 = vor.u32 4788187, %v6830
  %v6832 = vand.u32 2147483647, %v6831
  %v6834 = vcvt.s32.f32 %v6827
  %v6835 = vmul.f32 %v6834, %v6832
  %v6836 = vxor.u32 %v6835, 2147483648
  %v6837 = vsel %vm6754, %v6836, %v6835
  %v6838 = vsub.s32 4, %v6814
  %v6839 = vsel %vm6754, %v6838, %v6814
  %v6840 = vsel %vm6753, %v6748, %v6837
  %v6841 = vsel %vm6753, 0, %v6839
  %v6842 = vcosq.f32.pop %v6840
  %v6843 = vsinq.f32.pop %v6840
  %vm6844 = vweird.f32 %v6748
  %v6845 = vadd.s32 %v6841, 3
  %v6846 = vand.u32 %v6845, 3
  %vm6847 = vcmp.lt.s32.totalorder %v6846, 2
  %vm6848 = vcmp.eq.s32.totalorder %v6846, 0
  %v6849 = vxor.u32 %v6843, 2147483648
  %v6850 = vsel %vm6848, %v6842, %v6849
  %vm6851 = vcmp.eq.s32.totalorder %v6846, 2
  %v6852 = vxor.u32 %v6842, 2147483648
  %v6853 = vsel %vm6851, %v6852, %v6843
  %v6854 = vsel %vm6847, %v6850, %v6853
  %v6855 = vsel %vm6844, nan, %v6854
  %v6856 = vand.u32 2147483647, %v6749
  %vm6857 = vcmp.le.f32.partialorder %v6856, 0.7853982
  %vm6858 = vcmp.lt.s32.totalorder %v6749, 0
  %v6859 = vand.u32 %v6749, 2139095040
  %v6860 = vshrl.u32 %v6859, 23
  %v6861 = vsub.s32 %v6860, 127
  %v6862 = vand.u32 2147483647, %v6749
  %v6863 = vand.u32 %v6862, 8388607
  %v6864 = vor.u32 %v6863, 8388608
  %v6865 = vsub.s32 0, %v6864
  %v6866 = vadd.s32 %v6861, 1
  %vm6867 = vcmp.gt.s32.totalorder %v6866, 0
  %v6868 = vsel %vm6867, %v6866, 0
  %v6869 = vshrl.u32 %v6868, 5
  %v6870 = vand.u32 %v6868, 31
  %v6871 = vsub.s32 32, %v6870
  %v6872 = vshrl.u32 683565275, %v6871
  %v6873 = vshll.u32 683565275, %v6870
  %v6874 = vshrl.u32 2475754826, %v6871
  %v6875 = vor.u32 %v6873, %v6874
  %v6876 = vshll.u32 2475754826, %v6870
  %v6877 = vshrl.u32 2131351028, %v6871
  %v6878 = vor.u32 %v6876, %v6877
  %v6879 = vshll.u32 2131351028, %v6870
  %v6880 = vshrl.u32 2102212464, %v6871
  %v6881 = vor.u32 %v6879, %v6880
  %v6882 = vshll.u32 2102212464, %v6870
  %v6883 = vshrl.u32 920167782, %v6871
  %v6884 = vor.u32 %v6882, %v6883
  %v6885 = vshll.u32 920167782, %v6870
  %v6886 = vshrl.u32 1326507024, %v6871
  %v6887 = vor.u32 %v6885, %v6886
  %vm6888 = vcmp.lt.s32.totalorder %v6869, 1
  %vm6889 = vcmp.lt.s32.totalorder %v6869, 2
  %vm6890 = vcmp.lt.s32.totalorder %v6869, 3
  %vm6891 = vcmp.lt.s32.totalorder %v6869, 4
  %v6892 = vsel %vm6888, %v6872, %v6875
  %v6893 = vsel %vm6891, %v6881, 2102212464
  %v6894 = vsel %vm6890, %v6878, %v6893
  %v6895 = vsel %vm6889, %v6892, %v6894
  %v6896 = vsel %vm6888, %v6875, %v6878
  %v6897 = vsel %vm6891, %v6884, 920167782
  %v6898 = vsel %vm6890, %v6881, %v6897
  %v6899 = vsel %vm6889, %v6896, %v6898
  %v6900 = vsel %vm6888, %v6878, %v6881
  %v6901 = vsel %vm6891, %v6887, 1326507024
  %v6902 = vsel %vm6890, %v6884, %v6901
  %v6903 = vsel %vm6889, %v6900, %v6902
  %v6904 = vshll.u32 %v6864, 8
  %v6905 = vmul.u32.u64.compose %v6904, %v6903
  %v6906 = vextract.low.u32 %v6905
  %v6907 = vextract.high.u32 %v6905
  %v6908 = vmul.u32.u64.compose %v6904, %v6899
  %v6909 = vextract.low.u32 %v6908
  %v6910 = vextract.high.u32 %v6908
  %v6911 = vmul.u32 %v6904, %v6895
  %v6912 = vadd.s32 %v6907, %v6909
  %vm6913 = vc.u32 %v6907, %v6909
  %v6914 = vadd.s32 %v6910, 1
  %v6915 = vsel %vm6913, %v6914, %v6910
  %v6916 = vadd.s32 %v6911, %v6915
  %v6917 = vadd.s32 %v6916, 536870912
  %v6918 = vshrl.u32 %v6917, 30
  %v6919 = vshll.u32 %v6918, 30
  %v6920 = vsub.s32 %v6916, %v6919
  %vm6921 = vcmp.lt.s32.totalorder %v6920, 0
  %v6922 = vsub.s32 0, %v6920
  %v6923 = vsel %vm6921, %v6922, %v6920
  %v6924 = vclz %v6923
  %v6925 = vsub.s32 %v6924, 2
  %vm6926 = vcmp.gt.s32.totalorder 0, %v6925
  %v6927 = vsel %vm6926, 0, %v6925
  %v6928 = vsub.s32 32, %v6927
  %v6929 = vshll.u32 %v6920, %v6927
  %v6930 = vshrl.u32 %v6912, %v6928
  %v6931 = vor.u32 %v6929, %v6930
  %v6932 = vsub.s32 4294967266, %v6927
  %v6933 = vadd.s32 %v6932, 127
  %v6934 = vshll.u32 %v6933, 23
  %v6935 = vor.u32 4788187, %v6934
  %v6936 = vand.u32 2147483647, %v6935
  %v6938 = vcvt.s32.f32 %v6931
  %v6939 = vmul.f32 %v6938, %v6936
  %v6940 = vxor.u32 %v6939, 2147483648
  %v6941 = vsel %vm6858, %v6940, %v6939
  %v6942 = vsub.s32 4, %v6918
  %v6943 = vsel %vm6858, %v6942, %v6918
  %v6944 = vsel %vm6857, %v6749, %v6941
  %v6945 = vsel %vm6857, 0, %v6943
  %v6946 = vcosq.f32.pop %v6944
  %v6947 = vsinq.f32.pop %v6944
  %vm6948 = vweird.f32 %v6749
  %v6949 = vadd.s32 %v6945, 3
  %v6950 = vand.u32 %v6949, 3
  %vm6951 = vcmp.lt.s32.totalorder %v6950, 2
  %vm6952 = vcmp.eq.s32.totalorder %v6950, 0
  %v6953 = vxor.u32 %v6947, 2147483648
  %v6954 = vsel %vm6952, %v6946, %v6953
  %vm6955 = vcmp.eq.s32.totalorder %v6950, 2
  %v6956 = vxor.u32 %v6946, 2147483648
  %v6957 = vsel %vm6955, %v6956, %v6947
  %v6958 = vsel %vm6951, %v6954, %v6957
  %v6959 = vsel %vm6948, nan, %v6958
  %v6960 = vand.u32 2147483647, %v6750
  %vm6961 = vcmp.le.f32.partialorder %v6960, 0.7853982
  %vm6962 = vcmp.lt.s32.totalorder %v6750, 0
  %v6963 = vand.u32 %v6750, 2139095040
  %v6964 = vshrl.u32 %v6963, 23
  %v6965 = vsub.s32 %v6964, 127
  %v6966 = vand.u32 2147483647, %v6750
  %v6967 = vand.u32 %v6966, 8388607
  %v6968 = vor.u32 %v6967, 8388608
  %v6969 = vsub.s32 0, %v6968
  %v6970 = vadd.s32 %v6965, 1
  %vm6971 = vcmp.gt.s32.totalorder %v6970, 0
  %v6972 = vsel %vm6971, %v6970, 0
  %v6973 = vshrl.u32 %v6972, 5
  %v6974 = vand.u32 %v6972, 31
  %v6975 = vsub.s32 32, %v6974
  %v6976 = vshrl.u32 683565275, %v6975
  %v6977 = vshll.u32 683565275, %v6974
  %v6978 = vshrl.u32 2475754826, %v6975
  %v6979 = vor.u32 %v6977, %v6978
  %v6980 = vshll.u32 2475754826, %v6974
  %v6981 = vshrl.u32 2131351028, %v6975
  %v6982 = vor.u32 %v6980, %v6981
  %v6983 = vshll.u32 2131351028, %v6974
  %v6984 = vshrl.u32 2102212464, %v6975
  %v6985 = vor.u32 %v6983, %v6984
  %v6986 = vshll.u32 2102212464, %v6974
  %v6987 = vshrl.u32 920167782, %v6975
  %v6988 = vor.u32 %v6986, %v6987
  %v6989 = vshll.u32 920167782, %v6974
  %v6990 = vshrl.u32 1326507024, %v6975
  %v6991 = vor.u32 %v6989, %v6990
  %vm6992 = vcmp.lt.s32.totalorder %v6973, 1
  %vm6993 = vcmp.lt.s32.totalorder %v6973, 2
  %vm6994 = vcmp.lt.s32.totalorder %v6973, 3
  %vm6995 = vcmp.lt.s32.totalorder %v6973, 4
  %v6996 = vsel %vm6992, %v6976, %v6979
  %v6997 = vsel %vm6995, %v6985, 2102212464
  %v6998 = vsel %vm6994, %v6982, %v6997
  %v6999 = vsel %vm6993, %v6996, %v6998
  %v7000 = vsel %vm6992, %v6979, %v6982
  %v7001 = vsel %vm6995, %v6988, 920167782
  %v7002 = vsel %vm6994, %v6985, %v7001
  %v7003 = vsel %vm6993, %v7000, %v7002
  %v7004 = vsel %vm6992, %v6982, %v6985
  %v7005 = vsel %vm6995, %v6991, 1326507024
  %v7006 = vsel %vm6994, %v6988, %v7005
  %v7007 = vsel %vm6993, %v7004, %v7006
  %v7008 = vshll.u32 %v6968, 8
  %v7009 = vmul.u32.u64.compose %v7008, %v7007
  %v7010 = vextract.low.u32 %v7009
  %v7011 = vextract.high.u32 %v7009
  %v7012 = vmul.u32.u64.compose %v7008, %v7003
  %v7013 = vextract.low.u32 %v7012
  %v7014 = vextract.high.u32 %v7012
  %v7015 = vmul.u32 %v7008, %v6999
  %v7016 = vadd.s32 %v7011, %v7013
  %vm7017 = vc.u32 %v7011, %v7013
  %v7018 = vadd.s32 %v7014, 1
  %v7019 = vsel %vm7017, %v7018, %v7014
  %v7020 = vadd.s32 %v7015, %v7019
  %v7021 = vadd.s32 %v7020, 536870912
  %v7022 = vshrl.u32 %v7021, 30
  %v7023 = vshll.u32 %v7022, 30
  %v7024 = vsub.s32 %v7020, %v7023
  %vm7025 = vcmp.lt.s32.totalorder %v7024, 0
  %v7026 = vsub.s32 0, %v7024
  %v7027 = vsel %vm7025, %v7026, %v7024
  %v7028 = vclz %v7027
  %v7029 = vsub.s32 %v7028, 2
  %vm7030 = vcmp.gt.s32.totalorder 0, %v7029
  %v7031 = vsel %vm7030, 0, %v7029
  %v7032 = vsub.s32 32, %v7031
  %v7033 = vshll.u32 %v7024, %v7031
  %v7034 = vshrl.u32 %v7016, %v7032
  %v7035 = vor.u32 %v7033, %v7034
  %v7036 = vsub.s32 4294967266, %v7031
  %v7037 = vadd.s32 %v7036, 127
  %v7038 = vshll.u32 %v7037, 23
  %v7039 = vor.u32 4788187, %v7038
  %v7040 = vand.u32 2147483647, %v7039
  %v7042 = vcvt.s32.f32 %v7035
  %v7043 = vmul.f32 %v7042, %v7040
  %v7044 = vxor.u32 %v7043, 2147483648
  %v7045 = vsel %vm6962, %v7044, %v7043
  %v7046 = vsub.s32 4, %v7022
  %v7047 = vsel %vm6962, %v7046, %v7022
  %v7048 = vsel %vm6961, %v6750, %v7045
  %v7049 = vsel %vm6961, 0, %v7047
  %v7050 = vcosq.f32.pop %v7048
  %v7051 = vsinq.f32.pop %v7048
  %vm7052 = vweird.f32 %v6750
  %v7053 = vadd.s32 %v7049, 3
  %v7054 = vand.u32 %v7053, 3
  %vm7055 = vcmp.lt.s32.totalorder %v7054, 2
  %vm7056 = vcmp.eq.s32.totalorder %v7054, 0
  %v7057 = vxor.u32 %v7051, 2147483648
  %v7058 = vsel %vm7056, %v7050, %v7057
  %vm7059 = vcmp.eq.s32.totalorder %v7054, 2
  %v7060 = vxor.u32 %v7050, 2147483648
  %v7061 = vsel %vm7059, %v7060, %v7051
  %v7062 = vsel %vm7055, %v7058, %v7061
  %v7063 = vsel %vm7052, nan, %v7062
  %v7064 = vand.u32 2147483647, %v6751
  %vm7065 = vcmp.le.f32.partialorder %v7064, 0.7853982
  %vm7066 = vcmp.lt.s32.totalorder %v6751, 0
  %v7067 = vand.u32 %v6751, 2139095040
  %v7068 = vshrl.u32 %v7067, 23
  %v7069 = vsub.s32 %v7068, 127
  %v7070 = vand.u32 2147483647, %v6751
  %v7071 = vand.u32 %v7070, 8388607
  %v7072 = vor.u32 %v7071, 8388608
  %v7073 = vsub.s32 0, %v7072
  %v7074 = vadd.s32 %v7069, 1
  %vm7075 = vcmp.gt.s32.totalorder %v7074, 0
  %v7076 = vsel %vm7075, %v7074, 0
  %v7077 = vshrl.u32 %v7076, 5
  %v7078 = vand.u32 %v7076, 31
  %v7079 = vsub.s32 32, %v7078
  %v7080 = vshrl.u32 683565275, %v7079
  %v7081 = vshll.u32 683565275, %v7078
  %v7082 = vshrl.u32 2475754826, %v7079
  %v7083 = vor.u32 %v7081, %v7082
  %v7084 = vshll.u32 2475754826, %v7078
  %v7085 = vshrl.u32 2131351028, %v7079
  %v7086 = vor.u32 %v7084, %v7085
  %v7087 = vshll.u32 2131351028, %v7078
  %v7088 = vshrl.u32 2102212464, %v7079
  %v7089 = vor.u32 %v7087, %v7088
  %v7090 = vshll.u32 2102212464, %v7078
  %v7091 = vshrl.u32 920167782, %v7079
  %v7092 = vor.u32 %v7090, %v7091
  %v7093 = vshll.u32 920167782, %v7078
  %v7094 = vshrl.u32 1326507024, %v7079
  %v7095 = vor.u32 %v7093, %v7094
  %vm7096 = vcmp.lt.s32.totalorder %v7077, 1
  %vm7097 = vcmp.lt.s32.totalorder %v7077, 2
  %vm7098 = vcmp.lt.s32.totalorder %v7077, 3
  %vm7099 = vcmp.lt.s32.totalorder %v7077, 4
  %v7100 = vsel %vm7096, %v7080, %v7083
  %v7101 = vsel %vm7099, %v7089, 2102212464
  %v7102 = vsel %vm7098, %v7086, %v7101
  %v7103 = vsel %vm7097, %v7100, %v7102
  %v7104 = vsel %vm7096, %v7083, %v7086
  %v7105 = vsel %vm7099, %v7092, 920167782
  %v7106 = vsel %vm7098, %v7089, %v7105
  %v7107 = vsel %vm7097, %v7104, %v7106
  %v7108 = vsel %vm7096, %v7086, %v7089
  %v7109 = vsel %vm7099, %v7095, 1326507024
  %v7110 = vsel %vm7098, %v7092, %v7109
  %v7111 = vsel %vm7097, %v7108, %v7110
  %v7112 = vshll.u32 %v7072, 8
  %v7113 = vmul.u32.u64.compose %v7112, %v7111
  %v7114 = vextract.low.u32 %v7113
  %v7115 = vextract.high.u32 %v7113
  %v7116 = vmul.u32.u64.compose %v7112, %v7107
  %v7117 = vextract.low.u32 %v7116
  %v7118 = vextract.high.u32 %v7116
  %v7119 = vmul.u32 %v7112, %v7103
  %v7120 = vadd.s32 %v7115, %v7117
  %vm7121 = vc.u32 %v7115, %v7117
  %v7122 = vadd.s32 %v7118, 1
  %v7123 = vsel %vm7121, %v7122, %v7118
  %v7124 = vadd.s32 %v7119, %v7123
  %v7125 = vadd.s32 %v7124, 536870912
  %v7126 = vshrl.u32 %v7125, 30
  %v7127 = vshll.u32 %v7126, 30
  %v7128 = vsub.s32 %v7124, %v7127
  %vm7129 = vcmp.lt.s32.totalorder %v7128, 0
  %v7130 = vsub.s32 0, %v7128
  %v7131 = vsel %vm7129, %v7130, %v7128
  %v7132 = vclz %v7131
  %v7133 = vsub.s32 %v7132, 2
  %vm7134 = vcmp.gt.s32.totalorder 0, %v7133
  %v7135 = vsel %vm7134, 0, %v7133
  %v7136 = vsub.s32 32, %v7135
  %v7137 = vshll.u32 %v7128, %v7135
  %v7138 = vshrl.u32 %v7120, %v7136
  %v7139 = vor.u32 %v7137, %v7138
  %v7140 = vsub.s32 4294967266, %v7135
  %v7141 = vadd.s32 %v7140, 127
  %v7142 = vshll.u32 %v7141, 23
  %v7143 = vor.u32 4788187, %v7142
  %v7144 = vand.u32 2147483647, %v7143
  %v7146 = vcvt.s32.f32 %v7139
  %v7147 = vmul.f32 %v7146, %v7144
  %v7148 = vxor.u32 %v7147, 2147483648
  %v7149 = vsel %vm7066, %v7148, %v7147
  %v7150 = vsub.s32 4, %v7126
  %v7151 = vsel %vm7066, %v7150, %v7126
  %v7152 = vsel %vm7065, %v6751, %v7149
  %v7153 = vsel %vm7065, 0, %v7151
  %v7154 = vcosq.f32.pop %v7152
  %v7155 = vsinq.f32.pop %v7152
  %vm7156 = vweird.f32 %v6751
  %v7157 = vadd.s32 %v7153, 3
  %v7158 = vand.u32 %v7157, 3
  %vm7159 = vcmp.lt.s32.totalorder %v7158, 2
  %vm7160 = vcmp.eq.s32.totalorder %v7158, 0
  %v7161 = vxor.u32 %v7155, 2147483648
  %v7162 = vsel %vm7160, %v7154, %v7161
  %vm7163 = vcmp.eq.s32.totalorder %v7158, 2
  %v7164 = vxor.u32 %v7154, 2147483648
  %v7165 = vsel %vm7163, %v7164, %v7155
  %v7166 = vsel %vm7159, %v7162, %v7165
  %v7167 = vsel %vm7156, nan, %v7166
  %s7168 = scalar_lea.vmem %s1, 544
  %7169 = vst [vmem:[%s7168] sm:$0xff] %v6855
  %7170 = vst [vmem:[%s7168 + $0x8] sm:$0xff] %v6959
  %7171 = vst [vmem:[%s7168 + $0x10] sm:$0xff] %v7063
  %7172 = vst [vmem:[%s7168 + $0x18] sm:$0xff] %v7167
  %v7173 = vand.u32 2147483647, %v6748
  %vm7174 = vcmp.le.f32.partialorder %v7173, 0.7853982
  %vm7175 = vcmp.lt.s32.totalorder %v6748, 0
  %v7176 = vand.u32 %v6748, 2139095040
  %v7177 = vshrl.u32 %v7176, 23
  %v7178 = vsub.s32 %v7177, 127
  %v7179 = vand.u32 2147483647, %v6748
  %v7180 = vand.u32 %v7179, 8388607
  %v7181 = vor.u32 %v7180, 8388608
  %v7182 = vsub.s32 0, %v7181
  %v7183 = vadd.s32 %v7178, 1
  %vm7184 = vcmp.gt.s32.totalorder %v7183, 0
  %v7185 = vsel %vm7184, %v7183, 0
  %v7186 = vshrl.u32 %v7185, 5
  %v7187 = vand.u32 %v7185, 31
  %v7188 = vsub.s32 32, %v7187
  %v7189 = vshrl.u32 683565275, %v7188
  %v7190 = vshll.u32 683565275, %v7187
  %v7191 = vshrl.u32 2475754826, %v7188
  %v7192 = vor.u32 %v7190, %v7191
  %v7193 = vshll.u32 2475754826, %v7187
  %v7194 = vshrl.u32 2131351028, %v7188
  %v7195 = vor.u32 %v7193, %v7194
  %v7196 = vshll.u32 2131351028, %v7187
  %v7197 = vshrl.u32 2102212464, %v7188
  %v7198 = vor.u32 %v7196, %v7197
  %v7199 = vshll.u32 2102212464, %v7187
  %v7200 = vshrl.u32 920167782, %v7188
  %v7201 = vor.u32 %v7199, %v7200
  %v7202 = vshll.u32 920167782, %v7187
  %v7203 = vshrl.u32 1326507024, %v7188
  %v7204 = vor.u32 %v7202, %v7203
  %vm7205 = vcmp.lt.s32.totalorder %v7186, 1
  %vm7206 = vcmp.lt.s32.totalorder %v7186, 2
  %vm7207 = vcmp.lt.s32.totalorder %v7186, 3
  %vm7208 = vcmp.lt.s32.totalorder %v7186, 4
  %v7209 = vsel %vm7205, %v7189, %v7192
  %v7210 = vsel %vm7208, %v7198, 2102212464
  %v7211 = vsel %vm7207, %v7195, %v7210
  %v7212 = vsel %vm7206, %v7209, %v7211
  %v7213 = vsel %vm7205, %v7192, %v7195
  %v7214 = vsel %vm7208, %v7201, 920167782
  %v7215 = vsel %vm7207, %v7198, %v7214
  %v7216 = vsel %vm7206, %v7213, %v7215
  %v7217 = vsel %vm7205, %v7195, %v7198
  %v7218 = vsel %vm7208, %v7204, 1326507024
  %v7219 = vsel %vm7207, %v7201, %v7218
  %v7220 = vsel %vm7206, %v7217, %v7219
  %v7221 = vshll.u32 %v7181, 8
  %v7222 = vmul.u32.u64.compose %v7221, %v7220
  %v7223 = vextract.low.u32 %v7222
  %v7224 = vextract.high.u32 %v7222
  %v7225 = vmul.u32.u64.compose %v7221, %v7216
  %v7226 = vextract.low.u32 %v7225
  %v7227 = vextract.high.u32 %v7225
  %v7228 = vmul.u32 %v7221, %v7212
  %v7229 = vadd.s32 %v7224, %v7226
  %vm7230 = vc.u32 %v7224, %v7226
  %v7231 = vadd.s32 %v7227, 1
  %v7232 = vsel %vm7230, %v7231, %v7227
  %v7233 = vadd.s32 %v7228, %v7232
  %v7234 = vadd.s32 %v7233, 536870912
  %v7235 = vshrl.u32 %v7234, 30
  %v7236 = vshll.u32 %v7235, 30
  %v7237 = vsub.s32 %v7233, %v7236
  %vm7238 = vcmp.lt.s32.totalorder %v7237, 0
  %v7239 = vsub.s32 0, %v7237
  %v7240 = vsel %vm7238, %v7239, %v7237
  %v7241 = vclz %v7240
  %v7242 = vsub.s32 %v7241, 2
  %vm7243 = vcmp.gt.s32.totalorder 0, %v7242
  %v7244 = vsel %vm7243, 0, %v7242
  %v7245 = vsub.s32 32, %v7244
  %v7246 = vshll.u32 %v7237, %v7244
  %v7247 = vshrl.u32 %v7229, %v7245
  %v7248 = vor.u32 %v7246, %v7247
  %v7249 = vsub.s32 4294967266, %v7244
  %v7250 = vadd.s32 %v7249, 127
  %v7251 = vshll.u32 %v7250, 23
  %v7252 = vor.u32 4788187, %v7251
  %v7253 = vand.u32 2147483647, %v7252
  %v7255 = vcvt.s32.f32 %v7248
  %v7256 = vmul.f32 %v7255, %v7253
  %v7257 = vxor.u32 %v7256, 2147483648
  %v7258 = vsel %vm7175, %v7257, %v7256
  %v7259 = vsub.s32 4, %v7235
  %v7260 = vsel %vm7175, %v7259, %v7235
  %v7261 = vsel %vm7174, %v6748, %v7258
  %v7262 = vsel %vm7174, 0, %v7260
  %v7263 = vcosq.f32.pop %v7261
  %v7264 = vsinq.f32.pop %v7261
  %vm7265 = vweird.f32 %v6748
  %v7266 = vand.u32 %v7262, 3
  %vm7267 = vcmp.lt.s32.totalorder %v7266, 2
  %vm7268 = vcmp.eq.s32.totalorder %v7266, 0
  %v7269 = vxor.u32 %v7264, 2147483648
  %v7270 = vsel %vm7268, %v7263, %v7269
  %vm7271 = vcmp.eq.s32.totalorder %v7266, 2
  %v7272 = vxor.u32 %v7263, 2147483648
  %v7273 = vsel %vm7271, %v7272, %v7264
  %v7274 = vsel %vm7267, %v7270, %v7273
  %v7275 = vsel %vm7265, nan, %v7274
  %v7276 = vand.u32 2147483647, %v6749
  %vm7277 = vcmp.le.f32.partialorder %v7276, 0.7853982
  %vm7278 = vcmp.lt.s32.totalorder %v6749, 0
  %v7279 = vand.u32 %v6749, 2139095040
  %v7280 = vshrl.u32 %v7279, 23
  %v7281 = vsub.s32 %v7280, 127
  %v7282 = vand.u32 2147483647, %v6749
  %v7283 = vand.u32 %v7282, 8388607
  %v7284 = vor.u32 %v7283, 8388608
  %v7285 = vsub.s32 0, %v7284
  %v7286 = vadd.s32 %v7281, 1
  %vm7287 = vcmp.gt.s32.totalorder %v7286, 0
  %v7288 = vsel %vm7287, %v7286, 0
  %v7289 = vshrl.u32 %v7288, 5
  %v7290 = vand.u32 %v7288, 31
  %v7291 = vsub.s32 32, %v7290
  %v7292 = vshrl.u32 683565275, %v7291
  %v7293 = vshll.u32 683565275, %v7290
  %v7294 = vshrl.u32 2475754826, %v7291
  %v7295 = vor.u32 %v7293, %v7294
  %v7296 = vshll.u32 2475754826, %v7290
  %v7297 = vshrl.u32 2131351028, %v7291
  %v7298 = vor.u32 %v7296, %v7297
  %v7299 = vshll.u32 2131351028, %v7290
  %v7300 = vshrl.u32 2102212464, %v7291
  %v7301 = vor.u32 %v7299, %v7300
  %v7302 = vshll.u32 2102212464, %v7290
  %v7303 = vshrl.u32 920167782, %v7291
  %v7304 = vor.u32 %v7302, %v7303
  %v7305 = vshll.u32 920167782, %v7290
  %v7306 = vshrl.u32 1326507024, %v7291
  %v7307 = vor.u32 %v7305, %v7306
  %vm7308 = vcmp.lt.s32.totalorder %v7289, 1
  %vm7309 = vcmp.lt.s32.totalorder %v7289, 2
  %vm7310 = vcmp.lt.s32.totalorder %v7289, 3
  %vm7311 = vcmp.lt.s32.totalorder %v7289, 4
  %v7312 = vsel %vm7308, %v7292, %v7295
  %v7313 = vsel %vm7311, %v7301, 2102212464
  %v7314 = vsel %vm7310, %v7298, %v7313
  %v7315 = vsel %vm7309, %v7312, %v7314
  %v7316 = vsel %vm7308, %v7295, %v7298
  %v7317 = vsel %vm7311, %v7304, 920167782
  %v7318 = vsel %vm7310, %v7301, %v7317
  %v7319 = vsel %vm7309, %v7316, %v7318
  %v7320 = vsel %vm7308, %v7298, %v7301
  %v7321 = vsel %vm7311, %v7307, 1326507024
  %v7322 = vsel %vm7310, %v7304, %v7321
  %v7323 = vsel %vm7309, %v7320, %v7322
  %v7324 = vshll.u32 %v7284, 8
  %v7325 = vmul.u32.u64.compose %v7324, %v7323
  %v7326 = vextract.low.u32 %v7325
  %v7327 = vextract.high.u32 %v7325
  %v7328 = vmul.u32.u64.compose %v7324, %v7319
  %v7329 = vextract.low.u32 %v7328
  %v7330 = vextract.high.u32 %v7328
  %v7331 = vmul.u32 %v7324, %v7315
  %v7332 = vadd.s32 %v7327, %v7329
  %vm7333 = vc.u32 %v7327, %v7329
  %v7334 = vadd.s32 %v7330, 1
  %v7335 = vsel %vm7333, %v7334, %v7330
  %v7336 = vadd.s32 %v7331, %v7335
  %v7337 = vadd.s32 %v7336, 536870912
  %v7338 = vshrl.u32 %v7337, 30
  %v7339 = vshll.u32 %v7338, 30
  %v7340 = vsub.s32 %v7336, %v7339
  %vm7341 = vcmp.lt.s32.totalorder %v7340, 0
  %v7342 = vsub.s32 0, %v7340
  %v7343 = vsel %vm7341, %v7342, %v7340
  %v7344 = vclz %v7343
  %v7345 = vsub.s32 %v7344, 2
  %vm7346 = vcmp.gt.s32.totalorder 0, %v7345
  %v7347 = vsel %vm7346, 0, %v7345
  %v7348 = vsub.s32 32, %v7347
  %v7349 = vshll.u32 %v7340, %v7347
  %v7350 = vshrl.u32 %v7332, %v7348
  %v7351 = vor.u32 %v7349, %v7350
  %v7352 = vsub.s32 4294967266, %v7347
  %v7353 = vadd.s32 %v7352, 127
  %v7354 = vshll.u32 %v7353, 23
  %v7355 = vor.u32 4788187, %v7354
  %v7356 = vand.u32 2147483647, %v7355
  %v7358 = vcvt.s32.f32 %v7351
  %v7359 = vmul.f32 %v7358, %v7356
  %v7360 = vxor.u32 %v7359, 2147483648
  %v7361 = vsel %vm7278, %v7360, %v7359
  %v7362 = vsub.s32 4, %v7338
  %v7363 = vsel %vm7278, %v7362, %v7338
  %v7364 = vsel %vm7277, %v6749, %v7361
  %v7365 = vsel %vm7277, 0, %v7363
  %v7366 = vcosq.f32.pop %v7364
  %v7367 = vsinq.f32.pop %v7364
  %vm7368 = vweird.f32 %v6749
  %v7369 = vand.u32 %v7365, 3
  %vm7370 = vcmp.lt.s32.totalorder %v7369, 2
  %vm7371 = vcmp.eq.s32.totalorder %v7369, 0
  %v7372 = vxor.u32 %v7367, 2147483648
  %v7373 = vsel %vm7371, %v7366, %v7372
  %vm7374 = vcmp.eq.s32.totalorder %v7369, 2
  %v7375 = vxor.u32 %v7366, 2147483648
  %v7376 = vsel %vm7374, %v7375, %v7367
  %v7377 = vsel %vm7370, %v7373, %v7376
  %v7378 = vsel %vm7368, nan, %v7377
  %v7379 = vand.u32 2147483647, %v6750
  %vm7380 = vcmp.le.f32.partialorder %v7379, 0.7853982
  %vm7381 = vcmp.lt.s32.totalorder %v6750, 0
  %v7382 = vand.u32 %v6750, 2139095040
  %v7383 = vshrl.u32 %v7382, 23
  %v7384 = vsub.s32 %v7383, 127
  %v7385 = vand.u32 2147483647, %v6750
  %v7386 = vand.u32 %v7385, 8388607
  %v7387 = vor.u32 %v7386, 8388608
  %v7388 = vsub.s32 0, %v7387
  %v7389 = vadd.s32 %v7384, 1
  %vm7390 = vcmp.gt.s32.totalorder %v7389, 0
  %v7391 = vsel %vm7390, %v7389, 0
  %v7392 = vshrl.u32 %v7391, 5
  %v7393 = vand.u32 %v7391, 31
  %v7394 = vsub.s32 32, %v7393
  %v7395 = vshrl.u32 683565275, %v7394
  %v7396 = vshll.u32 683565275, %v7393
  %v7397 = vshrl.u32 2475754826, %v7394
  %v7398 = vor.u32 %v7396, %v7397
  %v7399 = vshll.u32 2475754826, %v7393
  %v7400 = vshrl.u32 2131351028, %v7394
  %v7401 = vor.u32 %v7399, %v7400
  %v7402 = vshll.u32 2131351028, %v7393
  %v7403 = vshrl.u32 2102212464, %v7394
  %v7404 = vor.u32 %v7402, %v7403
  %v7405 = vshll.u32 2102212464, %v7393
  %v7406 = vshrl.u32 920167782, %v7394
  %v7407 = vor.u32 %v7405, %v7406
  %v7408 = vshll.u32 920167782, %v7393
  %v7409 = vshrl.u32 1326507024, %v7394
  %v7410 = vor.u32 %v7408, %v7409
  %vm7411 = vcmp.lt.s32.totalorder %v7392, 1
  %vm7412 = vcmp.lt.s32.totalorder %v7392, 2
  %vm7413 = vcmp.lt.s32.totalorder %v7392, 3
  %vm7414 = vcmp.lt.s32.totalorder %v7392, 4
  %v7415 = vsel %vm7411, %v7395, %v7398
  %v7416 = vsel %vm7414, %v7404, 2102212464
  %v7417 = vsel %vm7413, %v7401, %v7416
  %v7418 = vsel %vm7412, %v7415, %v7417
  %v7419 = vsel %vm7411, %v7398, %v7401
  %v7420 = vsel %vm7414, %v7407, 920167782
  %v7421 = vsel %vm7413, %v7404, %v7420
  %v7422 = vsel %vm7412, %v7419, %v7421
  %v7423 = vsel %vm7411, %v7401, %v7404
  %v7424 = vsel %vm7414, %v7410, 1326507024
  %v7425 = vsel %vm7413, %v7407, %v7424
  %v7426 = vsel %vm7412, %v7423, %v7425
  %v7427 = vshll.u32 %v7387, 8
  %v7428 = vmul.u32.u64.compose %v7427, %v7426
  %v7429 = vextract.low.u32 %v7428
  %v7430 = vextract.high.u32 %v7428
  %v7431 = vmul.u32.u64.compose %v7427, %v7422
  %v7432 = vextract.low.u32 %v7431
  %v7433 = vextract.high.u32 %v7431
  %v7434 = vmul.u32 %v7427, %v7418
  %v7435 = vadd.s32 %v7430, %v7432
  %vm7436 = vc.u32 %v7430, %v7432
  %v7437 = vadd.s32 %v7433, 1
  %v7438 = vsel %vm7436, %v7437, %v7433
  %v7439 = vadd.s32 %v7434, %v7438
  %v7440 = vadd.s32 %v7439, 536870912
  %v7441 = vshrl.u32 %v7440, 30
  %v7442 = vshll.u32 %v7441, 30
  %v7443 = vsub.s32 %v7439, %v7442
  %vm7444 = vcmp.lt.s32.totalorder %v7443, 0
  %v7445 = vsub.s32 0, %v7443
  %v7446 = vsel %vm7444, %v7445, %v7443
  %v7447 = vclz %v7446
  %v7448 = vsub.s32 %v7447, 2
  %vm7449 = vcmp.gt.s32.totalorder 0, %v7448
  %v7450 = vsel %vm7449, 0, %v7448
  %v7451 = vsub.s32 32, %v7450
  %v7452 = vshll.u32 %v7443, %v7450
  %v7453 = vshrl.u32 %v7435, %v7451
  %v7454 = vor.u32 %v7452, %v7453
  %v7455 = vsub.s32 4294967266, %v7450
  %v7456 = vadd.s32 %v7455, 127
  %v7457 = vshll.u32 %v7456, 23
  %v7458 = vor.u32 4788187, %v7457
  %v7459 = vand.u32 2147483647, %v7458
  %v7461 = vcvt.s32.f32 %v7454
  %v7462 = vmul.f32 %v7461, %v7459
  %v7463 = vxor.u32 %v7462, 2147483648
  %v7464 = vsel %vm7381, %v7463, %v7462
  %v7465 = vsub.s32 4, %v7441
  %v7466 = vsel %vm7381, %v7465, %v7441
  %v7467 = vsel %vm7380, %v6750, %v7464
  %v7468 = vsel %vm7380, 0, %v7466
  %v7469 = vcosq.f32.pop %v7467
  %v7470 = vsinq.f32.pop %v7467
  %vm7471 = vweird.f32 %v6750
  %v7472 = vand.u32 %v7468, 3
  %vm7473 = vcmp.lt.s32.totalorder %v7472, 2
  %vm7474 = vcmp.eq.s32.totalorder %v7472, 0
  %v7475 = vxor.u32 %v7470, 2147483648
  %v7476 = vsel %vm7474, %v7469, %v7475
  %vm7477 = vcmp.eq.s32.totalorder %v7472, 2
  %v7478 = vxor.u32 %v7469, 2147483648
  %v7479 = vsel %vm7477, %v7478, %v7470
  %v7480 = vsel %vm7473, %v7476, %v7479
  %v7481 = vsel %vm7471, nan, %v7480
  %v7482 = vand.u32 2147483647, %v6751
  %vm7483 = vcmp.le.f32.partialorder %v7482, 0.7853982
  %vm7484 = vcmp.lt.s32.totalorder %v6751, 0
  %v7485 = vand.u32 %v6751, 2139095040
  %v7486 = vshrl.u32 %v7485, 23
  %v7487 = vsub.s32 %v7486, 127
  %v7488 = vand.u32 2147483647, %v6751
  %v7489 = vand.u32 %v7488, 8388607
  %v7490 = vor.u32 %v7489, 8388608
  %v7491 = vsub.s32 0, %v7490
  %v7492 = vadd.s32 %v7487, 1
  %vm7493 = vcmp.gt.s32.totalorder %v7492, 0
  %v7494 = vsel %vm7493, %v7492, 0
  %v7495 = vshrl.u32 %v7494, 5
  %v7496 = vand.u32 %v7494, 31
  %v7497 = vsub.s32 32, %v7496
  %v7498 = vshrl.u32 683565275, %v7497
  %v7499 = vshll.u32 683565275, %v7496
  %v7500 = vshrl.u32 2475754826, %v7497
  %v7501 = vor.u32 %v7499, %v7500
  %v7502 = vshll.u32 2475754826, %v7496
  %v7503 = vshrl.u32 2131351028, %v7497
  %v7504 = vor.u32 %v7502, %v7503
  %v7505 = vshll.u32 2131351028, %v7496
  %v7506 = vshrl.u32 2102212464, %v7497
  %v7507 = vor.u32 %v7505, %v7506
  %v7508 = vshll.u32 2102212464, %v7496
  %v7509 = vshrl.u32 920167782, %v7497
  %v7510 = vor.u32 %v7508, %v7509
  %v7511 = vshll.u32 920167782, %v7496
  %v7512 = vshrl.u32 1326507024, %v7497
  %v7513 = vor.u32 %v7511, %v7512
  %vm7514 = vcmp.lt.s32.totalorder %v7495, 1
  %vm7515 = vcmp.lt.s32.totalorder %v7495, 2
  %vm7516 = vcmp.lt.s32.totalorder %v7495, 3
  %vm7517 = vcmp.lt.s32.totalorder %v7495, 4
  %v7518 = vsel %vm7514, %v7498, %v7501
  %v7519 = vsel %vm7517, %v7507, 2102212464
  %v7520 = vsel %vm7516, %v7504, %v7519
  %v7521 = vsel %vm7515, %v7518, %v7520
  %v7522 = vsel %vm7514, %v7501, %v7504
  %v7523 = vsel %vm7517, %v7510, 920167782
  %v7524 = vsel %vm7516, %v7507, %v7523
  %v7525 = vsel %vm7515, %v7522, %v7524
  %v7526 = vsel %vm7514, %v7504, %v7507
  %v7527 = vsel %vm7517, %v7513, 1326507024
  %v7528 = vsel %vm7516, %v7510, %v7527
  %v7529 = vsel %vm7515, %v7526, %v7528
  %v7530 = vshll.u32 %v7490, 8
  %v7531 = vmul.u32.u64.compose %v7530, %v7529
  %v7532 = vextract.low.u32 %v7531
  %v7533 = vextract.high.u32 %v7531
  %v7534 = vmul.u32.u64.compose %v7530, %v7525
  %v7535 = vextract.low.u32 %v7534
  %v7536 = vextract.high.u32 %v7534
  %v7537 = vmul.u32 %v7530, %v7521
  %v7538 = vadd.s32 %v7533, %v7535
  %vm7539 = vc.u32 %v7533, %v7535
  %v7540 = vadd.s32 %v7536, 1
  %v7541 = vsel %vm7539, %v7540, %v7536
  %v7542 = vadd.s32 %v7537, %v7541
  %v7543 = vadd.s32 %v7542, 536870912
  %v7544 = vshrl.u32 %v7543, 30
  %v7545 = vshll.u32 %v7544, 30
  %v7546 = vsub.s32 %v7542, %v7545
  %vm7547 = vcmp.lt.s32.totalorder %v7546, 0
  %v7548 = vsub.s32 0, %v7546
  %v7549 = vsel %vm7547, %v7548, %v7546
  %v7550 = vclz %v7549
  %v7551 = vsub.s32 %v7550, 2
  %vm7552 = vcmp.gt.s32.totalorder 0, %v7551
  %v7553 = vsel %vm7552, 0, %v7551
  %v7554 = vsub.s32 32, %v7553
  %v7555 = vshll.u32 %v7546, %v7553
  %v7556 = vshrl.u32 %v7538, %v7554
  %v7557 = vor.u32 %v7555, %v7556
  %v7558 = vsub.s32 4294967266, %v7553
  %v7559 = vadd.s32 %v7558, 127
  %v7560 = vshll.u32 %v7559, 23
  %v7561 = vor.u32 4788187, %v7560
  %v7562 = vand.u32 2147483647, %v7561
  %v7564 = vcvt.s32.f32 %v7557
  %v7565 = vmul.f32 %v7564, %v7562
  %v7566 = vxor.u32 %v7565, 2147483648
  %v7567 = vsel %vm7484, %v7566, %v7565
  %v7568 = vsub.s32 4, %v7544
  %v7569 = vsel %vm7484, %v7568, %v7544
  %v7570 = vsel %vm7483, %v6751, %v7567
  %v7571 = vsel %vm7483, 0, %v7569
  %v7572 = vcosq.f32.pop %v7570
  %v7573 = vsinq.f32.pop %v7570
  %vm7574 = vweird.f32 %v6751
  %v7575 = vand.u32 %v7571, 3
  %vm7576 = vcmp.lt.s32.totalorder %v7575, 2
  %vm7577 = vcmp.eq.s32.totalorder %v7575, 0
  %v7578 = vxor.u32 %v7573, 2147483648
  %v7579 = vsel %vm7577, %v7572, %v7578
  %vm7580 = vcmp.eq.s32.totalorder %v7575, 2
  %v7581 = vxor.u32 %v7572, 2147483648
  %v7582 = vsel %vm7580, %v7581, %v7573
  %v7583 = vsel %vm7576, %v7579, %v7582
  %v7584 = vsel %vm7574, nan, %v7583
  %s7585 = scalar_lea.vmem %s1, 576
  %7586 = vst [vmem:[%s7585] sm:$0xff] %v7275
  %7587 = vst [vmem:[%s7585 + $0x8] sm:$0xff] %v7378
  %7588 = vst [vmem:[%s7585 + $0x10] sm:$0xff] %v7481
  %7589 = vst [vmem:[%s7585 + $0x18] sm:$0xff] %v7584
  %v7590 = vmul.f32 %v8, 512.0
  %v7591 = vmul.f32 %v9, 512.0
  %v7592 = vmul.f32 %v10, 512.0
  %v7593 = vmul.f32 %v11, 512.0
  %v7594 = vand.u32 2147483647, %v7590
  %vm7595 = vcmp.le.f32.partialorder %v7594, 0.7853982
  %vm7596 = vcmp.lt.s32.totalorder %v7590, 0
  %v7597 = vand.u32 %v7590, 2139095040
  %v7598 = vshrl.u32 %v7597, 23
  %v7599 = vsub.s32 %v7598, 127
  %v7600 = vand.u32 2147483647, %v7590
  %v7601 = vand.u32 %v7600, 8388607
  %v7602 = vor.u32 %v7601, 8388608
  %v7603 = vsub.s32 0, %v7602
  %v7604 = vadd.s32 %v7599, 1
  %vm7605 = vcmp.gt.s32.totalorder %v7604, 0
  %v7606 = vsel %vm7605, %v7604, 0
  %v7607 = vshrl.u32 %v7606, 5
  %v7608 = vand.u32 %v7606, 31
  %v7609 = vsub.s32 32, %v7608
  %v7610 = vshrl.u32 683565275, %v7609
  %v7611 = vshll.u32 683565275, %v7608
  %v7612 = vshrl.u32 2475754826, %v7609
  %v7613 = vor.u32 %v7611, %v7612
  %v7614 = vshll.u32 2475754826, %v7608
  %v7615 = vshrl.u32 2131351028, %v7609
  %v7616 = vor.u32 %v7614, %v7615
  %v7617 = vshll.u32 2131351028, %v7608
  %v7618 = vshrl.u32 2102212464, %v7609
  %v7619 = vor.u32 %v7617, %v7618
  %v7620 = vshll.u32 2102212464, %v7608
  %v7621 = vshrl.u32 920167782, %v7609
  %v7622 = vor.u32 %v7620, %v7621
  %v7623 = vshll.u32 920167782, %v7608
  %v7624 = vshrl.u32 1326507024, %v7609
  %v7625 = vor.u32 %v7623, %v7624
  %vm7626 = vcmp.lt.s32.totalorder %v7607, 1
  %vm7627 = vcmp.lt.s32.totalorder %v7607, 2
  %vm7628 = vcmp.lt.s32.totalorder %v7607, 3
  %vm7629 = vcmp.lt.s32.totalorder %v7607, 4
  %v7630 = vsel %vm7626, %v7610, %v7613
  %v7631 = vsel %vm7629, %v7619, 2102212464
  %v7632 = vsel %vm7628, %v7616, %v7631
  %v7633 = vsel %vm7627, %v7630, %v7632
  %v7634 = vsel %vm7626, %v7613, %v7616
  %v7635 = vsel %vm7629, %v7622, 920167782
  %v7636 = vsel %vm7628, %v7619, %v7635
  %v7637 = vsel %vm7627, %v7634, %v7636
  %v7638 = vsel %vm7626, %v7616, %v7619
  %v7639 = vsel %vm7629, %v7625, 1326507024
  %v7640 = vsel %vm7628, %v7622, %v7639
  %v7641 = vsel %vm7627, %v7638, %v7640
  %v7642 = vshll.u32 %v7602, 8
  %v7643 = vmul.u32.u64.compose %v7642, %v7641
  %v7644 = vextract.low.u32 %v7643
  %v7645 = vextract.high.u32 %v7643
  %v7646 = vmul.u32.u64.compose %v7642, %v7637
  %v7647 = vextract.low.u32 %v7646
  %v7648 = vextract.high.u32 %v7646
  %v7649 = vmul.u32 %v7642, %v7633
  %v7650 = vadd.s32 %v7645, %v7647
  %vm7651 = vc.u32 %v7645, %v7647
  %v7652 = vadd.s32 %v7648, 1
  %v7653 = vsel %vm7651, %v7652, %v7648
  %v7654 = vadd.s32 %v7649, %v7653
  %v7655 = vadd.s32 %v7654, 536870912
  %v7656 = vshrl.u32 %v7655, 30
  %v7657 = vshll.u32 %v7656, 30
  %v7658 = vsub.s32 %v7654, %v7657
  %vm7659 = vcmp.lt.s32.totalorder %v7658, 0
  %v7660 = vsub.s32 0, %v7658
  %v7661 = vsel %vm7659, %v7660, %v7658
  %v7662 = vclz %v7661
  %v7663 = vsub.s32 %v7662, 2
  %vm7664 = vcmp.gt.s32.totalorder 0, %v7663
  %v7665 = vsel %vm7664, 0, %v7663
  %v7666 = vsub.s32 32, %v7665
  %v7667 = vshll.u32 %v7658, %v7665
  %v7668 = vshrl.u32 %v7650, %v7666
  %v7669 = vor.u32 %v7667, %v7668
  %v7670 = vsub.s32 4294967266, %v7665
  %v7671 = vadd.s32 %v7670, 127
  %v7672 = vshll.u32 %v7671, 23
  %v7673 = vor.u32 4788187, %v7672
  %v7674 = vand.u32 2147483647, %v7673
  %v7676 = vcvt.s32.f32 %v7669
  %v7677 = vmul.f32 %v7676, %v7674
  %v7678 = vxor.u32 %v7677, 2147483648
  %v7679 = vsel %vm7596, %v7678, %v7677
  %v7680 = vsub.s32 4, %v7656
  %v7681 = vsel %vm7596, %v7680, %v7656
  %v7682 = vsel %vm7595, %v7590, %v7679
  %v7683 = vsel %vm7595, 0, %v7681
  %v7684 = vcosq.f32.pop %v7682
  %v7685 = vsinq.f32.pop %v7682
  %vm7686 = vweird.f32 %v7590
  %v7687 = vadd.s32 %v7683, 3
  %v7688 = vand.u32 %v7687, 3
  %vm7689 = vcmp.lt.s32.totalorder %v7688, 2
  %vm7690 = vcmp.eq.s32.totalorder %v7688, 0
  %v7691 = vxor.u32 %v7685, 2147483648
  %v7692 = vsel %vm7690, %v7684, %v7691
  %vm7693 = vcmp.eq.s32.totalorder %v7688, 2
  %v7694 = vxor.u32 %v7684, 2147483648
  %v7695 = vsel %vm7693, %v7694, %v7685
  %v7696 = vsel %vm7689, %v7692, %v7695
  %v7697 = vsel %vm7686, nan, %v7696
  %v7698 = vand.u32 2147483647, %v7591
  %vm7699 = vcmp.le.f32.partialorder %v7698, 0.7853982
  %vm7700 = vcmp.lt.s32.totalorder %v7591, 0
  %v7701 = vand.u32 %v7591, 2139095040
  %v7702 = vshrl.u32 %v7701, 23
  %v7703 = vsub.s32 %v7702, 127
  %v7704 = vand.u32 2147483647, %v7591
  %v7705 = vand.u32 %v7704, 8388607
  %v7706 = vor.u32 %v7705, 8388608
  %v7707 = vsub.s32 0, %v7706
  %v7708 = vadd.s32 %v7703, 1
  %vm7709 = vcmp.gt.s32.totalorder %v7708, 0
  %v7710 = vsel %vm7709, %v7708, 0
  %v7711 = vshrl.u32 %v7710, 5
  %v7712 = vand.u32 %v7710, 31
  %v7713 = vsub.s32 32, %v7712
  %v7714 = vshrl.u32 683565275, %v7713
  %v7715 = vshll.u32 683565275, %v7712
  %v7716 = vshrl.u32 2475754826, %v7713
  %v7717 = vor.u32 %v7715, %v7716
  %v7718 = vshll.u32 2475754826, %v7712
  %v7719 = vshrl.u32 2131351028, %v7713
  %v7720 = vor.u32 %v7718, %v7719
  %v7721 = vshll.u32 2131351028, %v7712
  %v7722 = vshrl.u32 2102212464, %v7713
  %v7723 = vor.u32 %v7721, %v7722
  %v7724 = vshll.u32 2102212464, %v7712
  %v7725 = vshrl.u32 920167782, %v7713
  %v7726 = vor.u32 %v7724, %v7725
  %v7727 = vshll.u32 920167782, %v7712
  %v7728 = vshrl.u32 1326507024, %v7713
  %v7729 = vor.u32 %v7727, %v7728
  %vm7730 = vcmp.lt.s32.totalorder %v7711, 1
  %vm7731 = vcmp.lt.s32.totalorder %v7711, 2
  %vm7732 = vcmp.lt.s32.totalorder %v7711, 3
  %vm7733 = vcmp.lt.s32.totalorder %v7711, 4
  %v7734 = vsel %vm7730, %v7714, %v7717
  %v7735 = vsel %vm7733, %v7723, 2102212464
  %v7736 = vsel %vm7732, %v7720, %v7735
  %v7737 = vsel %vm7731, %v7734, %v7736
  %v7738 = vsel %vm7730, %v7717, %v7720
  %v7739 = vsel %vm7733, %v7726, 920167782
  %v7740 = vsel %vm7732, %v7723, %v7739
  %v7741 = vsel %vm7731, %v7738, %v7740
  %v7742 = vsel %vm7730, %v7720, %v7723
  %v7743 = vsel %vm7733, %v7729, 1326507024
  %v7744 = vsel %vm7732, %v7726, %v7743
  %v7745 = vsel %vm7731, %v7742, %v7744
  %v7746 = vshll.u32 %v7706, 8
  %v7747 = vmul.u32.u64.compose %v7746, %v7745
  %v7748 = vextract.low.u32 %v7747
  %v7749 = vextract.high.u32 %v7747
  %v7750 = vmul.u32.u64.compose %v7746, %v7741
  %v7751 = vextract.low.u32 %v7750
  %v7752 = vextract.high.u32 %v7750
  %v7753 = vmul.u32 %v7746, %v7737
  %v7754 = vadd.s32 %v7749, %v7751
  %vm7755 = vc.u32 %v7749, %v7751
  %v7756 = vadd.s32 %v7752, 1
  %v7757 = vsel %vm7755, %v7756, %v7752
  %v7758 = vadd.s32 %v7753, %v7757
  %v7759 = vadd.s32 %v7758, 536870912
  %v7760 = vshrl.u32 %v7759, 30
  %v7761 = vshll.u32 %v7760, 30
  %v7762 = vsub.s32 %v7758, %v7761
  %vm7763 = vcmp.lt.s32.totalorder %v7762, 0
  %v7764 = vsub.s32 0, %v7762
  %v7765 = vsel %vm7763, %v7764, %v7762
  %v7766 = vclz %v7765
  %v7767 = vsub.s32 %v7766, 2
  %vm7768 = vcmp.gt.s32.totalorder 0, %v7767
  %v7769 = vsel %vm7768, 0, %v7767
  %v7770 = vsub.s32 32, %v7769
  %v7771 = vshll.u32 %v7762, %v7769
  %v7772 = vshrl.u32 %v7754, %v7770
  %v7773 = vor.u32 %v7771, %v7772
  %v7774 = vsub.s32 4294967266, %v7769
  %v7775 = vadd.s32 %v7774, 127
  %v7776 = vshll.u32 %v7775, 23
  %v7777 = vor.u32 4788187, %v7776
  %v7778 = vand.u32 2147483647, %v7777
  %v7780 = vcvt.s32.f32 %v7773
  %v7781 = vmul.f32 %v7780, %v7778
  %v7782 = vxor.u32 %v7781, 2147483648
  %v7783 = vsel %vm7700, %v7782, %v7781
  %v7784 = vsub.s32 4, %v7760
  %v7785 = vsel %vm7700, %v7784, %v7760
  %v7786 = vsel %vm7699, %v7591, %v7783
  %v7787 = vsel %vm7699, 0, %v7785
  %v7788 = vcosq.f32.pop %v7786
  %v7789 = vsinq.f32.pop %v7786
  %vm7790 = vweird.f32 %v7591
  %v7791 = vadd.s32 %v7787, 3
  %v7792 = vand.u32 %v7791, 3
  %vm7793 = vcmp.lt.s32.totalorder %v7792, 2
  %vm7794 = vcmp.eq.s32.totalorder %v7792, 0
  %v7795 = vxor.u32 %v7789, 2147483648
  %v7796 = vsel %vm7794, %v7788, %v7795
  %vm7797 = vcmp.eq.s32.totalorder %v7792, 2
  %v7798 = vxor.u32 %v7788, 2147483648
  %v7799 = vsel %vm7797, %v7798, %v7789
  %v7800 = vsel %vm7793, %v7796, %v7799
  %v7801 = vsel %vm7790, nan, %v7800
  %v7802 = vand.u32 2147483647, %v7592
  %vm7803 = vcmp.le.f32.partialorder %v7802, 0.7853982
  %vm7804 = vcmp.lt.s32.totalorder %v7592, 0
  %v7805 = vand.u32 %v7592, 2139095040
  %v7806 = vshrl.u32 %v7805, 23
  %v7807 = vsub.s32 %v7806, 127
  %v7808 = vand.u32 2147483647, %v7592
  %v7809 = vand.u32 %v7808, 8388607
  %v7810 = vor.u32 %v7809, 8388608
  %v7811 = vsub.s32 0, %v7810
  %v7812 = vadd.s32 %v7807, 1
  %vm7813 = vcmp.gt.s32.totalorder %v7812, 0
  %v7814 = vsel %vm7813, %v7812, 0
  %v7815 = vshrl.u32 %v7814, 5
  %v7816 = vand.u32 %v7814, 31
  %v7817 = vsub.s32 32, %v7816
  %v7818 = vshrl.u32 683565275, %v7817
  %v7819 = vshll.u32 683565275, %v7816
  %v7820 = vshrl.u32 2475754826, %v7817
  %v7821 = vor.u32 %v7819, %v7820
  %v7822 = vshll.u32 2475754826, %v7816
  %v7823 = vshrl.u32 2131351028, %v7817
  %v7824 = vor.u32 %v7822, %v7823
  %v7825 = vshll.u32 2131351028, %v7816
  %v7826 = vshrl.u32 2102212464, %v7817
  %v7827 = vor.u32 %v7825, %v7826
  %v7828 = vshll.u32 2102212464, %v7816
  %v7829 = vshrl.u32 920167782, %v7817
  %v7830 = vor.u32 %v7828, %v7829
  %v7831 = vshll.u32 920167782, %v7816
  %v7832 = vshrl.u32 1326507024, %v7817
  %v7833 = vor.u32 %v7831, %v7832
  %vm7834 = vcmp.lt.s32.totalorder %v7815, 1
  %vm7835 = vcmp.lt.s32.totalorder %v7815, 2
  %vm7836 = vcmp.lt.s32.totalorder %v7815, 3
  %vm7837 = vcmp.lt.s32.totalorder %v7815, 4
  %v7838 = vsel %vm7834, %v7818, %v7821
  %v7839 = vsel %vm7837, %v7827, 2102212464
  %v7840 = vsel %vm7836, %v7824, %v7839
  %v7841 = vsel %vm7835, %v7838, %v7840
  %v7842 = vsel %vm7834, %v7821, %v7824
  %v7843 = vsel %vm7837, %v7830, 920167782
  %v7844 = vsel %vm7836, %v7827, %v7843
  %v7845 = vsel %vm7835, %v7842, %v7844
  %v7846 = vsel %vm7834, %v7824, %v7827
  %v7847 = vsel %vm7837, %v7833, 1326507024
  %v7848 = vsel %vm7836, %v7830, %v7847
  %v7849 = vsel %vm7835, %v7846, %v7848
  %v7850 = vshll.u32 %v7810, 8
  %v7851 = vmul.u32.u64.compose %v7850, %v7849
  %v7852 = vextract.low.u32 %v7851
  %v7853 = vextract.high.u32 %v7851
  %v7854 = vmul.u32.u64.compose %v7850, %v7845
  %v7855 = vextract.low.u32 %v7854
  %v7856 = vextract.high.u32 %v7854
  %v7857 = vmul.u32 %v7850, %v7841
  %v7858 = vadd.s32 %v7853, %v7855
  %vm7859 = vc.u32 %v7853, %v7855
  %v7860 = vadd.s32 %v7856, 1
  %v7861 = vsel %vm7859, %v7860, %v7856
  %v7862 = vadd.s32 %v7857, %v7861
  %v7863 = vadd.s32 %v7862, 536870912
  %v7864 = vshrl.u32 %v7863, 30
  %v7865 = vshll.u32 %v7864, 30
  %v7866 = vsub.s32 %v7862, %v7865
  %vm7867 = vcmp.lt.s32.totalorder %v7866, 0
  %v7868 = vsub.s32 0, %v7866
  %v7869 = vsel %vm7867, %v7868, %v7866
  %v7870 = vclz %v7869
  %v7871 = vsub.s32 %v7870, 2
  %vm7872 = vcmp.gt.s32.totalorder 0, %v7871
  %v7873 = vsel %vm7872, 0, %v7871
  %v7874 = vsub.s32 32, %v7873
  %v7875 = vshll.u32 %v7866, %v7873
  %v7876 = vshrl.u32 %v7858, %v7874
  %v7877 = vor.u32 %v7875, %v7876
  %v7878 = vsub.s32 4294967266, %v7873
  %v7879 = vadd.s32 %v7878, 127
  %v7880 = vshll.u32 %v7879, 23
  %v7881 = vor.u32 4788187, %v7880
  %v7882 = vand.u32 2147483647, %v7881
  %v7884 = vcvt.s32.f32 %v7877
  %v7885 = vmul.f32 %v7884, %v7882
  %v7886 = vxor.u32 %v7885, 2147483648
  %v7887 = vsel %vm7804, %v7886, %v7885
  %v7888 = vsub.s32 4, %v7864
  %v7889 = vsel %vm7804, %v7888, %v7864
  %v7890 = vsel %vm7803, %v7592, %v7887
  %v7891 = vsel %vm7803, 0, %v7889
  %v7892 = vcosq.f32.pop %v7890
  %v7893 = vsinq.f32.pop %v7890
  %vm7894 = vweird.f32 %v7592
  %v7895 = vadd.s32 %v7891, 3
  %v7896 = vand.u32 %v7895, 3
  %vm7897 = vcmp.lt.s32.totalorder %v7896, 2
  %vm7898 = vcmp.eq.s32.totalorder %v7896, 0
  %v7899 = vxor.u32 %v7893, 2147483648
  %v7900 = vsel %vm7898, %v7892, %v7899
  %vm7901 = vcmp.eq.s32.totalorder %v7896, 2
  %v7902 = vxor.u32 %v7892, 2147483648
  %v7903 = vsel %vm7901, %v7902, %v7893
  %v7904 = vsel %vm7897, %v7900, %v7903
  %v7905 = vsel %vm7894, nan, %v7904
  %v7906 = vand.u32 2147483647, %v7593
  %vm7907 = vcmp.le.f32.partialorder %v7906, 0.7853982
  %vm7908 = vcmp.lt.s32.totalorder %v7593, 0
  %v7909 = vand.u32 %v7593, 2139095040
  %v7910 = vshrl.u32 %v7909, 23
  %v7911 = vsub.s32 %v7910, 127
  %v7912 = vand.u32 2147483647, %v7593
  %v7913 = vand.u32 %v7912, 8388607
  %v7914 = vor.u32 %v7913, 8388608
  %v7915 = vsub.s32 0, %v7914
  %v7916 = vadd.s32 %v7911, 1
  %vm7917 = vcmp.gt.s32.totalorder %v7916, 0
  %v7918 = vsel %vm7917, %v7916, 0
  %v7919 = vshrl.u32 %v7918, 5
  %v7920 = vand.u32 %v7918, 31
  %v7921 = vsub.s32 32, %v7920
  %v7922 = vshrl.u32 683565275, %v7921
  %v7923 = vshll.u32 683565275, %v7920
  %v7924 = vshrl.u32 2475754826, %v7921
  %v7925 = vor.u32 %v7923, %v7924
  %v7926 = vshll.u32 2475754826, %v7920
  %v7927 = vshrl.u32 2131351028, %v7921
  %v7928 = vor.u32 %v7926, %v7927
  %v7929 = vshll.u32 2131351028, %v7920
  %v7930 = vshrl.u32 2102212464, %v7921
  %v7931 = vor.u32 %v7929, %v7930
  %v7932 = vshll.u32 2102212464, %v7920
  %v7933 = vshrl.u32 920167782, %v7921
  %v7934 = vor.u32 %v7932, %v7933
  %v7935 = vshll.u32 920167782, %v7920
  %v7936 = vshrl.u32 1326507024, %v7921
  %v7937 = vor.u32 %v7935, %v7936
  %vm7938 = vcmp.lt.s32.totalorder %v7919, 1
  %vm7939 = vcmp.lt.s32.totalorder %v7919, 2
  %vm7940 = vcmp.lt.s32.totalorder %v7919, 3
  %vm7941 = vcmp.lt.s32.totalorder %v7919, 4
  %v7942 = vsel %vm7938, %v7922, %v7925
  %v7943 = vsel %vm7941, %v7931, 2102212464
  %v7944 = vsel %vm7940, %v7928, %v7943
  %v7945 = vsel %vm7939, %v7942, %v7944
  %v7946 = vsel %vm7938, %v7925, %v7928
  %v7947 = vsel %vm7941, %v7934, 920167782
  %v7948 = vsel %vm7940, %v7931, %v7947
  %v7949 = vsel %vm7939, %v7946, %v7948
  %v7950 = vsel %vm7938, %v7928, %v7931
  %v7951 = vsel %vm7941, %v7937, 1326507024
  %v7952 = vsel %vm7940, %v7934, %v7951
  %v7953 = vsel %vm7939, %v7950, %v7952
  %v7954 = vshll.u32 %v7914, 8
  %v7955 = vmul.u32.u64.compose %v7954, %v7953
  %v7956 = vextract.low.u32 %v7955
  %v7957 = vextract.high.u32 %v7955
  %v7958 = vmul.u32.u64.compose %v7954, %v7949
  %v7959 = vextract.low.u32 %v7958
  %v7960 = vextract.high.u32 %v7958
  %v7961 = vmul.u32 %v7954, %v7945
  %v7962 = vadd.s32 %v7957, %v7959
  %vm7963 = vc.u32 %v7957, %v7959
  %v7964 = vadd.s32 %v7960, 1
  %v7965 = vsel %vm7963, %v7964, %v7960
  %v7966 = vadd.s32 %v7961, %v7965
  %v7967 = vadd.s32 %v7966, 536870912
  %v7968 = vshrl.u32 %v7967, 30
  %v7969 = vshll.u32 %v7968, 30
  %v7970 = vsub.s32 %v7966, %v7969
  %vm7971 = vcmp.lt.s32.totalorder %v7970, 0
  %v7972 = vsub.s32 0, %v7970
  %v7973 = vsel %vm7971, %v7972, %v7970
  %v7974 = vclz %v7973
  %v7975 = vsub.s32 %v7974, 2
  %vm7976 = vcmp.gt.s32.totalorder 0, %v7975
  %v7977 = vsel %vm7976, 0, %v7975
  %v7978 = vsub.s32 32, %v7977
  %v7979 = vshll.u32 %v7970, %v7977
  %v7980 = vshrl.u32 %v7962, %v7978
  %v7981 = vor.u32 %v7979, %v7980
  %v7982 = vsub.s32 4294967266, %v7977
  %v7983 = vadd.s32 %v7982, 127
  %v7984 = vshll.u32 %v7983, 23
  %v7985 = vor.u32 4788187, %v7984
  %v7986 = vand.u32 2147483647, %v7985
  %v7988 = vcvt.s32.f32 %v7981
  %v7989 = vmul.f32 %v7988, %v7986
  %v7990 = vxor.u32 %v7989, 2147483648
  %v7991 = vsel %vm7908, %v7990, %v7989
  %v7992 = vsub.s32 4, %v7968
  %v7993 = vsel %vm7908, %v7992, %v7968
  %v7994 = vsel %vm7907, %v7593, %v7991
  %v7995 = vsel %vm7907, 0, %v7993
  %v7996 = vcosq.f32.pop %v7994
  %v7997 = vsinq.f32.pop %v7994
  %vm7998 = vweird.f32 %v7593
  %v7999 = vadd.s32 %v7995, 3
  %v8000 = vand.u32 %v7999, 3
  %vm8001 = vcmp.lt.s32.totalorder %v8000, 2
  %vm8002 = vcmp.eq.s32.totalorder %v8000, 0
  %v8003 = vxor.u32 %v7997, 2147483648
  %v8004 = vsel %vm8002, %v7996, %v8003
  %vm8005 = vcmp.eq.s32.totalorder %v8000, 2
  %v8006 = vxor.u32 %v7996, 2147483648
  %v8007 = vsel %vm8005, %v8006, %v7997
  %v8008 = vsel %vm8001, %v8004, %v8007
  %v8009 = vsel %vm7998, nan, %v8008
  %s8010 = scalar_lea.vmem %s1, 608
  %8011 = vst [vmem:[%s8010] sm:$0xff] %v7697
  %8012 = vst [vmem:[%s8010 + $0x8] sm:$0xff] %v7801
  %8013 = vst [vmem:[%s8010 + $0x10] sm:$0xff] %v7905
  %8014 = vst [vmem:[%s8010 + $0x18] sm:$0xff] %v8009
  %v8015 = vand.u32 2147483647, %v7590
  %vm8016 = vcmp.le.f32.partialorder %v8015, 0.7853982
  %vm8017 = vcmp.lt.s32.totalorder %v7590, 0
  %v8018 = vand.u32 %v7590, 2139095040
  %v8019 = vshrl.u32 %v8018, 23
  %v8020 = vsub.s32 %v8019, 127
  %v8021 = vand.u32 2147483647, %v7590
  %v8022 = vand.u32 %v8021, 8388607
  %v8023 = vor.u32 %v8022, 8388608
  %v8024 = vsub.s32 0, %v8023
  %v8025 = vadd.s32 %v8020, 1
  %vm8026 = vcmp.gt.s32.totalorder %v8025, 0
  %v8027 = vsel %vm8026, %v8025, 0
  %v8028 = vshrl.u32 %v8027, 5
  %v8029 = vand.u32 %v8027, 31
  %v8030 = vsub.s32 32, %v8029
  %v8031 = vshrl.u32 683565275, %v8030
  %v8032 = vshll.u32 683565275, %v8029
  %v8033 = vshrl.u32 2475754826, %v8030
  %v8034 = vor.u32 %v8032, %v8033
  %v8035 = vshll.u32 2475754826, %v8029
  %v8036 = vshrl.u32 2131351028, %v8030
  %v8037 = vor.u32 %v8035, %v8036
  %v8038 = vshll.u32 2131351028, %v8029
  %v8039 = vshrl.u32 2102212464, %v8030
  %v8040 = vor.u32 %v8038, %v8039
  %v8041 = vshll.u32 2102212464, %v8029
  %v8042 = vshrl.u32 920167782, %v8030
  %v8043 = vor.u32 %v8041, %v8042
  %v8044 = vshll.u32 920167782, %v8029
  %v8045 = vshrl.u32 1326507024, %v8030
  %v8046 = vor.u32 %v8044, %v8045
  %vm8047 = vcmp.lt.s32.totalorder %v8028, 1
  %vm8048 = vcmp.lt.s32.totalorder %v8028, 2
  %vm8049 = vcmp.lt.s32.totalorder %v8028, 3
  %vm8050 = vcmp.lt.s32.totalorder %v8028, 4
  %v8051 = vsel %vm8047, %v8031, %v8034
  %v8052 = vsel %vm8050, %v8040, 2102212464
  %v8053 = vsel %vm8049, %v8037, %v8052
  %v8054 = vsel %vm8048, %v8051, %v8053
  %v8055 = vsel %vm8047, %v8034, %v8037
  %v8056 = vsel %vm8050, %v8043, 920167782
  %v8057 = vsel %vm8049, %v8040, %v8056
  %v8058 = vsel %vm8048, %v8055, %v8057
  %v8059 = vsel %vm8047, %v8037, %v8040
  %v8060 = vsel %vm8050, %v8046, 1326507024
  %v8061 = vsel %vm8049, %v8043, %v8060
  %v8062 = vsel %vm8048, %v8059, %v8061
  %v8063 = vshll.u32 %v8023, 8
  %v8064 = vmul.u32.u64.compose %v8063, %v8062
  %v8065 = vextract.low.u32 %v8064
  %v8066 = vextract.high.u32 %v8064
  %v8067 = vmul.u32.u64.compose %v8063, %v8058
  %v8068 = vextract.low.u32 %v8067
  %v8069 = vextract.high.u32 %v8067
  %v8070 = vmul.u32 %v8063, %v8054
  %v8071 = vadd.s32 %v8066, %v8068
  %vm8072 = vc.u32 %v8066, %v8068
  %v8073 = vadd.s32 %v8069, 1
  %v8074 = vsel %vm8072, %v8073, %v8069
  %v8075 = vadd.s32 %v8070, %v8074
  %v8076 = vadd.s32 %v8075, 536870912
  %v8077 = vshrl.u32 %v8076, 30
  %v8078 = vshll.u32 %v8077, 30
  %v8079 = vsub.s32 %v8075, %v8078
  %vm8080 = vcmp.lt.s32.totalorder %v8079, 0
  %v8081 = vsub.s32 0, %v8079
  %v8082 = vsel %vm8080, %v8081, %v8079
  %v8083 = vclz %v8082
  %v8084 = vsub.s32 %v8083, 2
  %vm8085 = vcmp.gt.s32.totalorder 0, %v8084
  %v8086 = vsel %vm8085, 0, %v8084
  %v8087 = vsub.s32 32, %v8086
  %v8088 = vshll.u32 %v8079, %v8086
  %v8089 = vshrl.u32 %v8071, %v8087
  %v8090 = vor.u32 %v8088, %v8089
  %v8091 = vsub.s32 4294967266, %v8086
  %v8092 = vadd.s32 %v8091, 127
  %v8093 = vshll.u32 %v8092, 23
  %v8094 = vor.u32 4788187, %v8093
  %v8095 = vand.u32 2147483647, %v8094
  %v8097 = vcvt.s32.f32 %v8090
  %v8098 = vmul.f32 %v8097, %v8095
  %v8099 = vxor.u32 %v8098, 2147483648
  %v8100 = vsel %vm8017, %v8099, %v8098
  %v8101 = vsub.s32 4, %v8077
  %v8102 = vsel %vm8017, %v8101, %v8077
  %v8103 = vsel %vm8016, %v7590, %v8100
  %v8104 = vsel %vm8016, 0, %v8102
  %v8105 = vcosq.f32.pop %v8103
  %v8106 = vsinq.f32.pop %v8103
  %vm8107 = vweird.f32 %v7590
  %v8108 = vand.u32 %v8104, 3
  %vm8109 = vcmp.lt.s32.totalorder %v8108, 2
  %vm8110 = vcmp.eq.s32.totalorder %v8108, 0
  %v8111 = vxor.u32 %v8106, 2147483648
  %v8112 = vsel %vm8110, %v8105, %v8111
  %vm8113 = vcmp.eq.s32.totalorder %v8108, 2
  %v8114 = vxor.u32 %v8105, 2147483648
  %v8115 = vsel %vm8113, %v8114, %v8106
  %v8116 = vsel %vm8109, %v8112, %v8115
  %v8117 = vsel %vm8107, nan, %v8116
  %v8118 = vand.u32 2147483647, %v7591
  %vm8119 = vcmp.le.f32.partialorder %v8118, 0.7853982
  %vm8120 = vcmp.lt.s32.totalorder %v7591, 0
  %v8121 = vand.u32 %v7591, 2139095040
  %v8122 = vshrl.u32 %v8121, 23
  %v8123 = vsub.s32 %v8122, 127
  %v8124 = vand.u32 2147483647, %v7591
  %v8125 = vand.u32 %v8124, 8388607
  %v8126 = vor.u32 %v8125, 8388608
  %v8127 = vsub.s32 0, %v8126
  %v8128 = vadd.s32 %v8123, 1
  %vm8129 = vcmp.gt.s32.totalorder %v8128, 0
  %v8130 = vsel %vm8129, %v8128, 0
  %v8131 = vshrl.u32 %v8130, 5
  %v8132 = vand.u32 %v8130, 31
  %v8133 = vsub.s32 32, %v8132
  %v8134 = vshrl.u32 683565275, %v8133
  %v8135 = vshll.u32 683565275, %v8132
  %v8136 = vshrl.u32 2475754826, %v8133
  %v8137 = vor.u32 %v8135, %v8136
  %v8138 = vshll.u32 2475754826, %v8132
  %v8139 = vshrl.u32 2131351028, %v8133
  %v8140 = vor.u32 %v8138, %v8139
  %v8141 = vshll.u32 2131351028, %v8132
  %v8142 = vshrl.u32 2102212464, %v8133
  %v8143 = vor.u32 %v8141, %v8142
  %v8144 = vshll.u32 2102212464, %v8132
  %v8145 = vshrl.u32 920167782, %v8133
  %v8146 = vor.u32 %v8144, %v8145
  %v8147 = vshll.u32 920167782, %v8132
  %v8148 = vshrl.u32 1326507024, %v8133
  %v8149 = vor.u32 %v8147, %v8148
  %vm8150 = vcmp.lt.s32.totalorder %v8131, 1
  %vm8151 = vcmp.lt.s32.totalorder %v8131, 2
  %vm8152 = vcmp.lt.s32.totalorder %v8131, 3
  %vm8153 = vcmp.lt.s32.totalorder %v8131, 4
  %v8154 = vsel %vm8150, %v8134, %v8137
  %v8155 = vsel %vm8153, %v8143, 2102212464
  %v8156 = vsel %vm8152, %v8140, %v8155
  %v8157 = vsel %vm8151, %v8154, %v8156
  %v8158 = vsel %vm8150, %v8137, %v8140
  %v8159 = vsel %vm8153, %v8146, 920167782
  %v8160 = vsel %vm8152, %v8143, %v8159
  %v8161 = vsel %vm8151, %v8158, %v8160
  %v8162 = vsel %vm8150, %v8140, %v8143
  %v8163 = vsel %vm8153, %v8149, 1326507024
  %v8164 = vsel %vm8152, %v8146, %v8163
  %v8165 = vsel %vm8151, %v8162, %v8164
  %v8166 = vshll.u32 %v8126, 8
  %v8167 = vmul.u32.u64.compose %v8166, %v8165
  %v8168 = vextract.low.u32 %v8167
  %v8169 = vextract.high.u32 %v8167
  %v8170 = vmul.u32.u64.compose %v8166, %v8161
  %v8171 = vextract.low.u32 %v8170
  %v8172 = vextract.high.u32 %v8170
  %v8173 = vmul.u32 %v8166, %v8157
  %v8174 = vadd.s32 %v8169, %v8171
  %vm8175 = vc.u32 %v8169, %v8171
  %v8176 = vadd.s32 %v8172, 1
  %v8177 = vsel %vm8175, %v8176, %v8172
  %v8178 = vadd.s32 %v8173, %v8177
  %v8179 = vadd.s32 %v8178, 536870912
  %v8180 = vshrl.u32 %v8179, 30
  %v8181 = vshll.u32 %v8180, 30
  %v8182 = vsub.s32 %v8178, %v8181
  %vm8183 = vcmp.lt.s32.totalorder %v8182, 0
  %v8184 = vsub.s32 0, %v8182
  %v8185 = vsel %vm8183, %v8184, %v8182
  %v8186 = vclz %v8185
  %v8187 = vsub.s32 %v8186, 2
  %vm8188 = vcmp.gt.s32.totalorder 0, %v8187
  %v8189 = vsel %vm8188, 0, %v8187
  %v8190 = vsub.s32 32, %v8189
  %v8191 = vshll.u32 %v8182, %v8189
  %v8192 = vshrl.u32 %v8174, %v8190
  %v8193 = vor.u32 %v8191, %v8192
  %v8194 = vsub.s32 4294967266, %v8189
  %v8195 = vadd.s32 %v8194, 127
  %v8196 = vshll.u32 %v8195, 23
  %v8197 = vor.u32 4788187, %v8196
  %v8198 = vand.u32 2147483647, %v8197
  %v8200 = vcvt.s32.f32 %v8193
  %v8201 = vmul.f32 %v8200, %v8198
  %v8202 = vxor.u32 %v8201, 2147483648
  %v8203 = vsel %vm8120, %v8202, %v8201
  %v8204 = vsub.s32 4, %v8180
  %v8205 = vsel %vm8120, %v8204, %v8180
  %v8206 = vsel %vm8119, %v7591, %v8203
  %v8207 = vsel %vm8119, 0, %v8205
  %v8208 = vcosq.f32.pop %v8206
  %v8209 = vsinq.f32.pop %v8206
  %vm8210 = vweird.f32 %v7591
  %v8211 = vand.u32 %v8207, 3
  %vm8212 = vcmp.lt.s32.totalorder %v8211, 2
  %vm8213 = vcmp.eq.s32.totalorder %v8211, 0
  %v8214 = vxor.u32 %v8209, 2147483648
  %v8215 = vsel %vm8213, %v8208, %v8214
  %vm8216 = vcmp.eq.s32.totalorder %v8211, 2
  %v8217 = vxor.u32 %v8208, 2147483648
  %v8218 = vsel %vm8216, %v8217, %v8209
  %v8219 = vsel %vm8212, %v8215, %v8218
  %v8220 = vsel %vm8210, nan, %v8219
  %v8221 = vand.u32 2147483647, %v7592
  %vm8222 = vcmp.le.f32.partialorder %v8221, 0.7853982
  %vm8223 = vcmp.lt.s32.totalorder %v7592, 0
  %v8224 = vand.u32 %v7592, 2139095040
  %v8225 = vshrl.u32 %v8224, 23
  %v8226 = vsub.s32 %v8225, 127
  %v8227 = vand.u32 2147483647, %v7592
  %v8228 = vand.u32 %v8227, 8388607
  %v8229 = vor.u32 %v8228, 8388608
  %v8230 = vsub.s32 0, %v8229
  %v8231 = vadd.s32 %v8226, 1
  %vm8232 = vcmp.gt.s32.totalorder %v8231, 0
  %v8233 = vsel %vm8232, %v8231, 0
  %v8234 = vshrl.u32 %v8233, 5
  %v8235 = vand.u32 %v8233, 31
  %v8236 = vsub.s32 32, %v8235
  %v8237 = vshrl.u32 683565275, %v8236
  %v8238 = vshll.u32 683565275, %v8235
  %v8239 = vshrl.u32 2475754826, %v8236
  %v8240 = vor.u32 %v8238, %v8239
  %v8241 = vshll.u32 2475754826, %v8235
  %v8242 = vshrl.u32 2131351028, %v8236
  %v8243 = vor.u32 %v8241, %v8242
  %v8244 = vshll.u32 2131351028, %v8235
  %v8245 = vshrl.u32 2102212464, %v8236
  %v8246 = vor.u32 %v8244, %v8245
  %v8247 = vshll.u32 2102212464, %v8235
  %v8248 = vshrl.u32 920167782, %v8236
  %v8249 = vor.u32 %v8247, %v8248
  %v8250 = vshll.u32 920167782, %v8235
  %v8251 = vshrl.u32 1326507024, %v8236
  %v8252 = vor.u32 %v8250, %v8251
  %vm8253 = vcmp.lt.s32.totalorder %v8234, 1
  %vm8254 = vcmp.lt.s32.totalorder %v8234, 2
  %vm8255 = vcmp.lt.s32.totalorder %v8234, 3
  %vm8256 = vcmp.lt.s32.totalorder %v8234, 4
  %v8257 = vsel %vm8253, %v8237, %v8240
  %v8258 = vsel %vm8256, %v8246, 2102212464
  %v8259 = vsel %vm8255, %v8243, %v8258
  %v8260 = vsel %vm8254, %v8257, %v8259
  %v8261 = vsel %vm8253, %v8240, %v8243
  %v8262 = vsel %vm8256, %v8249, 920167782
  %v8263 = vsel %vm8255, %v8246, %v8262
  %v8264 = vsel %vm8254, %v8261, %v8263
  %v8265 = vsel %vm8253, %v8243, %v8246
  %v8266 = vsel %vm8256, %v8252, 1326507024
  %v8267 = vsel %vm8255, %v8249, %v8266
  %v8268 = vsel %vm8254, %v8265, %v8267
  %v8269 = vshll.u32 %v8229, 8
  %v8270 = vmul.u32.u64.compose %v8269, %v8268
  %v8271 = vextract.low.u32 %v8270
  %v8272 = vextract.high.u32 %v8270
  %v8273 = vmul.u32.u64.compose %v8269, %v8264
  %v8274 = vextract.low.u32 %v8273
  %v8275 = vextract.high.u32 %v8273
  %v8276 = vmul.u32 %v8269, %v8260
  %v8277 = vadd.s32 %v8272, %v8274
  %vm8278 = vc.u32 %v8272, %v8274
  %v8279 = vadd.s32 %v8275, 1
  %v8280 = vsel %vm8278, %v8279, %v8275
  %v8281 = vadd.s32 %v8276, %v8280
  %v8282 = vadd.s32 %v8281, 536870912
  %v8283 = vshrl.u32 %v8282, 30
  %v8284 = vshll.u32 %v8283, 30
  %v8285 = vsub.s32 %v8281, %v8284
  %vm8286 = vcmp.lt.s32.totalorder %v8285, 0
  %v8287 = vsub.s32 0, %v8285
  %v8288 = vsel %vm8286, %v8287, %v8285
  %v8289 = vclz %v8288
  %v8290 = vsub.s32 %v8289, 2
  %vm8291 = vcmp.gt.s32.totalorder 0, %v8290
  %v8292 = vsel %vm8291, 0, %v8290
  %v8293 = vsub.s32 32, %v8292
  %v8294 = vshll.u32 %v8285, %v8292
  %v8295 = vshrl.u32 %v8277, %v8293
  %v8296 = vor.u32 %v8294, %v8295
  %v8297 = vsub.s32 4294967266, %v8292
  %v8298 = vadd.s32 %v8297, 127
  %v8299 = vshll.u32 %v8298, 23
  %v8300 = vor.u32 4788187, %v8299
  %v8301 = vand.u32 2147483647, %v8300
  %v8303 = vcvt.s32.f32 %v8296
  %v8304 = vmul.f32 %v8303, %v8301
  %v8305 = vxor.u32 %v8304, 2147483648
  %v8306 = vsel %vm8223, %v8305, %v8304
  %v8307 = vsub.s32 4, %v8283
  %v8308 = vsel %vm8223, %v8307, %v8283
  %v8309 = vsel %vm8222, %v7592, %v8306
  %v8310 = vsel %vm8222, 0, %v8308
  %v8311 = vcosq.f32.pop %v8309
  %v8312 = vsinq.f32.pop %v8309
  %vm8313 = vweird.f32 %v7592
  %v8314 = vand.u32 %v8310, 3
  %vm8315 = vcmp.lt.s32.totalorder %v8314, 2
  %vm8316 = vcmp.eq.s32.totalorder %v8314, 0
  %v8317 = vxor.u32 %v8312, 2147483648
  %v8318 = vsel %vm8316, %v8311, %v8317
  %vm8319 = vcmp.eq.s32.totalorder %v8314, 2
  %v8320 = vxor.u32 %v8311, 2147483648
  %v8321 = vsel %vm8319, %v8320, %v8312
  %v8322 = vsel %vm8315, %v8318, %v8321
  %v8323 = vsel %vm8313, nan, %v8322
  %v8324 = vand.u32 2147483647, %v7593
  %vm8325 = vcmp.le.f32.partialorder %v8324, 0.7853982
  %vm8326 = vcmp.lt.s32.totalorder %v7593, 0
  %v8327 = vand.u32 %v7593, 2139095040
  %v8328 = vshrl.u32 %v8327, 23
  %v8329 = vsub.s32 %v8328, 127
  %v8330 = vand.u32 2147483647, %v7593
  %v8331 = vand.u32 %v8330, 8388607
  %v8332 = vor.u32 %v8331, 8388608
  %v8333 = vsub.s32 0, %v8332
  %v8334 = vadd.s32 %v8329, 1
  %vm8335 = vcmp.gt.s32.totalorder %v8334, 0
  %v8336 = vsel %vm8335, %v8334, 0
  %v8337 = vshrl.u32 %v8336, 5
  %v8338 = vand.u32 %v8336, 31
  %v8339 = vsub.s32 32, %v8338
  %v8340 = vshrl.u32 683565275, %v8339
  %v8341 = vshll.u32 683565275, %v8338
  %v8342 = vshrl.u32 2475754826, %v8339
  %v8343 = vor.u32 %v8341, %v8342
  %v8344 = vshll.u32 2475754826, %v8338
  %v8345 = vshrl.u32 2131351028, %v8339
  %v8346 = vor.u32 %v8344, %v8345
  %v8347 = vshll.u32 2131351028, %v8338
  %v8348 = vshrl.u32 2102212464, %v8339
  %v8349 = vor.u32 %v8347, %v8348
  %v8350 = vshll.u32 2102212464, %v8338
  %v8351 = vshrl.u32 920167782, %v8339
  %v8352 = vor.u32 %v8350, %v8351
  %v8353 = vshll.u32 920167782, %v8338
  %v8354 = vshrl.u32 1326507024, %v8339
  %v8355 = vor.u32 %v8353, %v8354
  %vm8356 = vcmp.lt.s32.totalorder %v8337, 1
  %vm8357 = vcmp.lt.s32.totalorder %v8337, 2
  %vm8358 = vcmp.lt.s32.totalorder %v8337, 3
  %vm8359 = vcmp.lt.s32.totalorder %v8337, 4
  %v8360 = vsel %vm8356, %v8340, %v8343
  %v8361 = vsel %vm8359, %v8349, 2102212464
  %v8362 = vsel %vm8358, %v8346, %v8361
  %v8363 = vsel %vm8357, %v8360, %v8362
  %v8364 = vsel %vm8356, %v8343, %v8346
  %v8365 = vsel %vm8359, %v8352, 920167782
  %v8366 = vsel %vm8358, %v8349, %v8365
  %v8367 = vsel %vm8357, %v8364, %v8366
  %v8368 = vsel %vm8356, %v8346, %v8349
  %v8369 = vsel %vm8359, %v8355, 1326507024
  %v8370 = vsel %vm8358, %v8352, %v8369
  %v8371 = vsel %vm8357, %v8368, %v8370
  %v8372 = vshll.u32 %v8332, 8
  %v8373 = vmul.u32.u64.compose %v8372, %v8371
  %v8374 = vextract.low.u32 %v8373
  %v8375 = vextract.high.u32 %v8373
  %v8376 = vmul.u32.u64.compose %v8372, %v8367
  %v8377 = vextract.low.u32 %v8376
  %v8378 = vextract.high.u32 %v8376
  %v8379 = vmul.u32 %v8372, %v8363
  %v8380 = vadd.s32 %v8375, %v8377
  %vm8381 = vc.u32 %v8375, %v8377
  %v8382 = vadd.s32 %v8378, 1
  %v8383 = vsel %vm8381, %v8382, %v8378
  %v8384 = vadd.s32 %v8379, %v8383
  %v8385 = vadd.s32 %v8384, 536870912
  %v8386 = vshrl.u32 %v8385, 30
  %v8387 = vshll.u32 %v8386, 30
  %v8388 = vsub.s32 %v8384, %v8387
  %vm8389 = vcmp.lt.s32.totalorder %v8388, 0
  %v8390 = vsub.s32 0, %v8388
  %v8391 = vsel %vm8389, %v8390, %v8388
  %v8392 = vclz %v8391
  %v8393 = vsub.s32 %v8392, 2
  %vm8394 = vcmp.gt.s32.totalorder 0, %v8393
  %v8395 = vsel %vm8394, 0, %v8393
  %v8396 = vsub.s32 32, %v8395
  %v8397 = vshll.u32 %v8388, %v8395
  %v8398 = vshrl.u32 %v8380, %v8396
  %v8399 = vor.u32 %v8397, %v8398
  %v8400 = vsub.s32 4294967266, %v8395
  %v8401 = vadd.s32 %v8400, 127
  %v8402 = vshll.u32 %v8401, 23
  %v8403 = vor.u32 4788187, %v8402
  %v8404 = vand.u32 2147483647, %v8403
  %v8406 = vcvt.s32.f32 %v8399
  %v8407 = vmul.f32 %v8406, %v8404
  %v8408 = vxor.u32 %v8407, 2147483648
  %v8409 = vsel %vm8326, %v8408, %v8407
  %v8410 = vsub.s32 4, %v8386
  %v8411 = vsel %vm8326, %v8410, %v8386
  %v8412 = vsel %vm8325, %v7593, %v8409
  %v8413 = vsel %vm8325, 0, %v8411
  %v8414 = vcosq.f32.pop %v8412
  %v8415 = vsinq.f32.pop %v8412
  %vm8416 = vweird.f32 %v7593
  %v8417 = vand.u32 %v8413, 3
  %vm8418 = vcmp.lt.s32.totalorder %v8417, 2
  %vm8419 = vcmp.eq.s32.totalorder %v8417, 0
  %v8420 = vxor.u32 %v8415, 2147483648
  %v8421 = vsel %vm8419, %v8414, %v8420
  %vm8422 = vcmp.eq.s32.totalorder %v8417, 2
  %v8423 = vxor.u32 %v8414, 2147483648
  %v8424 = vsel %vm8422, %v8423, %v8415
  %v8425 = vsel %vm8418, %v8421, %v8424
  %v8426 = vsel %vm8416, nan, %v8425
  %s8427 = scalar_lea.vmem %s1, 640
  %8428 = vst [vmem:[%s8427] sm:$0xff] %v8117
  %8429 = vst [vmem:[%s8427 + $0x8] sm:$0xff] %v8220
  %8430 = vst [vmem:[%s8427 + $0x10] sm:$0xff] %v8323
  %8431 = vst [vmem:[%s8427 + $0x18] sm:$0xff] %v8426
  // Predicated region
  $region6: #{pe_embed.1} parent=0 // pred_check
    _
  $region7: #{pe_embed.1} parent=0 // pred_check_branch
    %8433 = sbr.rel (0) target = $region9
  $region8: #{pe_embed.1} parent=0 // pred_region
    _
  $region9: #{pe_embed.1} parent=0 // pred_fallthru
    _
  // Predicated region
  $region10: #{pe_embed.1} parent=0 // pred_check
    _
  $region11: #{pe_embed.1} parent=0 // pred_check_branch
    %8435 = sbr.rel (0) target = $region13
  $region12: #{pe_embed.1} parent=0 // pred_region
    _
  $region13: #{pe_embed.1} parent=0 // pred_fallthru
    _

</llo_original>
